<compile_context>
chip_gen: v5e
topology: v5e:2x2
jax: 0.10.0
libtpu: 0.0.40
codegen_flags: <defaults>
</compile_context>

<pallas_src>
import math
import functools
import numpy as np

import jax
import jax.numpy as jnp
from jax.experimental import pallas as pl
from jax.experimental.pallas import tpu as pltpu

LANE = 128


def _round_up(n, m):
    return ((n + m - 1) // m) * m


# --------------------------------------------------------------------------------------
# Kernel: one grid step = one batch sample (InstanceNorm statistics are per-sample).
# --------------------------------------------------------------------------------------
def _resblk_kernel(*refs, H, W, Hh, Wh,
                   normalize, downsample, learned_sc, negative_slope):
    eps = 1e-5
    refs = list(refs)
    out_ref = refs.pop()                                  # (Hh*Wh, cout_p) f32
    x_ref, w1_ref, b1_ref, w2_ref, b2_ref = refs[:5]
    idx = 5
    if normalize:
        g1_ref, be1_ref, g2_ref, be2_ref = refs[idx:idx + 4]
        idx += 4
    if learned_sc:
        wsc_ref = refs[idx]

    def act_bf16(v):
        a = jnp.where(v >= 0, v, negative_slope * v)
        return a.astype(jnp.bfloat16)

    def norm_act_bf16(v, g_ref, b_ref):
        # Shifted two-pass InstanceNorm (f32 statistics) + affine + LeakyReLU -> bf16.
        n = v.shape[0]
        vf = v.astype(jnp.float32)
        mu = jnp.sum(vf, axis=0, keepdims=True) * (1.0 / n)
        d = vf - mu
        var = jnp.sum(d * d, axis=0, keepdims=True) * (1.0 / n)
        scale = g_ref[...] * jax.lax.rsqrt(var + eps)     # (1, C); zero on pad lanes
        nv = d * scale + b_ref[...]
        return act_bf16(nv)

    def conv3x3(v_bf16, w_ref, b_ref, Hs, Ws):
        # 3x3 / stride 1 / pad 1 conv via per-tap-pair accumulated MXU matmuls.
        # Vertical halo comes from a zero row-pad (rounded up to 8 rows so dx==0 taps
        # are sublane-aligned); horizontal row-wrap is killed by hoisted x-index masks.
        S, C = Hs * Ws, v_bf16.shape[1]
        co = w_ref.shape[1]
        P = _round_up(Ws + 1, 8)
        zpad = jnp.zeros((P, C), jnp.bfloat16)
        vpad = jnp.concatenate([zpad, v_bf16, zpad], axis=0)       # (S + 2P, C) bf16
        xcol = jax.lax.broadcasted_iota(jnp.int32, (S, 1), 0) % Ws
        mask_l = xcol >= 1            # valid lanes for dx = -1
        mask_r = xcol <= Ws - 2       # valid lanes for dx = +1

        def tap(t):                   # t = 3*(dy+1) + (dx+1); matches weight row order
            dy, dx = t // 3 - 1, t % 3 - 1
            off = P + dy * Ws + dx
            tp = vpad[off:off + S, :]
            if dx == -1:
                tp = jnp.where(mask_l, tp, jnp.zeros_like(tp))
            elif dx == 1:
                tp = jnp.where(mask_r, tp, jnp.zeros_like(tp))
            return tp

        acc = jnp.zeros((S, co), jnp.float32)
        t = 0
        while t < 9:                  # pairs -> K = 2*C (full MXU depth); last tap alone
            k = 2 if t + 1 < 9 else 1
            patch = tap(t) if k == 1 else jnp.concatenate([tap(t), tap(t + 1)], axis=1)
            wslab = w_ref[pl.ds(t * C, k * C), :]                  # (k*C, co) bf16
            acc = acc + jnp.dot(patch, wslab, preferred_element_type=jnp.float32)
            t += k
        return acc + b_ref[...]                                    # f32 bias (1, co)

    def pool2x2(v, Hs, Ws):
        C = v.shape[1]
        v5 = v.reshape(Hs // 2, 2, Ws // 2, 2, C)
        s = (v5[:, 0, :, 0, :] + v5[:, 0, :, 1, :] +
             v5[:, 1, :, 0, :] + v5[:, 1, :, 1, :])
        return (s * 0.25).reshape((Hs // 2) * (Ws // 2), C)

    x = x_ref[...]                                                 # (H*W, cin_p) bf16

    # -------- residual branch --------
    h = norm_act_bf16(x, g1_ref, be1_ref) if normalize else act_bf16(x)
    h = conv3x3(h, w1_ref, b1_ref, H, W)                           # (H*W, cin_p) f32
    if downsample:
        h = pool2x2(h, H, W)                                       # (Hh*Wh, cin_p) f32
    h = norm_act_bf16(h, g2_ref, be2_ref) if normalize else act_bf16(h)
    h = conv3x3(h, w2_ref, b2_ref, Hh, Wh)                         # (Hh*Wh, cout_p) f32

    # -------- shortcut branch: pool first, then 1x1 (commute; 4x fewer MXU FLOPs) ----
    sc = x
    if downsample:
        sc = pool2x2(sc, H, W)                                     # bf16
    if learned_sc:
        sc = jnp.dot(sc, wsc_ref[...], preferred_element_type=jnp.float32)

    out_ref[...] = ((h + sc) * (1.0 / math.sqrt(2.0))).astype(out_ref.dtype)


# --------------------------------------------------------------------------------------
# Parameter packing (lane-dense, zero-padded) — do this once per ResBlk.
# --------------------------------------------------------------------------------------
def pack_resblk_params(w1, b1, w2, b2, g1=None, be1=None, g2=None, be2=None, wsc=None,
                       *, normalize):
    cin, cout = w1.shape[0], w2.shape[0]
    learned_sc = cin != cout
    cin_p, cout_p = _round_up(cin, LANE), _round_up(cout, LANE)

    def im2col_weights(w, ci, co, ci_p, co_p):
        wt = jnp.transpose(w, (2, 3, 1, 0))                        # (3,3,ci,co)
        wt = jnp.pad(wt, ((0, 0), (0, 0), (0, ci_p - ci), (0, co_p - co)))
        return wt.reshape(9 * ci_p, co_p).astype(jnp.bfloat16)     # rows = (ky, kx, ci)

    def row_vec(v, cp):
        v = jnp.asarray(v, jnp.float32).reshape(1, -1)
        return jnp.pad(v, ((0, 0), (0, cp - v.shape[1])))          # zero pad: load-bearing

    params = dict(cin=cin, cout=cout, cin_p=cin_p, cout_p=cout_p,
                  learned_sc=learned_sc, normalize=normalize,
                  w1=im2col_weights(w1, cin, cin, cin_p, cin_p),
                  b1=row_vec(b1, cin_p),
                  w2=im2col_weights(w2, cin, cout, cin_p, cout_p),
                  b2=row_vec(b2, cout_p))
    if normalize:
        params.update(g1=row_vec(g1, cin_p), be1=row_vec(be1, cin_p),
                      g2=row_vec(g2, cin_p), be2=row_vec(be2, cin_p))
    if learned_sc:
        params["wsc"] = jnp.pad(jnp.transpose(wsc[:, :, 0, 0], (1, 0)),
                                ((0, cin_p - cin), (0, cout_p - cout))).astype(jnp.bfloat16)
    return params


# --------------------------------------------------------------------------------------
# Flat-layout entry point: keep chained ResBlks in (B, H*W, C_pad) bf16 between blocks.
# --------------------------------------------------------------------------------------
def resblk_apply_flat(x_flat, params, *, H, W, downsample, negative_slope=0.2):
    B, S, cin_p = x_flat.shape
    assert S == H * W and cin_p == params["cin_p"]
    normalize, learned_sc = params["normalize"], params["learned_sc"]
    cout_p = params["cout_p"]
    if downsample:
        assert H % 2 == 0 and W % 2 == 0, "avg_pool2d(2) requires even spatial dims"
    Hh, Wh = (H // 2, W // 2) if downsample else (H, W)
    Sh = Hh * Wh

    def const_spec(a):
        # Constant index map -> fetched once; single buffer saves VMEM at zero perf cost.
        return pl.BlockSpec(a.shape, lambda b: (0,) * a.ndim,
                            pipeline_mode=pl.Buffered(1))

    inputs = [x_flat, params["w1"], params["b1"], params["w2"], params["b2"]]
    in_specs = [pl.BlockSpec((pl.Squeezed(), S, cin_p), lambda b: (b, 0, 0)),
                const_spec(params["w1"]), const_spec(params["b1"]),
                const_spec(params["w2"]), const_spec(params["b2"])]
    if normalize:
        for k in ("g1", "be1", "g2", "be2"):
            inputs.append(params[k])
            in_specs.append(const_spec(params[k]))
    if learned_sc:
        inputs.append(params["wsc"])
        in_specs.append(const_spec(params["wsc"]))

    kernel = functools.partial(
        _resblk_kernel, H=H, W=W, Hh=Hh, Wh=Wh,
        normalize=normalize, downsample=downsample, learned_sc=learned_sc,
        negative_slope=negative_slope)

    # ---- cost estimate + VMEM budget (buffer arithmetic, with headroom) ----
    nbytes = lambda a: int(a.size) * a.dtype.itemsize
    weight_bytes = sum(nbytes(a) for a in inputs[1:])
    flops = B * (2 * S * 9 * cin_p * cin_p                       # conv1
                 + 2 * Sh * 9 * cin_p * cout_p                   # conv2
                 + (2 * Sh * cin_p * cout_p if learned_sc else 0))
    cost = pl.CostEstimate(
        flops=int(flops),
        transcendentals=int(2 * B * cin_p) if normalize else 0,
        bytes_accessed=int(nbytes(x_flat) + B * Sh * cout_p * 4 + weight_bytes))

    in_block = S * cin_p * 2                                     # bf16, double-buffered
    out_block = Sh * cout_p * 4                                  # f32, double-buffered
    tmp = 10 * S * max(cin_p, cout_p) * 4                        # vpad/taps/acc/f32 copies
    vmem_est = 2 * in_block + 2 * out_block + weight_bytes + tmp
    vmem_limit = int(min(max(vmem_est * 3 // 2, 16 * 1024 * 1024), 64 * 1024 * 1024))

    return pl.pallas_call(
        kernel,
        out_shape=jax.ShapeDtypeStruct((B, Sh, cout_p), jnp.float32),
        grid_spec=pltpu.PrefetchScalarGridSpec(
            num_scalar_prefetch=0,
            grid=(B,),
            in_specs=in_specs,
            out_specs=pl.BlockSpec((pl.Squeezed(), Sh, cout_p), lambda b: (b, 0, 0)),
        ),
        compiler_params=pltpu.CompilerParams(
            dimension_semantics=("parallel",),
            vmem_limit_bytes=vmem_limit),
        cost_estimate=cost,
    )(*inputs)
    # TODO(synk): for realistic sizes (e.g. 256x256, C_pad>=128) add a spatial row-tile
    # grid axis (parallel) with a 3-4 input-row halo (conv1 -> pool -> conv2 chains the
    # halos) so the per-step working set fits v7x's 64 MiB VMEM / v5e's 16 MiB scoped
    # default; the small shapes exercised here fit a whole sample comfortably.


# --------------------------------------------------------------------------------------
# PyTorch-convention wrapper: x NCHW, conv weights OIHW.  Returns NCHW.
# When chaining ResBlks, prefer resblk_apply_flat and convert only at entry/exit.
# --------------------------------------------------------------------------------------
def resblk_forward(x_nchw, w1, b1, w2, b2, g1=None, be1=None, g2=None, be2=None,
                   wsc=None, *, normalize, downsample, negative_slope=0.2):
    B, cin, H, W = x_nchw.shape
    params = pack_resblk_params(w1, b1, w2, b2, g1, be1, g2, be2, wsc,
                                normalize=normalize)
    cin_p, cout = params["cin_p"], params["cout"]

    x_flat = jnp.transpose(x_nchw, (0, 2, 3, 1)).reshape(B, H * W, cin)
    x_flat = jnp.pad(x_flat, ((0, 0), (0, 0), (0, cin_p - cin))).astype(jnp.bfloat16)

    out_flat = resblk_apply_flat(x_flat, params, H=H, W=W, downsample=downsample,
                                 negative_slope=negative_slope)

    Hh, Wh = (H // 2, W // 2) if downsample else (H, W)
    out = out_flat[:, :, :cout].reshape(B, Hh, Wh, cout)
    return jnp.transpose(out, (0, 3, 1, 2))                      # back to NCHW


# ---------------- pure-JAX reference (mirrors the PyTorch module) ----------------
def ref_resblk_nchw(x, w1, b1, w2, b2, g1, be1, g2, be2, wsc,
                    *, normalize, downsample):
    cin, cout = x.shape[1], w2.shape[0]
    learned_sc = cin != cout

    def conv(v, w, bias, pad):
        y = jax.lax.conv_general_dilated(v, w, (1, 1), [(pad, pad), (pad, pad)],
                                         dimension_numbers=("NCHW", "OIHW", "NCHW"))
        if bias is not None:
            y = y + bias[None, :, None, None]
        return y

    def inorm(v, g, b):
        mu = v.mean(axis=(2, 3), keepdims=True)
        var = ((v - mu) ** 2).mean(axis=(2, 3), keepdims=True)
        return (v - mu) / jnp.sqrt(var + 1e-5) * g[None, :, None, None] + b[None, :, None, None]

    def leaky(v):
        return jnp.where(v >= 0, v, 0.2 * v)

    def pool(v):
        B_, C_, H_, W_ = v.shape
        return v.reshape(B_, C_, H_ // 2, 2, W_ // 2, 2).mean(axis=(3, 5))

    h = x
    if normalize:
        h = inorm(h, g1, be1)
    h = leaky(h)
    h = conv(h, w1, b1, 1)
    if downsample:
        h = pool(h)
    if normalize:
        h = inorm(h, g2, be2)
    h = leaky(h)
    h = conv(h, w2, b2, 1)

    s = x
    if learned_sc:
        s = conv(s, wsc, None, 0)
    if downsample:
        s = pool(s)
    return (s + h) / math.sqrt(2.0)


if __name__ == "__main__":
    B, cin, cout, H, W = 2, 4, 8, 16, 16
    normalize, downsample = True, True          # exercises every ResBlk branch

    key = jax.random.PRNGKey(0)
    ks = jax.random.split(key, 11)
    x = jax.random.normal(ks[0], (B, cin, H, W), jnp.float32)
    w1 = 0.2 * jax.random.normal(ks[1], (cin, cin, 3, 3), jnp.float32)
    b1 = 0.1 * jax.random.normal(ks[2], (cin,), jnp.float32)
    w2 = 0.2 * jax.random.normal(ks[3], (cout, cin, 3, 3), jnp.float32)
    b2 = 0.1 * jax.random.normal(ks[4], (cout,), jnp.float32)
    g1 = 1.0 + 0.1 * jax.random.normal(ks[5], (cin,), jnp.float32)
    be1 = 0.1 * jax.random.normal(ks[6], (cin,), jnp.float32)
    g2 = 1.0 + 0.1 * jax.random.normal(ks[7], (cin,), jnp.float32)
    be2 = 0.1 * jax.random.normal(ks[8], (cin,), jnp.float32)
    wsc = 0.2 * jax.random.normal(ks[9], (cout, cin, 1, 1), jnp.float32)

    out = resblk_forward(x, w1, b1, w2, b2, g1, be1, g2, be2, wsc,
                         normalize=normalize, downsample=downsample)
    out = jax.block_until_ready(out)

    ref = ref_resblk_nchw(x, w1, b1, w2, b2, g1, be1, g2, be2, wsc,
                          normalize=normalize, downsample=downsample)
    ref = jax.block_until_ready(ref)

    # Activations stream in bf16 (MXU operands + InstanceNorm input), accumulation in
    # f32 — allow a correspondingly looser tolerance than pure-f32.
    np.testing.assert_allclose(np.asarray(out), np.asarray(ref),
                               atol=3e-2, rtol=3e-2)
    print("KERNEL_OK")
</pallas_src>

<mosaic_0001>
module attributes {stable_mosaic.version = 11 : i64} {
  func.func @_resblk_kernel(%arg0: i32, %arg1: memref<1x256x128xbf16, #tpu.memory_space<vmem>>, %arg2: memref<1152x128xbf16, #tpu.memory_space<vmem>>, %arg3: memref<1x128xf32, #tpu.memory_space<vmem>>, %arg4: memref<1152x128xbf16, #tpu.memory_space<vmem>>, %arg5: memref<1x128xf32, #tpu.memory_space<vmem>>, %arg6: memref<1x128xf32, #tpu.memory_space<vmem>>, %arg7: memref<1x128xf32, #tpu.memory_space<vmem>>, %arg8: memref<1x128xf32, #tpu.memory_space<vmem>>, %arg9: memref<1x128xf32, #tpu.memory_space<vmem>>, %arg10: memref<128x128xbf16, #tpu.memory_space<vmem>>, %arg11: memref<1x64x128xf32, #tpu.memory_space<vmem>>) attributes {dimension_semantics = [#tpu.dimension_semantics<parallel>], iteration_bounds = array<i64: 2>, scalar_prefetch = 0 : i64, scratch_operands = 0 : i64, tpu.core_type = #tpu.core_type<tc>, window_params = [{transform_indices = @transform_0, window_bounds = array<i64: 1, 256, 128>}, {pipeline_mode = #tpu.pipeline_mode<synchronous>, transform_indices = @transform_1, window_bounds = array<i64: 1152, 128>}, {pipeline_mode = #tpu.pipeline_mode<synchronous>, transform_indices = @transform_2, window_bounds = array<i64: 1, 128>}, {pipeline_mode = #tpu.pipeline_mode<synchronous>, transform_indices = @transform_3, window_bounds = array<i64: 1152, 128>}, {pipeline_mode = #tpu.pipeline_mode<synchronous>, transform_indices = @transform_4, window_bounds = array<i64: 1, 128>}, {pipeline_mode = #tpu.pipeline_mode<synchronous>, transform_indices = @transform_5, window_bounds = array<i64: 1, 128>}, {pipeline_mode = #tpu.pipeline_mode<synchronous>, transform_indices = @transform_6, window_bounds = array<i64: 1, 128>}, {pipeline_mode = #tpu.pipeline_mode<synchronous>, transform_indices = @transform_7, window_bounds = array<i64: 1, 128>}, {pipeline_mode = #tpu.pipeline_mode<synchronous>, transform_indices = @transform_8, window_bounds = array<i64: 1, 128>}, {pipeline_mode = #tpu.pipeline_mode<synchronous>, transform_indices = @transform_9, window_bounds = array<i64: 128, 128>}, {transform_indices = @transform_10, window_bounds = array<i64: 1, 64, 128>}]} {
    %c0 = arith.constant 0 : index
    %c0_0 = arith.constant 0 : index
    %c0_1 = arith.constant 0 : index
    %0 = vector.load %arg1[%c0, %c0_0, %c0_1] : memref<1x256x128xbf16, #tpu.memory_space<vmem>>, vector<1x256x128xbf16>
    %1 = vector.shape_cast %0 : vector<1x256x128xbf16> to vector<256x128xbf16>
    %2 = arith.extf %1 : vector<256x128xbf16> to vector<256x128xf32>
    %cst = arith.constant dense<0.000000e+00> : vector<128xf32>
    %3 = vector.multi_reduction <add>, %2, %cst [0] : vector<256x128xf32> to vector<128xf32>
    %4 = vector.shape_cast %3 : vector<128xf32> to vector<1x128xf32>
    %cst_2 = arith.constant 3.906250e-03 : f32
    %5 = vector.broadcast %cst_2 : f32 to vector<1x128xf32>
    %6 = arith.mulf %4, %5 : vector<1x128xf32>
    %7 = vector.broadcast %6 : vector<1x128xf32> to vector<256x128xf32>
    %8 = arith.subf %2, %7 : vector<256x128xf32>
    %9 = arith.mulf %8, %8 : vector<256x128xf32>
    %cst_3 = arith.constant dense<0.000000e+00> : vector<128xf32>
    %10 = vector.multi_reduction <add>, %9, %cst_3 [0] : vector<256x128xf32> to vector<128xf32>
    %11 = vector.shape_cast %10 : vector<128xf32> to vector<1x128xf32>
    %cst_4 = arith.constant 3.906250e-03 : f32
    %12 = vector.broadcast %cst_4 : f32 to vector<1x128xf32>
    %13 = arith.mulf %11, %12 : vector<1x128xf32>
    %c0_5 = arith.constant 0 : index
    %c0_6 = arith.constant 0 : index
    %14 = vector.load %arg6[%c0_5, %c0_6] : memref<1x128xf32, #tpu.memory_space<vmem>>, vector<1x128xf32>
    %cst_7 = arith.constant 9.99999974E-6 : f32
    %15 = vector.broadcast %cst_7 : f32 to vector<1x128xf32>
    %16 = arith.addf %13, %15 : vector<1x128xf32>
    %17 = math.rsqrt %16 : vector<1x128xf32>
    %18 = arith.mulf %14, %17 : vector<1x128xf32>
    %19 = vector.broadcast %18 : vector<1x128xf32> to vector<256x128xf32>
    %20 = arith.mulf %8, %19 : vector<256x128xf32>
    %c0_8 = arith.constant 0 : index
    %c0_9 = arith.constant 0 : index
    %21 = vector.load %arg7[%c0_8, %c0_9] : memref<1x128xf32, #tpu.memory_space<vmem>>, vector<1x128xf32>
    %22 = vector.broadcast %21 : vector<1x128xf32> to vector<256x128xf32>
    %23 = arith.addf %20, %22 : vector<256x128xf32>
    %cst_10 = arith.constant 0.000000e+00 : f32
    %24 = vector.broadcast %cst_10 : f32 to vector<256x128xf32>
    %25 = arith.cmpf oge, %23, %24 : vector<256x128xf32>
    %cst_11 = arith.constant 2.000000e-01 : f32
    %26 = vector.broadcast %cst_11 : f32 to vector<256x128xf32>
    %27 = arith.mulf %26, %23 : vector<256x128xf32>
    %28 = arith.select %25, %23, %27 : vector<256x128xi1>, vector<256x128xf32>
    %29 = arith.truncf %28 : vector<256x128xf32> to vector<256x128xbf16>
    %cst_12 = arith.constant 0.000000e+00 : bf16
    %30 = vector.broadcast %cst_12 : bf16 to vector<24x128xbf16>
    %31 = tpu.concatenate %30, %29, %30 in 0 : vector<24x128xbf16>, vector<256x128xbf16>, vector<24x128xbf16> -> vector<304x128xbf16>
    %32 = tpu.iota {dimensions = array<i32: 0>} : vector<256x1xi32>
    %c16_i32 = arith.constant 16 : i32
    %c0_i32 = arith.constant 0 : i32
    %33 = arith.cmpi eq, %c16_i32, %c0_i32 : i32
    %c1_i32 = arith.constant 1 : i32
    %34 = arith.select %33, %c1_i32, %c16_i32 : i32
    %35 = vector.broadcast %34 : i32 to vector<256x1xi32>
    %36 = arith.remsi %32, %35 : vector<256x1xi32>
    %c0_i32_13 = arith.constant 0 : i32
    %37 = vector.broadcast %c0_i32_13 : i32 to vector<256x1xi32>
    %38 = arith.cmpi ne, %36, %37 : vector<256x1xi32>
    %c0_i32_14 = arith.constant 0 : i32
    %39 = vector.broadcast %c0_i32_14 : i32 to vector<256x1xi32>
    %40 = arith.cmpi slt, %36, %39 : vector<256x1xi32>
    %c0_i32_15 = arith.constant 0 : i32
    %41 = arith.cmpi slt, %34, %c0_i32_15 : i32
    %42 = vector.broadcast %41 : i1 to vector<256x1xi1>
    %43 = vector.broadcast %42 : vector<256x1xi1> to vector<256x1xi1>
    %44 = arith.xori %40, %43 : vector<256x1xi1>
    %45 = arith.andi %44, %38 : vector<256x1xi1>
    %46 = vector.broadcast %34 : i32 to vector<256x1xi32>
    %47 = arith.addi %36, %46 : vector<256x1xi32>
    %48 = arith.select %45, %47, %36 : vector<256x1xi1>, vector<256x1xi32>
    %c1_i32_16 = arith.constant 1 : i32
    %49 = vector.broadcast %c1_i32_16 : i32 to vector<256x1xi32>
    %50 = arith.cmpi sge, %48, %49 : vector<256x1xi32>
    %c14_i32 = arith.constant 14 : i32
    %51 = vector.broadcast %c14_i32 : i32 to vector<256x1xi32>
    %52 = arith.cmpi sle, %48, %51 : vector<256x1xi32>
    %cst_17 = arith.constant 0.000000e+00 : f32
    %53 = vector.broadcast %cst_17 : f32 to vector<256x128xf32>
    %54 = vector.extract_strided_slice %31 {offsets = [7, 0], sizes = [256, 128], strides = [1, 1]} : vector<304x128xbf16> to vector<256x128xbf16>
    %cst_18 = arith.constant 0.000000e+00 : bf16
    %55 = vector.broadcast %cst_18 : bf16 to vector<256x128xbf16>
    %56 = vector.shape_cast %50 : vector<256x1xi1> to vector<256x1xi1>
    %57 = vector.broadcast %56 : vector<256x1xi1> to vector<256x128xi1>
    %58 = arith.select %57, %54, %55 : vector<256x128xi1>, vector<256x128xbf16>
    %59 = vector.extract_strided_slice %31 {offsets = [8, 0], sizes = [256, 128], strides = [1, 1]} : vector<304x128xbf16> to vector<256x128xbf16>
    %60 = tpu.concatenate %58, %59 in 1 : vector<256x128xbf16>, vector<256x128xbf16> -> vector<256x256xbf16>
    %c0_19 = arith.constant 0 : index
    %c0_20 = arith.constant 0 : index
    %61 = vector.load %arg2[%c0_19, %c0_20] : memref<1152x128xbf16, #tpu.memory_space<vmem>>, vector<256x128xbf16>
    %cst_21 = arith.constant dense<0.000000e+00> : vector<256x128xf32>
    %62 = tpu.matmul %60, %61, %cst_21 {dimension_numbers = #tpu.dot_dimension_numbers<[1], [0], [0], [1], [0, 0, 1, 1], [], []>} : vector<256x256xbf16>, vector<256x128xbf16>, vector<256x128xf32> -> vector<256x128xf32>
    %63 = arith.addf %53, %62 : vector<256x128xf32>
    %64 = vector.extract_strided_slice %31 {offsets = [9, 0], sizes = [256, 128], strides = [1, 1]} : vector<304x128xbf16> to vector<256x128xbf16>
    %cst_22 = arith.constant 0.000000e+00 : bf16
    %65 = vector.broadcast %cst_22 : bf16 to vector<256x128xbf16>
    %66 = vector.shape_cast %52 : vector<256x1xi1> to vector<256x1xi1>
    %67 = vector.broadcast %66 : vector<256x1xi1> to vector<256x128xi1>
    %68 = arith.select %67, %64, %65 : vector<256x128xi1>, vector<256x128xbf16>
    %69 = vector.extract_strided_slice %31 {offsets = [23, 0], sizes = [256, 128], strides = [1, 1]} : vector<304x128xbf16> to vector<256x128xbf16>
    %cst_23 = arith.constant 0.000000e+00 : bf16
    %70 = vector.broadcast %cst_23 : bf16 to vector<256x128xbf16>
    %71 = vector.shape_cast %50 : vector<256x1xi1> to vector<256x1xi1>
    %72 = vector.broadcast %71 : vector<256x1xi1> to vector<256x128xi1>
    %73 = arith.select %72, %69, %70 : vector<256x128xi1>, vector<256x128xbf16>
    %74 = tpu.concatenate %68, %73 in 1 : vector<256x128xbf16>, vector<256x128xbf16> -> vector<256x256xbf16>
    %c256 = arith.constant 256 : index
    %c0_24 = arith.constant 0 : index
    %75 = vector.load %arg2[%c256, %c0_24] : memref<1152x128xbf16, #tpu.memory_space<vmem>>, vector<256x128xbf16>
    %cst_25 = arith.constant dense<0.000000e+00> : vector<256x128xf32>
    %76 = tpu.matmul %74, %75, %cst_25 {dimension_numbers = #tpu.dot_dimension_numbers<[1], [0], [0], [1], [0, 0, 1, 1], [], []>} : vector<256x256xbf16>, vector<256x128xbf16>, vector<256x128xf32> -> vector<256x128xf32>
    %77 = arith.addf %63, %76 : vector<256x128xf32>
    %78 = vector.extract_strided_slice %31 {offsets = [24, 0], sizes = [256, 128], strides = [1, 1]} : vector<304x128xbf16> to vector<256x128xbf16>
    %79 = vector.extract_strided_slice %31 {offsets = [25, 0], sizes = [256, 128], strides = [1, 1]} : vector<304x128xbf16> to vector<256x128xbf16>
    %cst_26 = arith.constant 0.000000e+00 : bf16
    %80 = vector.broadcast %cst_26 : bf16 to vector<256x128xbf16>
    %81 = vector.shape_cast %52 : vector<256x1xi1> to vector<256x1xi1>
    %82 = vector.broadcast %81 : vector<256x1xi1> to vector<256x128xi1>
    %83 = arith.select %82, %79, %80 : vector<256x128xi1>, vector<256x128xbf16>
    %84 = tpu.concatenate %78, %83 in 1 : vector<256x128xbf16>, vector<256x128xbf16> -> vector<256x256xbf16>
    %c512 = arith.constant 512 : index
    %c0_27 = arith.constant 0 : index
    %85 = vector.load %arg2[%c512, %c0_27] : memref<1152x128xbf16, #tpu.memory_space<vmem>>, vector<256x128xbf16>
    %cst_28 = arith.constant dense<0.000000e+00> : vector<256x128xf32>
    %86 = tpu.matmul %84, %85, %cst_28 {dimension_numbers = #tpu.dot_dimension_numbers<[1], [0], [0], [1], [0, 0, 1, 1], [], []>} : vector<256x256xbf16>, vector<256x128xbf16>, vector<256x128xf32> -> vector<256x128xf32>
    %87 = arith.addf %77, %86 : vector<256x128xf32>
    %88 = vector.extract_strided_slice %31 {offsets = [39, 0], sizes = [256, 128], strides = [1, 1]} : vector<304x128xbf16> to vector<256x128xbf16>
    %cst_29 = arith.constant 0.000000e+00 : bf16
    %89 = vector.broadcast %cst_29 : bf16 to vector<256x128xbf16>
    %90 = vector.shape_cast %50 : vector<256x1xi1> to vector<256x1xi1>
    %91 = vector.broadcast %90 : vector<256x1xi1> to vector<256x128xi1>
    %92 = arith.select %91, %88, %89 : vector<256x128xi1>, vector<256x128xbf16>
    %93 = vector.extract_strided_slice %31 {offsets = [40, 0], sizes = [256, 128], strides = [1, 1]} : vector<304x128xbf16> to vector<256x128xbf16>
    %94 = tpu.concatenate %92, %93 in 1 : vector<256x128xbf16>, vector<256x128xbf16> -> vector<256x256xbf16>
    %c768 = arith.constant 768 : index
    %c0_30 = arith.constant 0 : index
    %95 = vector.load %arg2[%c768, %c0_30] : memref<1152x128xbf16, #tpu.memory_space<vmem>>, vector<256x128xbf16>
    %cst_31 = arith.constant dense<0.000000e+00> : vector<256x128xf32>
    %96 = tpu.matmul %94, %95, %cst_31 {dimension_numbers = #tpu.dot_dimension_numbers<[1], [0], [0], [1], [0, 0, 1, 1], [], []>} : vector<256x256xbf16>, vector<256x128xbf16>, vector<256x128xf32> -> vector<256x128xf32>
    %97 = arith.addf %87, %96 : vector<256x128xf32>
    %98 = vector.extract_strided_slice %31 {offsets = [41, 0], sizes = [256, 128], strides = [1, 1]} : vector<304x128xbf16> to vector<256x128xbf16>
    %cst_32 = arith.constant 0.000000e+00 : bf16
    %99 = vector.broadcast %cst_32 : bf16 to vector<256x128xbf16>
    %100 = vector.shape_cast %52 : vector<256x1xi1> to vector<256x1xi1>
    %101 = vector.broadcast %100 : vector<256x1xi1> to vector<256x128xi1>
    %102 = arith.select %101, %98, %99 : vector<256x128xi1>, vector<256x128xbf16>
    %c1024 = arith.constant 1024 : index
    %c0_33 = arith.constant 0 : index
    %103 = vector.load %arg2[%c1024, %c0_33] : memref<1152x128xbf16, #tpu.memory_space<vmem>>, vector<128x128xbf16>
    %cst_34 = arith.constant dense<0.000000e+00> : vector<256x128xf32>
    %104 = tpu.matmul %102, %103, %cst_34 {dimension_numbers = #tpu.dot_dimension_numbers<[1], [0], [0], [1], [0, 0, 1, 1], [], []>} : vector<256x128xbf16>, vector<128x128xbf16>, vector<256x128xf32> -> vector<256x128xf32>
    %105 = arith.addf %97, %104 : vector<256x128xf32>
    %c0_35 = arith.constant 0 : index
    %c0_36 = arith.constant 0 : index
    %106 = vector.load %arg3[%c0_35, %c0_36] : memref<1x128xf32, #tpu.memory_space<vmem>>, vector<1x128xf32>
    %107 = vector.broadcast %106 : vector<1x128xf32> to vector<256x128xf32>
    %108 = arith.addf %105, %107 : vector<256x128xf32>
    %109 = vector.shape_cast %108 : vector<256x128xf32> to vector<8x2x8x2x128xf32>
    %110 = vector.extract_strided_slice %109 {offsets = [0, 0, 0, 0, 0], sizes = [8, 1, 8, 1, 128], strides = [1, 1, 1, 1, 1]} : vector<8x2x8x2x128xf32> to vector<8x1x8x1x128xf32>
    %111 = vector.shape_cast %110 : vector<8x1x8x1x128xf32> to vector<8x8x128xf32>
    %112 = vector.extract_strided_slice %109 {offsets = [0, 0, 0, 1, 0], sizes = [8, 1, 8, 1, 128], strides = [1, 1, 1, 1, 1]} : vector<8x2x8x2x128xf32> to vector<8x1x8x1x128xf32>
    %113 = vector.shape_cast %112 : vector<8x1x8x1x128xf32> to vector<8x8x128xf32>
    %114 = arith.addf %111, %113 : vector<8x8x128xf32>
    %115 = vector.extract_strided_slice %109 {offsets = [0, 1, 0, 0, 0], sizes = [8, 1, 8, 1, 128], strides = [1, 1, 1, 1, 1]} : vector<8x2x8x2x128xf32> to vector<8x1x8x1x128xf32>
    %116 = vector.shape_cast %115 : vector<8x1x8x1x128xf32> to vector<8x8x128xf32>
    %117 = arith.addf %114, %116 : vector<8x8x128xf32>
    %118 = vector.extract_strided_slice %109 {offsets = [0, 1, 0, 1, 0], sizes = [8, 1, 8, 1, 128], strides = [1, 1, 1, 1, 1]} : vector<8x2x8x2x128xf32> to vector<8x1x8x1x128xf32>
    %119 = vector.shape_cast %118 : vector<8x1x8x1x128xf32> to vector<8x8x128xf32>
    %120 = arith.addf %117, %119 : vector<8x8x128xf32>
    %cst_37 = arith.constant 2.500000e-01 : f32
    %121 = vector.broadcast %cst_37 : f32 to vector<8x8x128xf32>
    %122 = arith.mulf %120, %121 : vector<8x8x128xf32>
    %123 = vector.shape_cast %122 : vector<8x8x128xf32> to vector<64x128xf32>
    %cst_38 = arith.constant dense<0.000000e+00> : vector<128xf32>
    %124 = vector.multi_reduction <add>, %123, %cst_38 [0] : vector<64x128xf32> to vector<128xf32>
    %125 = vector.shape_cast %124 : vector<128xf32> to vector<1x128xf32>
    %cst_39 = arith.constant 1.562500e-02 : f32
    %126 = vector.broadcast %cst_39 : f32 to vector<1x128xf32>
    %127 = arith.mulf %125, %126 : vector<1x128xf32>
    %128 = vector.broadcast %127 : vector<1x128xf32> to vector<64x128xf32>
    %129 = arith.subf %123, %128 : vector<64x128xf32>
    %130 = arith.mulf %129, %129 : vector<64x128xf32>
    %cst_40 = arith.constant dense<0.000000e+00> : vector<128xf32>
    %131 = vector.multi_reduction <add>, %130, %cst_40 [0] : vector<64x128xf32> to vector<128xf32>
    %132 = vector.shape_cast %131 : vector<128xf32> to vector<1x128xf32>
    %cst_41 = arith.constant 1.562500e-02 : f32
    %133 = vector.broadcast %cst_41 : f32 to vector<1x128xf32>
    %134 = arith.mulf %132, %133 : vector<1x128xf32>
    %c0_42 = arith.constant 0 : index
    %c0_43 = arith.constant 0 : index
    %135 = vector.load %arg8[%c0_42, %c0_43] : memref<1x128xf32, #tpu.memory_space<vmem>>, vector<1x128xf32>
    %cst_44 = arith.constant 9.99999974E-6 : f32
    %136 = vector.broadcast %cst_44 : f32 to vector<1x128xf32>
    %137 = arith.addf %134, %136 : vector<1x128xf32>
    %138 = math.rsqrt %137 : vector<1x128xf32>
    %139 = arith.mulf %135, %138 : vector<1x128xf32>
    %140 = vector.broadcast %139 : vector<1x128xf32> to vector<64x128xf32>
    %141 = arith.mulf %129, %140 : vector<64x128xf32>
    %c0_45 = arith.constant 0 : index
    %c0_46 = arith.constant 0 : index
    %142 = vector.load %arg9[%c0_45, %c0_46] : memref<1x128xf32, #tpu.memory_space<vmem>>, vector<1x128xf32>
    %143 = vector.broadcast %142 : vector<1x128xf32> to vector<64x128xf32>
    %144 = arith.addf %141, %143 : vector<64x128xf32>
    %cst_47 = arith.constant 0.000000e+00 : f32
    %145 = vector.broadcast %cst_47 : f32 to vector<64x128xf32>
    %146 = arith.cmpf oge, %144, %145 : vector<64x128xf32>
    %cst_48 = arith.constant 2.000000e-01 : f32
    %147 = vector.broadcast %cst_48 : f32 to vector<64x128xf32>
    %148 = arith.mulf %147, %144 : vector<64x128xf32>
    %149 = arith.select %146, %144, %148 : vector<64x128xi1>, vector<64x128xf32>
    %150 = arith.truncf %149 : vector<64x128xf32> to vector<64x128xbf16>
    %cst_49 = arith.constant 0.000000e+00 : bf16
    %151 = vector.broadcast %cst_49 : bf16 to vector<16x128xbf16>
    %152 = tpu.concatenate %151, %150, %151 in 0 : vector<16x128xbf16>, vector<64x128xbf16>, vector<16x128xbf16> -> vector<96x128xbf16>
    %153 = tpu.iota {dimensions = array<i32: 0>} : vector<64x1xi32>
    %c8_i32 = arith.constant 8 : i32
    %c0_i32_50 = arith.constant 0 : i32
    %154 = arith.cmpi eq, %c8_i32, %c0_i32_50 : i32
    %c1_i32_51 = arith.constant 1 : i32
    %155 = arith.select %154, %c1_i32_51, %c8_i32 : i32
    %156 = vector.broadcast %155 : i32 to vector<64x1xi32>
    %157 = arith.remsi %153, %156 : vector<64x1xi32>
    %c0_i32_52 = arith.constant 0 : i32
    %158 = vector.broadcast %c0_i32_52 : i32 to vector<64x1xi32>
    %159 = arith.cmpi ne, %157, %158 : vector<64x1xi32>
    %c0_i32_53 = arith.constant 0 : i32
    %160 = vector.broadcast %c0_i32_53 : i32 to vector<64x1xi32>
    %161 = arith.cmpi slt, %157, %160 : vector<64x1xi32>
    %c0_i32_54 = arith.constant 0 : i32
    %162 = arith.cmpi slt, %155, %c0_i32_54 : i32
    %163 = vector.broadcast %162 : i1 to vector<64x1xi1>
    %164 = vector.broadcast %163 : vector<64x1xi1> to vector<64x1xi1>
    %165 = arith.xori %161, %164 : vector<64x1xi1>
    %166 = arith.andi %165, %159 : vector<64x1xi1>
    %167 = vector.broadcast %155 : i32 to vector<64x1xi32>
    %168 = arith.addi %157, %167 : vector<64x1xi32>
    %169 = arith.select %166, %168, %157 : vector<64x1xi1>, vector<64x1xi32>
    %c1_i32_55 = arith.constant 1 : i32
    %170 = vector.broadcast %c1_i32_55 : i32 to vector<64x1xi32>
    %171 = arith.cmpi sge, %169, %170 : vector<64x1xi32>
    %c6_i32 = arith.constant 6 : i32
    %172 = vector.broadcast %c6_i32 : i32 to vector<64x1xi32>
    %173 = arith.cmpi sle, %169, %172 : vector<64x1xi32>
    %cst_56 = arith.constant 0.000000e+00 : f32
    %174 = vector.broadcast %cst_56 : f32 to vector<64x128xf32>
    %175 = vector.extract_strided_slice %152 {offsets = [7, 0], sizes = [64, 128], strides = [1, 1]} : vector<96x128xbf16> to vector<64x128xbf16>
    %cst_57 = arith.constant 0.000000e+00 : bf16
    %176 = vector.broadcast %cst_57 : bf16 to vector<64x128xbf16>
    %177 = vector.shape_cast %171 : vector<64x1xi1> to vector<64x1xi1>
    %178 = vector.broadcast %177 : vector<64x1xi1> to vector<64x128xi1>
    %179 = arith.select %178, %175, %176 : vector<64x128xi1>, vector<64x128xbf16>
    %180 = vector.extract_strided_slice %152 {offsets = [8, 0], sizes = [64, 128], strides = [1, 1]} : vector<96x128xbf16> to vector<64x128xbf16>
    %181 = tpu.concatenate %179, %180 in 1 : vector<64x128xbf16>, vector<64x128xbf16> -> vector<64x256xbf16>
    %c0_58 = arith.constant 0 : index
    %c0_59 = arith.constant 0 : index
    %182 = vector.load %arg4[%c0_58, %c0_59] : memref<1152x128xbf16, #tpu.memory_space<vmem>>, vector<256x128xbf16>
    %cst_60 = arith.constant dense<0.000000e+00> : vector<64x128xf32>
    %183 = tpu.matmul %181, %182, %cst_60 {dimension_numbers = #tpu.dot_dimension_numbers<[1], [0], [0], [1], [0, 0, 1, 1], [], []>} : vector<64x256xbf16>, vector<256x128xbf16>, vector<64x128xf32> -> vector<64x128xf32>
    %184 = arith.addf %174, %183 : vector<64x128xf32>
    %185 = vector.extract_strided_slice %152 {offsets = [9, 0], sizes = [64, 128], strides = [1, 1]} : vector<96x128xbf16> to vector<64x128xbf16>
    %cst_61 = arith.constant 0.000000e+00 : bf16
    %186 = vector.broadcast %cst_61 : bf16 to vector<64x128xbf16>
    %187 = vector.shape_cast %173 : vector<64x1xi1> to vector<64x1xi1>
    %188 = vector.broadcast %187 : vector<64x1xi1> to vector<64x128xi1>
    %189 = arith.select %188, %185, %186 : vector<64x128xi1>, vector<64x128xbf16>
    %190 = vector.extract_strided_slice %152 {offsets = [15, 0], sizes = [64, 128], strides = [1, 1]} : vector<96x128xbf16> to vector<64x128xbf16>
    %cst_62 = arith.constant 0.000000e+00 : bf16
    %191 = vector.broadcast %cst_62 : bf16 to vector<64x128xbf16>
    %192 = vector.shape_cast %171 : vector<64x1xi1> to vector<64x1xi1>
    %193 = vector.broadcast %192 : vector<64x1xi1> to vector<64x128xi1>
    %194 = arith.select %193, %190, %191 : vector<64x128xi1>, vector<64x128xbf16>
    %195 = tpu.concatenate %189, %194 in 1 : vector<64x128xbf16>, vector<64x128xbf16> -> vector<64x256xbf16>
    %c256_63 = arith.constant 256 : index
    %c0_64 = arith.constant 0 : index
    %196 = vector.load %arg4[%c256_63, %c0_64] : memref<1152x128xbf16, #tpu.memory_space<vmem>>, vector<256x128xbf16>
    %cst_65 = arith.constant dense<0.000000e+00> : vector<64x128xf32>
    %197 = tpu.matmul %195, %196, %cst_65 {dimension_numbers = #tpu.dot_dimension_numbers<[1], [0], [0], [1], [0, 0, 1, 1], [], []>} : vector<64x256xbf16>, vector<256x128xbf16>, vector<64x128xf32> -> vector<64x128xf32>
    %198 = arith.addf %184, %197 : vector<64x128xf32>
    %199 = vector.extract_strided_slice %152 {offsets = [16, 0], sizes = [64, 128], strides = [1, 1]} : vector<96x128xbf16> to vector<64x128xbf16>
    %200 = vector.extract_strided_slice %152 {offsets = [17, 0], sizes = [64, 128], strides = [1, 1]} : vector<96x128xbf16> to vector<64x128xbf16>
    %cst_66 = arith.constant 0.000000e+00 : bf16
    %201 = vector.broadcast %cst_66 : bf16 to vector<64x128xbf16>
    %202 = vector.shape_cast %173 : vector<64x1xi1> to vector<64x1xi1>
    %203 = vector.broadcast %202 : vector<64x1xi1> to vector<64x128xi1>
    %204 = arith.select %203, %200, %201 : vector<64x128xi1>, vector<64x128xbf16>
    %205 = tpu.concatenate %199, %204 in 1 : vector<64x128xbf16>, vector<64x128xbf16> -> vector<64x256xbf16>
    %c512_67 = arith.constant 512 : index
    %c0_68 = arith.constant 0 : index
    %206 = vector.load %arg4[%c512_67, %c0_68] : memref<1152x128xbf16, #tpu.memory_space<vmem>>, vector<256x128xbf16>
    %cst_69 = arith.constant dense<0.000000e+00> : vector<64x128xf32>
    %207 = tpu.matmul %205, %206, %cst_69 {dimension_numbers = #tpu.dot_dimension_numbers<[1], [0], [0], [1], [0, 0, 1, 1], [], []>} : vector<64x256xbf16>, vector<256x128xbf16>, vector<64x128xf32> -> vector<64x128xf32>
    %208 = arith.addf %198, %207 : vector<64x128xf32>
    %209 = vector.extract_strided_slice %152 {offsets = [23, 0], sizes = [64, 128], strides = [1, 1]} : vector<96x128xbf16> to vector<64x128xbf16>
    %cst_70 = arith.constant 0.000000e+00 : bf16
    %210 = vector.broadcast %cst_70 : bf16 to vector<64x128xbf16>
    %211 = vector.shape_cast %171 : vector<64x1xi1> to vector<64x1xi1>
    %212 = vector.broadcast %211 : vector<64x1xi1> to vector<64x128xi1>
    %213 = arith.select %212, %209, %210 : vector<64x128xi1>, vector<64x128xbf16>
    %214 = vector.extract_strided_slice %152 {offsets = [24, 0], sizes = [64, 128], strides = [1, 1]} : vector<96x128xbf16> to vector<64x128xbf16>
    %215 = tpu.concatenate %213, %214 in 1 : vector<64x128xbf16>, vector<64x128xbf16> -> vector<64x256xbf16>
    %c768_71 = arith.constant 768 : index
    %c0_72 = arith.constant 0 : index
    %216 = vector.load %arg4[%c768_71, %c0_72] : memref<1152x128xbf16, #tpu.memory_space<vmem>>, vector<256x128xbf16>
    %cst_73 = arith.constant dense<0.000000e+00> : vector<64x128xf32>
    %217 = tpu.matmul %215, %216, %cst_73 {dimension_numbers = #tpu.dot_dimension_numbers<[1], [0], [0], [1], [0, 0, 1, 1], [], []>} : vector<64x256xbf16>, vector<256x128xbf16>, vector<64x128xf32> -> vector<64x128xf32>
    %218 = arith.addf %208, %217 : vector<64x128xf32>
    %219 = vector.extract_strided_slice %152 {offsets = [25, 0], sizes = [64, 128], strides = [1, 1]} : vector<96x128xbf16> to vector<64x128xbf16>
    %cst_74 = arith.constant 0.000000e+00 : bf16
    %220 = vector.broadcast %cst_74 : bf16 to vector<64x128xbf16>
    %221 = vector.shape_cast %173 : vector<64x1xi1> to vector<64x1xi1>
    %222 = vector.broadcast %221 : vector<64x1xi1> to vector<64x128xi1>
    %223 = arith.select %222, %219, %220 : vector<64x128xi1>, vector<64x128xbf16>
    %c1024_75 = arith.constant 1024 : index
    %c0_76 = arith.constant 0 : index
    %224 = vector.load %arg4[%c1024_75, %c0_76] : memref<1152x128xbf16, #tpu.memory_space<vmem>>, vector<128x128xbf16>
    %cst_77 = arith.constant dense<0.000000e+00> : vector<64x128xf32>
    %225 = tpu.matmul %223, %224, %cst_77 {dimension_numbers = #tpu.dot_dimension_numbers<[1], [0], [0], [1], [0, 0, 1, 1], [], []>} : vector<64x128xbf16>, vector<128x128xbf16>, vector<64x128xf32> -> vector<64x128xf32>
    %226 = arith.addf %218, %225 : vector<64x128xf32>
    %c0_78 = arith.constant 0 : index
    %c0_79 = arith.constant 0 : index
    %227 = vector.load %arg5[%c0_78, %c0_79] : memref<1x128xf32, #tpu.memory_space<vmem>>, vector<1x128xf32>
    %228 = vector.broadcast %227 : vector<1x128xf32> to vector<64x128xf32>
    %229 = arith.addf %226, %228 : vector<64x128xf32>
    %230 = vector.shape_cast %1 : vector<256x128xbf16> to vector<8x2x8x2x128xbf16>
    %231 = vector.extract_strided_slice %230 {offsets = [0, 0, 0, 0, 0], sizes = [8, 1, 8, 1, 128], strides = [1, 1, 1, 1, 1]} : vector<8x2x8x2x128xbf16> to vector<8x1x8x1x128xbf16>
    %232 = vector.shape_cast %231 : vector<8x1x8x1x128xbf16> to vector<8x8x128xbf16>
    %233 = vector.extract_strided_slice %230 {offsets = [0, 0, 0, 1, 0], sizes = [8, 1, 8, 1, 128], strides = [1, 1, 1, 1, 1]} : vector<8x2x8x2x128xbf16> to vector<8x1x8x1x128xbf16>
    %234 = vector.shape_cast %233 : vector<8x1x8x1x128xbf16> to vector<8x8x128xbf16>
    %235 = arith.addf %232, %234 : vector<8x8x128xbf16>
    %236 = vector.extract_strided_slice %230 {offsets = [0, 1, 0, 0, 0], sizes = [8, 1, 8, 1, 128], strides = [1, 1, 1, 1, 1]} : vector<8x2x8x2x128xbf16> to vector<8x1x8x1x128xbf16>
    %237 = vector.shape_cast %236 : vector<8x1x8x1x128xbf16> to vector<8x8x128xbf16>
    %238 = arith.addf %235, %237 : vector<8x8x128xbf16>
    %239 = vector.extract_strided_slice %230 {offsets = [0, 1, 0, 1, 0], sizes = [8, 1, 8, 1, 128], strides = [1, 1, 1, 1, 1]} : vector<8x2x8x2x128xbf16> to vector<8x1x8x1x128xbf16>
    %240 = vector.shape_cast %239 : vector<8x1x8x1x128xbf16> to vector<8x8x128xbf16>
    %241 = arith.addf %238, %240 : vector<8x8x128xbf16>
    %cst_80 = arith.constant 2.500000e-01 : bf16
    %242 = vector.broadcast %cst_80 : bf16 to vector<8x8x128xbf16>
    %243 = arith.mulf %241, %242 : vector<8x8x128xbf16>
    %244 = vector.shape_cast %243 : vector<8x8x128xbf16> to vector<64x128xbf16>
    %c0_81 = arith.constant 0 : index
    %c0_82 = arith.constant 0 : index
    %245 = vector.load %arg10[%c0_81, %c0_82] : memref<128x128xbf16, #tpu.memory_space<vmem>>, vector<128x128xbf16>
    %cst_83 = arith.constant dense<0.000000e+00> : vector<64x128xf32>
    %246 = tpu.matmul %244, %245, %cst_83 {dimension_numbers = #tpu.dot_dimension_numbers<[1], [0], [0], [1], [0, 0, 1, 1], [], []>} : vector<64x128xbf16>, vector<128x128xbf16>, vector<64x128xf32> -> vector<64x128xf32>
    %247 = arith.addf %229, %246 : vector<64x128xf32>
    %cst_84 = arith.constant 0.707106769 : f32
    %248 = vector.broadcast %cst_84 : f32 to vector<64x128xf32>
    %249 = arith.mulf %247, %248 : vector<64x128xf32>
    %c0_85 = arith.constant 0 : index
    %c0_86 = arith.constant 0 : index
    %c0_87 = arith.constant 0 : index
    %250 = vector.load %arg11[%c0_85, %c0_86, %c0_87] : memref<1x64x128xf32, #tpu.memory_space<vmem>>, vector<1x64x128xf32>
    %251 = vector.shape_cast %250 : vector<1x64x128xf32> to vector<64x128xf32>
    %252 = vector.shape_cast %249 : vector<64x128xf32> to vector<1x64x128xf32>
    tpu.vector_store %arg11[%c0_85, %c0_86, %c0_87], %252 {strides = array<i32>} : memref<1x64x128xf32, #tpu.memory_space<vmem>>, vector<1x64x128xf32>,
    return
  }
  func.func @transform_0(%arg0: i32) -> (i32, i32, i32) {
    %c0_i32 = arith.constant 0 : i32
    %c0_i32_0 = arith.constant 0 : i32
    %c0_i32_1 = arith.constant 0 : i32
    return %arg0, %c0_i32, %c0_i32_0 : i32, i32, i32
  }
  func.func @transform_1(%arg0: i32) -> (i32, i32) {
    %c0_i32 = arith.constant 0 : i32
    %c0_i32_0 = arith.constant 0 : i32
    %c0_i32_1 = arith.constant 0 : i32
    return %c0_i32, %c0_i32_0 : i32, i32
  }
  func.func @transform_2(%arg0: i32) -> (i32, i32) {
    %c0_i32 = arith.constant 0 : i32
    %c0_i32_0 = arith.constant 0 : i32
    %c0_i32_1 = arith.constant 0 : i32
    return %c0_i32, %c0_i32_0 : i32, i32
  }
  func.func @transform_3(%arg0: i32) -> (i32, i32) {
    %c0_i32 = arith.constant 0 : i32
    %c0_i32_0 = arith.constant 0 : i32
    %c0_i32_1 = arith.constant 0 : i32
    return %c0_i32, %c0_i32_0 : i32, i32
  }
  func.func @transform_4(%arg0: i32) -> (i32, i32) {
    %c0_i32 = arith.constant 0 : i32
    %c0_i32_0 = arith.constant 0 : i32
    %c0_i32_1 = arith.constant 0 : i32
    return %c0_i32, %c0_i32_0 : i32, i32
  }
  func.func @transform_5(%arg0: i32) -> (i32, i32) {
    %c0_i32 = arith.constant 0 : i32
    %c0_i32_0 = arith.constant 0 : i32
    %c0_i32_1 = arith.constant 0 : i32
    return %c0_i32, %c0_i32_0 : i32, i32
  }
  func.func @transform_6(%arg0: i32) -> (i32, i32) {
    %c0_i32 = arith.constant 0 : i32
    %c0_i32_0 = arith.constant 0 : i32
    %c0_i32_1 = arith.constant 0 : i32
    return %c0_i32, %c0_i32_0 : i32, i32
  }
  func.func @transform_7(%arg0: i32) -> (i32, i32) {
    %c0_i32 = arith.constant 0 : i32
    %c0_i32_0 = arith.constant 0 : i32
    %c0_i32_1 = arith.constant 0 : i32
    return %c0_i32, %c0_i32_0 : i32, i32
  }
  func.func @transform_8(%arg0: i32) -> (i32, i32) {
    %c0_i32 = arith.constant 0 : i32
    %c0_i32_0 = arith.constant 0 : i32
    %c0_i32_1 = arith.constant 0 : i32
    return %c0_i32, %c0_i32_0 : i32, i32
  }
  func.func @transform_9(%arg0: i32) -> (i32, i32) {
    %c0_i32 = arith.constant 0 : i32
    %c0_i32_0 = arith.constant 0 : i32
    %c0_i32_1 = arith.constant 0 : i32
    return %c0_i32, %c0_i32_0 : i32, i32
  }
  func.func @transform_10(%arg0: i32) -> (i32, i32, i32) {
    %c0_i32 = arith.constant 0 : i32
    %c0_i32_0 = arith.constant 0 : i32
    %c0_i32_1 = arith.constant 0 : i32
    return %arg0, %c0_i32, %c0_i32_0 : i32, i32, i32
  }
}

</mosaic_0001>

<llo_original>
// kernel: tpu_custom_call.1
$region0: #{tpu_custom_call.1}
  #allocation0 [shape = 'u32[]', space=smem, size = 0x4, offset = 0x4, fixed_abs, tag = 'smem constant byte address 0x4 - core index']
  #allocation1 [shape = 'u32[72,128]{1,0:T(1,128)}', space=vmem, size = 0x9000, scoped, tag = 'internal scratch']
  %s0 = inlined_call_operand.hbm [shape: bf16[2,256,128], index: 0, kind: input, shape index: {}]
  %s1 = inlined_call_operand.hbm [shape: bf16[1152,128], index: 1, kind: input, shape index: {}]
  %s2 = inlined_call_operand.vmem [shape: f32[1,128], index: 2, kind: input, shape index: {}]
  %s3 = inlined_call_operand.hbm [shape: bf16[1152,128], index: 3, kind: input, shape index: {}]
  %s4 = inlined_call_operand.vmem [shape: f32[1,128], index: 4, kind: input, shape index: {}]
  %s5 = inlined_call_operand.vmem [shape: f32[1,128], index: 5, kind: input, shape index: {}]
  %s6 = inlined_call_operand.vmem [shape: f32[1,128], index: 6, kind: input, shape index: {}]
  %s7 = inlined_call_operand.vmem [shape: f32[1,128], index: 7, kind: input, shape index: {}]
  %s8 = inlined_call_operand.vmem [shape: f32[1,128], index: 8, kind: input, shape index: {}]
  %s9 = inlined_call_operand.hbm [shape: bf16[128,128], index: 9, kind: input, shape index: {}]
  %s10 = inlined_call_operand.hbm [shape: f32[2,64,128], index: 10, kind: output, shape index: {}]
  %s11 = sld [smem:[#allocation0]]
  $region89: #{tpu_custom_call.1} parent=0
    _
  %s13 = ssub.s32 1, %s11
  %s14 = scalar_select 0, %s13, %s11
  $region1: #{tpu_custom_call.1} parent=0
    #allocation2 [shape = 'u8[131072]{0}', space=vmem, size = 0x20000, scoped, tag = 'input window, operand 0']
    #allocation3 [shape = 's32[2]{0}', space=sflag, size = 0x8, scoped, tag = 'scoped memory for tpu_custom_call.1']
    #allocation4 [shape = 's32[2]{0}', space=sflag, size = 0x8, scoped, tag = 'scoped memory for tpu_custom_call.1']
    #allocation5 [shape = 'u8[294912]{0}', space=vmem, size = 0x48000, scoped, tag = 'input window, operand 1, single buffered']
    #allocation6 [shape = 's32[1]{0}', space=sflag, size = 0x4, scoped, tag = 'scoped memory for tpu_custom_call.1']
    #allocation7 [shape = 'u8[294912]{0}', space=vmem, size = 0x48000, scoped, tag = 'input window, operand 3, single buffered']
    #allocation8 [shape = 'u8[32768]{0}', space=vmem, size = 0x8000, scoped, tag = 'input window, operand 9, single buffered']
    #allocation9 [shape = 's32[1]{0}', space=sflag, size = 0x4, scoped, tag = 'scoped memory for tpu_custom_call.1']
    #allocation10 [shape = 'u8[65536]{0}', space=vmem, size = 0x10000, scoped, tag = 'output window, operand 0']
    %15 = vsyncpa [#allocation3], 0
    %s16 = scalar_lea.sflag [#allocation3], 1
    %17 = vsyncpa %s16, 0
    %18 = vsyncpa [#allocation6], 0
    %19 = vsyncpa [#allocation9], 0
    %20 = vsyncpa [#allocation4], 0
    %s21 = scalar_lea.sflag [#allocation4], 1
    %22 = vsyncpa %s21, 0
    loop: start=0, step=1, limit=4
    $region2: #{tpu_custom_call.1} parent=1 // loop_pre_header
      _
    $region3: #{tpu_custom_call.1} parent=1 // loop_header
      %s24 = sphi 0, %s28
      %p25 = scmp.ge.s32.totalorder %s24, 4
      %s34 = sphi 0, %s36
      %s37 = sphi 0, %s34
      %s38 = sphi 0, %s37
      %s54 = sphi 0, %s38
      %s58 = sphi 0, %s58
      %s60 = sphi 0, %s58
      %s61 = sphi 0, %s60
      %s75 = sphi 0, %s61
      %s79 = sphi 0, %s79
      %s81 = sphi 0, %s79
      %s82 = sphi 0, %s81
      %s96 = sphi 0, %s82
      %s100 = sphi 0, %s100
      %s102 = sphi 0, %s100
      %s103 = sphi 0, %s102
      %s117 = sphi 0, %s103
      %s121 = sphi 0, %s121
      %s123 = sphi 0, %s121
      %s124 = sphi 0, %s123
      %s138 = sphi 0, %s124
      %s142 = sphi 0, %s142
      %s144 = sphi 0, %s142
      %s145 = sphi 0, %s144
      %s159 = sphi 0, %s145
      %s163 = sphi 0, %s163
      %s165 = sphi 0, %s163
      %s166 = sphi 0, %s165
      %s180 = sphi 0, %s166
      %s184 = sphi 0, %s184
      %s186 = sphi 0, %s184
      %s187 = sphi 0, %s186
      %s201 = sphi 0, %s187
      %s205 = sphi 0, %s205
      %s207 = sphi 0, %s205
      %s208 = sphi 0, %s207
      %s222 = sphi 0, %s208
      %s226 = sphi 0, %s226
      %s228 = sphi 0, %s226
      %s229 = sphi 0, %s228
      %s243 = sphi 0, %s229
      %s249 = sphi 0, %s251
      %s252 = sphi 0, %s249
      %s253 = sphi 0, %s252
      %s269 = sphi 0, %s253
    $region4: #{tpu_custom_call.1} parent=1 // loop_header_branch
      %27 = sbr.rel (%p25) target = $region8
    $region5: #{tpu_custom_call.1} parent=1 // loop_body
      %s29 = ssub.s32 %s24, 1
      %s30 = ssub.s32 %s24, 2
      %s31 = sadd.s32 %s24, 1
      %s32 = ssub.s32 %s24, %s31
      %p33 = scmp.eq.s32.totalorder %s32, 0
      %s35 = sadd.s32 %s34, 1
      %s36 = scalar_select %p33, %s34, %s35
      %p39 = pneg %p33
      %p40 = scmp.eq.s32.totalorder %s24, 1
      %p41 = por %p39, %p40
      %p42 = scmp.ne.s32.totalorder %s34, %s37
      %p43 = scmp.eq.s32.totalorder %s24, 0
      %p44 = por %p42, %p43
      %p45 = scmp.ne.s32.totalorder %s34, %s37
      %p46 = scmp.eq.s32.totalorder %s29, 1
      %p47 = por %p45, %p46
      %p48 = scmp.ne.s32.totalorder %s37, %s38
      %p49 = scmp.eq.s32.totalorder %s29, 0
      %p50 = por %p48, %p49
      %p51 = scmp.ne.s32.totalorder %s37, %s38
      %p52 = scmp.eq.s32.totalorder %s30, 1
      %p53 = por %p51, %p52
      %p55 = scmp.ne.s32.totalorder %s38, %s54
      %p56 = scmp.eq.s32.totalorder %s30, 0
      %p57 = por %p55, %p56
      %s59 = sadd.s32 %s58, 1
      %p62 = scmp.eq.s32.totalorder %s24, 1
      %p63 = scmp.ne.s32.totalorder %s58, %s60
      %p64 = scmp.eq.s32.totalorder %s24, 0
      %p65 = por %p63, %p64
      %p66 = scmp.ne.s32.totalorder %s58, %s60
      %p67 = scmp.eq.s32.totalorder %s29, 1
      %p68 = por %p66, %p67
      %p69 = scmp.ne.s32.totalorder %s60, %s61
      %p70 = scmp.eq.s32.totalorder %s29, 0
      %p71 = por %p69, %p70
      %p72 = scmp.ne.s32.totalorder %s60, %s61
      %p73 = scmp.eq.s32.totalorder %s30, 1
      %p74 = por %p72, %p73
      %p76 = scmp.ne.s32.totalorder %s61, %s75
      %p77 = scmp.eq.s32.totalorder %s30, 0
      %p78 = por %p76, %p77
      %s80 = sadd.s32 %s79, 1
      %p83 = scmp.eq.s32.totalorder %s24, 1
      %p84 = scmp.ne.s32.totalorder %s79, %s81
      %p85 = scmp.eq.s32.totalorder %s24, 0
      %p86 = por %p84, %p85
      %p87 = scmp.ne.s32.totalorder %s79, %s81
      %p88 = scmp.eq.s32.totalorder %s29, 1
      %p89 = por %p87, %p88
      %p90 = scmp.ne.s32.totalorder %s81, %s82
      %p91 = scmp.eq.s32.totalorder %s29, 0
      %p92 = por %p90, %p91
      %p93 = scmp.ne.s32.totalorder %s81, %s82
      %p94 = scmp.eq.s32.totalorder %s30, 1
      %p95 = por %p93, %p94
      %p97 = scmp.ne.s32.totalorder %s82, %s96
      %p98 = scmp.eq.s32.totalorder %s30, 0
      %p99 = por %p97, %p98
      %s101 = sadd.s32 %s100, 1
      %p104 = scmp.eq.s32.totalorder %s24, 1
      %p105 = scmp.ne.s32.totalorder %s100, %s102
      %p106 = scmp.eq.s32.totalorder %s24, 0
      %p107 = por %p105, %p106
      %p108 = scmp.ne.s32.totalorder %s100, %s102
      %p109 = scmp.eq.s32.totalorder %s29, 1
      %p110 = por %p108, %p109
      %p111 = scmp.ne.s32.totalorder %s102, %s103
      %p112 = scmp.eq.s32.totalorder %s29, 0
      %p113 = por %p111, %p112
      %p114 = scmp.ne.s32.totalorder %s102, %s103
      %p115 = scmp.eq.s32.totalorder %s30, 1
      %p116 = por %p114, %p115
      %p118 = scmp.ne.s32.totalorder %s103, %s117
      %p119 = scmp.eq.s32.totalorder %s30, 0
      %p120 = por %p118, %p119
      %s122 = sadd.s32 %s121, 1
      %p125 = scmp.eq.s32.totalorder %s24, 1
      %p126 = scmp.ne.s32.totalorder %s121, %s123
      %p127 = scmp.eq.s32.totalorder %s24, 0
      %p128 = por %p126, %p127
      %p129 = scmp.ne.s32.totalorder %s121, %s123
      %p130 = scmp.eq.s32.totalorder %s29, 1
      %p131 = por %p129, %p130
      %p132 = scmp.ne.s32.totalorder %s123, %s124
      %p133 = scmp.eq.s32.totalorder %s29, 0
      %p134 = por %p132, %p133
      %p135 = scmp.ne.s32.totalorder %s123, %s124
      %p136 = scmp.eq.s32.totalorder %s30, 1
      %p137 = por %p135, %p136
      %p139 = scmp.ne.s32.totalorder %s124, %s138
      %p140 = scmp.eq.s32.totalorder %s30, 0
      %p141 = por %p139, %p140
      %s143 = sadd.s32 %s142, 1
      %p146 = scmp.eq.s32.totalorder %s24, 1
      %p147 = scmp.ne.s32.totalorder %s142, %s144
      %p148 = scmp.eq.s32.totalorder %s24, 0
      %p149 = por %p147, %p148
      %p150 = scmp.ne.s32.totalorder %s142, %s144
      %p151 = scmp.eq.s32.totalorder %s29, 1
      %p152 = por %p150, %p151
      %p153 = scmp.ne.s32.totalorder %s144, %s145
      %p154 = scmp.eq.s32.totalorder %s29, 0
      %p155 = por %p153, %p154
      %p156 = scmp.ne.s32.totalorder %s144, %s145
      %p157 = scmp.eq.s32.totalorder %s30, 1
      %p158 = por %p156, %p157
      %p160 = scmp.ne.s32.totalorder %s145, %s159
      %p161 = scmp.eq.s32.totalorder %s30, 0
      %p162 = por %p160, %p161
      %s164 = sadd.s32 %s163, 1
      %p167 = scmp.eq.s32.totalorder %s24, 1
      %p168 = scmp.ne.s32.totalorder %s163, %s165
      %p169 = scmp.eq.s32.totalorder %s24, 0
      %p170 = por %p168, %p169
      %p171 = scmp.ne.s32.totalorder %s163, %s165
      %p172 = scmp.eq.s32.totalorder %s29, 1
      %p173 = por %p171, %p172
      %p174 = scmp.ne.s32.totalorder %s165, %s166
      %p175 = scmp.eq.s32.totalorder %s29, 0
      %p176 = por %p174, %p175
      %p177 = scmp.ne.s32.totalorder %s165, %s166
      %p178 = scmp.eq.s32.totalorder %s30, 1
      %p179 = por %p177, %p178
      %p181 = scmp.ne.s32.totalorder %s166, %s180
      %p182 = scmp.eq.s32.totalorder %s30, 0
      %p183 = por %p181, %p182
      %s185 = sadd.s32 %s184, 1
      %p188 = scmp.eq.s32.totalorder %s24, 1
      %p189 = scmp.ne.s32.totalorder %s184, %s186
      %p190 = scmp.eq.s32.totalorder %s24, 0
      %p191 = por %p189, %p190
      %p192 = scmp.ne.s32.totalorder %s184, %s186
      %p193 = scmp.eq.s32.totalorder %s29, 1
      %p194 = por %p192, %p193
      %p195 = scmp.ne.s32.totalorder %s186, %s187
      %p196 = scmp.eq.s32.totalorder %s29, 0
      %p197 = por %p195, %p196
      %p198 = scmp.ne.s32.totalorder %s186, %s187
      %p199 = scmp.eq.s32.totalorder %s30, 1
      %p200 = por %p198, %p199
      %p202 = scmp.ne.s32.totalorder %s187, %s201
      %p203 = scmp.eq.s32.totalorder %s30, 0
      %p204 = por %p202, %p203
      %s206 = sadd.s32 %s205, 1
      %p209 = scmp.eq.s32.totalorder %s24, 1
      %p210 = scmp.ne.s32.totalorder %s205, %s207
      %p211 = scmp.eq.s32.totalorder %s24, 0
      %p212 = por %p210, %p211
      %p213 = scmp.ne.s32.totalorder %s205, %s207
      %p214 = scmp.eq.s32.totalorder %s29, 1
      %p215 = por %p213, %p214
      %p216 = scmp.ne.s32.totalorder %s207, %s208
      %p217 = scmp.eq.s32.totalorder %s29, 0
      %p218 = por %p216, %p217
      %p219 = scmp.ne.s32.totalorder %s207, %s208
      %p220 = scmp.eq.s32.totalorder %s30, 1
      %p221 = por %p219, %p220
      %p223 = scmp.ne.s32.totalorder %s208, %s222
      %p224 = scmp.eq.s32.totalorder %s30, 0
      %p225 = por %p223, %p224
      %s227 = sadd.s32 %s226, 1
      %p230 = scmp.eq.s32.totalorder %s24, 1
      %p231 = scmp.ne.s32.totalorder %s226, %s228
      %p232 = scmp.eq.s32.totalorder %s24, 0
      %p233 = por %p231, %p232
      %p234 = scmp.ne.s32.totalorder %s226, %s228
      %p235 = scmp.eq.s32.totalorder %s29, 1
      %p236 = por %p234, %p235
      %p237 = scmp.ne.s32.totalorder %s228, %s229
      %p238 = scmp.eq.s32.totalorder %s29, 0
      %p239 = por %p237, %p238
      %p240 = scmp.ne.s32.totalorder %s228, %s229
      %p241 = scmp.eq.s32.totalorder %s30, 1
      %p242 = por %p240, %p241
      %p244 = scmp.ne.s32.totalorder %s229, %s243
      %p245 = scmp.eq.s32.totalorder %s30, 0
      %p246 = por %p244, %p245
      %s247 = ssub.s32 %s24, %s31
      %p248 = scmp.eq.s32.totalorder %s247, 0
      %s250 = sadd.s32 %s249, 1
      %s251 = scalar_select %p248, %s249, %s250
      %p254 = pneg %p248
      %p255 = scmp.eq.s32.totalorder %s24, 1
      %p256 = por %p254, %p255
      %p257 = scmp.ne.s32.totalorder %s249, %s252
      %p258 = scmp.eq.s32.totalorder %s24, 0
      %p259 = por %p257, %p258
      %p260 = scmp.ne.s32.totalorder %s249, %s252
      %p261 = scmp.eq.s32.totalorder %s29, 1
      %p262 = por %p260, %p261
      %p263 = scmp.ne.s32.totalorder %s252, %s253
      %p264 = scmp.eq.s32.totalorder %s29, 0
      %p265 = por %p263, %p264
      %p266 = scmp.ne.s32.totalorder %s252, %s253
      %p267 = scmp.eq.s32.totalorder %s30, 1
      %p268 = por %p266, %p267
      %p270 = scmp.ne.s32.totalorder %s253, %s269
      %p271 = scmp.eq.s32.totalorder %s30, 0
      %p272 = por %p270, %p271
      %p273 = scmp.le.s32.totalorder 1, %s24
      %p274 = scmp.lt.s32.totalorder %s24, 3
      %p275 = pnand %p273, %p274
      %p276 = pneg %p275
      // Predicated region
      $region9: #{tpu_custom_call.1} parent=5 // pred_check
        _
      $region10: #{tpu_custom_call.1} parent=5 // pred_check_branch
        %278 = sbr.rel (%p275) target = $region12
      $region11: #{tpu_custom_call.1} parent=5 // pred_region
        %s279 = ssub.s32 %s24, 1
        // Predicated region
        $region13: #{tpu_custom_call.1} parent=11 // pred_check
          %p280 = pneg %p71
        $region14: #{tpu_custom_call.1} parent=11 // pred_check_branch
          %282 = sbr.rel (%p280) target = $region16
        $region15: #{tpu_custom_call.1} parent=11 // pred_region
          %284 = vsyncadd [#allocation6], 0
          %s285 = sshll.u32 %s1, 4
          %s286 = int_to_ptr.hbm [resolvable:$true] %s285
          %s287 = sshll.u32 [#allocation5], 4
          %s288 = int_to_ptr.vmem [resolvable:$true] %s287
          %293 = dma.hbm_to_vmem [thread:$0]  %s286, 9216, %s288, [#allocation6], 64, 64, 4
        $region16: #{tpu_custom_call.1} parent=11 // pred_fallthru
          _
        // Predicated region
        $region17: #{tpu_custom_call.1} parent=11 // pred_check
          %p294 = pneg %p92
        $region18: #{tpu_custom_call.1} parent=11 // pred_check_branch
          %296 = sbr.rel (%p294) target = $region20
        $region19: #{tpu_custom_call.1} parent=11 // pred_region
          _
        $region20: #{tpu_custom_call.1} parent=11 // pred_fallthru
          _
        // Predicated region
        $region21: #{tpu_custom_call.1} parent=11 // pred_check
          %p297 = pneg %p113
        $region22: #{tpu_custom_call.1} parent=11 // pred_check_branch
          %299 = sbr.rel (%p297) target = $region24
        $region23: #{tpu_custom_call.1} parent=11 // pred_region
          %301 = vsyncadd [#allocation6], 0
          %s302 = sshll.u32 %s3, 4
          %s303 = int_to_ptr.hbm [resolvable:$true] %s302
          %s304 = sshll.u32 [#allocation7], 4
          %s305 = int_to_ptr.vmem [resolvable:$true] %s304
          %310 = dma.hbm_to_vmem [thread:$0]  %s303, 9216, %s305, [#allocation6], 64, 64, 4
        $region24: #{tpu_custom_call.1} parent=11 // pred_fallthru
          _
        // Predicated region
        $region25: #{tpu_custom_call.1} parent=11 // pred_check
          %p311 = pneg %p134
        $region26: #{tpu_custom_call.1} parent=11 // pred_check_branch
          %313 = sbr.rel (%p311) target = $region28
        $region27: #{tpu_custom_call.1} parent=11 // pred_region
          _
        $region28: #{tpu_custom_call.1} parent=11 // pred_fallthru
          _
        // Predicated region
        $region29: #{tpu_custom_call.1} parent=11 // pred_check
          %p314 = pneg %p155
        $region30: #{tpu_custom_call.1} parent=11 // pred_check_branch
          %316 = sbr.rel (%p314) target = $region32
        $region31: #{tpu_custom_call.1} parent=11 // pred_region
          _
        $region32: #{tpu_custom_call.1} parent=11 // pred_fallthru
          _
        // Predicated region
        $region33: #{tpu_custom_call.1} parent=11 // pred_check
          %p317 = pneg %p176
        $region34: #{tpu_custom_call.1} parent=11 // pred_check_branch
          %319 = sbr.rel (%p317) target = $region36
        $region35: #{tpu_custom_call.1} parent=11 // pred_region
          _
        $region36: #{tpu_custom_call.1} parent=11 // pred_fallthru
          _
        // Predicated region
        $region37: #{tpu_custom_call.1} parent=11 // pred_check
          %p320 = pneg %p197
        $region38: #{tpu_custom_call.1} parent=11 // pred_check_branch
          %322 = sbr.rel (%p320) target = $region40
        $region39: #{tpu_custom_call.1} parent=11 // pred_region
          _
        $region40: #{tpu_custom_call.1} parent=11 // pred_fallthru
          _
        // Predicated region
        $region41: #{tpu_custom_call.1} parent=11 // pred_check
          %p323 = pneg %p218
        $region42: #{tpu_custom_call.1} parent=11 // pred_check_branch
          %325 = sbr.rel (%p323) target = $region44
        $region43: #{tpu_custom_call.1} parent=11 // pred_region
          _
        $region44: #{tpu_custom_call.1} parent=11 // pred_fallthru
          _
        // Predicated region
        $region45: #{tpu_custom_call.1} parent=11 // pred_check
          %p326 = pneg %p239
        $region46: #{tpu_custom_call.1} parent=11 // pred_check_branch
          %328 = sbr.rel (%p326) target = $region48
        $region47: #{tpu_custom_call.1} parent=11 // pred_region
          %330 = vsyncadd [#allocation9], 0
          %s331 = sshll.u32 %s9, 4
          %s332 = int_to_ptr.hbm [resolvable:$true] %s331
          %s333 = sshll.u32 [#allocation8], 4
          %s334 = int_to_ptr.vmem [resolvable:$true] %s333
          %339 = dma.hbm_to_vmem [thread:$0]  %s332, 1024, %s334, [#allocation9], 64, 64, 4
        $region48: #{tpu_custom_call.1} parent=11 // pred_fallthru
          _
      $region12: #{tpu_custom_call.1} parent=5 // pred_fallthru
        _
      %p340 = scmp.lt.s32.totalorder %s24, 2
      // Predicated region
      $region49: #{tpu_custom_call.1} parent=5 // pred_check
        %p341 = pneg %p340
      $region50: #{tpu_custom_call.1} parent=5 // pred_check_branch
        %343 = sbr.rel (%p341) target = $region52
      $region51: #{tpu_custom_call.1} parent=5 // pred_region
        // Predicated region
        $region53: #{tpu_custom_call.1} parent=51 // pred_check
          %p344 = pneg %p44
        $region54: #{tpu_custom_call.1} parent=51 // pred_check_branch
          %346 = sbr.rel (%p344) target = $region56
        $region55: #{tpu_custom_call.1} parent=51 // pred_region
          %s347 = sand.u32 %s34, 1
          %s348 = scalar_lea.sflag [#allocation3], %s347
          %s349 = sand.u32 %s34, 1
          %s350 = smul.addr %s349, 128
          %s351 = scalar_lea.vmem [#allocation2], %s350
          %353 = vsyncadd %s348, 0
          %s354 = smul.addr %s24, 32
          %s355 = smul.addr %s354, 4
          %s356 = scalar_lea.hbm %s0, %s355
          %s357 = sshll.u32 %s356, 4
          %s358 = int_to_ptr.hbm [resolvable:$true] %s357
          %s359 = sshll.u32 %s351, 4
          %s360 = int_to_ptr.vmem [resolvable:$true] %s359
          %365 = dma.hbm_to_vmem [thread:$0]  %s358, 2048, %s360, %s348, 64, 64, 4
        $region56: #{tpu_custom_call.1} parent=51 // pred_fallthru
          _
      $region52: #{tpu_custom_call.1} parent=5 // pred_fallthru
        _
      %p366 = scmp.le.s32.totalorder 1, %s24
      %p367 = scmp.lt.s32.totalorder %s24, 3
      %p368 = pnand %p366, %p367
      %p369 = pneg %p368
      // Predicated region
      $region57: #{tpu_custom_call.1} parent=5 // pred_check
        _
      $region58: #{tpu_custom_call.1} parent=5 // pred_check_branch
        %371 = sbr.rel (%p368) target = $region60
      $region59: #{tpu_custom_call.1} parent=5 // pred_region
        %s372 = ssub.s32 %s24, 1
        %s373 = sand.u32 %s37, 1
        %s374 = scalar_lea.sflag [#allocation3], %s373
        %s375 = sand.u32 %s37, 1
        %s376 = smul.addr %s375, 128
        %s377 = scalar_lea.vmem [#allocation2], %s376
        // Predicated region
        $region61: #{tpu_custom_call.1} parent=59 // pred_check
          %p378 = pneg %p50
        $region62: #{tpu_custom_call.1} parent=59 // pred_check_branch
          %380 = sbr.rel (%p378) target = $region64
        $region63: #{tpu_custom_call.1} parent=59 // pred_region
          %382 = dma.done %s374, 2048
        $region64: #{tpu_custom_call.1} parent=59 // pred_fallthru
          _
        // Predicated region
        $region65: #{tpu_custom_call.1} parent=59 // pred_check
          %p383 = pneg %p71
        $region66: #{tpu_custom_call.1} parent=59 // pred_check_branch
          %385 = sbr.rel (%p383) target = $region68
        $region67: #{tpu_custom_call.1} parent=59 // pred_region
          %387 = dma.done [#allocation6], 9216
        $region68: #{tpu_custom_call.1} parent=59 // pred_fallthru
          _
        // Predicated region
        $region69: #{tpu_custom_call.1} parent=59 // pred_check
          %p388 = pneg %p113
        $region70: #{tpu_custom_call.1} parent=59 // pred_check_branch
          %390 = sbr.rel (%p388) target = $region72
        $region71: #{tpu_custom_call.1} parent=59 // pred_region
          %392 = dma.done [#allocation6], 9216
        $region72: #{tpu_custom_call.1} parent=59 // pred_fallthru
          _
        // Predicated region
        $region73: #{tpu_custom_call.1} parent=59 // pred_check
          %p393 = pneg %p239
        $region74: #{tpu_custom_call.1} parent=59 // pred_check_branch
          %395 = sbr.rel (%p393) target = $region76
        $region75: #{tpu_custom_call.1} parent=59 // pred_region
          %397 = dma.done [#allocation9], 1024
        $region76: #{tpu_custom_call.1} parent=59 // pred_fallthru
          _
        %s398 = sand.u32 %s37, 1
        %s399 = scalar_lea.sflag [#allocation3], %s398
        %s400 = sand.u32 %s37, 1
        %s401 = smul.addr %s400, 128
        %s402 = scalar_lea.vmem [#allocation2], %s401
        %p403 = pneg %p50
        %p404 = pneg %p47
        %p405 = pneg %p71
        %p406 = pneg %p68
        %p407 = pneg %p92
        %p408 = pneg %p89
        %p409 = pneg %p113
        %p410 = pneg %p110
        %p411 = pneg %p134
        %p412 = pneg %p131
        %p413 = pneg %p155
        %p414 = pneg %p152
        %p415 = pneg %p176
        %p416 = pneg %p173
        %p417 = pneg %p197
        %p418 = pneg %p194
        %p419 = pneg %p218
        %p420 = pneg %p215
        %p421 = pneg %p239
        %p422 = pneg %p236
        %p423 = pneg %p265
        %p424 = pneg %p262
        %s425 = sand.u32 %s252, 1
        %s426 = scalar_lea.sflag [#allocation4], %s425
        %s427 = sand.u32 %s252, 1
        %s428 = smul.addr %s427, 64
        %s429 = scalar_lea.vmem [#allocation10], %s428
        %v433 = vld [vmem:[%s377] sm:$0xf]
        %v434 = vld [vmem:[%s377 + $0x4] sm:$0xf]
        %v435 = vld [vmem:[%s377 + $0x8] sm:$0xf]
        %v436 = vld [vmem:[%s377 + $0xc] sm:$0xf]
        %v437 = vld [vmem:[%s377 + $0x10] sm:$0xf]
        %v438 = vld [vmem:[%s377 + $0x14] sm:$0xf]
        %v439 = vld [vmem:[%s377 + $0x18] sm:$0xf]
        %v440 = vld [vmem:[%s377 + $0x1c] sm:$0xf]
        %v441 = vld [vmem:[%s377 + $0x20] sm:$0xf]
        %v442 = vld [vmem:[%s377 + $0x24] sm:$0xf]
        %v443 = vld [vmem:[%s377 + $0x28] sm:$0xf]
        %v444 = vld [vmem:[%s377 + $0x2c] sm:$0xf]
        %v445 = vld [vmem:[%s377 + $0x30] sm:$0xf]
        %v446 = vld [vmem:[%s377 + $0x34] sm:$0xf]
        %v447 = vld [vmem:[%s377 + $0x38] sm:$0xf]
        %v448 = vld [vmem:[%s377 + $0x3c] sm:$0xf]
        %v449 = vld [vmem:[%s377 + $0x40] sm:$0xf]
        %v450 = vld [vmem:[%s377 + $0x44] sm:$0xf]
        %v451 = vld [vmem:[%s377 + $0x48] sm:$0xf]
        %v452 = vld [vmem:[%s377 + $0x4c] sm:$0xf]
        %v453 = vld [vmem:[%s377 + $0x50] sm:$0xf]
        %v454 = vld [vmem:[%s377 + $0x54] sm:$0xf]
        %v455 = vld [vmem:[%s377 + $0x58] sm:$0xf]
        %v456 = vld [vmem:[%s377 + $0x5c] sm:$0xf]
        %v457 = vld [vmem:[%s377 + $0x60] sm:$0xf]
        %v458 = vld [vmem:[%s377 + $0x64] sm:$0xf]
        %v459 = vld [vmem:[%s377 + $0x68] sm:$0xf]
        %v460 = vld [vmem:[%s377 + $0x6c] sm:$0xf]
        %v461 = vld [vmem:[%s377 + $0x70] sm:$0xf]
        %v462 = vld [vmem:[%s377 + $0x74] sm:$0xf]
        %v463 = vld [vmem:[%s377 + $0x78] sm:$0xf]
        %v464 = vld [vmem:[%s377 + $0x7c] sm:$0xf]
        %v465 = vunpack.c.l.bf16 %v433
        %v466 = vunpack.c.l.bf16 %v434
        %v467 = vunpack.c.l.bf16 %v435
        %v468 = vunpack.c.l.bf16 %v436
        %v469 = vunpack.c.l.bf16 %v437
        %v470 = vunpack.c.l.bf16 %v438
        %v471 = vunpack.c.l.bf16 %v439
        %v472 = vunpack.c.l.bf16 %v440
        %v473 = vunpack.c.l.bf16 %v441
        %v474 = vunpack.c.l.bf16 %v442
        %v475 = vunpack.c.l.bf16 %v443
        %v476 = vunpack.c.l.bf16 %v444
        %v477 = vunpack.c.l.bf16 %v445
        %v478 = vunpack.c.l.bf16 %v446
        %v479 = vunpack.c.l.bf16 %v447
        %v480 = vunpack.c.l.bf16 %v448
        %v481 = vunpack.c.l.bf16 %v449
        %v482 = vunpack.c.l.bf16 %v450
        %v483 = vunpack.c.l.bf16 %v451
        %v484 = vunpack.c.l.bf16 %v452
        %v485 = vunpack.c.l.bf16 %v453
        %v486 = vunpack.c.l.bf16 %v454
        %v487 = vunpack.c.l.bf16 %v455
        %v488 = vunpack.c.l.bf16 %v456
        %v489 = vunpack.c.l.bf16 %v457
        %v490 = vunpack.c.l.bf16 %v458
        %v491 = vunpack.c.l.bf16 %v459
        %v492 = vunpack.c.l.bf16 %v460
        %v493 = vunpack.c.l.bf16 %v461
        %v494 = vunpack.c.l.bf16 %v462
        %v495 = vunpack.c.l.bf16 %v463
        %v496 = vunpack.c.l.bf16 %v464
        %v497 = vadd.f32 %v465, %v466
        %v498 = vadd.f32 %v497, %v467
        %v499 = vadd.f32 %v498, %v468
        %v500 = vadd.f32 %v499, %v469
        %v501 = vadd.f32 %v500, %v470
        %v502 = vadd.f32 %v501, %v471
        %v503 = vadd.f32 %v502, %v472
        %v504 = vadd.f32 %v503, %v473
        %v505 = vadd.f32 %v504, %v474
        %v506 = vadd.f32 %v505, %v475
        %v507 = vadd.f32 %v506, %v476
        %v508 = vadd.f32 %v507, %v477
        %v509 = vadd.f32 %v508, %v478
        %v510 = vadd.f32 %v509, %v479
        %v511 = vadd.f32 %v510, %v480
        %v512 = vadd.f32 %v511, %v481
        %v513 = vadd.f32 %v512, %v482
        %v514 = vadd.f32 %v513, %v483
        %v515 = vadd.f32 %v514, %v484
        %v516 = vadd.f32 %v515, %v485
        %v517 = vadd.f32 %v516, %v486
        %v518 = vadd.f32 %v517, %v487
        %v519 = vadd.f32 %v518, %v488
        %v520 = vadd.f32 %v519, %v489
        %v521 = vadd.f32 %v520, %v490
        %v522 = vadd.f32 %v521, %v491
        %v523 = vadd.f32 %v522, %v492
        %v524 = vadd.f32 %v523, %v493
        %v525 = vadd.f32 %v524, %v494
        %v526 = vadd.f32 %v525, %v495
        %v527 = vadd.f32 %v526, %v496
        %v528 = vrot.slane %v527, 4
        %v529 = vadd.f32 %v527, %v528
        %v530 = vrot.slane %v529, 2
        %v531 = vadd.f32 %v529, %v530
        %v532 = vrot.slane %v531, 1
        %v533 = vadd.f32 %v531, %v532
        %v534 = vmul.f32 %v533, 0.00390625
        %v535 = vsub.f32 %v465, %v534
        %v536 = vsub.f32 %v466, %v534
        %v537 = vsub.f32 %v467, %v534
        %v538 = vsub.f32 %v468, %v534
        %v539 = vsub.f32 %v469, %v534
        %v540 = vsub.f32 %v470, %v534
        %v541 = vsub.f32 %v471, %v534
        %v542 = vsub.f32 %v472, %v534
        %v543 = vsub.f32 %v473, %v534
        %v544 = vsub.f32 %v474, %v534
        %v545 = vsub.f32 %v475, %v534
        %v546 = vsub.f32 %v476, %v534
        %v547 = vsub.f32 %v477, %v534
        %v548 = vsub.f32 %v478, %v534
        %v549 = vsub.f32 %v479, %v534
        %v550 = vsub.f32 %v480, %v534
        %v551 = vsub.f32 %v481, %v534
        %v552 = vsub.f32 %v482, %v534
        %v553 = vsub.f32 %v483, %v534
        %v554 = vsub.f32 %v484, %v534
        %v555 = vsub.f32 %v485, %v534
        %v556 = vsub.f32 %v486, %v534
        %v557 = vsub.f32 %v487, %v534
        %v558 = vsub.f32 %v488, %v534
        %v559 = vsub.f32 %v489, %v534
        %v560 = vsub.f32 %v490, %v534
        %v561 = vsub.f32 %v491, %v534
        %v562 = vsub.f32 %v492, %v534
        %v563 = vsub.f32 %v493, %v534
        %v564 = vsub.f32 %v494, %v534
        %v565 = vsub.f32 %v495, %v534
        %v566 = vsub.f32 %v496, %v534
        %v567 = vmul.f32 %v535, %v535
        %v568 = vmul.f32 %v536, %v536
        %v569 = vmul.f32 %v537, %v537
        %v570 = vmul.f32 %v538, %v538
        %v571 = vmul.f32 %v539, %v539
        %v572 = vmul.f32 %v540, %v540
        %v573 = vmul.f32 %v541, %v541
        %v574 = vmul.f32 %v542, %v542
        %v575 = vmul.f32 %v543, %v543
        %v576 = vmul.f32 %v544, %v544
        %v577 = vmul.f32 %v545, %v545
        %v578 = vmul.f32 %v546, %v546
        %v579 = vmul.f32 %v547, %v547
        %v580 = vmul.f32 %v548, %v548
        %v581 = vmul.f32 %v549, %v549
        %v582 = vmul.f32 %v550, %v550
        %v583 = vmul.f32 %v551, %v551
        %v584 = vmul.f32 %v552, %v552
        %v585 = vmul.f32 %v553, %v553
        %v586 = vmul.f32 %v554, %v554
        %v587 = vmul.f32 %v555, %v555
        %v588 = vmul.f32 %v556, %v556
        %v589 = vmul.f32 %v557, %v557
        %v590 = vmul.f32 %v558, %v558
        %v591 = vmul.f32 %v559, %v559
        %v592 = vmul.f32 %v560, %v560
        %v593 = vmul.f32 %v561, %v561
        %v594 = vmul.f32 %v562, %v562
        %v595 = vmul.f32 %v563, %v563
        %v596 = vmul.f32 %v564, %v564
        %v597 = vmul.f32 %v565, %v565
        %v598 = vmul.f32 %v566, %v566
        %v599 = vadd.f32 %v567, %v568
        %v600 = vadd.f32 %v599, %v569
        %v601 = vadd.f32 %v600, %v570
        %v602 = vadd.f32 %v601, %v571
        %v603 = vadd.f32 %v602, %v572
        %v604 = vadd.f32 %v603, %v573
        %v605 = vadd.f32 %v604, %v574
        %v606 = vadd.f32 %v605, %v575
        %v607 = vadd.f32 %v606, %v576
        %v608 = vadd.f32 %v607, %v577
        %v609 = vadd.f32 %v608, %v578
        %v610 = vadd.f32 %v609, %v579
        %v611 = vadd.f32 %v610, %v580
        %v612 = vadd.f32 %v611, %v581
        %v613 = vadd.f32 %v612, %v582
        %v614 = vadd.f32 %v613, %v583
        %v615 = vadd.f32 %v614, %v584
        %v616 = vadd.f32 %v615, %v585
        %v617 = vadd.f32 %v616, %v586
        %v618 = vadd.f32 %v617, %v587
        %v619 = vadd.f32 %v618, %v588
        %v620 = vadd.f32 %v619, %v589
        %v621 = vadd.f32 %v620, %v590
        %v622 = vadd.f32 %v621, %v591
        %v623 = vadd.f32 %v622, %v592
        %v624 = vadd.f32 %v623, %v593
        %v625 = vadd.f32 %v624, %v594
        %v626 = vadd.f32 %v625, %v595
        %v627 = vadd.f32 %v626, %v596
        %v628 = vadd.f32 %v627, %v597
        %v629 = vadd.f32 %v628, %v598
        %v630 = vrot.slane %v629, 4
        %v631 = vadd.f32 %v629, %v630
        %v632 = vrot.slane %v631, 2
        %v633 = vadd.f32 %v631, %v632
        %v634 = vrot.slane %v633, 1
        %v635 = vadd.f32 %v633, %v634
        %v636 = vmul.f32 %v635, 0.00390625
        %v637 = vld [vmem:[%s5] sm:$0x1]
        %v638 = vadd.f32 %v636, 1e-05
        %v639 = vrsqrt.pop %v638
        %v640 = vmul.f32 %v639, %v638
        %v641 = vmul.f32 %v640, %v639
        %v642 = vmul.f32 0.5, %v641
        %v643 = vsub.f32 1.5, %v642
        %v644 = vmul.f32 %v639, %v643
        %vm645 = vweird.f32 %v638
        %vm646 = vweird.f32 %v639
        %vm647 = vmor %vm645, %vm646
        %v648 = vsel %vm647, %v639, %v644
        %v649 = vmul.f32 %v637, %v648
        %v651 = vperm.slane %v649, 0
        %v653 = vmul.f32 %v535, %v651
        %v654 = vmul.f32 %v536, %v651
        %v655 = vmul.f32 %v537, %v651
        %v656 = vmul.f32 %v538, %v651
        %v657 = vmul.f32 %v539, %v651
        %v658 = vmul.f32 %v540, %v651
        %v659 = vmul.f32 %v541, %v651
        %v660 = vmul.f32 %v542, %v651
        %v661 = vmul.f32 %v543, %v651
        %v662 = vmul.f32 %v544, %v651
        %v663 = vmul.f32 %v545, %v651
        %v664 = vmul.f32 %v546, %v651
        %v665 = vmul.f32 %v547, %v651
        %v666 = vmul.f32 %v548, %v651
        %v667 = vmul.f32 %v549, %v651
        %v668 = vmul.f32 %v550, %v651
        %v669 = vmul.f32 %v551, %v651
        %v670 = vmul.f32 %v552, %v651
        %v671 = vmul.f32 %v553, %v651
        %v672 = vmul.f32 %v554, %v651
        %v673 = vmul.f32 %v555, %v651
        %v674 = vmul.f32 %v556, %v651
        %v675 = vmul.f32 %v557, %v651
        %v676 = vmul.f32 %v558, %v651
        %v677 = vmul.f32 %v559, %v651
        %v678 = vmul.f32 %v560, %v651
        %v679 = vmul.f32 %v561, %v651
        %v680 = vmul.f32 %v562, %v651
        %v681 = vmul.f32 %v563, %v651
        %v682 = vmul.f32 %v564, %v651
        %v683 = vmul.f32 %v565, %v651
        %v684 = vmul.f32 %v566, %v651
        %v685 = vld [vmem:[%s6] sm:$0x1]
        %v687 = vperm.slane %v685, 0
        %v689 = vadd.f32 %v653, %v687
        %v690 = vadd.f32 %v654, %v687
        %v691 = vadd.f32 %v655, %v687
        %v692 = vadd.f32 %v656, %v687
        %v693 = vadd.f32 %v657, %v687
        %v694 = vadd.f32 %v658, %v687
        %v695 = vadd.f32 %v659, %v687
        %v696 = vadd.f32 %v660, %v687
        %v697 = vadd.f32 %v661, %v687
        %v698 = vadd.f32 %v662, %v687
        %v699 = vadd.f32 %v663, %v687
        %v700 = vadd.f32 %v664, %v687
        %v701 = vadd.f32 %v665, %v687
        %v702 = vadd.f32 %v666, %v687
        %v703 = vadd.f32 %v667, %v687
        %v704 = vadd.f32 %v668, %v687
        %v705 = vadd.f32 %v669, %v687
        %v706 = vadd.f32 %v670, %v687
        %v707 = vadd.f32 %v671, %v687
        %v708 = vadd.f32 %v672, %v687
        %v709 = vadd.f32 %v673, %v687
        %v710 = vadd.f32 %v674, %v687
        %v711 = vadd.f32 %v675, %v687
        %v712 = vadd.f32 %v676, %v687
        %v713 = vadd.f32 %v677, %v687
        %v714 = vadd.f32 %v678, %v687
        %v715 = vadd.f32 %v679, %v687
        %v716 = vadd.f32 %v680, %v687
        %v717 = vadd.f32 %v681, %v687
        %v718 = vadd.f32 %v682, %v687
        %v719 = vadd.f32 %v683, %v687
        %v720 = vadd.f32 %v684, %v687
        %vm721 = vcmp.ge.f32.partialorder %v689, 0.0
        %vm722 = vcmp.ge.f32.partialorder %v690, 0.0
        %vm723 = vcmp.ge.f32.partialorder %v691, 0.0
        %vm724 = vcmp.ge.f32.partialorder %v692, 0.0
        %vm725 = vcmp.ge.f32.partialorder %v693, 0.0
        %vm726 = vcmp.ge.f32.partialorder %v694, 0.0
        %vm727 = vcmp.ge.f32.partialorder %v695, 0.0
        %vm728 = vcmp.ge.f32.partialorder %v696, 0.0
        %vm729 = vcmp.ge.f32.partialorder %v697, 0.0
        %vm730 = vcmp.ge.f32.partialorder %v698, 0.0
        %vm731 = vcmp.ge.f32.partialorder %v699, 0.0
        %vm732 = vcmp.ge.f32.partialorder %v700, 0.0
        %vm733 = vcmp.ge.f32.partialorder %v701, 0.0
        %vm734 = vcmp.ge.f32.partialorder %v702, 0.0
        %vm735 = vcmp.ge.f32.partialorder %v703, 0.0
        %vm736 = vcmp.ge.f32.partialorder %v704, 0.0
        %vm737 = vcmp.ge.f32.partialorder %v705, 0.0
        %vm738 = vcmp.ge.f32.partialorder %v706, 0.0
        %vm739 = vcmp.ge.f32.partialorder %v707, 0.0
        %vm740 = vcmp.ge.f32.partialorder %v708, 0.0
        %vm741 = vcmp.ge.f32.partialorder %v709, 0.0
        %vm742 = vcmp.ge.f32.partialorder %v710, 0.0
        %vm743 = vcmp.ge.f32.partialorder %v711, 0.0
        %vm744 = vcmp.ge.f32.partialorder %v712, 0.0
        %vm745 = vcmp.ge.f32.partialorder %v713, 0.0
        %vm746 = vcmp.ge.f32.partialorder %v714, 0.0
        %vm747 = vcmp.ge.f32.partialorder %v715, 0.0
        %vm748 = vcmp.ge.f32.partialorder %v716, 0.0
        %vm749 = vcmp.ge.f32.partialorder %v717, 0.0
        %vm750 = vcmp.ge.f32.partialorder %v718, 0.0
        %vm751 = vcmp.ge.f32.partialorder %v719, 0.0
        %vm752 = vcmp.ge.f32.partialorder %v720, 0.0
        %v753 = vmul.f32 %v689, 0.2
        %v754 = vmul.f32 %v690, 0.2
        %v755 = vmul.f32 %v691, 0.2
        %v756 = vmul.f32 %v692, 0.2
        %v757 = vmul.f32 %v693, 0.2
        %v758 = vmul.f32 %v694, 0.2
        %v759 = vmul.f32 %v695, 0.2
        %v760 = vmul.f32 %v696, 0.2
        %v761 = vmul.f32 %v697, 0.2
        %v762 = vmul.f32 %v698, 0.2
        %v763 = vmul.f32 %v699, 0.2
        %v764 = vmul.f32 %v700, 0.2
        %v765 = vmul.f32 %v701, 0.2
        %v766 = vmul.f32 %v702, 0.2
        %v767 = vmul.f32 %v703, 0.2
        %v768 = vmul.f32 %v704, 0.2
        %v769 = vmul.f32 %v705, 0.2
        %v770 = vmul.f32 %v706, 0.2
        %v771 = vmul.f32 %v707, 0.2
        %v772 = vmul.f32 %v708, 0.2
        %v773 = vmul.f32 %v709, 0.2
        %v774 = vmul.f32 %v710, 0.2
        %v775 = vmul.f32 %v711, 0.2
        %v776 = vmul.f32 %v712, 0.2
        %v777 = vmul.f32 %v713, 0.2
        %v778 = vmul.f32 %v714, 0.2
        %v779 = vmul.f32 %v715, 0.2
        %v780 = vmul.f32 %v716, 0.2
        %v781 = vmul.f32 %v717, 0.2
        %v782 = vmul.f32 %v718, 0.2
        %v783 = vmul.f32 %v719, 0.2
        %v784 = vmul.f32 %v720, 0.2
        %v785 = vsel %vm721, %v689, %v753
        %v786 = vsel %vm722, %v690, %v754
        %v787 = vsel %vm723, %v691, %v755
        %v788 = vsel %vm724, %v692, %v756
        %v789 = vsel %vm725, %v693, %v757
        %v790 = vsel %vm726, %v694, %v758
        %v791 = vsel %vm727, %v695, %v759
        %v792 = vsel %vm728, %v696, %v760
        %v793 = vsel %vm729, %v697, %v761
        %v794 = vsel %vm730, %v698, %v762
        %v795 = vsel %vm731, %v699, %v763
        %v796 = vsel %vm732, %v700, %v764
        %v797 = vsel %vm733, %v701, %v765
        %v798 = vsel %vm734, %v702, %v766
        %v799 = vsel %vm735, %v703, %v767
        %v800 = vsel %vm736, %v704, %v768
        %v801 = vsel %vm737, %v705, %v769
        %v802 = vsel %vm738, %v706, %v770
        %v803 = vsel %vm739, %v707, %v771
        %v804 = vsel %vm740, %v708, %v772
        %v805 = vsel %vm741, %v709, %v773
        %v806 = vsel %vm742, %v710, %v774
        %v807 = vsel %vm743, %v711, %v775
        %v808 = vsel %vm744, %v712, %v776
        %v809 = vsel %vm745, %v713, %v777
        %v810 = vsel %vm746, %v714, %v778
        %v811 = vsel %vm747, %v715, %v779
        %v812 = vsel %vm748, %v716, %v780
        %v813 = vsel %vm749, %v717, %v781
        %v814 = vsel %vm750, %v718, %v782
        %v815 = vsel %vm751, %v719, %v783
        %v816 = vsel %vm752, %v720, %v784
        %v817 = vpack.c.bf16 %v785, %v785
        %v818 = vpack.c.bf16 %v786, %v786
        %v819 = vpack.c.bf16 %v787, %v787
        %v820 = vpack.c.bf16 %v788, %v788
        %v821 = vpack.c.bf16 %v789, %v789
        %v822 = vpack.c.bf16 %v790, %v790
        %v823 = vpack.c.bf16 %v791, %v791
        %v824 = vpack.c.bf16 %v792, %v792
        %v825 = vpack.c.bf16 %v793, %v793
        %v826 = vpack.c.bf16 %v794, %v794
        %v827 = vpack.c.bf16 %v795, %v795
        %v828 = vpack.c.bf16 %v796, %v796
        %v829 = vpack.c.bf16 %v797, %v797
        %v830 = vpack.c.bf16 %v798, %v798
        %v831 = vpack.c.bf16 %v799, %v799
        %v832 = vpack.c.bf16 %v800, %v800
        %v833 = vpack.c.bf16 %v801, %v801
        %v834 = vpack.c.bf16 %v802, %v802
        %v835 = vpack.c.bf16 %v803, %v803
        %v836 = vpack.c.bf16 %v804, %v804
        %v837 = vpack.c.bf16 %v805, %v805
        %v838 = vpack.c.bf16 %v806, %v806
        %v839 = vpack.c.bf16 %v807, %v807
        %v840 = vpack.c.bf16 %v808, %v808
        %v841 = vpack.c.bf16 %v809, %v809
        %v842 = vpack.c.bf16 %v810, %v810
        %v843 = vpack.c.bf16 %v811, %v811
        %v844 = vpack.c.bf16 %v812, %v812
        %v845 = vpack.c.bf16 %v813, %v813
        %v846 = vpack.c.bf16 %v814, %v814
        %v847 = vpack.c.bf16 %v815, %v815
        %v848 = vpack.c.bf16 %v816, %v816
        %v881 = vunpack.c.l.b16 %v817
        %v882 = vunpack.c.l.b16 %v818
        %v883 = vunpack.c.l.b16 %v819
        %v884 = vunpack.c.l.b16 %v820
        %v885 = vunpack.c.l.b16 %v821
        %v886 = vunpack.c.l.b16 %v822
        %v887 = vunpack.c.l.b16 %v823
        %v888 = vunpack.c.l.b16 %v824
        %v889 = vunpack.c.l.b16 %v825
        %v890 = vunpack.c.l.b16 %v826
        %v891 = vunpack.c.l.b16 %v827
        %v892 = vunpack.c.l.b16 %v828
        %v893 = vunpack.c.l.b16 %v829
        %v894 = vunpack.c.l.b16 %v830
        %v895 = vunpack.c.l.b16 %v831
        %v896 = vunpack.c.l.b16 %v832
        %v897 = vunpack.c.l.b16 %v833
        %v898 = vunpack.c.l.b16 %v834
        %v899 = vunpack.c.l.b16 %v835
        %v900 = vunpack.c.l.b16 %v836
        %v901 = vunpack.c.l.b16 %v837
        %v902 = vunpack.c.l.b16 %v838
        %v903 = vunpack.c.l.b16 %v839
        %v904 = vunpack.c.l.b16 %v840
        %v905 = vunpack.c.l.b16 %v841
        %v906 = vunpack.c.l.b16 %v842
        %v907 = vunpack.c.l.b16 %v843
        %v908 = vunpack.c.l.b16 %v844
        %v909 = vunpack.c.l.b16 %v845
        %v910 = vunpack.c.l.b16 %v846
        %v911 = vunpack.c.l.b16 %v847
        %v912 = vunpack.c.l.b16 %v848
        %v913 = vpack.c.b16 %v881, %v881
        %v914 = vpack.c.b16 %v883, %v882
        %v915 = vpack.c.b16 %v885, %v884
        %v916 = vpack.c.b16 %v887, %v886
        %v917 = vpack.c.b16 %v889, %v888
        %v918 = vpack.c.b16 %v891, %v890
        %v919 = vpack.c.b16 %v893, %v892
        %v920 = vpack.c.b16 %v895, %v894
        %v921 = vpack.c.b16 %v897, %v896
        %v922 = vpack.c.b16 %v899, %v898
        %v923 = vpack.c.b16 %v901, %v900
        %v924 = vpack.c.b16 %v903, %v902
        %v925 = vpack.c.b16 %v905, %v904
        %v926 = vpack.c.b16 %v907, %v906
        %v927 = vpack.c.b16 %v909, %v908
        %v928 = vpack.c.b16 %v911, %v910
        %v929 = vpack.c.b16 %v912, %v912
        %vm945 = vcmask 1043456
        %v948 = vsel %vm945, 0, %v913
        %v951 = vsel %vm945, %v929, 0
        %v953 = vlaneseq
        %v954 = vshrl.u32 %v953, 7
        %v955 = vadd.s32 %v954, 8
        %v956 = vadd.s32 %v954, 16
        %v957 = vadd.s32 %v954, 24
        %v958 = vadd.s32 %v954, 32
        %v959 = vadd.s32 %v954, 40
        %v960 = vadd.s32 %v954, 48
        %v961 = vadd.s32 %v954, 56
        %v962 = vadd.s32 %v954, 64
        %v963 = vadd.s32 %v954, 72
        %v964 = vadd.s32 %v954, 80
        %v965 = vadd.s32 %v954, 88
        %v966 = vadd.s32 %v954, 96
        %v967 = vadd.s32 %v954, 104
        %v968 = vadd.s32 %v954, 112
        %v969 = vadd.s32 %v954, 120
        %v970 = vadd.s32 %v954, 128
        %v971 = vadd.s32 %v954, 136
        %v972 = vadd.s32 %v954, 144
        %v973 = vadd.s32 %v954, 152
        %v974 = vadd.s32 %v954, 160
        %v975 = vadd.s32 %v954, 168
        %v976 = vadd.s32 %v954, 176
        %v977 = vadd.s32 %v954, 184
        %v978 = vadd.s32 %v954, 192
        %v979 = vadd.s32 %v954, 200
        %v980 = vadd.s32 %v954, 208
        %v981 = vadd.s32 %v954, 216
        %v982 = vadd.s32 %v954, 224
        %v983 = vadd.s32 %v954, 232
        %v984 = vadd.s32 %v954, 240
        %v985 = vadd.s32 %v954, 248
        %vm986 = vcmp.lt.s32.totalorder %v954, 0
        %v987 = vsub.s32 0, %v954
        %v988 = vsel %vm986, %v987, %v954
        %v989 = vshrl.u32 %v988, 4
        %v990 = vand.u32 %v988, 15
        %v991 = vsub.s32 0, %v990
        %v992 = vsel %vm986, %v991, %v990
        %vm993 = vcmp.lt.s32.totalorder %v955, 0
        %v994 = vsub.s32 0, %v955
        %v995 = vsel %vm993, %v994, %v955
        %v996 = vshrl.u32 %v995, 4
        %v997 = vand.u32 %v995, 15
        %v998 = vsub.s32 0, %v997
        %v999 = vsel %vm993, %v998, %v997
        %vm1000 = vcmp.lt.s32.totalorder %v956, 0
        %v1001 = vsub.s32 0, %v956
        %v1002 = vsel %vm1000, %v1001, %v956
        %v1003 = vshrl.u32 %v1002, 4
        %v1004 = vand.u32 %v1002, 15
        %v1005 = vsub.s32 0, %v1004
        %v1006 = vsel %vm1000, %v1005, %v1004
        %vm1007 = vcmp.lt.s32.totalorder %v957, 0
        %v1008 = vsub.s32 0, %v957
        %v1009 = vsel %vm1007, %v1008, %v957
        %v1010 = vshrl.u32 %v1009, 4
        %v1011 = vand.u32 %v1009, 15
        %v1012 = vsub.s32 0, %v1011
        %v1013 = vsel %vm1007, %v1012, %v1011
        %vm1014 = vcmp.lt.s32.totalorder %v958, 0
        %v1015 = vsub.s32 0, %v958
        %v1016 = vsel %vm1014, %v1015, %v958
        %v1017 = vshrl.u32 %v1016, 4
        %v1018 = vand.u32 %v1016, 15
        %v1019 = vsub.s32 0, %v1018
        %v1020 = vsel %vm1014, %v1019, %v1018
        %vm1021 = vcmp.lt.s32.totalorder %v959, 0
        %v1022 = vsub.s32 0, %v959
        %v1023 = vsel %vm1021, %v1022, %v959
        %v1024 = vshrl.u32 %v1023, 4
        %v1025 = vand.u32 %v1023, 15
        %v1026 = vsub.s32 0, %v1025
        %v1027 = vsel %vm1021, %v1026, %v1025
        %vm1028 = vcmp.lt.s32.totalorder %v960, 0
        %v1029 = vsub.s32 0, %v960
        %v1030 = vsel %vm1028, %v1029, %v960
        %v1031 = vshrl.u32 %v1030, 4
        %v1032 = vand.u32 %v1030, 15
        %v1033 = vsub.s32 0, %v1032
        %v1034 = vsel %vm1028, %v1033, %v1032
        %vm1035 = vcmp.lt.s32.totalorder %v961, 0
        %v1036 = vsub.s32 0, %v961
        %v1037 = vsel %vm1035, %v1036, %v961
        %v1038 = vshrl.u32 %v1037, 4
        %v1039 = vand.u32 %v1037, 15
        %v1040 = vsub.s32 0, %v1039
        %v1041 = vsel %vm1035, %v1040, %v1039
        %vm1042 = vcmp.lt.s32.totalorder %v962, 0
        %v1043 = vsub.s32 0, %v962
        %v1044 = vsel %vm1042, %v1043, %v962
        %v1045 = vshrl.u32 %v1044, 4
        %v1046 = vand.u32 %v1044, 15
        %v1047 = vsub.s32 0, %v1046
        %v1048 = vsel %vm1042, %v1047, %v1046
        %vm1049 = vcmp.lt.s32.totalorder %v963, 0
        %v1050 = vsub.s32 0, %v963
        %v1051 = vsel %vm1049, %v1050, %v963
        %v1052 = vshrl.u32 %v1051, 4
        %v1053 = vand.u32 %v1051, 15
        %v1054 = vsub.s32 0, %v1053
        %v1055 = vsel %vm1049, %v1054, %v1053
        %vm1056 = vcmp.lt.s32.totalorder %v964, 0
        %v1057 = vsub.s32 0, %v964
        %v1058 = vsel %vm1056, %v1057, %v964
        %v1059 = vshrl.u32 %v1058, 4
        %v1060 = vand.u32 %v1058, 15
        %v1061 = vsub.s32 0, %v1060
        %v1062 = vsel %vm1056, %v1061, %v1060
        %vm1063 = vcmp.lt.s32.totalorder %v965, 0
        %v1064 = vsub.s32 0, %v965
        %v1065 = vsel %vm1063, %v1064, %v965
        %v1066 = vshrl.u32 %v1065, 4
        %v1067 = vand.u32 %v1065, 15
        %v1068 = vsub.s32 0, %v1067
        %v1069 = vsel %vm1063, %v1068, %v1067
        %vm1070 = vcmp.lt.s32.totalorder %v966, 0
        %v1071 = vsub.s32 0, %v966
        %v1072 = vsel %vm1070, %v1071, %v966
        %v1073 = vshrl.u32 %v1072, 4
        %v1074 = vand.u32 %v1072, 15
        %v1075 = vsub.s32 0, %v1074
        %v1076 = vsel %vm1070, %v1075, %v1074
        %vm1077 = vcmp.lt.s32.totalorder %v967, 0
        %v1078 = vsub.s32 0, %v967
        %v1079 = vsel %vm1077, %v1078, %v967
        %v1080 = vshrl.u32 %v1079, 4
        %v1081 = vand.u32 %v1079, 15
        %v1082 = vsub.s32 0, %v1081
        %v1083 = vsel %vm1077, %v1082, %v1081
        %vm1084 = vcmp.lt.s32.totalorder %v968, 0
        %v1085 = vsub.s32 0, %v968
        %v1086 = vsel %vm1084, %v1085, %v968
        %v1087 = vshrl.u32 %v1086, 4
        %v1088 = vand.u32 %v1086, 15
        %v1089 = vsub.s32 0, %v1088
        %v1090 = vsel %vm1084, %v1089, %v1088
        %vm1091 = vcmp.lt.s32.totalorder %v969, 0
        %v1092 = vsub.s32 0, %v969
        %v1093 = vsel %vm1091, %v1092, %v969
        %v1094 = vshrl.u32 %v1093, 4
        %v1095 = vand.u32 %v1093, 15
        %v1096 = vsub.s32 0, %v1095
        %v1097 = vsel %vm1091, %v1096, %v1095
        %vm1098 = vcmp.lt.s32.totalorder %v970, 0
        %v1099 = vsub.s32 0, %v970
        %v1100 = vsel %vm1098, %v1099, %v970
        %v1101 = vshrl.u32 %v1100, 4
        %v1102 = vand.u32 %v1100, 15
        %v1103 = vsub.s32 0, %v1102
        %v1104 = vsel %vm1098, %v1103, %v1102
        %vm1105 = vcmp.lt.s32.totalorder %v971, 0
        %v1106 = vsub.s32 0, %v971
        %v1107 = vsel %vm1105, %v1106, %v971
        %v1108 = vshrl.u32 %v1107, 4
        %v1109 = vand.u32 %v1107, 15
        %v1110 = vsub.s32 0, %v1109
        %v1111 = vsel %vm1105, %v1110, %v1109
        %vm1112 = vcmp.lt.s32.totalorder %v972, 0
        %v1113 = vsub.s32 0, %v972
        %v1114 = vsel %vm1112, %v1113, %v972
        %v1115 = vshrl.u32 %v1114, 4
        %v1116 = vand.u32 %v1114, 15
        %v1117 = vsub.s32 0, %v1116
        %v1118 = vsel %vm1112, %v1117, %v1116
        %vm1119 = vcmp.lt.s32.totalorder %v973, 0
        %v1120 = vsub.s32 0, %v973
        %v1121 = vsel %vm1119, %v1120, %v973
        %v1122 = vshrl.u32 %v1121, 4
        %v1123 = vand.u32 %v1121, 15
        %v1124 = vsub.s32 0, %v1123
        %v1125 = vsel %vm1119, %v1124, %v1123
        %vm1126 = vcmp.lt.s32.totalorder %v974, 0
        %v1127 = vsub.s32 0, %v974
        %v1128 = vsel %vm1126, %v1127, %v974
        %v1129 = vshrl.u32 %v1128, 4
        %v1130 = vand.u32 %v1128, 15
        %v1131 = vsub.s32 0, %v1130
        %v1132 = vsel %vm1126, %v1131, %v1130
        %vm1133 = vcmp.lt.s32.totalorder %v975, 0
        %v1134 = vsub.s32 0, %v975
        %v1135 = vsel %vm1133, %v1134, %v975
        %v1136 = vshrl.u32 %v1135, 4
        %v1137 = vand.u32 %v1135, 15
        %v1138 = vsub.s32 0, %v1137
        %v1139 = vsel %vm1133, %v1138, %v1137
        %vm1140 = vcmp.lt.s32.totalorder %v976, 0
        %v1141 = vsub.s32 0, %v976
        %v1142 = vsel %vm1140, %v1141, %v976
        %v1143 = vshrl.u32 %v1142, 4
        %v1144 = vand.u32 %v1142, 15
        %v1145 = vsub.s32 0, %v1144
        %v1146 = vsel %vm1140, %v1145, %v1144
        %vm1147 = vcmp.lt.s32.totalorder %v977, 0
        %v1148 = vsub.s32 0, %v977
        %v1149 = vsel %vm1147, %v1148, %v977
        %v1150 = vshrl.u32 %v1149, 4
        %v1151 = vand.u32 %v1149, 15
        %v1152 = vsub.s32 0, %v1151
        %v1153 = vsel %vm1147, %v1152, %v1151
        %vm1154 = vcmp.lt.s32.totalorder %v978, 0
        %v1155 = vsub.s32 0, %v978
        %v1156 = vsel %vm1154, %v1155, %v978
        %v1157 = vshrl.u32 %v1156, 4
        %v1158 = vand.u32 %v1156, 15
        %v1159 = vsub.s32 0, %v1158
        %v1160 = vsel %vm1154, %v1159, %v1158
        %vm1161 = vcmp.lt.s32.totalorder %v979, 0
        %v1162 = vsub.s32 0, %v979
        %v1163 = vsel %vm1161, %v1162, %v979
        %v1164 = vshrl.u32 %v1163, 4
        %v1165 = vand.u32 %v1163, 15
        %v1166 = vsub.s32 0, %v1165
        %v1167 = vsel %vm1161, %v1166, %v1165
        %vm1168 = vcmp.lt.s32.totalorder %v980, 0
        %v1169 = vsub.s32 0, %v980
        %v1170 = vsel %vm1168, %v1169, %v980
        %v1171 = vshrl.u32 %v1170, 4
        %v1172 = vand.u32 %v1170, 15
        %v1173 = vsub.s32 0, %v1172
        %v1174 = vsel %vm1168, %v1173, %v1172
        %vm1175 = vcmp.lt.s32.totalorder %v981, 0
        %v1176 = vsub.s32 0, %v981
        %v1177 = vsel %vm1175, %v1176, %v981
        %v1178 = vshrl.u32 %v1177, 4
        %v1179 = vand.u32 %v1177, 15
        %v1180 = vsub.s32 0, %v1179
        %v1181 = vsel %vm1175, %v1180, %v1179
        %vm1182 = vcmp.lt.s32.totalorder %v982, 0
        %v1183 = vsub.s32 0, %v982
        %v1184 = vsel %vm1182, %v1183, %v982
        %v1185 = vshrl.u32 %v1184, 4
        %v1186 = vand.u32 %v1184, 15
        %v1187 = vsub.s32 0, %v1186
        %v1188 = vsel %vm1182, %v1187, %v1186
        %vm1189 = vcmp.lt.s32.totalorder %v983, 0
        %v1190 = vsub.s32 0, %v983
        %v1191 = vsel %vm1189, %v1190, %v983
        %v1192 = vshrl.u32 %v1191, 4
        %v1193 = vand.u32 %v1191, 15
        %v1194 = vsub.s32 0, %v1193
        %v1195 = vsel %vm1189, %v1194, %v1193
        %vm1196 = vcmp.lt.s32.totalorder %v984, 0
        %v1197 = vsub.s32 0, %v984
        %v1198 = vsel %vm1196, %v1197, %v984
        %v1199 = vshrl.u32 %v1198, 4
        %v1200 = vand.u32 %v1198, 15
        %v1201 = vsub.s32 0, %v1200
        %v1202 = vsel %vm1196, %v1201, %v1200
        %vm1203 = vcmp.lt.s32.totalorder %v985, 0
        %v1204 = vsub.s32 0, %v985
        %v1205 = vsel %vm1203, %v1204, %v985
        %v1206 = vshrl.u32 %v1205, 4
        %v1207 = vand.u32 %v1205, 15
        %v1208 = vsub.s32 0, %v1207
        %v1209 = vsel %vm1203, %v1208, %v1207
        %vm1210 = vcmp.ne.s32.totalorder %v992, 0
        %vm1211 = vcmp.ne.s32.totalorder %v999, 0
        %vm1212 = vcmp.ne.s32.totalorder %v1006, 0
        %vm1213 = vcmp.ne.s32.totalorder %v1013, 0
        %vm1214 = vcmp.ne.s32.totalorder %v1020, 0
        %vm1215 = vcmp.ne.s32.totalorder %v1027, 0
        %vm1216 = vcmp.ne.s32.totalorder %v1034, 0
        %vm1217 = vcmp.ne.s32.totalorder %v1041, 0
        %vm1218 = vcmp.ne.s32.totalorder %v1048, 0
        %vm1219 = vcmp.ne.s32.totalorder %v1055, 0
        %vm1220 = vcmp.ne.s32.totalorder %v1062, 0
        %vm1221 = vcmp.ne.s32.totalorder %v1069, 0
        %vm1222 = vcmp.ne.s32.totalorder %v1076, 0
        %vm1223 = vcmp.ne.s32.totalorder %v1083, 0
        %vm1224 = vcmp.ne.s32.totalorder %v1090, 0
        %vm1225 = vcmp.ne.s32.totalorder %v1097, 0
        %vm1226 = vcmp.ne.s32.totalorder %v1104, 0
        %vm1227 = vcmp.ne.s32.totalorder %v1111, 0
        %vm1228 = vcmp.ne.s32.totalorder %v1118, 0
        %vm1229 = vcmp.ne.s32.totalorder %v1125, 0
        %vm1230 = vcmp.ne.s32.totalorder %v1132, 0
        %vm1231 = vcmp.ne.s32.totalorder %v1139, 0
        %vm1232 = vcmp.ne.s32.totalorder %v1146, 0
        %vm1233 = vcmp.ne.s32.totalorder %v1153, 0
        %vm1234 = vcmp.ne.s32.totalorder %v1160, 0
        %vm1235 = vcmp.ne.s32.totalorder %v1167, 0
        %vm1236 = vcmp.ne.s32.totalorder %v1174, 0
        %vm1237 = vcmp.ne.s32.totalorder %v1181, 0
        %vm1238 = vcmp.ne.s32.totalorder %v1188, 0
        %vm1239 = vcmp.ne.s32.totalorder %v1195, 0
        %vm1240 = vcmp.ne.s32.totalorder %v1202, 0
        %vm1241 = vcmp.ne.s32.totalorder %v1209, 0
        %vm1242 = vcmp.lt.s32.totalorder %v992, 0
        %vm1243 = vcmp.lt.s32.totalorder %v999, 0
        %vm1244 = vcmp.lt.s32.totalorder %v1006, 0
        %vm1245 = vcmp.lt.s32.totalorder %v1013, 0
        %vm1246 = vcmp.lt.s32.totalorder %v1020, 0
        %vm1247 = vcmp.lt.s32.totalorder %v1027, 0
        %vm1248 = vcmp.lt.s32.totalorder %v1034, 0
        %vm1249 = vcmp.lt.s32.totalorder %v1041, 0
        %vm1250 = vcmp.lt.s32.totalorder %v1048, 0
        %vm1251 = vcmp.lt.s32.totalorder %v1055, 0
        %vm1252 = vcmp.lt.s32.totalorder %v1062, 0
        %vm1253 = vcmp.lt.s32.totalorder %v1069, 0
        %vm1254 = vcmp.lt.s32.totalorder %v1076, 0
        %vm1255 = vcmp.lt.s32.totalorder %v1083, 0
        %vm1256 = vcmp.lt.s32.totalorder %v1090, 0
        %vm1257 = vcmp.lt.s32.totalorder %v1097, 0
        %vm1258 = vcmp.lt.s32.totalorder %v1104, 0
        %vm1259 = vcmp.lt.s32.totalorder %v1111, 0
        %vm1260 = vcmp.lt.s32.totalorder %v1118, 0
        %vm1261 = vcmp.lt.s32.totalorder %v1125, 0
        %vm1262 = vcmp.lt.s32.totalorder %v1132, 0
        %vm1263 = vcmp.lt.s32.totalorder %v1139, 0
        %vm1264 = vcmp.lt.s32.totalorder %v1146, 0
        %vm1265 = vcmp.lt.s32.totalorder %v1153, 0
        %vm1266 = vcmp.lt.s32.totalorder %v1160, 0
        %vm1267 = vcmp.lt.s32.totalorder %v1167, 0
        %vm1268 = vcmp.lt.s32.totalorder %v1174, 0
        %vm1269 = vcmp.lt.s32.totalorder %v1181, 0
        %vm1270 = vcmp.lt.s32.totalorder %v1188, 0
        %vm1271 = vcmp.lt.s32.totalorder %v1195, 0
        %vm1272 = vcmp.lt.s32.totalorder %v1202, 0
        %vm1273 = vcmp.lt.s32.totalorder %v1209, 0
        %vm1274 = vmand %vm1242, %vm1210
        %vm1275 = vmand %vm1243, %vm1211
        %vm1276 = vmand %vm1244, %vm1212
        %vm1277 = vmand %vm1245, %vm1213
        %vm1278 = vmand %vm1246, %vm1214
        %vm1279 = vmand %vm1247, %vm1215
        %vm1280 = vmand %vm1248, %vm1216
        %vm1281 = vmand %vm1249, %vm1217
        %vm1282 = vmand %vm1250, %vm1218
        %vm1283 = vmand %vm1251, %vm1219
        %vm1284 = vmand %vm1252, %vm1220
        %vm1285 = vmand %vm1253, %vm1221
        %vm1286 = vmand %vm1254, %vm1222
        %vm1287 = vmand %vm1255, %vm1223
        %vm1288 = vmand %vm1256, %vm1224
        %vm1289 = vmand %vm1257, %vm1225
        %vm1290 = vmand %vm1258, %vm1226
        %vm1291 = vmand %vm1259, %vm1227
        %vm1292 = vmand %vm1260, %vm1228
        %vm1293 = vmand %vm1261, %vm1229
        %vm1294 = vmand %vm1262, %vm1230
        %vm1295 = vmand %vm1263, %vm1231
        %vm1296 = vmand %vm1264, %vm1232
        %vm1297 = vmand %vm1265, %vm1233
        %vm1298 = vmand %vm1266, %vm1234
        %vm1299 = vmand %vm1267, %vm1235
        %vm1300 = vmand %vm1268, %vm1236
        %vm1301 = vmand %vm1269, %vm1237
        %vm1302 = vmand %vm1270, %vm1238
        %vm1303 = vmand %vm1271, %vm1239
        %vm1304 = vmand %vm1272, %vm1240
        %vm1305 = vmand %vm1273, %vm1241
        %v1306 = vadd.s32 %v992, 16
        %v1307 = vadd.s32 %v999, 16
        %v1308 = vadd.s32 %v1006, 16
        %v1309 = vadd.s32 %v1013, 16
        %v1310 = vadd.s32 %v1020, 16
        %v1311 = vadd.s32 %v1027, 16
        %v1312 = vadd.s32 %v1034, 16
        %v1313 = vadd.s32 %v1041, 16
        %v1314 = vadd.s32 %v1048, 16
        %v1315 = vadd.s32 %v1055, 16
        %v1316 = vadd.s32 %v1062, 16
        %v1317 = vadd.s32 %v1069, 16
        %v1318 = vadd.s32 %v1076, 16
        %v1319 = vadd.s32 %v1083, 16
        %v1320 = vadd.s32 %v1090, 16
        %v1321 = vadd.s32 %v1097, 16
        %v1322 = vadd.s32 %v1104, 16
        %v1323 = vadd.s32 %v1111, 16
        %v1324 = vadd.s32 %v1118, 16
        %v1325 = vadd.s32 %v1125, 16
        %v1326 = vadd.s32 %v1132, 16
        %v1327 = vadd.s32 %v1139, 16
        %v1328 = vadd.s32 %v1146, 16
        %v1329 = vadd.s32 %v1153, 16
        %v1330 = vadd.s32 %v1160, 16
        %v1331 = vadd.s32 %v1167, 16
        %v1332 = vadd.s32 %v1174, 16
        %v1333 = vadd.s32 %v1181, 16
        %v1334 = vadd.s32 %v1188, 16
        %v1335 = vadd.s32 %v1195, 16
        %v1336 = vadd.s32 %v1202, 16
        %v1337 = vadd.s32 %v1209, 16
        %v1338 = vsel %vm1274, %v1306, %v992
        %v1339 = vsel %vm1275, %v1307, %v999
        %v1340 = vsel %vm1276, %v1308, %v1006
        %v1341 = vsel %vm1277, %v1309, %v1013
        %v1342 = vsel %vm1278, %v1310, %v1020
        %v1343 = vsel %vm1279, %v1311, %v1027
        %v1344 = vsel %vm1280, %v1312, %v1034
        %v1345 = vsel %vm1281, %v1313, %v1041
        %v1346 = vsel %vm1282, %v1314, %v1048
        %v1347 = vsel %vm1283, %v1315, %v1055
        %v1348 = vsel %vm1284, %v1316, %v1062
        %v1349 = vsel %vm1285, %v1317, %v1069
        %v1350 = vsel %vm1286, %v1318, %v1076
        %v1351 = vsel %vm1287, %v1319, %v1083
        %v1352 = vsel %vm1288, %v1320, %v1090
        %v1353 = vsel %vm1289, %v1321, %v1097
        %v1354 = vsel %vm1290, %v1322, %v1104
        %v1355 = vsel %vm1291, %v1323, %v1111
        %v1356 = vsel %vm1292, %v1324, %v1118
        %v1357 = vsel %vm1293, %v1325, %v1125
        %v1358 = vsel %vm1294, %v1326, %v1132
        %v1359 = vsel %vm1295, %v1327, %v1139
        %v1360 = vsel %vm1296, %v1328, %v1146
        %v1361 = vsel %vm1297, %v1329, %v1153
        %v1362 = vsel %vm1298, %v1330, %v1160
        %v1363 = vsel %vm1299, %v1331, %v1167
        %v1364 = vsel %vm1300, %v1332, %v1174
        %v1365 = vsel %vm1301, %v1333, %v1181
        %v1366 = vsel %vm1302, %v1334, %v1188
        %v1367 = vsel %vm1303, %v1335, %v1195
        %v1368 = vsel %vm1304, %v1336, %v1202
        %v1369 = vsel %vm1305, %v1337, %v1209
        %vm1370 = vcmp.ge.s32.totalorder %v1338, 1
        %vm1371 = vcmp.ge.s32.totalorder %v1339, 1
        %vm1372 = vcmp.ge.s32.totalorder %v1340, 1
        %vm1373 = vcmp.ge.s32.totalorder %v1341, 1
        %vm1374 = vcmp.ge.s32.totalorder %v1342, 1
        %vm1375 = vcmp.ge.s32.totalorder %v1343, 1
        %vm1376 = vcmp.ge.s32.totalorder %v1344, 1
        %vm1377 = vcmp.ge.s32.totalorder %v1345, 1
        %vm1378 = vcmp.ge.s32.totalorder %v1346, 1
        %vm1379 = vcmp.ge.s32.totalorder %v1347, 1
        %vm1380 = vcmp.ge.s32.totalorder %v1348, 1
        %vm1381 = vcmp.ge.s32.totalorder %v1349, 1
        %vm1382 = vcmp.ge.s32.totalorder %v1350, 1
        %vm1383 = vcmp.ge.s32.totalorder %v1351, 1
        %vm1384 = vcmp.ge.s32.totalorder %v1352, 1
        %vm1385 = vcmp.ge.s32.totalorder %v1353, 1
        %vm1386 = vcmp.ge.s32.totalorder %v1354, 1
        %vm1387 = vcmp.ge.s32.totalorder %v1355, 1
        %vm1388 = vcmp.ge.s32.totalorder %v1356, 1
        %vm1389 = vcmp.ge.s32.totalorder %v1357, 1
        %vm1390 = vcmp.ge.s32.totalorder %v1358, 1
        %vm1391 = vcmp.ge.s32.totalorder %v1359, 1
        %vm1392 = vcmp.ge.s32.totalorder %v1360, 1
        %vm1393 = vcmp.ge.s32.totalorder %v1361, 1
        %vm1394 = vcmp.ge.s32.totalorder %v1362, 1
        %vm1395 = vcmp.ge.s32.totalorder %v1363, 1
        %vm1396 = vcmp.ge.s32.totalorder %v1364, 1
        %vm1397 = vcmp.ge.s32.totalorder %v1365, 1
        %vm1398 = vcmp.ge.s32.totalorder %v1366, 1
        %vm1399 = vcmp.ge.s32.totalorder %v1367, 1
        %vm1400 = vcmp.ge.s32.totalorder %v1368, 1
        %vm1401 = vcmp.ge.s32.totalorder %v1369, 1
        %vm1402 = vcmp.le.s32.totalorder %v1338, 14
        %vm1403 = vcmp.le.s32.totalorder %v1339, 14
        %vm1404 = vcmp.le.s32.totalorder %v1340, 14
        %vm1405 = vcmp.le.s32.totalorder %v1341, 14
        %vm1406 = vcmp.le.s32.totalorder %v1342, 14
        %vm1407 = vcmp.le.s32.totalorder %v1343, 14
        %vm1408 = vcmp.le.s32.totalorder %v1344, 14
        %vm1409 = vcmp.le.s32.totalorder %v1345, 14
        %vm1410 = vcmp.le.s32.totalorder %v1346, 14
        %vm1411 = vcmp.le.s32.totalorder %v1347, 14
        %vm1412 = vcmp.le.s32.totalorder %v1348, 14
        %vm1413 = vcmp.le.s32.totalorder %v1349, 14
        %vm1414 = vcmp.le.s32.totalorder %v1350, 14
        %vm1415 = vcmp.le.s32.totalorder %v1351, 14
        %vm1416 = vcmp.le.s32.totalorder %v1352, 14
        %vm1417 = vcmp.le.s32.totalorder %v1353, 14
        %vm1418 = vcmp.le.s32.totalorder %v1354, 14
        %vm1419 = vcmp.le.s32.totalorder %v1355, 14
        %vm1420 = vcmp.le.s32.totalorder %v1356, 14
        %vm1421 = vcmp.le.s32.totalorder %v1357, 14
        %vm1422 = vcmp.le.s32.totalorder %v1358, 14
        %vm1423 = vcmp.le.s32.totalorder %v1359, 14
        %vm1424 = vcmp.le.s32.totalorder %v1360, 14
        %vm1425 = vcmp.le.s32.totalorder %v1361, 14
        %vm1426 = vcmp.le.s32.totalorder %v1362, 14
        %vm1427 = vcmp.le.s32.totalorder %v1363, 14
        %vm1428 = vcmp.le.s32.totalorder %v1364, 14
        %vm1429 = vcmp.le.s32.totalorder %v1365, 14
        %vm1430 = vcmp.le.s32.totalorder %v1366, 14
        %vm1431 = vcmp.le.s32.totalorder %v1367, 14
        %vm1432 = vcmp.le.s32.totalorder %v1368, 14
        %vm1433 = vcmp.le.s32.totalorder %v1369, 14
        %v1434 = vsel %vm1370, 1, 0
        %v1435 = vsel %vm1371, 1, 0
        %v1436 = vsel %vm1372, 1, 0
        %v1437 = vsel %vm1373, 1, 0
        %v1438 = vsel %vm1374, 1, 0
        %v1439 = vsel %vm1375, 1, 0
        %v1440 = vsel %vm1376, 1, 0
        %v1441 = vsel %vm1377, 1, 0
        %v1442 = vsel %vm1378, 1, 0
        %v1443 = vsel %vm1379, 1, 0
        %v1444 = vsel %vm1380, 1, 0
        %v1445 = vsel %vm1381, 1, 0
        %v1446 = vsel %vm1382, 1, 0
        %v1447 = vsel %vm1383, 1, 0
        %v1448 = vsel %vm1384, 1, 0
        %v1449 = vsel %vm1385, 1, 0
        %v1450 = vsel %vm1386, 1, 0
        %v1451 = vsel %vm1387, 1, 0
        %v1452 = vsel %vm1388, 1, 0
        %v1453 = vsel %vm1389, 1, 0
        %v1454 = vsel %vm1390, 1, 0
        %v1455 = vsel %vm1391, 1, 0
        %v1456 = vsel %vm1392, 1, 0
        %v1457 = vsel %vm1393, 1, 0
        %v1458 = vsel %vm1394, 1, 0
        %v1459 = vsel %vm1395, 1, 0
        %v1460 = vsel %vm1396, 1, 0
        %v1461 = vsel %vm1397, 1, 0
        %v1462 = vsel %vm1398, 1, 0
        %v1463 = vsel %vm1399, 1, 0
        %v1464 = vsel %vm1400, 1, 0
        %v1465 = vsel %vm1401, 1, 0
        %vm1466 = vcmp.eq.s32.totalorder %v1434, 1
        %vm1467 = vcmp.eq.s32.totalorder %v1435, 1
        %vm1468 = vcmp.eq.s32.totalorder %v1436, 1
        %vm1469 = vcmp.eq.s32.totalorder %v1437, 1
        %vm1470 = vcmp.eq.s32.totalorder %v1438, 1
        %vm1471 = vcmp.eq.s32.totalorder %v1439, 1
        %vm1472 = vcmp.eq.s32.totalorder %v1440, 1
        %vm1473 = vcmp.eq.s32.totalorder %v1441, 1
        %vm1474 = vcmp.eq.s32.totalorder %v1442, 1
        %vm1475 = vcmp.eq.s32.totalorder %v1443, 1
        %vm1476 = vcmp.eq.s32.totalorder %v1444, 1
        %vm1477 = vcmp.eq.s32.totalorder %v1445, 1
        %vm1478 = vcmp.eq.s32.totalorder %v1446, 1
        %vm1479 = vcmp.eq.s32.totalorder %v1447, 1
        %vm1480 = vcmp.eq.s32.totalorder %v1448, 1
        %vm1481 = vcmp.eq.s32.totalorder %v1449, 1
        %vm1482 = vcmp.eq.s32.totalorder %v1450, 1
        %vm1483 = vcmp.eq.s32.totalorder %v1451, 1
        %vm1484 = vcmp.eq.s32.totalorder %v1452, 1
        %vm1485 = vcmp.eq.s32.totalorder %v1453, 1
        %vm1486 = vcmp.eq.s32.totalorder %v1454, 1
        %vm1487 = vcmp.eq.s32.totalorder %v1455, 1
        %vm1488 = vcmp.eq.s32.totalorder %v1456, 1
        %vm1489 = vcmp.eq.s32.totalorder %v1457, 1
        %vm1490 = vcmp.eq.s32.totalorder %v1458, 1
        %vm1491 = vcmp.eq.s32.totalorder %v1459, 1
        %vm1492 = vcmp.eq.s32.totalorder %v1460, 1
        %vm1493 = vcmp.eq.s32.totalorder %v1461, 1
        %vm1494 = vcmp.eq.s32.totalorder %v1462, 1
        %vm1495 = vcmp.eq.s32.totalorder %v1463, 1
        %vm1496 = vcmp.eq.s32.totalorder %v1464, 1
        %vm1497 = vcmp.eq.s32.totalorder %v1465, 1
        %vm1498 = vmpackc.low %vm1466, %vm1466
        %vm1499 = vmpackc.low %vm1467, %vm1467
        %vm1500 = vmpackc.low %vm1468, %vm1468
        %vm1501 = vmpackc.low %vm1469, %vm1469
        %vm1502 = vmpackc.low %vm1470, %vm1470
        %vm1503 = vmpackc.low %vm1471, %vm1471
        %vm1504 = vmpackc.low %vm1472, %vm1472
        %vm1505 = vmpackc.low %vm1473, %vm1473
        %vm1506 = vmpackc.low %vm1474, %vm1474
        %vm1507 = vmpackc.low %vm1475, %vm1475
        %vm1508 = vmpackc.low %vm1476, %vm1476
        %vm1509 = vmpackc.low %vm1477, %vm1477
        %vm1510 = vmpackc.low %vm1478, %vm1478
        %vm1511 = vmpackc.low %vm1479, %vm1479
        %vm1512 = vmpackc.low %vm1480, %vm1480
        %vm1513 = vmpackc.low %vm1481, %vm1481
        %vm1514 = vmpackc.low %vm1482, %vm1482
        %vm1515 = vmpackc.low %vm1483, %vm1483
        %vm1516 = vmpackc.low %vm1484, %vm1484
        %vm1517 = vmpackc.low %vm1485, %vm1485
        %vm1518 = vmpackc.low %vm1486, %vm1486
        %vm1519 = vmpackc.low %vm1487, %vm1487
        %vm1520 = vmpackc.low %vm1488, %vm1488
        %vm1521 = vmpackc.low %vm1489, %vm1489
        %vm1522 = vmpackc.low %vm1490, %vm1490
        %vm1523 = vmpackc.low %vm1491, %vm1491
        %vm1524 = vmpackc.low %vm1492, %vm1492
        %vm1525 = vmpackc.low %vm1493, %vm1493
        %vm1526 = vmpackc.low %vm1494, %vm1494
        %vm1527 = vmpackc.low %vm1495, %vm1495
        %vm1528 = vmpackc.low %vm1496, %vm1496
        %vm1529 = vmpackc.low %vm1497, %vm1497
        %v1530 = vsel %vm1498, 65537, 0
        %v1531 = vsel %vm1499, 65537, 0
        %v1532 = vsel %vm1500, 65537, 0
        %v1533 = vsel %vm1501, 65537, 0
        %v1534 = vsel %vm1502, 65537, 0
        %v1535 = vsel %vm1503, 65537, 0
        %v1536 = vsel %vm1504, 65537, 0
        %v1537 = vsel %vm1505, 65537, 0
        %v1538 = vsel %vm1506, 65537, 0
        %v1539 = vsel %vm1507, 65537, 0
        %v1540 = vsel %vm1508, 65537, 0
        %v1541 = vsel %vm1509, 65537, 0
        %v1542 = vsel %vm1510, 65537, 0
        %v1543 = vsel %vm1511, 65537, 0
        %v1544 = vsel %vm1512, 65537, 0
        %v1545 = vsel %vm1513, 65537, 0
        %v1546 = vsel %vm1514, 65537, 0
        %v1547 = vsel %vm1515, 65537, 0
        %v1548 = vsel %vm1516, 65537, 0
        %v1549 = vsel %vm1517, 65537, 0
        %v1550 = vsel %vm1518, 65537, 0
        %v1551 = vsel %vm1519, 65537, 0
        %v1552 = vsel %vm1520, 65537, 0
        %v1553 = vsel %vm1521, 65537, 0
        %v1554 = vsel %vm1522, 65537, 0
        %v1555 = vsel %vm1523, 65537, 0
        %v1556 = vsel %vm1524, 65537, 0
        %v1557 = vsel %vm1525, 65537, 0
        %v1558 = vsel %vm1526, 65537, 0
        %v1559 = vsel %vm1527, 65537, 0
        %v1560 = vsel %vm1528, 65537, 0
        %v1561 = vsel %vm1529, 65537, 0
        %v1562 = vunpack.c.l.b16 %v1530
        %v1563 = vunpack.c.l.b16 %v1531
        %v1564 = vunpack.c.l.b16 %v1532
        %v1565 = vunpack.c.l.b16 %v1533
        %v1566 = vunpack.c.l.b16 %v1534
        %v1567 = vunpack.c.l.b16 %v1535
        %v1568 = vunpack.c.l.b16 %v1536
        %v1569 = vunpack.c.l.b16 %v1537
        %v1570 = vunpack.c.l.b16 %v1538
        %v1571 = vunpack.c.l.b16 %v1539
        %v1572 = vunpack.c.l.b16 %v1540
        %v1573 = vunpack.c.l.b16 %v1541
        %v1574 = vunpack.c.l.b16 %v1542
        %v1575 = vunpack.c.l.b16 %v1543
        %v1576 = vunpack.c.l.b16 %v1544
        %v1577 = vunpack.c.l.b16 %v1545
        %v1578 = vunpack.c.l.b16 %v1546
        %v1579 = vunpack.c.l.b16 %v1547
        %v1580 = vunpack.c.l.b16 %v1548
        %v1581 = vunpack.c.l.b16 %v1549
        %v1582 = vunpack.c.l.b16 %v1550
        %v1583 = vunpack.c.l.b16 %v1551
        %v1584 = vunpack.c.l.b16 %v1552
        %v1585 = vunpack.c.l.b16 %v1553
        %v1586 = vunpack.c.l.b16 %v1554
        %v1587 = vunpack.c.l.b16 %v1555
        %v1588 = vunpack.c.l.b16 %v1556
        %v1589 = vunpack.c.l.b16 %v1557
        %v1590 = vunpack.c.l.b16 %v1558
        %v1591 = vunpack.c.l.b16 %v1559
        %v1592 = vunpack.c.l.b16 %v1560
        %v1593 = vunpack.c.l.b16 %v1561
        %v1594 = vpack.c.b16 %v1563, %v1562
        %v1595 = vpack.c.b16 %v1565, %v1564
        %v1596 = vpack.c.b16 %v1567, %v1566
        %v1597 = vpack.c.b16 %v1569, %v1568
        %v1598 = vpack.c.b16 %v1571, %v1570
        %v1599 = vpack.c.b16 %v1573, %v1572
        %v1600 = vpack.c.b16 %v1575, %v1574
        %v1601 = vpack.c.b16 %v1577, %v1576
        %v1602 = vpack.c.b16 %v1579, %v1578
        %v1603 = vpack.c.b16 %v1581, %v1580
        %v1604 = vpack.c.b16 %v1583, %v1582
        %v1605 = vpack.c.b16 %v1585, %v1584
        %v1606 = vpack.c.b16 %v1587, %v1586
        %v1607 = vpack.c.b16 %v1589, %v1588
        %v1608 = vpack.c.b16 %v1591, %v1590
        %v1609 = vpack.c.b16 %v1593, %v1592
        %vm1610 = vsmask.f32 3328
        %v1612 = vshrl.u32 %v1594, 16
        %v1614 = vrot.slane %v1612, 4
        %v1615 = vshll.u32 %v1594, 16
        %v1617 = vrot.slane %v1615, 5
        %v1618 = vor.u32 %v1614, %v1617
        %v1620 = vshrl.u32 %v1595, 16
        %v1622 = vrot.slane %v1620, 4
        %v1623 = vshll.u32 %v1595, 16
        %v1625 = vrot.slane %v1623, 5
        %v1626 = vor.u32 %v1622, %v1625
        %v1627 = vsel %vm1610, %v1618, %v1626
        %v1629 = vshrl.u32 %v1596, 16
        %v1631 = vrot.slane %v1629, 4
        %v1632 = vshll.u32 %v1596, 16
        %v1634 = vrot.slane %v1632, 5
        %v1635 = vor.u32 %v1631, %v1634
        %v1636 = vsel %vm1610, %v1626, %v1635
        %v1638 = vshrl.u32 %v1597, 16
        %v1640 = vrot.slane %v1638, 4
        %v1641 = vshll.u32 %v1597, 16
        %v1643 = vrot.slane %v1641, 5
        %v1644 = vor.u32 %v1640, %v1643
        %v1645 = vsel %vm1610, %v1635, %v1644
        %v1647 = vshrl.u32 %v1598, 16
        %v1649 = vrot.slane %v1647, 4
        %v1650 = vshll.u32 %v1598, 16
        %v1652 = vrot.slane %v1650, 5
        %v1653 = vor.u32 %v1649, %v1652
        %v1654 = vsel %vm1610, %v1644, %v1653
        %v1656 = vshrl.u32 %v1599, 16
        %v1658 = vrot.slane %v1656, 4
        %v1659 = vshll.u32 %v1599, 16
        %v1661 = vrot.slane %v1659, 5
        %v1662 = vor.u32 %v1658, %v1661
        %v1663 = vsel %vm1610, %v1653, %v1662
        %v1665 = vshrl.u32 %v1600, 16
        %v1667 = vrot.slane %v1665, 4
        %v1668 = vshll.u32 %v1600, 16
        %v1670 = vrot.slane %v1668, 5
        %v1671 = vor.u32 %v1667, %v1670
        %v1672 = vsel %vm1610, %v1662, %v1671
        %v1674 = vshrl.u32 %v1601, 16
        %v1676 = vrot.slane %v1674, 4
        %v1677 = vshll.u32 %v1601, 16
        %v1679 = vrot.slane %v1677, 5
        %v1680 = vor.u32 %v1676, %v1679
        %v1681 = vsel %vm1610, %v1671, %v1680
        %v1683 = vshrl.u32 %v1602, 16
        %v1685 = vrot.slane %v1683, 4
        %v1686 = vshll.u32 %v1602, 16
        %v1688 = vrot.slane %v1686, 5
        %v1689 = vor.u32 %v1685, %v1688
        %v1690 = vsel %vm1610, %v1680, %v1689
        %v1692 = vshrl.u32 %v1603, 16
        %v1694 = vrot.slane %v1692, 4
        %v1695 = vshll.u32 %v1603, 16
        %v1697 = vrot.slane %v1695, 5
        %v1698 = vor.u32 %v1694, %v1697
        %v1699 = vsel %vm1610, %v1689, %v1698
        %v1701 = vshrl.u32 %v1604, 16
        %v1703 = vrot.slane %v1701, 4
        %v1704 = vshll.u32 %v1604, 16
        %v1706 = vrot.slane %v1704, 5
        %v1707 = vor.u32 %v1703, %v1706
        %v1708 = vsel %vm1610, %v1698, %v1707
        %v1710 = vshrl.u32 %v1605, 16
        %v1712 = vrot.slane %v1710, 4
        %v1713 = vshll.u32 %v1605, 16
        %v1715 = vrot.slane %v1713, 5
        %v1716 = vor.u32 %v1712, %v1715
        %v1717 = vsel %vm1610, %v1707, %v1716
        %v1719 = vshrl.u32 %v1606, 16
        %v1721 = vrot.slane %v1719, 4
        %v1722 = vshll.u32 %v1606, 16
        %v1724 = vrot.slane %v1722, 5
        %v1725 = vor.u32 %v1721, %v1724
        %v1726 = vsel %vm1610, %v1716, %v1725
        %v1728 = vshrl.u32 %v1607, 16
        %v1730 = vrot.slane %v1728, 4
        %v1731 = vshll.u32 %v1607, 16
        %v1733 = vrot.slane %v1731, 5
        %v1734 = vor.u32 %v1730, %v1733
        %v1735 = vsel %vm1610, %v1725, %v1734
        %v1737 = vshrl.u32 %v1608, 16
        %v1739 = vrot.slane %v1737, 4
        %v1740 = vshll.u32 %v1608, 16
        %v1742 = vrot.slane %v1740, 5
        %v1743 = vor.u32 %v1739, %v1742
        %v1744 = vsel %vm1610, %v1734, %v1743
        %v1746 = vshrl.u32 %v1609, 16
        %v1748 = vrot.slane %v1746, 4
        %v1749 = vshll.u32 %v1609, 16
        %v1751 = vrot.slane %v1749, 5
        %v1752 = vor.u32 %v1748, %v1751
        %v1753 = vsel %vm1610, %v1743, %v1752
        %v1754 = vunpack.c.l.b16 %v1627
        %v1755 = vunpack.c.h.b16 %v1627
        %v1756 = vunpack.c.l.b16 0
        %v1757 = vunpack.c.h.b16 0
        %vm1758 = vcmp.ne.s32.totalorder %v1754, %v1756
        %vm1759 = vcmp.ne.s32.totalorder %v1755, %v1757
        %vm1760 = vmpackc.low %vm1759, %vm1758
        %v1761 = vunpack.c.l.b16 %v1636
        %v1762 = vunpack.c.h.b16 %v1636
        %v1763 = vunpack.c.l.b16 0
        %v1764 = vunpack.c.h.b16 0
        %vm1765 = vcmp.ne.s32.totalorder %v1761, %v1763
        %vm1766 = vcmp.ne.s32.totalorder %v1762, %v1764
        %vm1767 = vmpackc.low %vm1766, %vm1765
        %v1768 = vunpack.c.l.b16 %v1645
        %v1769 = vunpack.c.h.b16 %v1645
        %v1770 = vunpack.c.l.b16 0
        %v1771 = vunpack.c.h.b16 0
        %vm1772 = vcmp.ne.s32.totalorder %v1768, %v1770
        %vm1773 = vcmp.ne.s32.totalorder %v1769, %v1771
        %vm1774 = vmpackc.low %vm1773, %vm1772
        %v1775 = vunpack.c.l.b16 %v1654
        %v1776 = vunpack.c.h.b16 %v1654
        %v1777 = vunpack.c.l.b16 0
        %v1778 = vunpack.c.h.b16 0
        %vm1779 = vcmp.ne.s32.totalorder %v1775, %v1777
        %vm1780 = vcmp.ne.s32.totalorder %v1776, %v1778
        %vm1781 = vmpackc.low %vm1780, %vm1779
        %v1782 = vunpack.c.l.b16 %v1663
        %v1783 = vunpack.c.h.b16 %v1663
        %v1784 = vunpack.c.l.b16 0
        %v1785 = vunpack.c.h.b16 0
        %vm1786 = vcmp.ne.s32.totalorder %v1782, %v1784
        %vm1787 = vcmp.ne.s32.totalorder %v1783, %v1785
        %vm1788 = vmpackc.low %vm1787, %vm1786
        %v1789 = vunpack.c.l.b16 %v1672
        %v1790 = vunpack.c.h.b16 %v1672
        %v1791 = vunpack.c.l.b16 0
        %v1792 = vunpack.c.h.b16 0
        %vm1793 = vcmp.ne.s32.totalorder %v1789, %v1791
        %vm1794 = vcmp.ne.s32.totalorder %v1790, %v1792
        %vm1795 = vmpackc.low %vm1794, %vm1793
        %v1796 = vunpack.c.l.b16 %v1681
        %v1797 = vunpack.c.h.b16 %v1681
        %v1798 = vunpack.c.l.b16 0
        %v1799 = vunpack.c.h.b16 0
        %vm1800 = vcmp.ne.s32.totalorder %v1796, %v1798
        %vm1801 = vcmp.ne.s32.totalorder %v1797, %v1799
        %vm1802 = vmpackc.low %vm1801, %vm1800
        %v1803 = vunpack.c.l.b16 %v1690
        %v1804 = vunpack.c.h.b16 %v1690
        %v1805 = vunpack.c.l.b16 0
        %v1806 = vunpack.c.h.b16 0
        %vm1807 = vcmp.ne.s32.totalorder %v1803, %v1805
        %vm1808 = vcmp.ne.s32.totalorder %v1804, %v1806
        %vm1809 = vmpackc.low %vm1808, %vm1807
        %v1810 = vunpack.c.l.b16 %v1699
        %v1811 = vunpack.c.h.b16 %v1699
        %v1812 = vunpack.c.l.b16 0
        %v1813 = vunpack.c.h.b16 0
        %vm1814 = vcmp.ne.s32.totalorder %v1810, %v1812
        %vm1815 = vcmp.ne.s32.totalorder %v1811, %v1813
        %vm1816 = vmpackc.low %vm1815, %vm1814
        %v1817 = vunpack.c.l.b16 %v1708
        %v1818 = vunpack.c.h.b16 %v1708
        %v1819 = vunpack.c.l.b16 0
        %v1820 = vunpack.c.h.b16 0
        %vm1821 = vcmp.ne.s32.totalorder %v1817, %v1819
        %vm1822 = vcmp.ne.s32.totalorder %v1818, %v1820
        %vm1823 = vmpackc.low %vm1822, %vm1821
        %v1824 = vunpack.c.l.b16 %v1717
        %v1825 = vunpack.c.h.b16 %v1717
        %v1826 = vunpack.c.l.b16 0
        %v1827 = vunpack.c.h.b16 0
        %vm1828 = vcmp.ne.s32.totalorder %v1824, %v1826
        %vm1829 = vcmp.ne.s32.totalorder %v1825, %v1827
        %vm1830 = vmpackc.low %vm1829, %vm1828
        %v1831 = vunpack.c.l.b16 %v1726
        %v1832 = vunpack.c.h.b16 %v1726
        %v1833 = vunpack.c.l.b16 0
        %v1834 = vunpack.c.h.b16 0
        %vm1835 = vcmp.ne.s32.totalorder %v1831, %v1833
        %vm1836 = vcmp.ne.s32.totalorder %v1832, %v1834
        %vm1837 = vmpackc.low %vm1836, %vm1835
        %v1838 = vunpack.c.l.b16 %v1735
        %v1839 = vunpack.c.h.b16 %v1735
        %v1840 = vunpack.c.l.b16 0
        %v1841 = vunpack.c.h.b16 0
        %vm1842 = vcmp.ne.s32.totalorder %v1838, %v1840
        %vm1843 = vcmp.ne.s32.totalorder %v1839, %v1841
        %vm1844 = vmpackc.low %vm1843, %vm1842
        %v1845 = vunpack.c.l.b16 %v1744
        %v1846 = vunpack.c.h.b16 %v1744
        %v1847 = vunpack.c.l.b16 0
        %v1848 = vunpack.c.h.b16 0
        %vm1849 = vcmp.ne.s32.totalorder %v1845, %v1847
        %vm1850 = vcmp.ne.s32.totalorder %v1846, %v1848
        %vm1851 = vmpackc.low %vm1850, %vm1849
        %v1852 = vunpack.c.l.b16 %v1753
        %v1853 = vunpack.c.h.b16 %v1753
        %v1854 = vunpack.c.l.b16 0
        %v1855 = vunpack.c.h.b16 0
        %vm1856 = vcmp.ne.s32.totalorder %v1852, %v1854
        %vm1857 = vcmp.ne.s32.totalorder %v1853, %v1855
        %vm1858 = vmpackc.low %vm1857, %vm1856
        %v1859 = vunpack.c.l.b16 %v1752
        %v1860 = vunpack.c.h.b16 %v1752
        %v1861 = vunpack.c.l.b16 0
        %v1862 = vunpack.c.h.b16 0
        %vm1863 = vcmp.ne.s32.totalorder %v1859, %v1861
        %vm1864 = vcmp.ne.s32.totalorder %v1860, %v1862
        %vm1865 = vmpackc.low %vm1864, %vm1863
        %v1866 = vsel %vm1760, %v948, 0
        %v1867 = vsel %vm1767, %v914, 0
        %v1868 = vsel %vm1774, %v915, 0
        %v1869 = vsel %vm1781, %v916, 0
        %v1870 = vsel %vm1788, %v917, 0
        %v1871 = vsel %vm1795, %v918, 0
        %v1872 = vsel %vm1802, %v919, 0
        %v1873 = vsel %vm1809, %v920, 0
        %v1874 = vsel %vm1816, %v921, 0
        %v1875 = vsel %vm1823, %v922, 0
        %v1876 = vsel %vm1830, %v923, 0
        %v1877 = vsel %vm1837, %v924, 0
        %v1878 = vsel %vm1844, %v925, 0
        %v1879 = vsel %vm1851, %v926, 0
        %v1880 = vsel %vm1858, %v927, 0
        %v1881 = vsel %vm1865, %v928, 0
        %vm1882 = vsmask.f32 7424
        %v1883 = vshrl.u32 0, 16
        %v1885 = vshll.u32 0, 16
        %v1887 = vrot.slane %v1885, 1
        %v1888 = vor.u32 %v1883, %v1887
        %v1889 = vshll.u32 %v948, 16
        %v1891 = vrot.slane %v1889, 1
        %v1892 = vsel %vm1882, %v1888, %v1891
        %v1893 = vshrl.u32 %v948, 16
        %v1895 = vor.u32 %v1893, %v1891
        %v1897 = vshll.u32 %v914, 16
        %v1899 = vrot.slane %v1897, 1
        %v1900 = vsel %vm1882, %v1895, %v1899
        %v1901 = vshrl.u32 %v914, 16
        %v1903 = vor.u32 %v1901, %v1899
        %v1905 = vshll.u32 %v915, 16
        %v1907 = vrot.slane %v1905, 1
        %v1908 = vsel %vm1882, %v1903, %v1907
        %v1909 = vshrl.u32 %v915, 16
        %v1911 = vor.u32 %v1909, %v1907
        %v1913 = vshll.u32 %v916, 16
        %v1915 = vrot.slane %v1913, 1
        %v1916 = vsel %vm1882, %v1911, %v1915
        %v1917 = vshrl.u32 %v916, 16
        %v1919 = vor.u32 %v1917, %v1915
        %v1921 = vshll.u32 %v917, 16
        %v1923 = vrot.slane %v1921, 1
        %v1924 = vsel %vm1882, %v1919, %v1923
        %v1925 = vshrl.u32 %v917, 16
        %v1927 = vor.u32 %v1925, %v1923
        %v1929 = vshll.u32 %v918, 16
        %v1931 = vrot.slane %v1929, 1
        %v1932 = vsel %vm1882, %v1927, %v1931
        %v1933 = vshrl.u32 %v918, 16
        %v1935 = vor.u32 %v1933, %v1931
        %v1937 = vshll.u32 %v919, 16
        %v1939 = vrot.slane %v1937, 1
        %v1940 = vsel %vm1882, %v1935, %v1939
        %v1941 = vshrl.u32 %v919, 16
        %v1943 = vor.u32 %v1941, %v1939
        %v1945 = vshll.u32 %v920, 16
        %v1947 = vrot.slane %v1945, 1
        %v1948 = vsel %vm1882, %v1943, %v1947
        %v1949 = vshrl.u32 %v920, 16
        %v1951 = vor.u32 %v1949, %v1947
        %v1953 = vshll.u32 %v921, 16
        %v1955 = vrot.slane %v1953, 1
        %v1956 = vsel %vm1882, %v1951, %v1955
        %v1957 = vshrl.u32 %v921, 16
        %v1959 = vor.u32 %v1957, %v1955
        %v1961 = vshll.u32 %v922, 16
        %v1963 = vrot.slane %v1961, 1
        %v1964 = vsel %vm1882, %v1959, %v1963
        %v1965 = vshrl.u32 %v922, 16
        %v1967 = vor.u32 %v1965, %v1963
        %v1969 = vshll.u32 %v923, 16
        %v1971 = vrot.slane %v1969, 1
        %v1972 = vsel %vm1882, %v1967, %v1971
        %v1973 = vshrl.u32 %v923, 16
        %v1975 = vor.u32 %v1973, %v1971
        %v1977 = vshll.u32 %v924, 16
        %v1979 = vrot.slane %v1977, 1
        %v1980 = vsel %vm1882, %v1975, %v1979
        %v1981 = vshrl.u32 %v924, 16
        %v1983 = vor.u32 %v1981, %v1979
        %v1985 = vshll.u32 %v925, 16
        %v1987 = vrot.slane %v1985, 1
        %v1988 = vsel %vm1882, %v1983, %v1987
        %v1989 = vshrl.u32 %v925, 16
        %v1991 = vor.u32 %v1989, %v1987
        %v1993 = vshll.u32 %v926, 16
        %v1995 = vrot.slane %v1993, 1
        %v1996 = vsel %vm1882, %v1991, %v1995
        %v1997 = vshrl.u32 %v926, 16
        %v1999 = vor.u32 %v1997, %v1995
        %v2001 = vshll.u32 %v927, 16
        %v2003 = vrot.slane %v2001, 1
        %v2004 = vsel %vm1882, %v1999, %v2003
        %v2005 = vshrl.u32 %v927, 16
        %v2007 = vor.u32 %v2005, %v2003
        %v2009 = vshll.u32 %v928, 16
        %v2011 = vrot.slane %v2009, 1
        %v2012 = vsel %vm1882, %v2007, %v2011
        %v2013 = vshrl.u32 %v928, 16
        %v2015 = vor.u32 %v2013, %v2011
        %v2016 = vld [vmem:[#allocation5] sm:$0xf]
        %v2017 = vld [vmem:[#allocation5 + $0x4] sm:$0xf]
        %v2018 = vld [vmem:[#allocation5 + $0x8] sm:$0xf]
        %v2019 = vld [vmem:[#allocation5 + $0xc] sm:$0xf]
        %v2020 = vld [vmem:[#allocation5 + $0x10] sm:$0xf]
        %v2021 = vld [vmem:[#allocation5 + $0x14] sm:$0xf]
        %v2022 = vld [vmem:[#allocation5 + $0x18] sm:$0xf]
        %v2023 = vld [vmem:[#allocation5 + $0x1c] sm:$0xf]
        %v2024 = vld [vmem:[#allocation5 + $0x20] sm:$0xf]
        %v2025 = vld [vmem:[#allocation5 + $0x24] sm:$0xf]
        %v2026 = vld [vmem:[#allocation5 + $0x28] sm:$0xf]
        %v2027 = vld [vmem:[#allocation5 + $0x2c] sm:$0xf]
        %v2028 = vld [vmem:[#allocation5 + $0x30] sm:$0xf]
        %v2029 = vld [vmem:[#allocation5 + $0x34] sm:$0xf]
        %v2030 = vld [vmem:[#allocation5 + $0x38] sm:$0xf]
        %v2031 = vld [vmem:[#allocation5 + $0x3c] sm:$0xf]
        %v2032 = vld [vmem:[#allocation5 + $0x40] sm:$0xf]
        %v2033 = vld [vmem:[#allocation5 + $0x44] sm:$0xf]
        %v2034 = vld [vmem:[#allocation5 + $0x48] sm:$0xf]
        %v2035 = vld [vmem:[#allocation5 + $0x4c] sm:$0xf]
        %v2036 = vld [vmem:[#allocation5 + $0x50] sm:$0xf]
        %v2037 = vld [vmem:[#allocation5 + $0x54] sm:$0xf]
        %v2038 = vld [vmem:[#allocation5 + $0x58] sm:$0xf]
        %v2039 = vld [vmem:[#allocation5 + $0x5c] sm:$0xf]
        %v2040 = vld [vmem:[#allocation5 + $0x60] sm:$0xf]
        %v2041 = vld [vmem:[#allocation5 + $0x64] sm:$0xf]
        %v2042 = vld [vmem:[#allocation5 + $0x68] sm:$0xf]
        %v2043 = vld [vmem:[#allocation5 + $0x6c] sm:$0xf]
        %v2044 = vld [vmem:[#allocation5 + $0x70] sm:$0xf]
        %v2045 = vld [vmem:[#allocation5 + $0x74] sm:$0xf]
        %v2046 = vld [vmem:[#allocation5 + $0x78] sm:$0xf]
        %v2047 = vld [vmem:[#allocation5 + $0x7c] sm:$0xf]
        %v2048 = vsel %vm1402, 1, 0
        %v2049 = vsel %vm1403, 1, 0
        %v2050 = vsel %vm1404, 1, 0
        %v2051 = vsel %vm1405, 1, 0
        %v2052 = vsel %vm1406, 1, 0
        %v2053 = vsel %vm1407, 1, 0
        %v2054 = vsel %vm1408, 1, 0
        %v2055 = vsel %vm1409, 1, 0
        %v2056 = vsel %vm1410, 1, 0
        %v2057 = vsel %vm1411, 1, 0
        %v2058 = vsel %vm1412, 1, 0
        %v2059 = vsel %vm1413, 1, 0
        %v2060 = vsel %vm1414, 1, 0
        %v2061 = vsel %vm1415, 1, 0
        %v2062 = vsel %vm1416, 1, 0
        %v2063 = vsel %vm1417, 1, 0
        %v2064 = vsel %vm1418, 1, 0
        %v2065 = vsel %vm1419, 1, 0
        %v2066 = vsel %vm1420, 1, 0
        %v2067 = vsel %vm1421, 1, 0
        %v2068 = vsel %vm1422, 1, 0
        %v2069 = vsel %vm1423, 1, 0
        %v2070 = vsel %vm1424, 1, 0
        %v2071 = vsel %vm1425, 1, 0
        %v2072 = vsel %vm1426, 1, 0
        %v2073 = vsel %vm1427, 1, 0
        %v2074 = vsel %vm1428, 1, 0
        %v2075 = vsel %vm1429, 1, 0
        %v2076 = vsel %vm1430, 1, 0
        %v2077 = vsel %vm1431, 1, 0
        %v2078 = vsel %vm1432, 1, 0
        %v2079 = vsel %vm1433, 1, 0
        %vm2080 = vcmp.eq.s32.totalorder %v2048, 1
        %vm2081 = vcmp.eq.s32.totalorder %v2049, 1
        %vm2082 = vcmp.eq.s32.totalorder %v2050, 1
        %vm2083 = vcmp.eq.s32.totalorder %v2051, 1
        %vm2084 = vcmp.eq.s32.totalorder %v2052, 1
        %vm2085 = vcmp.eq.s32.totalorder %v2053, 1
        %vm2086 = vcmp.eq.s32.totalorder %v2054, 1
        %vm2087 = vcmp.eq.s32.totalorder %v2055, 1
        %vm2088 = vcmp.eq.s32.totalorder %v2056, 1
        %vm2089 = vcmp.eq.s32.totalorder %v2057, 1
        %vm2090 = vcmp.eq.s32.totalorder %v2058, 1
        %vm2091 = vcmp.eq.s32.totalorder %v2059, 1
        %vm2092 = vcmp.eq.s32.totalorder %v2060, 1
        %vm2093 = vcmp.eq.s32.totalorder %v2061, 1
        %vm2094 = vcmp.eq.s32.totalorder %v2062, 1
        %vm2095 = vcmp.eq.s32.totalorder %v2063, 1
        %vm2096 = vcmp.eq.s32.totalorder %v2064, 1
        %vm2097 = vcmp.eq.s32.totalorder %v2065, 1
        %vm2098 = vcmp.eq.s32.totalorder %v2066, 1
        %vm2099 = vcmp.eq.s32.totalorder %v2067, 1
        %vm2100 = vcmp.eq.s32.totalorder %v2068, 1
        %vm2101 = vcmp.eq.s32.totalorder %v2069, 1
        %vm2102 = vcmp.eq.s32.totalorder %v2070, 1
        %vm2103 = vcmp.eq.s32.totalorder %v2071, 1
        %vm2104 = vcmp.eq.s32.totalorder %v2072, 1
        %vm2105 = vcmp.eq.s32.totalorder %v2073, 1
        %vm2106 = vcmp.eq.s32.totalorder %v2074, 1
        %vm2107 = vcmp.eq.s32.totalorder %v2075, 1
        %vm2108 = vcmp.eq.s32.totalorder %v2076, 1
        %vm2109 = vcmp.eq.s32.totalorder %v2077, 1
        %vm2110 = vcmp.eq.s32.totalorder %v2078, 1
        %vm2111 = vcmp.eq.s32.totalorder %v2079, 1
        %vm2112 = vmpackc.low %vm2080, %vm2080
        %vm2113 = vmpackc.low %vm2081, %vm2081
        %vm2114 = vmpackc.low %vm2082, %vm2082
        %vm2115 = vmpackc.low %vm2083, %vm2083
        %vm2116 = vmpackc.low %vm2084, %vm2084
        %vm2117 = vmpackc.low %vm2085, %vm2085
        %vm2118 = vmpackc.low %vm2086, %vm2086
        %vm2119 = vmpackc.low %vm2087, %vm2087
        %vm2120 = vmpackc.low %vm2088, %vm2088
        %vm2121 = vmpackc.low %vm2089, %vm2089
        %vm2122 = vmpackc.low %vm2090, %vm2090
        %vm2123 = vmpackc.low %vm2091, %vm2091
        %vm2124 = vmpackc.low %vm2092, %vm2092
        %vm2125 = vmpackc.low %vm2093, %vm2093
        %vm2126 = vmpackc.low %vm2094, %vm2094
        %vm2127 = vmpackc.low %vm2095, %vm2095
        %vm2128 = vmpackc.low %vm2096, %vm2096
        %vm2129 = vmpackc.low %vm2097, %vm2097
        %vm2130 = vmpackc.low %vm2098, %vm2098
        %vm2131 = vmpackc.low %vm2099, %vm2099
        %vm2132 = vmpackc.low %vm2100, %vm2100
        %vm2133 = vmpackc.low %vm2101, %vm2101
        %vm2134 = vmpackc.low %vm2102, %vm2102
        %vm2135 = vmpackc.low %vm2103, %vm2103
        %vm2136 = vmpackc.low %vm2104, %vm2104
        %vm2137 = vmpackc.low %vm2105, %vm2105
        %vm2138 = vmpackc.low %vm2106, %vm2106
        %vm2139 = vmpackc.low %vm2107, %vm2107
        %vm2140 = vmpackc.low %vm2108, %vm2108
        %vm2141 = vmpackc.low %vm2109, %vm2109
        %vm2142 = vmpackc.low %vm2110, %vm2110
        %vm2143 = vmpackc.low %vm2111, %vm2111
        %v2144 = vsel %vm2112, 65537, 0
        %v2145 = vsel %vm2113, 65537, 0
        %v2146 = vsel %vm2114, 65537, 0
        %v2147 = vsel %vm2115, 65537, 0
        %v2148 = vsel %vm2116, 65537, 0
        %v2149 = vsel %vm2117, 65537, 0
        %v2150 = vsel %vm2118, 65537, 0
        %v2151 = vsel %vm2119, 65537, 0
        %v2152 = vsel %vm2120, 65537, 0
        %v2153 = vsel %vm2121, 65537, 0
        %v2154 = vsel %vm2122, 65537, 0
        %v2155 = vsel %vm2123, 65537, 0
        %v2156 = vsel %vm2124, 65537, 0
        %v2157 = vsel %vm2125, 65537, 0
        %v2158 = vsel %vm2126, 65537, 0
        %v2159 = vsel %vm2127, 65537, 0
        %v2160 = vsel %vm2128, 65537, 0
        %v2161 = vsel %vm2129, 65537, 0
        %v2162 = vsel %vm2130, 65537, 0
        %v2163 = vsel %vm2131, 65537, 0
        %v2164 = vsel %vm2132, 65537, 0
        %v2165 = vsel %vm2133, 65537, 0
        %v2166 = vsel %vm2134, 65537, 0
        %v2167 = vsel %vm2135, 65537, 0
        %v2168 = vsel %vm2136, 65537, 0
        %v2169 = vsel %vm2137, 65537, 0
        %v2170 = vsel %vm2138, 65537, 0
        %v2171 = vsel %vm2139, 65537, 0
        %v2172 = vsel %vm2140, 65537, 0
        %v2173 = vsel %vm2141, 65537, 0
        %v2174 = vsel %vm2142, 65537, 0
        %v2175 = vsel %vm2143, 65537, 0
        %v2176 = vunpack.c.l.b16 %v2144
        %v2177 = vunpack.c.l.b16 %v2145
        %v2178 = vunpack.c.l.b16 %v2146
        %v2179 = vunpack.c.l.b16 %v2147
        %v2180 = vunpack.c.l.b16 %v2148
        %v2181 = vunpack.c.l.b16 %v2149
        %v2182 = vunpack.c.l.b16 %v2150
        %v2183 = vunpack.c.l.b16 %v2151
        %v2184 = vunpack.c.l.b16 %v2152
        %v2185 = vunpack.c.l.b16 %v2153
        %v2186 = vunpack.c.l.b16 %v2154
        %v2187 = vunpack.c.l.b16 %v2155
        %v2188 = vunpack.c.l.b16 %v2156
        %v2189 = vunpack.c.l.b16 %v2157
        %v2190 = vunpack.c.l.b16 %v2158
        %v2191 = vunpack.c.l.b16 %v2159
        %v2192 = vunpack.c.l.b16 %v2160
        %v2193 = vunpack.c.l.b16 %v2161
        %v2194 = vunpack.c.l.b16 %v2162
        %v2195 = vunpack.c.l.b16 %v2163
        %v2196 = vunpack.c.l.b16 %v2164
        %v2197 = vunpack.c.l.b16 %v2165
        %v2198 = vunpack.c.l.b16 %v2166
        %v2199 = vunpack.c.l.b16 %v2167
        %v2200 = vunpack.c.l.b16 %v2168
        %v2201 = vunpack.c.l.b16 %v2169
        %v2202 = vunpack.c.l.b16 %v2170
        %v2203 = vunpack.c.l.b16 %v2171
        %v2204 = vunpack.c.l.b16 %v2172
        %v2205 = vunpack.c.l.b16 %v2173
        %v2206 = vunpack.c.l.b16 %v2174
        %v2207 = vunpack.c.l.b16 %v2175
        %v2208 = vpack.c.b16 %v2177, %v2176
        %v2209 = vpack.c.b16 %v2179, %v2178
        %v2210 = vpack.c.b16 %v2181, %v2180
        %v2211 = vpack.c.b16 %v2183, %v2182
        %v2212 = vpack.c.b16 %v2185, %v2184
        %v2213 = vpack.c.b16 %v2187, %v2186
        %v2214 = vpack.c.b16 %v2189, %v2188
        %v2215 = vpack.c.b16 %v2191, %v2190
        %v2216 = vpack.c.b16 %v2193, %v2192
        %v2217 = vpack.c.b16 %v2195, %v2194
        %v2218 = vpack.c.b16 %v2197, %v2196
        %v2219 = vpack.c.b16 %v2199, %v2198
        %v2220 = vpack.c.b16 %v2201, %v2200
        %v2221 = vpack.c.b16 %v2203, %v2202
        %v2222 = vpack.c.b16 %v2205, %v2204
        %v2223 = vpack.c.b16 %v2207, %v2206
        %vm2224 = vsmask.f32 4352
        %v2226 = vshrl.u32 %v2208, 16
        %v2228 = vrot.slane %v2226, 3
        %v2229 = vshll.u32 %v2208, 16
        %v2231 = vrot.slane %v2229, 4
        %v2232 = vor.u32 %v2228, %v2231
        %v2234 = vshrl.u32 %v2209, 16
        %v2236 = vrot.slane %v2234, 3
        %v2237 = vshll.u32 %v2209, 16
        %v2239 = vrot.slane %v2237, 4
        %v2240 = vor.u32 %v2236, %v2239
        %v2241 = vsel %vm2224, %v2232, %v2240
        %v2243 = vshrl.u32 %v2210, 16
        %v2245 = vrot.slane %v2243, 3
        %v2246 = vshll.u32 %v2210, 16
        %v2248 = vrot.slane %v2246, 4
        %v2249 = vor.u32 %v2245, %v2248
        %v2250 = vsel %vm2224, %v2240, %v2249
        %v2252 = vshrl.u32 %v2211, 16
        %v2254 = vrot.slane %v2252, 3
        %v2255 = vshll.u32 %v2211, 16
        %v2257 = vrot.slane %v2255, 4
        %v2258 = vor.u32 %v2254, %v2257
        %v2259 = vsel %vm2224, %v2249, %v2258
        %v2261 = vshrl.u32 %v2212, 16
        %v2263 = vrot.slane %v2261, 3
        %v2264 = vshll.u32 %v2212, 16
        %v2266 = vrot.slane %v2264, 4
        %v2267 = vor.u32 %v2263, %v2266
        %v2268 = vsel %vm2224, %v2258, %v2267
        %v2270 = vshrl.u32 %v2213, 16
        %v2272 = vrot.slane %v2270, 3
        %v2273 = vshll.u32 %v2213, 16
        %v2275 = vrot.slane %v2273, 4
        %v2276 = vor.u32 %v2272, %v2275
        %v2277 = vsel %vm2224, %v2267, %v2276
        %v2279 = vshrl.u32 %v2214, 16
        %v2281 = vrot.slane %v2279, 3
        %v2282 = vshll.u32 %v2214, 16
        %v2284 = vrot.slane %v2282, 4
        %v2285 = vor.u32 %v2281, %v2284
        %v2286 = vsel %vm2224, %v2276, %v2285
        %v2288 = vshrl.u32 %v2215, 16
        %v2290 = vrot.slane %v2288, 3
        %v2291 = vshll.u32 %v2215, 16
        %v2293 = vrot.slane %v2291, 4
        %v2294 = vor.u32 %v2290, %v2293
        %v2295 = vsel %vm2224, %v2285, %v2294
        %v2297 = vshrl.u32 %v2216, 16
        %v2299 = vrot.slane %v2297, 3
        %v2300 = vshll.u32 %v2216, 16
        %v2302 = vrot.slane %v2300, 4
        %v2303 = vor.u32 %v2299, %v2302
        %v2304 = vsel %vm2224, %v2294, %v2303
        %v2306 = vshrl.u32 %v2217, 16
        %v2308 = vrot.slane %v2306, 3
        %v2309 = vshll.u32 %v2217, 16
        %v2311 = vrot.slane %v2309, 4
        %v2312 = vor.u32 %v2308, %v2311
        %v2313 = vsel %vm2224, %v2303, %v2312
        %v2315 = vshrl.u32 %v2218, 16
        %v2317 = vrot.slane %v2315, 3
        %v2318 = vshll.u32 %v2218, 16
        %v2320 = vrot.slane %v2318, 4
        %v2321 = vor.u32 %v2317, %v2320
        %v2322 = vsel %vm2224, %v2312, %v2321
        %v2324 = vshrl.u32 %v2219, 16
        %v2326 = vrot.slane %v2324, 3
        %v2327 = vshll.u32 %v2219, 16
        %v2329 = vrot.slane %v2327, 4
        %v2330 = vor.u32 %v2326, %v2329
        %v2331 = vsel %vm2224, %v2321, %v2330
        %v2333 = vshrl.u32 %v2220, 16
        %v2335 = vrot.slane %v2333, 3
        %v2336 = vshll.u32 %v2220, 16
        %v2338 = vrot.slane %v2336, 4
        %v2339 = vor.u32 %v2335, %v2338
        %v2340 = vsel %vm2224, %v2330, %v2339
        %v2342 = vshrl.u32 %v2221, 16
        %v2344 = vrot.slane %v2342, 3
        %v2345 = vshll.u32 %v2221, 16
        %v2347 = vrot.slane %v2345, 4
        %v2348 = vor.u32 %v2344, %v2347
        %v2349 = vsel %vm2224, %v2339, %v2348
        %v2351 = vshrl.u32 %v2222, 16
        %v2353 = vrot.slane %v2351, 3
        %v2354 = vshll.u32 %v2222, 16
        %v2356 = vrot.slane %v2354, 4
        %v2357 = vor.u32 %v2353, %v2356
        %v2358 = vsel %vm2224, %v2348, %v2357
        %v2360 = vshrl.u32 %v2223, 16
        %v2362 = vrot.slane %v2360, 3
        %v2363 = vshll.u32 %v2223, 16
        %v2365 = vrot.slane %v2363, 4
        %v2366 = vor.u32 %v2362, %v2365
        %v2367 = vsel %vm2224, %v2357, %v2366
        %v2368 = vunpack.c.l.b16 %v2241
        %v2369 = vunpack.c.h.b16 %v2241
        %v2370 = vunpack.c.l.b16 0
        %v2371 = vunpack.c.h.b16 0
        %vm2372 = vcmp.ne.s32.totalorder %v2368, %v2370
        %vm2373 = vcmp.ne.s32.totalorder %v2369, %v2371
        %vm2374 = vmpackc.low %vm2373, %vm2372
        %v2375 = vunpack.c.l.b16 %v2250
        %v2376 = vunpack.c.h.b16 %v2250
        %v2377 = vunpack.c.l.b16 0
        %v2378 = vunpack.c.h.b16 0
        %vm2379 = vcmp.ne.s32.totalorder %v2375, %v2377
        %vm2380 = vcmp.ne.s32.totalorder %v2376, %v2378
        %vm2381 = vmpackc.low %vm2380, %vm2379
        %v2382 = vunpack.c.l.b16 %v2259
        %v2383 = vunpack.c.h.b16 %v2259
        %v2384 = vunpack.c.l.b16 0
        %v2385 = vunpack.c.h.b16 0
        %vm2386 = vcmp.ne.s32.totalorder %v2382, %v2384
        %vm2387 = vcmp.ne.s32.totalorder %v2383, %v2385
        %vm2388 = vmpackc.low %vm2387, %vm2386
        %v2389 = vunpack.c.l.b16 %v2268
        %v2390 = vunpack.c.h.b16 %v2268
        %v2391 = vunpack.c.l.b16 0
        %v2392 = vunpack.c.h.b16 0
        %vm2393 = vcmp.ne.s32.totalorder %v2389, %v2391
        %vm2394 = vcmp.ne.s32.totalorder %v2390, %v2392
        %vm2395 = vmpackc.low %vm2394, %vm2393
        %v2396 = vunpack.c.l.b16 %v2277
        %v2397 = vunpack.c.h.b16 %v2277
        %v2398 = vunpack.c.l.b16 0
        %v2399 = vunpack.c.h.b16 0
        %vm2400 = vcmp.ne.s32.totalorder %v2396, %v2398
        %vm2401 = vcmp.ne.s32.totalorder %v2397, %v2399
        %vm2402 = vmpackc.low %vm2401, %vm2400
        %v2403 = vunpack.c.l.b16 %v2286
        %v2404 = vunpack.c.h.b16 %v2286
        %v2405 = vunpack.c.l.b16 0
        %v2406 = vunpack.c.h.b16 0
        %vm2407 = vcmp.ne.s32.totalorder %v2403, %v2405
        %vm2408 = vcmp.ne.s32.totalorder %v2404, %v2406
        %vm2409 = vmpackc.low %vm2408, %vm2407
        %v2410 = vunpack.c.l.b16 %v2295
        %v2411 = vunpack.c.h.b16 %v2295
        %v2412 = vunpack.c.l.b16 0
        %v2413 = vunpack.c.h.b16 0
        %vm2414 = vcmp.ne.s32.totalorder %v2410, %v2412
        %vm2415 = vcmp.ne.s32.totalorder %v2411, %v2413
        %vm2416 = vmpackc.low %vm2415, %vm2414
        %v2417 = vunpack.c.l.b16 %v2304
        %v2418 = vunpack.c.h.b16 %v2304
        %v2419 = vunpack.c.l.b16 0
        %v2420 = vunpack.c.h.b16 0
        %vm2421 = vcmp.ne.s32.totalorder %v2417, %v2419
        %vm2422 = vcmp.ne.s32.totalorder %v2418, %v2420
        %vm2423 = vmpackc.low %vm2422, %vm2421
        %v2424 = vunpack.c.l.b16 %v2313
        %v2425 = vunpack.c.h.b16 %v2313
        %v2426 = vunpack.c.l.b16 0
        %v2427 = vunpack.c.h.b16 0
        %vm2428 = vcmp.ne.s32.totalorder %v2424, %v2426
        %vm2429 = vcmp.ne.s32.totalorder %v2425, %v2427
        %vm2430 = vmpackc.low %vm2429, %vm2428
        %v2431 = vunpack.c.l.b16 %v2322
        %v2432 = vunpack.c.h.b16 %v2322
        %v2433 = vunpack.c.l.b16 0
        %v2434 = vunpack.c.h.b16 0
        %vm2435 = vcmp.ne.s32.totalorder %v2431, %v2433
        %vm2436 = vcmp.ne.s32.totalorder %v2432, %v2434
        %vm2437 = vmpackc.low %vm2436, %vm2435
        %v2438 = vunpack.c.l.b16 %v2331
        %v2439 = vunpack.c.h.b16 %v2331
        %v2440 = vunpack.c.l.b16 0
        %v2441 = vunpack.c.h.b16 0
        %vm2442 = vcmp.ne.s32.totalorder %v2438, %v2440
        %vm2443 = vcmp.ne.s32.totalorder %v2439, %v2441
        %vm2444 = vmpackc.low %vm2443, %vm2442
        %v2445 = vunpack.c.l.b16 %v2340
        %v2446 = vunpack.c.h.b16 %v2340
        %v2447 = vunpack.c.l.b16 0
        %v2448 = vunpack.c.h.b16 0
        %vm2449 = vcmp.ne.s32.totalorder %v2445, %v2447
        %vm2450 = vcmp.ne.s32.totalorder %v2446, %v2448
        %vm2451 = vmpackc.low %vm2450, %vm2449
        %v2452 = vunpack.c.l.b16 %v2349
        %v2453 = vunpack.c.h.b16 %v2349
        %v2454 = vunpack.c.l.b16 0
        %v2455 = vunpack.c.h.b16 0
        %vm2456 = vcmp.ne.s32.totalorder %v2452, %v2454
        %vm2457 = vcmp.ne.s32.totalorder %v2453, %v2455
        %vm2458 = vmpackc.low %vm2457, %vm2456
        %v2459 = vunpack.c.l.b16 %v2358
        %v2460 = vunpack.c.h.b16 %v2358
        %v2461 = vunpack.c.l.b16 0
        %v2462 = vunpack.c.h.b16 0
        %vm2463 = vcmp.ne.s32.totalorder %v2459, %v2461
        %vm2464 = vcmp.ne.s32.totalorder %v2460, %v2462
        %vm2465 = vmpackc.low %vm2464, %vm2463
        %v2466 = vunpack.c.l.b16 %v2367
        %v2467 = vunpack.c.h.b16 %v2367
        %v2468 = vunpack.c.l.b16 0
        %v2469 = vunpack.c.h.b16 0
        %vm2470 = vcmp.ne.s32.totalorder %v2466, %v2468
        %vm2471 = vcmp.ne.s32.totalorder %v2467, %v2469
        %vm2472 = vmpackc.low %vm2471, %vm2470
        %v2473 = vunpack.c.l.b16 %v2366
        %v2474 = vunpack.c.h.b16 %v2366
        %v2475 = vunpack.c.l.b16 0
        %v2476 = vunpack.c.h.b16 0
        %vm2477 = vcmp.ne.s32.totalorder %v2473, %v2475
        %vm2478 = vcmp.ne.s32.totalorder %v2474, %v2476
        %vm2479 = vmpackc.low %vm2478, %vm2477
        %v2480 = vsel %vm2374, %v948, 0
        %v2481 = vsel %vm2381, %v914, 0
        %v2482 = vsel %vm2388, %v915, 0
        %v2483 = vsel %vm2395, %v916, 0
        %v2484 = vsel %vm2402, %v917, 0
        %v2485 = vsel %vm2409, %v918, 0
        %v2486 = vsel %vm2416, %v919, 0
        %v2487 = vsel %vm2423, %v920, 0
        %v2488 = vsel %vm2430, %v921, 0
        %v2489 = vsel %vm2437, %v922, 0
        %v2490 = vsel %vm2444, %v923, 0
        %v2491 = vsel %vm2451, %v924, 0
        %v2492 = vsel %vm2458, %v925, 0
        %v2493 = vsel %vm2465, %v926, 0
        %v2494 = vsel %vm2472, %v927, 0
        %v2495 = vsel %vm2479, %v928, 0
        %v2496 = vunpack.c.l.b16 %v1618
        %v2497 = vunpack.c.h.b16 %v1618
        %v2498 = vunpack.c.l.b16 0
        %v2499 = vunpack.c.h.b16 0
        %vm2500 = vcmp.ne.s32.totalorder %v2496, %v2498
        %vm2501 = vcmp.ne.s32.totalorder %v2497, %v2499
        %vm2502 = vmpackc.low %vm2501, %vm2500
        %v2503 = vsel %vm2502, %v948, 0
        %v2504 = vsel %vm1760, %v914, 0
        %v2505 = vsel %vm1767, %v915, 0
        %v2506 = vsel %vm1774, %v916, 0
        %v2507 = vsel %vm1781, %v917, 0
        %v2508 = vsel %vm1788, %v918, 0
        %v2509 = vsel %vm1795, %v919, 0
        %v2510 = vsel %vm1802, %v920, 0
        %v2511 = vsel %vm1809, %v921, 0
        %v2512 = vsel %vm1816, %v922, 0
        %v2513 = vsel %vm1823, %v923, 0
        %v2514 = vsel %vm1830, %v924, 0
        %v2515 = vsel %vm1837, %v925, 0
        %v2516 = vsel %vm1844, %v926, 0
        %v2517 = vsel %vm1851, %v927, 0
        %v2518 = vsel %vm1858, %v928, 0
        %v2519 = vsel %vm1865, %v951, 0
        %vm2537 = vcmask 1040384
        %v2538 = vrot.slane %v2503, 7
        %v2539 = vrot.slane %v2504, 7
        %v2540 = vsel %vm2537, %v2538, %v2539
        %v2541 = vrot.slane %v2505, 7
        %v2542 = vsel %vm2537, %v2539, %v2541
        %v2543 = vrot.slane %v2506, 7
        %v2544 = vsel %vm2537, %v2541, %v2543
        %v2545 = vrot.slane %v2507, 7
        %v2546 = vsel %vm2537, %v2543, %v2545
        %v2547 = vrot.slane %v2508, 7
        %v2548 = vsel %vm2537, %v2545, %v2547
        %v2549 = vrot.slane %v2509, 7
        %v2550 = vsel %vm2537, %v2547, %v2549
        %v2551 = vrot.slane %v2510, 7
        %v2552 = vsel %vm2537, %v2549, %v2551
        %v2553 = vrot.slane %v2511, 7
        %v2554 = vsel %vm2537, %v2551, %v2553
        %v2555 = vrot.slane %v2512, 7
        %v2556 = vsel %vm2537, %v2553, %v2555
        %v2557 = vrot.slane %v2513, 7
        %v2558 = vsel %vm2537, %v2555, %v2557
        %v2559 = vrot.slane %v2514, 7
        %v2560 = vsel %vm2537, %v2557, %v2559
        %v2561 = vrot.slane %v2515, 7
        %v2562 = vsel %vm2537, %v2559, %v2561
        %v2563 = vrot.slane %v2516, 7
        %v2564 = vsel %vm2537, %v2561, %v2563
        %v2565 = vrot.slane %v2517, 7
        %v2566 = vsel %vm2537, %v2563, %v2565
        %v2567 = vrot.slane %v2518, 7
        %v2568 = vsel %vm2537, %v2565, %v2567
        %v2569 = vrot.slane %v2519, 7
        %v2570 = vsel %vm2537, %v2567, %v2569
        %v2571 = vld [vmem:[#allocation5 + $0x80] sm:$0xf]
        %v2572 = vld [vmem:[#allocation5 + $0x84] sm:$0xf]
        %v2573 = vld [vmem:[#allocation5 + $0x88] sm:$0xf]
        %v2574 = vld [vmem:[#allocation5 + $0x8c] sm:$0xf]
        %v2575 = vld [vmem:[#allocation5 + $0x90] sm:$0xf]
        %v2576 = vld [vmem:[#allocation5 + $0x94] sm:$0xf]
        %v2577 = vld [vmem:[#allocation5 + $0x98] sm:$0xf]
        %v2578 = vld [vmem:[#allocation5 + $0x9c] sm:$0xf]
        %v2579 = vld [vmem:[#allocation5 + $0xa0] sm:$0xf]
        %v2580 = vld [vmem:[#allocation5 + $0xa4] sm:$0xf]
        %v2581 = vld [vmem:[#allocation5 + $0xa8] sm:$0xf]
        %v2582 = vld [vmem:[#allocation5 + $0xac] sm:$0xf]
        %v2583 = vld [vmem:[#allocation5 + $0xb0] sm:$0xf]
        %v2584 = vld [vmem:[#allocation5 + $0xb4] sm:$0xf]
        %v2585 = vld [vmem:[#allocation5 + $0xb8] sm:$0xf]
        %v2586 = vld [vmem:[#allocation5 + $0xbc] sm:$0xf]
        %v2587 = vld [vmem:[#allocation5 + $0xc0] sm:$0xf]
        %v2588 = vld [vmem:[#allocation5 + $0xc4] sm:$0xf]
        %v2589 = vld [vmem:[#allocation5 + $0xc8] sm:$0xf]
        %v2590 = vld [vmem:[#allocation5 + $0xcc] sm:$0xf]
        %v2591 = vld [vmem:[#allocation5 + $0xd0] sm:$0xf]
        %v2592 = vld [vmem:[#allocation5 + $0xd4] sm:$0xf]
        %v2593 = vld [vmem:[#allocation5 + $0xd8] sm:$0xf]
        %v2594 = vld [vmem:[#allocation5 + $0xdc] sm:$0xf]
        %v2595 = vld [vmem:[#allocation5 + $0xe0] sm:$0xf]
        %v2596 = vld [vmem:[#allocation5 + $0xe4] sm:$0xf]
        %v2597 = vld [vmem:[#allocation5 + $0xe8] sm:$0xf]
        %v2598 = vld [vmem:[#allocation5 + $0xec] sm:$0xf]
        %v2599 = vld [vmem:[#allocation5 + $0xf0] sm:$0xf]
        %v2600 = vld [vmem:[#allocation5 + $0xf4] sm:$0xf]
        %v2601 = vld [vmem:[#allocation5 + $0xf8] sm:$0xf]
        %v2602 = vld [vmem:[#allocation5 + $0xfc] sm:$0xf]
        %v2603 = vrot.slane %v1883, 4
        %v2604 = vrot.slane %v1885, 5
        %v2605 = vor.u32 %v2603, %v2604
        %v2607 = vshrl.u32 %v2480, 16
        %v2609 = vrot.slane %v2607, 4
        %v2610 = vshll.u32 %v2480, 16
        %v2612 = vrot.slane %v2610, 5
        %v2613 = vor.u32 %v2609, %v2612
        %v2614 = vsel %vm1610, %v2605, %v2613
        %v2616 = vshrl.u32 %v2538, 16
        %v2618 = vrot.slane %v2616, 4
        %v2619 = vshll.u32 %v2538, 16
        %v2621 = vrot.slane %v2619, 5
        %v2622 = vor.u32 %v2618, %v2621
        %v2624 = vshrl.u32 %v2540, 16
        %v2626 = vrot.slane %v2624, 4
        %v2627 = vshll.u32 %v2540, 16
        %v2629 = vrot.slane %v2627, 5
        %v2630 = vor.u32 %v2626, %v2629
        %v2631 = vsel %vm1610, %v2622, %v2630
        %v2633 = vshrl.u32 %v2481, 16
        %v2635 = vrot.slane %v2633, 4
        %v2636 = vshll.u32 %v2481, 16
        %v2638 = vrot.slane %v2636, 5
        %v2639 = vor.u32 %v2635, %v2638
        %v2640 = vsel %vm1610, %v2613, %v2639
        %v2642 = vshrl.u32 %v2542, 16
        %v2644 = vrot.slane %v2642, 4
        %v2645 = vshll.u32 %v2542, 16
        %v2647 = vrot.slane %v2645, 5
        %v2648 = vor.u32 %v2644, %v2647
        %v2649 = vsel %vm1610, %v2630, %v2648
        %v2651 = vshrl.u32 %v2482, 16
        %v2653 = vrot.slane %v2651, 4
        %v2654 = vshll.u32 %v2482, 16
        %v2656 = vrot.slane %v2654, 5
        %v2657 = vor.u32 %v2653, %v2656
        %v2658 = vsel %vm1610, %v2639, %v2657
        %v2660 = vshrl.u32 %v2544, 16
        %v2662 = vrot.slane %v2660, 4
        %v2663 = vshll.u32 %v2544, 16
        %v2665 = vrot.slane %v2663, 5
        %v2666 = vor.u32 %v2662, %v2665
        %v2667 = vsel %vm1610, %v2648, %v2666
        %v2669 = vshrl.u32 %v2483, 16
        %v2671 = vrot.slane %v2669, 4
        %v2672 = vshll.u32 %v2483, 16
        %v2674 = vrot.slane %v2672, 5
        %v2675 = vor.u32 %v2671, %v2674
        %v2676 = vsel %vm1610, %v2657, %v2675
        %v2678 = vshrl.u32 %v2546, 16
        %v2680 = vrot.slane %v2678, 4
        %v2681 = vshll.u32 %v2546, 16
        %v2683 = vrot.slane %v2681, 5
        %v2684 = vor.u32 %v2680, %v2683
        %v2685 = vsel %vm1610, %v2666, %v2684
        %v2687 = vshrl.u32 %v2484, 16
        %v2689 = vrot.slane %v2687, 4
        %v2690 = vshll.u32 %v2484, 16
        %v2692 = vrot.slane %v2690, 5
        %v2693 = vor.u32 %v2689, %v2692
        %v2694 = vsel %vm1610, %v2675, %v2693
        %v2696 = vshrl.u32 %v2548, 16
        %v2698 = vrot.slane %v2696, 4
        %v2699 = vshll.u32 %v2548, 16
        %v2701 = vrot.slane %v2699, 5
        %v2702 = vor.u32 %v2698, %v2701
        %v2703 = vsel %vm1610, %v2684, %v2702
        %v2705 = vshrl.u32 %v2485, 16
        %v2707 = vrot.slane %v2705, 4
        %v2708 = vshll.u32 %v2485, 16
        %v2710 = vrot.slane %v2708, 5
        %v2711 = vor.u32 %v2707, %v2710
        %v2712 = vsel %vm1610, %v2693, %v2711
        %v2714 = vshrl.u32 %v2550, 16
        %v2716 = vrot.slane %v2714, 4
        %v2717 = vshll.u32 %v2550, 16
        %v2719 = vrot.slane %v2717, 5
        %v2720 = vor.u32 %v2716, %v2719
        %v2721 = vsel %vm1610, %v2702, %v2720
        %v2723 = vshrl.u32 %v2486, 16
        %v2725 = vrot.slane %v2723, 4
        %v2726 = vshll.u32 %v2486, 16
        %v2728 = vrot.slane %v2726, 5
        %v2729 = vor.u32 %v2725, %v2728
        %v2730 = vsel %vm1610, %v2711, %v2729
        %v2732 = vshrl.u32 %v2552, 16
        %v2734 = vrot.slane %v2732, 4
        %v2735 = vshll.u32 %v2552, 16
        %v2737 = vrot.slane %v2735, 5
        %v2738 = vor.u32 %v2734, %v2737
        %v2739 = vsel %vm1610, %v2720, %v2738
        %v2741 = vshrl.u32 %v2487, 16
        %v2743 = vrot.slane %v2741, 4
        %v2744 = vshll.u32 %v2487, 16
        %v2746 = vrot.slane %v2744, 5
        %v2747 = vor.u32 %v2743, %v2746
        %v2748 = vsel %vm1610, %v2729, %v2747
        %v2750 = vshrl.u32 %v2554, 16
        %v2752 = vrot.slane %v2750, 4
        %v2753 = vshll.u32 %v2554, 16
        %v2755 = vrot.slane %v2753, 5
        %v2756 = vor.u32 %v2752, %v2755
        %v2757 = vsel %vm1610, %v2738, %v2756
        %v2759 = vshrl.u32 %v2488, 16
        %v2761 = vrot.slane %v2759, 4
        %v2762 = vshll.u32 %v2488, 16
        %v2764 = vrot.slane %v2762, 5
        %v2765 = vor.u32 %v2761, %v2764
        %v2766 = vsel %vm1610, %v2747, %v2765
        %v2768 = vshrl.u32 %v2556, 16
        %v2770 = vrot.slane %v2768, 4
        %v2771 = vshll.u32 %v2556, 16
        %v2773 = vrot.slane %v2771, 5
        %v2774 = vor.u32 %v2770, %v2773
        %v2775 = vsel %vm1610, %v2756, %v2774
        %v2777 = vshrl.u32 %v2489, 16
        %v2779 = vrot.slane %v2777, 4
        %v2780 = vshll.u32 %v2489, 16
        %v2782 = vrot.slane %v2780, 5
        %v2783 = vor.u32 %v2779, %v2782
        %v2784 = vsel %vm1610, %v2765, %v2783
        %v2786 = vshrl.u32 %v2558, 16
        %v2788 = vrot.slane %v2786, 4
        %v2789 = vshll.u32 %v2558, 16
        %v2791 = vrot.slane %v2789, 5
        %v2792 = vor.u32 %v2788, %v2791
        %v2793 = vsel %vm1610, %v2774, %v2792
        %v2795 = vshrl.u32 %v2490, 16
        %v2797 = vrot.slane %v2795, 4
        %v2798 = vshll.u32 %v2490, 16
        %v2800 = vrot.slane %v2798, 5
        %v2801 = vor.u32 %v2797, %v2800
        %v2802 = vsel %vm1610, %v2783, %v2801
        %v2804 = vshrl.u32 %v2560, 16
        %v2806 = vrot.slane %v2804, 4
        %v2807 = vshll.u32 %v2560, 16
        %v2809 = vrot.slane %v2807, 5
        %v2810 = vor.u32 %v2806, %v2809
        %v2811 = vsel %vm1610, %v2792, %v2810
        %v2813 = vshrl.u32 %v2491, 16
        %v2815 = vrot.slane %v2813, 4
        %v2816 = vshll.u32 %v2491, 16
        %v2818 = vrot.slane %v2816, 5
        %v2819 = vor.u32 %v2815, %v2818
        %v2820 = vsel %vm1610, %v2801, %v2819
        %v2822 = vshrl.u32 %v2562, 16
        %v2824 = vrot.slane %v2822, 4
        %v2825 = vshll.u32 %v2562, 16
        %v2827 = vrot.slane %v2825, 5
        %v2828 = vor.u32 %v2824, %v2827
        %v2829 = vsel %vm1610, %v2810, %v2828
        %v2831 = vshrl.u32 %v2492, 16
        %v2833 = vrot.slane %v2831, 4
        %v2834 = vshll.u32 %v2492, 16
        %v2836 = vrot.slane %v2834, 5
        %v2837 = vor.u32 %v2833, %v2836
        %v2838 = vsel %vm1610, %v2819, %v2837
        %v2840 = vshrl.u32 %v2564, 16
        %v2842 = vrot.slane %v2840, 4
        %v2843 = vshll.u32 %v2564, 16
        %v2845 = vrot.slane %v2843, 5
        %v2846 = vor.u32 %v2842, %v2845
        %v2847 = vsel %vm1610, %v2828, %v2846
        %v2849 = vshrl.u32 %v2493, 16
        %v2851 = vrot.slane %v2849, 4
        %v2852 = vshll.u32 %v2493, 16
        %v2854 = vrot.slane %v2852, 5
        %v2855 = vor.u32 %v2851, %v2854
        %v2856 = vsel %vm1610, %v2837, %v2855
        %v2858 = vshrl.u32 %v2566, 16
        %v2860 = vrot.slane %v2858, 4
        %v2861 = vshll.u32 %v2566, 16
        %v2863 = vrot.slane %v2861, 5
        %v2864 = vor.u32 %v2860, %v2863
        %v2865 = vsel %vm1610, %v2846, %v2864
        %v2867 = vshrl.u32 %v2494, 16
        %v2869 = vrot.slane %v2867, 4
        %v2870 = vshll.u32 %v2494, 16
        %v2872 = vrot.slane %v2870, 5
        %v2873 = vor.u32 %v2869, %v2872
        %v2874 = vsel %vm1610, %v2855, %v2873
        %v2876 = vshrl.u32 %v2568, 16
        %v2878 = vrot.slane %v2876, 4
        %v2879 = vshll.u32 %v2568, 16
        %v2881 = vrot.slane %v2879, 5
        %v2882 = vor.u32 %v2878, %v2881
        %v2883 = vsel %vm1610, %v2864, %v2882
        %v2885 = vshrl.u32 %v2495, 16
        %v2887 = vrot.slane %v2885, 4
        %v2888 = vshll.u32 %v2495, 16
        %v2890 = vrot.slane %v2888, 5
        %v2891 = vor.u32 %v2887, %v2890
        %v2892 = vsel %vm1610, %v2873, %v2891
        %v2894 = vshrl.u32 %v2570, 16
        %v2896 = vrot.slane %v2894, 4
        %v2897 = vshll.u32 %v2570, 16
        %v2899 = vrot.slane %v2897, 5
        %v2900 = vor.u32 %v2896, %v2899
        %v2901 = vsel %vm1610, %v2882, %v2900
        %v2966 = vunpack.c.l.b16 %v2571
        %v2967 = vunpack.c.l.b16 %v2572
        %v2968 = vunpack.c.l.b16 %v2573
        %v2969 = vunpack.c.l.b16 %v2574
        %v2970 = vunpack.c.l.b16 %v2575
        %v2971 = vunpack.c.l.b16 %v2576
        %v2972 = vunpack.c.l.b16 %v2577
        %v2973 = vunpack.c.l.b16 %v2578
        %v2974 = vunpack.c.l.b16 %v2579
        %v2975 = vunpack.c.l.b16 %v2580
        %v2976 = vunpack.c.l.b16 %v2581
        %v2977 = vunpack.c.l.b16 %v2582
        %v2978 = vunpack.c.l.b16 %v2583
        %v2979 = vunpack.c.l.b16 %v2584
        %v2980 = vunpack.c.l.b16 %v2585
        %v2981 = vunpack.c.l.b16 %v2586
        %v2982 = vunpack.c.l.b16 %v2587
        %v2983 = vunpack.c.l.b16 %v2588
        %v2984 = vunpack.c.l.b16 %v2589
        %v2985 = vunpack.c.l.b16 %v2590
        %v2986 = vunpack.c.l.b16 %v2591
        %v2987 = vunpack.c.l.b16 %v2592
        %v2988 = vunpack.c.l.b16 %v2593
        %v2989 = vunpack.c.l.b16 %v2594
        %v2990 = vunpack.c.l.b16 %v2595
        %v2991 = vunpack.c.l.b16 %v2596
        %v2992 = vunpack.c.l.b16 %v2597
        %v2993 = vunpack.c.l.b16 %v2598
        %v2994 = vunpack.c.l.b16 %v2599
        %v2995 = vunpack.c.l.b16 %v2600
        %v2996 = vunpack.c.l.b16 %v2601
        %v2997 = vunpack.c.l.b16 %v2602
        %v2998 = vpack.c.b16 %v2967, %v2966
        %v2999 = vpack.c.b16 %v2969, %v2968
        %v3000 = vpack.c.b16 %v2971, %v2970
        %v3001 = vpack.c.b16 %v2973, %v2972
        %v3002 = vpack.c.b16 %v2975, %v2974
        %v3003 = vpack.c.b16 %v2977, %v2976
        %v3004 = vpack.c.b16 %v2979, %v2978
        %v3005 = vpack.c.b16 %v2981, %v2980
        %v3006 = vpack.c.b16 %v2983, %v2982
        %v3007 = vpack.c.b16 %v2985, %v2984
        %v3008 = vpack.c.b16 %v2987, %v2986
        %v3009 = vpack.c.b16 %v2989, %v2988
        %v3010 = vpack.c.b16 %v2991, %v2990
        %v3011 = vpack.c.b16 %v2993, %v2992
        %v3012 = vpack.c.b16 %v2995, %v2994
        %v3013 = vpack.c.b16 %v2997, %v2996
        %3030 = vmatpush.bf16.msra.mxu0 %v3005
        %3031 = vmatpush.bf16.msra.mxu0 %v3004
        %3032 = vmatpush.bf16.msra.mxu0 %v3003
        %3033 = vmatpush.bf16.msra.mxu0 %v3002
        %3034 = vmatpush.bf16.msra.mxu0 %v3001
        %3035 = vmatpush.bf16.msra.mxu0 %v3000
        %3036 = vmatpush.bf16.msra.mxu0 %v2999
        %3037 = vmatpush.bf16.msra.mxu0 %v2998
        %3038 = vmatmul.bf16.gmra.mxu0 %v2614
        %v3039 = vpop.f32.mrf.mxu0
        %v3040 = vadd.f32 0.0, %v3039
        %v3041 = vpop.f32.mrf.mxu0
        %v3042 = vadd.f32 0.0, %v3041
        %3043 = vmatmul.bf16.gmra.mxu0 %v2640
        %v3044 = vpop.f32.mrf.mxu0
        %v3045 = vadd.f32 0.0, %v3044
        %v3046 = vpop.f32.mrf.mxu0
        %v3047 = vadd.f32 0.0, %v3046
        %3048 = vmatmul.bf16.gmra.mxu0 %v2658
        %v3049 = vpop.f32.mrf.mxu0
        %v3050 = vadd.f32 0.0, %v3049
        %v3051 = vpop.f32.mrf.mxu0
        %v3052 = vadd.f32 0.0, %v3051
        %3053 = vmatmul.bf16.gmra.mxu0 %v2676
        %v3054 = vpop.f32.mrf.mxu0
        %v3055 = vadd.f32 0.0, %v3054
        %v3056 = vpop.f32.mrf.mxu0
        %v3057 = vadd.f32 0.0, %v3056
        %3058 = vmatmul.bf16.gmra.mxu0 %v2694
        %v3059 = vpop.f32.mrf.mxu0
        %v3060 = vadd.f32 0.0, %v3059
        %v3061 = vpop.f32.mrf.mxu0
        %v3062 = vadd.f32 0.0, %v3061
        %3063 = vmatmul.bf16.gmra.mxu0 %v2712
        %v3064 = vpop.f32.mrf.mxu0
        %v3065 = vadd.f32 0.0, %v3064
        %v3066 = vpop.f32.mrf.mxu0
        %v3067 = vadd.f32 0.0, %v3066
        %3068 = vmatmul.bf16.gmra.mxu0 %v2730
        %v3069 = vpop.f32.mrf.mxu0
        %v3070 = vadd.f32 0.0, %v3069
        %v3071 = vpop.f32.mrf.mxu0
        %v3072 = vadd.f32 0.0, %v3071
        %3073 = vmatmul.bf16.gmra.mxu0 %v2748
        %v3074 = vpop.f32.mrf.mxu0
        %v3075 = vadd.f32 0.0, %v3074
        %v3076 = vpop.f32.mrf.mxu0
        %v3077 = vadd.f32 0.0, %v3076
        %3078 = vmatmul.bf16.gmra.mxu0 %v2766
        %v3079 = vpop.f32.mrf.mxu0
        %v3080 = vadd.f32 0.0, %v3079
        %v3081 = vpop.f32.mrf.mxu0
        %v3082 = vadd.f32 0.0, %v3081
        %3083 = vmatmul.bf16.gmra.mxu0 %v2784
        %v3084 = vpop.f32.mrf.mxu0
        %v3085 = vadd.f32 0.0, %v3084
        %v3086 = vpop.f32.mrf.mxu0
        %v3087 = vadd.f32 0.0, %v3086
        %3088 = vmatmul.bf16.gmra.mxu0 %v2802
        %v3089 = vpop.f32.mrf.mxu0
        %v3090 = vadd.f32 0.0, %v3089
        %v3091 = vpop.f32.mrf.mxu0
        %v3092 = vadd.f32 0.0, %v3091
        %3093 = vmatmul.bf16.gmra.mxu0 %v2820
        %v3094 = vpop.f32.mrf.mxu0
        %v3095 = vadd.f32 0.0, %v3094
        %v3096 = vpop.f32.mrf.mxu0
        %v3097 = vadd.f32 0.0, %v3096
        %3098 = vmatmul.bf16.gmra.mxu0 %v2838
        %v3099 = vpop.f32.mrf.mxu0
        %v3100 = vadd.f32 0.0, %v3099
        %v3101 = vpop.f32.mrf.mxu0
        %v3102 = vadd.f32 0.0, %v3101
        %3103 = vmatmul.bf16.gmra.mxu0 %v2856
        %v3104 = vpop.f32.mrf.mxu0
        %v3105 = vadd.f32 0.0, %v3104
        %v3106 = vpop.f32.mrf.mxu0
        %v3107 = vadd.f32 0.0, %v3106
        %3108 = vmatmul.bf16.gmra.mxu0 %v2874
        %v3109 = vpop.f32.mrf.mxu0
        %v3110 = vadd.f32 0.0, %v3109
        %v3111 = vpop.f32.mrf.mxu0
        %v3112 = vadd.f32 0.0, %v3111
        %3113 = vmatmul.bf16.gmra.mxu0 %v2892
        %v3114 = vpop.f32.mrf.mxu0
        %v3115 = vadd.f32 0.0, %v3114
        %v3116 = vpop.f32.mrf.mxu0
        %v3117 = vadd.f32 0.0, %v3116
        %3118 = vdwg.mxu0
        %3119 = vmatpush.bf16.msra.mxu0 %v3013
        %3120 = vmatpush.bf16.msra.mxu0 %v3012
        %3121 = vmatpush.bf16.msra.mxu0 %v3011
        %3122 = vmatpush.bf16.msra.mxu0 %v3010
        %3123 = vmatpush.bf16.msra.mxu0 %v3009
        %3124 = vmatpush.bf16.msra.mxu0 %v3008
        %3125 = vmatpush.bf16.msra.mxu0 %v3007
        %3126 = vmatpush.bf16.msra.mxu0 %v3006
        %3127 = vmatmul.bf16.gmra.mxu0 %v2631
        %v3128 = vpop.f32.mrf.mxu0
        %v3129 = vadd.f32 %v3040, %v3128
        %v3130 = vpop.f32.mrf.mxu0
        %v3131 = vadd.f32 %v3042, %v3130
        %3132 = vmatmul.bf16.gmra.mxu0 %v2649
        %v3133 = vpop.f32.mrf.mxu0
        %v3134 = vadd.f32 %v3045, %v3133
        %v3135 = vpop.f32.mrf.mxu0
        %v3136 = vadd.f32 %v3047, %v3135
        %3137 = vmatmul.bf16.gmra.mxu0 %v2667
        %v3138 = vpop.f32.mrf.mxu0
        %v3139 = vadd.f32 %v3050, %v3138
        %v3140 = vpop.f32.mrf.mxu0
        %v3141 = vadd.f32 %v3052, %v3140
        %3142 = vmatmul.bf16.gmra.mxu0 %v2685
        %v3143 = vpop.f32.mrf.mxu0
        %v3144 = vadd.f32 %v3055, %v3143
        %v3145 = vpop.f32.mrf.mxu0
        %v3146 = vadd.f32 %v3057, %v3145
        %3147 = vmatmul.bf16.gmra.mxu0 %v2703
        %v3148 = vpop.f32.mrf.mxu0
        %v3149 = vadd.f32 %v3060, %v3148
        %v3150 = vpop.f32.mrf.mxu0
        %v3151 = vadd.f32 %v3062, %v3150
        %3152 = vmatmul.bf16.gmra.mxu0 %v2721
        %v3153 = vpop.f32.mrf.mxu0
        %v3154 = vadd.f32 %v3065, %v3153
        %v3155 = vpop.f32.mrf.mxu0
        %v3156 = vadd.f32 %v3067, %v3155
        %3157 = vmatmul.bf16.gmra.mxu0 %v2739
        %v3158 = vpop.f32.mrf.mxu0
        %v3159 = vadd.f32 %v3070, %v3158
        %v3160 = vpop.f32.mrf.mxu0
        %v3161 = vadd.f32 %v3072, %v3160
        %3162 = vmatmul.bf16.gmra.mxu0 %v2757
        %v3163 = vpop.f32.mrf.mxu0
        %v3164 = vadd.f32 %v3075, %v3163
        %v3165 = vpop.f32.mrf.mxu0
        %v3166 = vadd.f32 %v3077, %v3165
        %3167 = vmatmul.bf16.gmra.mxu0 %v2775
        %v3168 = vpop.f32.mrf.mxu0
        %v3169 = vadd.f32 %v3080, %v3168
        %v3170 = vpop.f32.mrf.mxu0
        %v3171 = vadd.f32 %v3082, %v3170
        %3172 = vmatmul.bf16.gmra.mxu0 %v2793
        %v3173 = vpop.f32.mrf.mxu0
        %v3174 = vadd.f32 %v3085, %v3173
        %v3175 = vpop.f32.mrf.mxu0
        %v3176 = vadd.f32 %v3087, %v3175
        %3177 = vmatmul.bf16.gmra.mxu0 %v2811
        %v3178 = vpop.f32.mrf.mxu0
        %v3179 = vadd.f32 %v3090, %v3178
        %v3180 = vpop.f32.mrf.mxu0
        %v3181 = vadd.f32 %v3092, %v3180
        %3182 = vmatmul.bf16.gmra.mxu0 %v2829
        %v3183 = vpop.f32.mrf.mxu0
        %v3184 = vadd.f32 %v3095, %v3183
        %v3185 = vpop.f32.mrf.mxu0
        %v3186 = vadd.f32 %v3097, %v3185
        %3187 = vmatmul.bf16.gmra.mxu0 %v2847
        %v3188 = vpop.f32.mrf.mxu0
        %v3189 = vadd.f32 %v3100, %v3188
        %v3190 = vpop.f32.mrf.mxu0
        %v3191 = vadd.f32 %v3102, %v3190
        %3192 = vmatmul.bf16.gmra.mxu0 %v2865
        %v3193 = vpop.f32.mrf.mxu0
        %v3194 = vadd.f32 %v3105, %v3193
        %v3195 = vpop.f32.mrf.mxu0
        %v3196 = vadd.f32 %v3107, %v3195
        %3197 = vmatmul.bf16.gmra.mxu0 %v2883
        %v3198 = vpop.f32.mrf.mxu0
        %v3199 = vadd.f32 %v3110, %v3198
        %v3200 = vpop.f32.mrf.mxu0
        %v3201 = vadd.f32 %v3112, %v3200
        %3202 = vmatmul.bf16.gmra.mxu0 %v2901
        %v3203 = vpop.f32.mrf.mxu0
        %v3204 = vadd.f32 %v3115, %v3203
        %v3205 = vpop.f32.mrf.mxu0
        %v3206 = vadd.f32 %v3117, %v3205
        %3207 = vdwg.mxu0
        %v3208 = vrot.slane %v1883, 3
        %v3209 = vrot.slane %v1885, 4
        %v3210 = vor.u32 %v3208, %v3209
        %v3212 = vshrl.u32 %v1866, 16
        %v3214 = vrot.slane %v3212, 3
        %v3215 = vshll.u32 %v1866, 16
        %v3217 = vrot.slane %v3215, 4
        %v3218 = vor.u32 %v3214, %v3217
        %v3219 = vsel %vm2224, %v3210, %v3218
        %v3221 = vshrl.u32 %v1892, 16
        %v3223 = vrot.slane %v3221, 3
        %v3224 = vshll.u32 %v1892, 16
        %v3226 = vrot.slane %v3224, 4
        %v3227 = vor.u32 %v3223, %v3226
        %v3229 = vshrl.u32 %v1900, 16
        %v3231 = vrot.slane %v3229, 3
        %v3232 = vshll.u32 %v1900, 16
        %v3234 = vrot.slane %v3232, 4
        %v3235 = vor.u32 %v3231, %v3234
        %v3236 = vsel %vm2224, %v3227, %v3235
        %v3238 = vshrl.u32 %v1867, 16
        %v3240 = vrot.slane %v3238, 3
        %v3241 = vshll.u32 %v1867, 16
        %v3243 = vrot.slane %v3241, 4
        %v3244 = vor.u32 %v3240, %v3243
        %v3245 = vsel %vm2224, %v3218, %v3244
        %v3247 = vshrl.u32 %v1908, 16
        %v3249 = vrot.slane %v3247, 3
        %v3250 = vshll.u32 %v1908, 16
        %v3252 = vrot.slane %v3250, 4
        %v3253 = vor.u32 %v3249, %v3252
        %v3254 = vsel %vm2224, %v3235, %v3253
        %v3256 = vshrl.u32 %v1868, 16
        %v3258 = vrot.slane %v3256, 3
        %v3259 = vshll.u32 %v1868, 16
        %v3261 = vrot.slane %v3259, 4
        %v3262 = vor.u32 %v3258, %v3261
        %v3263 = vsel %vm2224, %v3244, %v3262
        %v3265 = vshrl.u32 %v1916, 16
        %v3267 = vrot.slane %v3265, 3
        %v3268 = vshll.u32 %v1916, 16
        %v3270 = vrot.slane %v3268, 4
        %v3271 = vor.u32 %v3267, %v3270
        %v3272 = vsel %vm2224, %v3253, %v3271
        %v3274 = vshrl.u32 %v1869, 16
        %v3276 = vrot.slane %v3274, 3
        %v3277 = vshll.u32 %v1869, 16
        %v3279 = vrot.slane %v3277, 4
        %v3280 = vor.u32 %v3276, %v3279
        %v3281 = vsel %vm2224, %v3262, %v3280
        %v3283 = vshrl.u32 %v1924, 16
        %v3285 = vrot.slane %v3283, 3
        %v3286 = vshll.u32 %v1924, 16
        %v3288 = vrot.slane %v3286, 4
        %v3289 = vor.u32 %v3285, %v3288
        %v3290 = vsel %vm2224, %v3271, %v3289
        %v3292 = vshrl.u32 %v1870, 16
        %v3294 = vrot.slane %v3292, 3
        %v3295 = vshll.u32 %v1870, 16
        %v3297 = vrot.slane %v3295, 4
        %v3298 = vor.u32 %v3294, %v3297
        %v3299 = vsel %vm2224, %v3280, %v3298
        %v3301 = vshrl.u32 %v1932, 16
        %v3303 = vrot.slane %v3301, 3
        %v3304 = vshll.u32 %v1932, 16
        %v3306 = vrot.slane %v3304, 4
        %v3307 = vor.u32 %v3303, %v3306
        %v3308 = vsel %vm2224, %v3289, %v3307
        %v3310 = vshrl.u32 %v1871, 16
        %v3312 = vrot.slane %v3310, 3
        %v3313 = vshll.u32 %v1871, 16
        %v3315 = vrot.slane %v3313, 4
        %v3316 = vor.u32 %v3312, %v3315
        %v3317 = vsel %vm2224, %v3298, %v3316
        %v3319 = vshrl.u32 %v1940, 16
        %v3321 = vrot.slane %v3319, 3
        %v3322 = vshll.u32 %v1940, 16
        %v3324 = vrot.slane %v3322, 4
        %v3325 = vor.u32 %v3321, %v3324
        %v3326 = vsel %vm2224, %v3307, %v3325
        %v3328 = vshrl.u32 %v1872, 16
        %v3330 = vrot.slane %v3328, 3
        %v3331 = vshll.u32 %v1872, 16
        %v3333 = vrot.slane %v3331, 4
        %v3334 = vor.u32 %v3330, %v3333
        %v3335 = vsel %vm2224, %v3316, %v3334
        %v3337 = vshrl.u32 %v1948, 16
        %v3339 = vrot.slane %v3337, 3
        %v3340 = vshll.u32 %v1948, 16
        %v3342 = vrot.slane %v3340, 4
        %v3343 = vor.u32 %v3339, %v3342
        %v3344 = vsel %vm2224, %v3325, %v3343
        %v3346 = vshrl.u32 %v1873, 16
        %v3348 = vrot.slane %v3346, 3
        %v3349 = vshll.u32 %v1873, 16
        %v3351 = vrot.slane %v3349, 4
        %v3352 = vor.u32 %v3348, %v3351
        %v3353 = vsel %vm2224, %v3334, %v3352
        %v3355 = vshrl.u32 %v1956, 16
        %v3357 = vrot.slane %v3355, 3
        %v3358 = vshll.u32 %v1956, 16
        %v3360 = vrot.slane %v3358, 4
        %v3361 = vor.u32 %v3357, %v3360
        %v3362 = vsel %vm2224, %v3343, %v3361
        %v3364 = vshrl.u32 %v1874, 16
        %v3366 = vrot.slane %v3364, 3
        %v3367 = vshll.u32 %v1874, 16
        %v3369 = vrot.slane %v3367, 4
        %v3370 = vor.u32 %v3366, %v3369
        %v3371 = vsel %vm2224, %v3352, %v3370
        %v3373 = vshrl.u32 %v1964, 16
        %v3375 = vrot.slane %v3373, 3
        %v3376 = vshll.u32 %v1964, 16
        %v3378 = vrot.slane %v3376, 4
        %v3379 = vor.u32 %v3375, %v3378
        %v3380 = vsel %vm2224, %v3361, %v3379
        %v3382 = vshrl.u32 %v1875, 16
        %v3384 = vrot.slane %v3382, 3
        %v3385 = vshll.u32 %v1875, 16
        %v3387 = vrot.slane %v3385, 4
        %v3388 = vor.u32 %v3384, %v3387
        %v3389 = vsel %vm2224, %v3370, %v3388
        %v3391 = vshrl.u32 %v1972, 16
        %v3393 = vrot.slane %v3391, 3
        %v3394 = vshll.u32 %v1972, 16
        %v3396 = vrot.slane %v3394, 4
        %v3397 = vor.u32 %v3393, %v3396
        %v3398 = vsel %vm2224, %v3379, %v3397
        %v3400 = vshrl.u32 %v1876, 16
        %v3402 = vrot.slane %v3400, 3
        %v3403 = vshll.u32 %v1876, 16
        %v3405 = vrot.slane %v3403, 4
        %v3406 = vor.u32 %v3402, %v3405
        %v3407 = vsel %vm2224, %v3388, %v3406
        %v3409 = vshrl.u32 %v1980, 16
        %v3411 = vrot.slane %v3409, 3
        %v3412 = vshll.u32 %v1980, 16
        %v3414 = vrot.slane %v3412, 4
        %v3415 = vor.u32 %v3411, %v3414
        %v3416 = vsel %vm2224, %v3397, %v3415
        %v3418 = vshrl.u32 %v1877, 16
        %v3420 = vrot.slane %v3418, 3
        %v3421 = vshll.u32 %v1877, 16
        %v3423 = vrot.slane %v3421, 4
        %v3424 = vor.u32 %v3420, %v3423
        %v3425 = vsel %vm2224, %v3406, %v3424
        %v3427 = vshrl.u32 %v1988, 16
        %v3429 = vrot.slane %v3427, 3
        %v3430 = vshll.u32 %v1988, 16
        %v3432 = vrot.slane %v3430, 4
        %v3433 = vor.u32 %v3429, %v3432
        %v3434 = vsel %vm2224, %v3415, %v3433
        %v3436 = vshrl.u32 %v1878, 16
        %v3438 = vrot.slane %v3436, 3
        %v3439 = vshll.u32 %v1878, 16
        %v3441 = vrot.slane %v3439, 4
        %v3442 = vor.u32 %v3438, %v3441
        %v3443 = vsel %vm2224, %v3424, %v3442
        %v3445 = vshrl.u32 %v1996, 16
        %v3447 = vrot.slane %v3445, 3
        %v3448 = vshll.u32 %v1996, 16
        %v3450 = vrot.slane %v3448, 4
        %v3451 = vor.u32 %v3447, %v3450
        %v3452 = vsel %vm2224, %v3433, %v3451
        %v3454 = vshrl.u32 %v1879, 16
        %v3456 = vrot.slane %v3454, 3
        %v3457 = vshll.u32 %v1879, 16
        %v3459 = vrot.slane %v3457, 4
        %v3460 = vor.u32 %v3456, %v3459
        %v3461 = vsel %vm2224, %v3442, %v3460
        %v3463 = vshrl.u32 %v2004, 16
        %v3465 = vrot.slane %v3463, 3
        %v3466 = vshll.u32 %v2004, 16
        %v3468 = vrot.slane %v3466, 4
        %v3469 = vor.u32 %v3465, %v3468
        %v3470 = vsel %vm2224, %v3451, %v3469
        %v3472 = vshrl.u32 %v1880, 16
        %v3474 = vrot.slane %v3472, 3
        %v3475 = vshll.u32 %v1880, 16
        %v3477 = vrot.slane %v3475, 4
        %v3478 = vor.u32 %v3474, %v3477
        %v3479 = vsel %vm2224, %v3460, %v3478
        %v3481 = vshrl.u32 %v2012, 16
        %v3483 = vrot.slane %v3481, 3
        %v3484 = vshll.u32 %v2012, 16
        %v3486 = vrot.slane %v3484, 4
        %v3487 = vor.u32 %v3483, %v3486
        %v3488 = vsel %vm2224, %v3469, %v3487
        %v3490 = vshrl.u32 %v1881, 16
        %v3492 = vrot.slane %v3490, 3
        %v3493 = vshll.u32 %v1881, 16
        %v3495 = vrot.slane %v3493, 4
        %v3496 = vor.u32 %v3492, %v3495
        %v3497 = vsel %vm2224, %v3478, %v3496
        %v3499 = vshrl.u32 %v2015, 16
        %v3501 = vrot.slane %v3499, 3
        %v3502 = vshll.u32 %v2015, 16
        %v3504 = vrot.slane %v3502, 4
        %v3505 = vor.u32 %v3501, %v3504
        %v3506 = vsel %vm2224, %v3487, %v3505
        %v3571 = vunpack.c.l.b16 %v2016
        %v3572 = vunpack.c.l.b16 %v2017
        %v3573 = vunpack.c.l.b16 %v2018
        %v3574 = vunpack.c.l.b16 %v2019
        %v3575 = vunpack.c.l.b16 %v2020
        %v3576 = vunpack.c.l.b16 %v2021
        %v3577 = vunpack.c.l.b16 %v2022
        %v3578 = vunpack.c.l.b16 %v2023
        %v3579 = vunpack.c.l.b16 %v2024
        %v3580 = vunpack.c.l.b16 %v2025
        %v3581 = vunpack.c.l.b16 %v2026
        %v3582 = vunpack.c.l.b16 %v2027
        %v3583 = vunpack.c.l.b16 %v2028
        %v3584 = vunpack.c.l.b16 %v2029
        %v3585 = vunpack.c.l.b16 %v2030
        %v3586 = vunpack.c.l.b16 %v2031
        %v3587 = vunpack.c.l.b16 %v2032
        %v3588 = vunpack.c.l.b16 %v2033
        %v3589 = vunpack.c.l.b16 %v2034
        %v3590 = vunpack.c.l.b16 %v2035
        %v3591 = vunpack.c.l.b16 %v2036
        %v3592 = vunpack.c.l.b16 %v2037
        %v3593 = vunpack.c.l.b16 %v2038
        %v3594 = vunpack.c.l.b16 %v2039
        %v3595 = vunpack.c.l.b16 %v2040
        %v3596 = vunpack.c.l.b16 %v2041
        %v3597 = vunpack.c.l.b16 %v2042
        %v3598 = vunpack.c.l.b16 %v2043
        %v3599 = vunpack.c.l.b16 %v2044
        %v3600 = vunpack.c.l.b16 %v2045
        %v3601 = vunpack.c.l.b16 %v2046
        %v3602 = vunpack.c.l.b16 %v2047
        %v3603 = vpack.c.b16 %v3572, %v3571
        %v3604 = vpack.c.b16 %v3574, %v3573
        %v3605 = vpack.c.b16 %v3576, %v3575
        %v3606 = vpack.c.b16 %v3578, %v3577
        %v3607 = vpack.c.b16 %v3580, %v3579
        %v3608 = vpack.c.b16 %v3582, %v3581
        %v3609 = vpack.c.b16 %v3584, %v3583
        %v3610 = vpack.c.b16 %v3586, %v3585
        %v3611 = vpack.c.b16 %v3588, %v3587
        %v3612 = vpack.c.b16 %v3590, %v3589
        %v3613 = vpack.c.b16 %v3592, %v3591
        %v3614 = vpack.c.b16 %v3594, %v3593
        %v3615 = vpack.c.b16 %v3596, %v3595
        %v3616 = vpack.c.b16 %v3598, %v3597
        %v3617 = vpack.c.b16 %v3600, %v3599
        %v3618 = vpack.c.b16 %v3602, %v3601
        %3635 = vmatpush.bf16.msra.mxu0 %v3610
        %3636 = vmatpush.bf16.msra.mxu0 %v3609
        %3637 = vmatpush.bf16.msra.mxu0 %v3608
        %3638 = vmatpush.bf16.msra.mxu0 %v3607
        %3639 = vmatpush.bf16.msra.mxu0 %v3606
        %3640 = vmatpush.bf16.msra.mxu0 %v3605
        %3641 = vmatpush.bf16.msra.mxu0 %v3604
        %3642 = vmatpush.bf16.msra.mxu0 %v3603
        %3643 = vmatmul.bf16.gmra.mxu0 %v3219
        %v3644 = vpop.f32.mrf.mxu0
        %v3645 = vadd.f32 %v3129, %v3644
        %v3646 = vpop.f32.mrf.mxu0
        %v3647 = vadd.f32 %v3131, %v3646
        %3648 = vmatmul.bf16.gmra.mxu0 %v3245
        %v3649 = vpop.f32.mrf.mxu0
        %v3650 = vadd.f32 %v3134, %v3649
        %v3651 = vpop.f32.mrf.mxu0
        %v3652 = vadd.f32 %v3136, %v3651
        %3653 = vmatmul.bf16.gmra.mxu0 %v3263
        %v3654 = vpop.f32.mrf.mxu0
        %v3655 = vadd.f32 %v3139, %v3654
        %v3656 = vpop.f32.mrf.mxu0
        %v3657 = vadd.f32 %v3141, %v3656
        %3658 = vmatmul.bf16.gmra.mxu0 %v3281
        %v3659 = vpop.f32.mrf.mxu0
        %v3660 = vadd.f32 %v3144, %v3659
        %v3661 = vpop.f32.mrf.mxu0
        %v3662 = vadd.f32 %v3146, %v3661
        %3663 = vmatmul.bf16.gmra.mxu0 %v3299
        %v3664 = vpop.f32.mrf.mxu0
        %v3665 = vadd.f32 %v3149, %v3664
        %v3666 = vpop.f32.mrf.mxu0
        %v3667 = vadd.f32 %v3151, %v3666
        %3668 = vmatmul.bf16.gmra.mxu0 %v3317
        %v3669 = vpop.f32.mrf.mxu0
        %v3670 = vadd.f32 %v3154, %v3669
        %v3671 = vpop.f32.mrf.mxu0
        %v3672 = vadd.f32 %v3156, %v3671
        %3673 = vmatmul.bf16.gmra.mxu0 %v3335
        %v3674 = vpop.f32.mrf.mxu0
        %v3675 = vadd.f32 %v3159, %v3674
        %v3676 = vpop.f32.mrf.mxu0
        %v3677 = vadd.f32 %v3161, %v3676
        %3678 = vmatmul.bf16.gmra.mxu0 %v3353
        %v3679 = vpop.f32.mrf.mxu0
        %v3680 = vadd.f32 %v3164, %v3679
        %v3681 = vpop.f32.mrf.mxu0
        %v3682 = vadd.f32 %v3166, %v3681
        %3683 = vmatmul.bf16.gmra.mxu0 %v3371
        %v3684 = vpop.f32.mrf.mxu0
        %v3685 = vadd.f32 %v3169, %v3684
        %v3686 = vpop.f32.mrf.mxu0
        %v3687 = vadd.f32 %v3171, %v3686
        %3688 = vmatmul.bf16.gmra.mxu0 %v3389
        %v3689 = vpop.f32.mrf.mxu0
        %v3690 = vadd.f32 %v3174, %v3689
        %v3691 = vpop.f32.mrf.mxu0
        %v3692 = vadd.f32 %v3176, %v3691
        %3693 = vmatmul.bf16.gmra.mxu0 %v3407
        %v3694 = vpop.f32.mrf.mxu0
        %v3695 = vadd.f32 %v3179, %v3694
        %v3696 = vpop.f32.mrf.mxu0
        %v3697 = vadd.f32 %v3181, %v3696
        %3698 = vmatmul.bf16.gmra.mxu0 %v3425
        %v3699 = vpop.f32.mrf.mxu0
        %v3700 = vadd.f32 %v3184, %v3699
        %v3701 = vpop.f32.mrf.mxu0
        %v3702 = vadd.f32 %v3186, %v3701
        %3703 = vmatmul.bf16.gmra.mxu0 %v3443
        %v3704 = vpop.f32.mrf.mxu0
        %v3705 = vadd.f32 %v3189, %v3704
        %v3706 = vpop.f32.mrf.mxu0
        %v3707 = vadd.f32 %v3191, %v3706
        %3708 = vmatmul.bf16.gmra.mxu0 %v3461
        %v3709 = vpop.f32.mrf.mxu0
        %v3710 = vadd.f32 %v3194, %v3709
        %v3711 = vpop.f32.mrf.mxu0
        %v3712 = vadd.f32 %v3196, %v3711
        %3713 = vmatmul.bf16.gmra.mxu0 %v3479
        %v3714 = vpop.f32.mrf.mxu0
        %v3715 = vadd.f32 %v3199, %v3714
        %v3716 = vpop.f32.mrf.mxu0
        %v3717 = vadd.f32 %v3201, %v3716
        %3718 = vmatmul.bf16.gmra.mxu0 %v3497
        %v3719 = vpop.f32.mrf.mxu0
        %v3720 = vadd.f32 %v3204, %v3719
        %v3721 = vpop.f32.mrf.mxu0
        %v3722 = vadd.f32 %v3206, %v3721
        %3723 = vdwg.mxu0
        %3724 = vmatpush.bf16.msra.mxu0 %v3618
        %3725 = vmatpush.bf16.msra.mxu0 %v3617
        %3726 = vmatpush.bf16.msra.mxu0 %v3616
        %3727 = vmatpush.bf16.msra.mxu0 %v3615
        %3728 = vmatpush.bf16.msra.mxu0 %v3614
        %3729 = vmatpush.bf16.msra.mxu0 %v3613
        %3730 = vmatpush.bf16.msra.mxu0 %v3612
        %3731 = vmatpush.bf16.msra.mxu0 %v3611
        %3732 = vmatmul.bf16.gmra.mxu0 %v3236
        %v3733 = vpop.f32.mrf.mxu0
        %v3734 = vadd.f32 %v3645, %v3733
        %v3735 = vpop.f32.mrf.mxu0
        %v3736 = vadd.f32 %v3647, %v3735
        %3737 = vmatmul.bf16.gmra.mxu0 %v3254
        %v3738 = vpop.f32.mrf.mxu0
        %v3739 = vadd.f32 %v3650, %v3738
        %v3740 = vpop.f32.mrf.mxu0
        %v3741 = vadd.f32 %v3652, %v3740
        %3742 = vmatmul.bf16.gmra.mxu0 %v3272
        %v3743 = vpop.f32.mrf.mxu0
        %v3744 = vadd.f32 %v3655, %v3743
        %v3745 = vpop.f32.mrf.mxu0
        %v3746 = vadd.f32 %v3657, %v3745
        %3747 = vmatmul.bf16.gmra.mxu0 %v3290
        %v3748 = vpop.f32.mrf.mxu0
        %v3749 = vadd.f32 %v3660, %v3748
        %v3750 = vpop.f32.mrf.mxu0
        %v3751 = vadd.f32 %v3662, %v3750
        %3752 = vmatmul.bf16.gmra.mxu0 %v3308
        %v3753 = vpop.f32.mrf.mxu0
        %v3754 = vadd.f32 %v3665, %v3753
        %v3755 = vpop.f32.mrf.mxu0
        %v3756 = vadd.f32 %v3667, %v3755
        %3757 = vmatmul.bf16.gmra.mxu0 %v3326
        %v3758 = vpop.f32.mrf.mxu0
        %v3759 = vadd.f32 %v3670, %v3758
        %v3760 = vpop.f32.mrf.mxu0
        %v3761 = vadd.f32 %v3672, %v3760
        %3762 = vmatmul.bf16.gmra.mxu0 %v3344
        %v3763 = vpop.f32.mrf.mxu0
        %v3764 = vadd.f32 %v3675, %v3763
        %v3765 = vpop.f32.mrf.mxu0
        %v3766 = vadd.f32 %v3677, %v3765
        %3767 = vmatmul.bf16.gmra.mxu0 %v3362
        %v3768 = vpop.f32.mrf.mxu0
        %v3769 = vadd.f32 %v3680, %v3768
        %v3770 = vpop.f32.mrf.mxu0
        %v3771 = vadd.f32 %v3682, %v3770
        %3772 = vmatmul.bf16.gmra.mxu0 %v3380
        %v3773 = vpop.f32.mrf.mxu0
        %v3774 = vadd.f32 %v3685, %v3773
        %v3775 = vpop.f32.mrf.mxu0
        %v3776 = vadd.f32 %v3687, %v3775
        %3777 = vmatmul.bf16.gmra.mxu0 %v3398
        %v3778 = vpop.f32.mrf.mxu0
        %v3779 = vadd.f32 %v3690, %v3778
        %v3780 = vpop.f32.mrf.mxu0
        %v3781 = vadd.f32 %v3692, %v3780
        %3782 = vmatmul.bf16.gmra.mxu0 %v3416
        %v3783 = vpop.f32.mrf.mxu0
        %v3784 = vadd.f32 %v3695, %v3783
        %v3785 = vpop.f32.mrf.mxu0
        %v3786 = vadd.f32 %v3697, %v3785
        %3787 = vmatmul.bf16.gmra.mxu0 %v3434
        %v3788 = vpop.f32.mrf.mxu0
        %v3789 = vadd.f32 %v3700, %v3788
        %v3790 = vpop.f32.mrf.mxu0
        %v3791 = vadd.f32 %v3702, %v3790
        %3792 = vmatmul.bf16.gmra.mxu0 %v3452
        %v3793 = vpop.f32.mrf.mxu0
        %v3794 = vadd.f32 %v3705, %v3793
        %v3795 = vpop.f32.mrf.mxu0
        %v3796 = vadd.f32 %v3707, %v3795
        %3797 = vmatmul.bf16.gmra.mxu0 %v3470
        %v3798 = vpop.f32.mrf.mxu0
        %v3799 = vadd.f32 %v3710, %v3798
        %v3800 = vpop.f32.mrf.mxu0
        %v3801 = vadd.f32 %v3712, %v3800
        %3802 = vmatmul.bf16.gmra.mxu0 %v3488
        %v3803 = vpop.f32.mrf.mxu0
        %v3804 = vadd.f32 %v3715, %v3803
        %v3805 = vpop.f32.mrf.mxu0
        %v3806 = vadd.f32 %v3717, %v3805
        %3807 = vmatmul.bf16.gmra.mxu0 %v3506
        %v3808 = vpop.f32.mrf.mxu0
        %v3809 = vadd.f32 %v3720, %v3808
        %v3810 = vpop.f32.mrf.mxu0
        %v3811 = vadd.f32 %v3722, %v3810
        %3812 = vdwg.mxu0
        %v3813 = vunpack.c.l.b16 %v2232
        %v3814 = vunpack.c.h.b16 %v2232
        %v3815 = vunpack.c.l.b16 0
        %v3816 = vunpack.c.h.b16 0
        %vm3817 = vcmp.ne.s32.totalorder %v3813, %v3815
        %vm3818 = vcmp.ne.s32.totalorder %v3814, %v3816
        %vm3819 = vmpackc.low %vm3818, %vm3817
        %v3820 = vsel %vm3819, %v948, 0
        %v3821 = vsel %vm2374, %v914, 0
        %v3822 = vsel %vm2381, %v915, 0
        %v3823 = vsel %vm2388, %v916, 0
        %v3824 = vsel %vm2395, %v917, 0
        %v3825 = vsel %vm2402, %v918, 0
        %v3826 = vsel %vm2409, %v919, 0
        %v3827 = vsel %vm2416, %v920, 0
        %v3828 = vsel %vm2423, %v921, 0
        %v3829 = vsel %vm2430, %v922, 0
        %v3830 = vsel %vm2437, %v923, 0
        %v3831 = vsel %vm2444, %v924, 0
        %v3832 = vsel %vm2451, %v925, 0
        %v3833 = vsel %vm2458, %v926, 0
        %v3834 = vsel %vm2465, %v927, 0
        %v3835 = vsel %vm2472, %v928, 0
        %v3836 = vsel %vm2479, %v951, 0
        %v3838 = vshrl.u32 %v3820, 16
        %v3840 = vshll.u32 %v3820, 16
        %v3842 = vrot.slane %v3840, 1
        %v3843 = vor.u32 %v3838, %v3842
        %v3845 = vshll.u32 %v3821, 16
        %v3847 = vrot.slane %v3845, 1
        %v3848 = vsel %vm1882, %v3843, %v3847
        %v3849 = vshrl.u32 %v3821, 16
        %v3851 = vor.u32 %v3849, %v3847
        %v3853 = vshll.u32 %v3822, 16
        %v3855 = vrot.slane %v3853, 1
        %v3856 = vsel %vm1882, %v3851, %v3855
        %v3857 = vshrl.u32 %v3822, 16
        %v3859 = vor.u32 %v3857, %v3855
        %v3861 = vshll.u32 %v3823, 16
        %v3863 = vrot.slane %v3861, 1
        %v3864 = vsel %vm1882, %v3859, %v3863
        %v3865 = vshrl.u32 %v3823, 16
        %v3867 = vor.u32 %v3865, %v3863
        %v3869 = vshll.u32 %v3824, 16
        %v3871 = vrot.slane %v3869, 1
        %v3872 = vsel %vm1882, %v3867, %v3871
        %v3873 = vshrl.u32 %v3824, 16
        %v3875 = vor.u32 %v3873, %v3871
        %v3877 = vshll.u32 %v3825, 16
        %v3879 = vrot.slane %v3877, 1
        %v3880 = vsel %vm1882, %v3875, %v3879
        %v3881 = vshrl.u32 %v3825, 16
        %v3883 = vor.u32 %v3881, %v3879
        %v3885 = vshll.u32 %v3826, 16
        %v3887 = vrot.slane %v3885, 1
        %v3888 = vsel %vm1882, %v3883, %v3887
        %v3889 = vshrl.u32 %v3826, 16
        %v3891 = vor.u32 %v3889, %v3887
        %v3893 = vshll.u32 %v3827, 16
        %v3895 = vrot.slane %v3893, 1
        %v3896 = vsel %vm1882, %v3891, %v3895
        %v3897 = vshrl.u32 %v3827, 16
        %v3899 = vor.u32 %v3897, %v3895
        %v3901 = vshll.u32 %v3828, 16
        %v3903 = vrot.slane %v3901, 1
        %v3904 = vsel %vm1882, %v3899, %v3903
        %v3905 = vshrl.u32 %v3828, 16
        %v3907 = vor.u32 %v3905, %v3903
        %v3909 = vshll.u32 %v3829, 16
        %v3911 = vrot.slane %v3909, 1
        %v3912 = vsel %vm1882, %v3907, %v3911
        %v3913 = vshrl.u32 %v3829, 16
        %v3915 = vor.u32 %v3913, %v3911
        %v3917 = vshll.u32 %v3830, 16
        %v3919 = vrot.slane %v3917, 1
        %v3920 = vsel %vm1882, %v3915, %v3919
        %v3921 = vshrl.u32 %v3830, 16
        %v3923 = vor.u32 %v3921, %v3919
        %v3925 = vshll.u32 %v3831, 16
        %v3927 = vrot.slane %v3925, 1
        %v3928 = vsel %vm1882, %v3923, %v3927
        %v3929 = vshrl.u32 %v3831, 16
        %v3931 = vor.u32 %v3929, %v3927
        %v3933 = vshll.u32 %v3832, 16
        %v3935 = vrot.slane %v3933, 1
        %v3936 = vsel %vm1882, %v3931, %v3935
        %v3937 = vshrl.u32 %v3832, 16
        %v3939 = vor.u32 %v3937, %v3935
        %v3941 = vshll.u32 %v3833, 16
        %v3943 = vrot.slane %v3941, 1
        %v3944 = vsel %vm1882, %v3939, %v3943
        %v3945 = vshrl.u32 %v3833, 16
        %v3947 = vor.u32 %v3945, %v3943
        %v3949 = vshll.u32 %v3834, 16
        %v3951 = vrot.slane %v3949, 1
        %v3952 = vsel %vm1882, %v3947, %v3951
        %v3953 = vshrl.u32 %v3834, 16
        %v3955 = vor.u32 %v3953, %v3951
        %v3957 = vshll.u32 %v3835, 16
        %v3959 = vrot.slane %v3957, 1
        %v3960 = vsel %vm1882, %v3955, %v3959
        %v3961 = vshrl.u32 %v3835, 16
        %v3963 = vor.u32 %v3961, %v3959
        %v3965 = vshll.u32 %v3836, 16
        %v3967 = vrot.slane %v3965, 1
        %v3968 = vsel %vm1882, %v3963, %v3967
        %v3969 = vshrl.u32 %v3836, 16
        %v3971 = vor.u32 %v3969, %v3967
        %v3972 = vld [vmem:[#allocation5 + $0x100] sm:$0xf]
        %v3973 = vld [vmem:[#allocation5 + $0x104] sm:$0xf]
        %v3974 = vld [vmem:[#allocation5 + $0x108] sm:$0xf]
        %v3975 = vld [vmem:[#allocation5 + $0x10c] sm:$0xf]
        %v3976 = vld [vmem:[#allocation5 + $0x110] sm:$0xf]
        %v3977 = vld [vmem:[#allocation5 + $0x114] sm:$0xf]
        %v3978 = vld [vmem:[#allocation5 + $0x118] sm:$0xf]
        %v3979 = vld [vmem:[#allocation5 + $0x11c] sm:$0xf]
        %v3980 = vld [vmem:[#allocation5 + $0x120] sm:$0xf]
        %v3981 = vld [vmem:[#allocation5 + $0x124] sm:$0xf]
        %v3982 = vld [vmem:[#allocation5 + $0x128] sm:$0xf]
        %v3983 = vld [vmem:[#allocation5 + $0x12c] sm:$0xf]
        %v3984 = vld [vmem:[#allocation5 + $0x130] sm:$0xf]
        %v3985 = vld [vmem:[#allocation5 + $0x134] sm:$0xf]
        %v3986 = vld [vmem:[#allocation5 + $0x138] sm:$0xf]
        %v3987 = vld [vmem:[#allocation5 + $0x13c] sm:$0xf]
        %v3988 = vld [vmem:[#allocation5 + $0x140] sm:$0xf]
        %v3989 = vld [vmem:[#allocation5 + $0x144] sm:$0xf]
        %v3990 = vld [vmem:[#allocation5 + $0x148] sm:$0xf]
        %v3991 = vld [vmem:[#allocation5 + $0x14c] sm:$0xf]
        %v3992 = vld [vmem:[#allocation5 + $0x150] sm:$0xf]
        %v3993 = vld [vmem:[#allocation5 + $0x154] sm:$0xf]
        %v3994 = vld [vmem:[#allocation5 + $0x158] sm:$0xf]
        %v3995 = vld [vmem:[#allocation5 + $0x15c] sm:$0xf]
        %v3996 = vld [vmem:[#allocation5 + $0x160] sm:$0xf]
        %v3997 = vld [vmem:[#allocation5 + $0x164] sm:$0xf]
        %v3998 = vld [vmem:[#allocation5 + $0x168] sm:$0xf]
        %v3999 = vld [vmem:[#allocation5 + $0x16c] sm:$0xf]
        %v4000 = vld [vmem:[#allocation5 + $0x170] sm:$0xf]
        %v4001 = vld [vmem:[#allocation5 + $0x174] sm:$0xf]
        %v4002 = vld [vmem:[#allocation5 + $0x178] sm:$0xf]
        %v4003 = vld [vmem:[#allocation5 + $0x17c] sm:$0xf]
        %vm4006 = vcmask 1043456
        %v4007 = vrot.slane %v948, 4
        %v4008 = vrot.slane %v914, 4
        %v4009 = vsel %vm4006, %v4007, %v4008
        %v4010 = vrot.slane %v3848, 4
        %v4011 = vrot.slane %v3856, 4
        %v4012 = vsel %vm4006, %v4010, %v4011
        %v4013 = vrot.slane %v915, 4
        %v4014 = vsel %vm4006, %v4008, %v4013
        %v4015 = vrot.slane %v3864, 4
        %v4016 = vsel %vm4006, %v4011, %v4015
        %v4017 = vrot.slane %v916, 4
        %v4018 = vsel %vm4006, %v4013, %v4017
        %v4019 = vrot.slane %v3872, 4
        %v4020 = vsel %vm4006, %v4015, %v4019
        %v4021 = vrot.slane %v917, 4
        %v4022 = vsel %vm4006, %v4017, %v4021
        %v4023 = vrot.slane %v3880, 4
        %v4024 = vsel %vm4006, %v4019, %v4023
        %v4025 = vrot.slane %v918, 4
        %v4026 = vsel %vm4006, %v4021, %v4025
        %v4027 = vrot.slane %v3888, 4
        %v4028 = vsel %vm4006, %v4023, %v4027
        %v4029 = vrot.slane %v919, 4
        %v4030 = vsel %vm4006, %v4025, %v4029
        %v4031 = vrot.slane %v3896, 4
        %v4032 = vsel %vm4006, %v4027, %v4031
        %v4033 = vrot.slane %v920, 4
        %v4034 = vsel %vm4006, %v4029, %v4033
        %v4035 = vrot.slane %v3904, 4
        %v4036 = vsel %vm4006, %v4031, %v4035
        %v4037 = vrot.slane %v921, 4
        %v4038 = vsel %vm4006, %v4033, %v4037
        %v4039 = vrot.slane %v3912, 4
        %v4040 = vsel %vm4006, %v4035, %v4039
        %v4041 = vrot.slane %v922, 4
        %v4042 = vsel %vm4006, %v4037, %v4041
        %v4043 = vrot.slane %v3920, 4
        %v4044 = vsel %vm4006, %v4039, %v4043
        %v4045 = vrot.slane %v923, 4
        %v4046 = vsel %vm4006, %v4041, %v4045
        %v4047 = vrot.slane %v3928, 4
        %v4048 = vsel %vm4006, %v4043, %v4047
        %v4049 = vrot.slane %v924, 4
        %v4050 = vsel %vm4006, %v4045, %v4049
        %v4051 = vrot.slane %v3936, 4
        %v4052 = vsel %vm4006, %v4047, %v4051
        %v4053 = vrot.slane %v925, 4
        %v4054 = vsel %vm4006, %v4049, %v4053
        %v4055 = vrot.slane %v3944, 4
        %v4056 = vsel %vm4006, %v4051, %v4055
        %v4057 = vrot.slane %v926, 4
        %v4058 = vsel %vm4006, %v4053, %v4057
        %v4059 = vrot.slane %v3952, 4
        %v4060 = vsel %vm4006, %v4055, %v4059
        %v4061 = vrot.slane %v927, 4
        %v4062 = vsel %vm4006, %v4057, %v4061
        %v4063 = vrot.slane %v3960, 4
        %v4064 = vsel %vm4006, %v4059, %v4063
        %v4065 = vrot.slane %v928, 4
        %v4066 = vsel %vm4006, %v4061, %v4065
        %v4067 = vrot.slane %v3968, 4
        %v4068 = vsel %vm4006, %v4063, %v4067
        %v4069 = vrot.slane %v951, 4
        %v4070 = vsel %vm4006, %v4065, %v4069
        %v4071 = vrot.slane %v3971, 4
        %v4072 = vsel %vm4006, %v4067, %v4071
        %v4137 = vunpack.c.l.b16 %v3972
        %v4138 = vunpack.c.l.b16 %v3973
        %v4139 = vunpack.c.l.b16 %v3974
        %v4140 = vunpack.c.l.b16 %v3975
        %v4141 = vunpack.c.l.b16 %v3976
        %v4142 = vunpack.c.l.b16 %v3977
        %v4143 = vunpack.c.l.b16 %v3978
        %v4144 = vunpack.c.l.b16 %v3979
        %v4145 = vunpack.c.l.b16 %v3980
        %v4146 = vunpack.c.l.b16 %v3981
        %v4147 = vunpack.c.l.b16 %v3982
        %v4148 = vunpack.c.l.b16 %v3983
        %v4149 = vunpack.c.l.b16 %v3984
        %v4150 = vunpack.c.l.b16 %v3985
        %v4151 = vunpack.c.l.b16 %v3986
        %v4152 = vunpack.c.l.b16 %v3987
        %v4153 = vunpack.c.l.b16 %v3988
        %v4154 = vunpack.c.l.b16 %v3989
        %v4155 = vunpack.c.l.b16 %v3990
        %v4156 = vunpack.c.l.b16 %v3991
        %v4157 = vunpack.c.l.b16 %v3992
        %v4158 = vunpack.c.l.b16 %v3993
        %v4159 = vunpack.c.l.b16 %v3994
        %v4160 = vunpack.c.l.b16 %v3995
        %v4161 = vunpack.c.l.b16 %v3996
        %v4162 = vunpack.c.l.b16 %v3997
        %v4163 = vunpack.c.l.b16 %v3998
        %v4164 = vunpack.c.l.b16 %v3999
        %v4165 = vunpack.c.l.b16 %v4000
        %v4166 = vunpack.c.l.b16 %v4001
        %v4167 = vunpack.c.l.b16 %v4002
        %v4168 = vunpack.c.l.b16 %v4003
        %v4169 = vpack.c.b16 %v4138, %v4137
        %v4170 = vpack.c.b16 %v4140, %v4139
        %v4171 = vpack.c.b16 %v4142, %v4141
        %v4172 = vpack.c.b16 %v4144, %v4143
        %v4173 = vpack.c.b16 %v4146, %v4145
        %v4174 = vpack.c.b16 %v4148, %v4147
        %v4175 = vpack.c.b16 %v4150, %v4149
        %v4176 = vpack.c.b16 %v4152, %v4151
        %v4177 = vpack.c.b16 %v4154, %v4153
        %v4178 = vpack.c.b16 %v4156, %v4155
        %v4179 = vpack.c.b16 %v4158, %v4157
        %v4180 = vpack.c.b16 %v4160, %v4159
        %v4181 = vpack.c.b16 %v4162, %v4161
        %v4182 = vpack.c.b16 %v4164, %v4163
        %v4183 = vpack.c.b16 %v4166, %v4165
        %v4184 = vpack.c.b16 %v4168, %v4167
        %4201 = vmatpush.bf16.msra.mxu0 %v4176
        %4202 = vmatpush.bf16.msra.mxu0 %v4175
        %4203 = vmatpush.bf16.msra.mxu0 %v4174
        %4204 = vmatpush.bf16.msra.mxu0 %v4173
        %4205 = vmatpush.bf16.msra.mxu0 %v4172
        %4206 = vmatpush.bf16.msra.mxu0 %v4171
        %4207 = vmatpush.bf16.msra.mxu0 %v4170
        %4208 = vmatpush.bf16.msra.mxu0 %v4169
        %4209 = vmatmul.bf16.gmra.mxu0 %v4009
        %v4210 = vpop.f32.mrf.mxu0
        %v4211 = vadd.f32 0.0, %v4210
        %v4212 = vpop.f32.mrf.mxu0
        %v4213 = vadd.f32 0.0, %v4212
        %4214 = vmatmul.bf16.gmra.mxu0 %v4014
        %v4215 = vpop.f32.mrf.mxu0
        %v4216 = vadd.f32 0.0, %v4215
        %v4217 = vpop.f32.mrf.mxu0
        %v4218 = vadd.f32 0.0, %v4217
        %4219 = vmatmul.bf16.gmra.mxu0 %v4018
        %v4220 = vpop.f32.mrf.mxu0
        %v4221 = vadd.f32 0.0, %v4220
        %v4222 = vpop.f32.mrf.mxu0
        %v4223 = vadd.f32 0.0, %v4222
        %4224 = vmatmul.bf16.gmra.mxu0 %v4022
        %v4225 = vpop.f32.mrf.mxu0
        %v4226 = vadd.f32 0.0, %v4225
        %v4227 = vpop.f32.mrf.mxu0
        %v4228 = vadd.f32 0.0, %v4227
        %4229 = vmatmul.bf16.gmra.mxu0 %v4026
        %v4230 = vpop.f32.mrf.mxu0
        %v4231 = vadd.f32 0.0, %v4230
        %v4232 = vpop.f32.mrf.mxu0
        %v4233 = vadd.f32 0.0, %v4232
        %4234 = vmatmul.bf16.gmra.mxu0 %v4030
        %v4235 = vpop.f32.mrf.mxu0
        %v4236 = vadd.f32 0.0, %v4235
        %v4237 = vpop.f32.mrf.mxu0
        %v4238 = vadd.f32 0.0, %v4237
        %4239 = vmatmul.bf16.gmra.mxu0 %v4034
        %v4240 = vpop.f32.mrf.mxu0
        %v4241 = vadd.f32 0.0, %v4240
        %v4242 = vpop.f32.mrf.mxu0
        %v4243 = vadd.f32 0.0, %v4242
        %4244 = vmatmul.bf16.gmra.mxu0 %v4038
        %v4245 = vpop.f32.mrf.mxu0
        %v4246 = vadd.f32 0.0, %v4245
        %v4247 = vpop.f32.mrf.mxu0
        %v4248 = vadd.f32 0.0, %v4247
        %4249 = vmatmul.bf16.gmra.mxu0 %v4042
        %v4250 = vpop.f32.mrf.mxu0
        %v4251 = vadd.f32 0.0, %v4250
        %v4252 = vpop.f32.mrf.mxu0
        %v4253 = vadd.f32 0.0, %v4252
        %4254 = vmatmul.bf16.gmra.mxu0 %v4046
        %v4255 = vpop.f32.mrf.mxu0
        %v4256 = vadd.f32 0.0, %v4255
        %v4257 = vpop.f32.mrf.mxu0
        %v4258 = vadd.f32 0.0, %v4257
        %4259 = vmatmul.bf16.gmra.mxu0 %v4050
        %v4260 = vpop.f32.mrf.mxu0
        %v4261 = vadd.f32 0.0, %v4260
        %v4262 = vpop.f32.mrf.mxu0
        %v4263 = vadd.f32 0.0, %v4262
        %4264 = vmatmul.bf16.gmra.mxu0 %v4054
        %v4265 = vpop.f32.mrf.mxu0
        %v4266 = vadd.f32 0.0, %v4265
        %v4267 = vpop.f32.mrf.mxu0
        %v4268 = vadd.f32 0.0, %v4267
        %4269 = vmatmul.bf16.gmra.mxu0 %v4058
        %v4270 = vpop.f32.mrf.mxu0
        %v4271 = vadd.f32 0.0, %v4270
        %v4272 = vpop.f32.mrf.mxu0
        %v4273 = vadd.f32 0.0, %v4272
        %4274 = vmatmul.bf16.gmra.mxu0 %v4062
        %v4275 = vpop.f32.mrf.mxu0
        %v4276 = vadd.f32 0.0, %v4275
        %v4277 = vpop.f32.mrf.mxu0
        %v4278 = vadd.f32 0.0, %v4277
        %4279 = vmatmul.bf16.gmra.mxu0 %v4066
        %v4280 = vpop.f32.mrf.mxu0
        %v4281 = vadd.f32 0.0, %v4280
        %v4282 = vpop.f32.mrf.mxu0
        %v4283 = vadd.f32 0.0, %v4282
        %4284 = vmatmul.bf16.gmra.mxu0 %v4070
        %v4285 = vpop.f32.mrf.mxu0
        %v4286 = vadd.f32 0.0, %v4285
        %v4287 = vpop.f32.mrf.mxu0
        %v4288 = vadd.f32 0.0, %v4287
        %4289 = vdwg.mxu0
        %4290 = vmatpush.bf16.msra.mxu0 %v4184
        %4291 = vmatpush.bf16.msra.mxu0 %v4183
        %4292 = vmatpush.bf16.msra.mxu0 %v4182
        %4293 = vmatpush.bf16.msra.mxu0 %v4181
        %4294 = vmatpush.bf16.msra.mxu0 %v4180
        %4295 = vmatpush.bf16.msra.mxu0 %v4179
        %4296 = vmatpush.bf16.msra.mxu0 %v4178
        %4297 = vmatpush.bf16.msra.mxu0 %v4177
        %4298 = vmatmul.bf16.gmra.mxu0 %v4012
        %v4299 = vpop.f32.mrf.mxu0
        %v4300 = vadd.f32 %v4211, %v4299
        %v4301 = vpop.f32.mrf.mxu0
        %v4302 = vadd.f32 %v4213, %v4301
        %4303 = vmatmul.bf16.gmra.mxu0 %v4016
        %v4304 = vpop.f32.mrf.mxu0
        %v4305 = vadd.f32 %v4216, %v4304
        %v4306 = vpop.f32.mrf.mxu0
        %v4307 = vadd.f32 %v4218, %v4306
        %4308 = vmatmul.bf16.gmra.mxu0 %v4020
        %v4309 = vpop.f32.mrf.mxu0
        %v4310 = vadd.f32 %v4221, %v4309
        %v4311 = vpop.f32.mrf.mxu0
        %v4312 = vadd.f32 %v4223, %v4311
        %4313 = vmatmul.bf16.gmra.mxu0 %v4024
        %v4314 = vpop.f32.mrf.mxu0
        %v4315 = vadd.f32 %v4226, %v4314
        %v4316 = vpop.f32.mrf.mxu0
        %v4317 = vadd.f32 %v4228, %v4316
        %4318 = vmatmul.bf16.gmra.mxu0 %v4028
        %v4319 = vpop.f32.mrf.mxu0
        %v4320 = vadd.f32 %v4231, %v4319
        %v4321 = vpop.f32.mrf.mxu0
        %v4322 = vadd.f32 %v4233, %v4321
        %4323 = vmatmul.bf16.gmra.mxu0 %v4032
        %v4324 = vpop.f32.mrf.mxu0
        %v4325 = vadd.f32 %v4236, %v4324
        %v4326 = vpop.f32.mrf.mxu0
        %v4327 = vadd.f32 %v4238, %v4326
        %4328 = vmatmul.bf16.gmra.mxu0 %v4036
        %v4329 = vpop.f32.mrf.mxu0
        %v4330 = vadd.f32 %v4241, %v4329
        %v4331 = vpop.f32.mrf.mxu0
        %v4332 = vadd.f32 %v4243, %v4331
        %4333 = vmatmul.bf16.gmra.mxu0 %v4040
        %v4334 = vpop.f32.mrf.mxu0
        %v4335 = vadd.f32 %v4246, %v4334
        %v4336 = vpop.f32.mrf.mxu0
        %v4337 = vadd.f32 %v4248, %v4336
        %4338 = vmatmul.bf16.gmra.mxu0 %v4044
        %v4339 = vpop.f32.mrf.mxu0
        %v4340 = vadd.f32 %v4251, %v4339
        %v4341 = vpop.f32.mrf.mxu0
        %v4342 = vadd.f32 %v4253, %v4341
        %4343 = vmatmul.bf16.gmra.mxu0 %v4048
        %v4344 = vpop.f32.mrf.mxu0
        %v4345 = vadd.f32 %v4256, %v4344
        %v4346 = vpop.f32.mrf.mxu0
        %v4347 = vadd.f32 %v4258, %v4346
        %4348 = vmatmul.bf16.gmra.mxu0 %v4052
        %v4349 = vpop.f32.mrf.mxu0
        %v4350 = vadd.f32 %v4261, %v4349
        %v4351 = vpop.f32.mrf.mxu0
        %v4352 = vadd.f32 %v4263, %v4351
        %4353 = vmatmul.bf16.gmra.mxu0 %v4056
        %v4354 = vpop.f32.mrf.mxu0
        %v4355 = vadd.f32 %v4266, %v4354
        %v4356 = vpop.f32.mrf.mxu0
        %v4357 = vadd.f32 %v4268, %v4356
        %4358 = vmatmul.bf16.gmra.mxu0 %v4060
        %v4359 = vpop.f32.mrf.mxu0
        %v4360 = vadd.f32 %v4271, %v4359
        %v4361 = vpop.f32.mrf.mxu0
        %v4362 = vadd.f32 %v4273, %v4361
        %4363 = vmatmul.bf16.gmra.mxu0 %v4064
        %v4364 = vpop.f32.mrf.mxu0
        %v4365 = vadd.f32 %v4276, %v4364
        %v4366 = vpop.f32.mrf.mxu0
        %v4367 = vadd.f32 %v4278, %v4366
        %4368 = vmatmul.bf16.gmra.mxu0 %v4068
        %v4369 = vpop.f32.mrf.mxu0
        %v4370 = vadd.f32 %v4281, %v4369
        %v4371 = vpop.f32.mrf.mxu0
        %v4372 = vadd.f32 %v4283, %v4371
        %4373 = vmatmul.bf16.gmra.mxu0 %v4072
        %v4374 = vpop.f32.mrf.mxu0
        %v4375 = vadd.f32 %v4286, %v4374
        %v4376 = vpop.f32.mrf.mxu0
        %v4377 = vadd.f32 %v4288, %v4376
        %4378 = vdwg.mxu0
        %v4379 = vadd.f32 %v3734, %v4300
        %v4380 = vadd.f32 %v3736, %v4302
        %v4381 = vadd.f32 %v3739, %v4305
        %v4382 = vadd.f32 %v3741, %v4307
        %v4383 = vadd.f32 %v3744, %v4310
        %v4384 = vadd.f32 %v3746, %v4312
        %v4385 = vadd.f32 %v3749, %v4315
        %v4386 = vadd.f32 %v3751, %v4317
        %v4387 = vadd.f32 %v3754, %v4320
        %v4388 = vadd.f32 %v3756, %v4322
        %v4389 = vadd.f32 %v3759, %v4325
        %v4390 = vadd.f32 %v3761, %v4327
        %v4391 = vadd.f32 %v3764, %v4330
        %v4392 = vadd.f32 %v3766, %v4332
        %v4393 = vadd.f32 %v3769, %v4335
        %v4394 = vadd.f32 %v3771, %v4337
        %v4395 = vadd.f32 %v3774, %v4340
        %v4396 = vadd.f32 %v3776, %v4342
        %v4397 = vadd.f32 %v3779, %v4345
        %v4398 = vadd.f32 %v3781, %v4347
        %v4399 = vadd.f32 %v3784, %v4350
        %v4400 = vadd.f32 %v3786, %v4352
        %v4401 = vadd.f32 %v3789, %v4355
        %v4402 = vadd.f32 %v3791, %v4357
        %v4403 = vadd.f32 %v3794, %v4360
        %v4404 = vadd.f32 %v3796, %v4362
        %v4405 = vadd.f32 %v3799, %v4365
        %v4406 = vadd.f32 %v3801, %v4367
        %v4407 = vadd.f32 %v3804, %v4370
        %v4408 = vadd.f32 %v3806, %v4372
        %v4409 = vadd.f32 %v3809, %v4375
        %v4410 = vadd.f32 %v3811, %v4377
        %v4411 = vsel %vm2502, %v914, 0
        %v4412 = vsel %vm1760, %v915, 0
        %v4413 = vsel %vm1767, %v916, 0
        %v4414 = vsel %vm1774, %v917, 0
        %v4415 = vsel %vm1781, %v918, 0
        %v4416 = vsel %vm1788, %v919, 0
        %v4417 = vsel %vm1795, %v920, 0
        %v4418 = vsel %vm1802, %v921, 0
        %v4419 = vsel %vm1809, %v922, 0
        %v4420 = vsel %vm1816, %v923, 0
        %v4421 = vsel %vm1823, %v924, 0
        %v4422 = vsel %vm1830, %v925, 0
        %v4423 = vsel %vm1837, %v926, 0
        %v4424 = vsel %vm1844, %v927, 0
        %v4425 = vsel %vm1851, %v928, 0
        %v4426 = vsel %vm1858, %v951, 0
        %v4427 = vshll.u32 %v951, 16
        %v4429 = vrot.slane %v4427, 1
        %v4430 = vsel %vm1882, %v2015, %v4429
        %v4431 = vshrl.u32 %v951, 16
        %v4433 = vor.u32 %v4431, %v4429
        %v4434 = vsel %vm1882, %v4433, %v1887
        %v4435 = vld [vmem:[#allocation5 + $0x180] sm:$0xf]
        %v4436 = vld [vmem:[#allocation5 + $0x184] sm:$0xf]
        %v4437 = vld [vmem:[#allocation5 + $0x188] sm:$0xf]
        %v4438 = vld [vmem:[#allocation5 + $0x18c] sm:$0xf]
        %v4439 = vld [vmem:[#allocation5 + $0x190] sm:$0xf]
        %v4440 = vld [vmem:[#allocation5 + $0x194] sm:$0xf]
        %v4441 = vld [vmem:[#allocation5 + $0x198] sm:$0xf]
        %v4442 = vld [vmem:[#allocation5 + $0x19c] sm:$0xf]
        %v4443 = vld [vmem:[#allocation5 + $0x1a0] sm:$0xf]
        %v4444 = vld [vmem:[#allocation5 + $0x1a4] sm:$0xf]
        %v4445 = vld [vmem:[#allocation5 + $0x1a8] sm:$0xf]
        %v4446 = vld [vmem:[#allocation5 + $0x1ac] sm:$0xf]
        %v4447 = vld [vmem:[#allocation5 + $0x1b0] sm:$0xf]
        %v4448 = vld [vmem:[#allocation5 + $0x1b4] sm:$0xf]
        %v4449 = vld [vmem:[#allocation5 + $0x1b8] sm:$0xf]
        %v4450 = vld [vmem:[#allocation5 + $0x1bc] sm:$0xf]
        %v4451 = vld [vmem:[#allocation5 + $0x1c0] sm:$0xf]
        %v4452 = vld [vmem:[#allocation5 + $0x1c4] sm:$0xf]
        %v4453 = vld [vmem:[#allocation5 + $0x1c8] sm:$0xf]
        %v4454 = vld [vmem:[#allocation5 + $0x1cc] sm:$0xf]
        %v4455 = vld [vmem:[#allocation5 + $0x1d0] sm:$0xf]
        %v4456 = vld [vmem:[#allocation5 + $0x1d4] sm:$0xf]
        %v4457 = vld [vmem:[#allocation5 + $0x1d8] sm:$0xf]
        %v4458 = vld [vmem:[#allocation5 + $0x1dc] sm:$0xf]
        %v4459 = vld [vmem:[#allocation5 + $0x1e0] sm:$0xf]
        %v4460 = vld [vmem:[#allocation5 + $0x1e4] sm:$0xf]
        %v4461 = vld [vmem:[#allocation5 + $0x1e8] sm:$0xf]
        %v4462 = vld [vmem:[#allocation5 + $0x1ec] sm:$0xf]
        %v4463 = vld [vmem:[#allocation5 + $0x1f0] sm:$0xf]
        %v4464 = vld [vmem:[#allocation5 + $0x1f4] sm:$0xf]
        %v4465 = vld [vmem:[#allocation5 + $0x1f8] sm:$0xf]
        %v4466 = vld [vmem:[#allocation5 + $0x1fc] sm:$0xf]
        %v4468 = vshrl.u32 %v4411, 16
        %v4470 = vrot.slane %v4468, 3
        %v4471 = vshll.u32 %v4411, 16
        %v4473 = vrot.slane %v4471, 4
        %v4474 = vor.u32 %v4470, %v4473
        %v4476 = vshrl.u32 %v4412, 16
        %v4478 = vrot.slane %v4476, 3
        %v4479 = vshll.u32 %v4412, 16
        %v4481 = vrot.slane %v4479, 4
        %v4482 = vor.u32 %v4478, %v4481
        %v4483 = vsel %vm2224, %v4474, %v4482
        %v4485 = vshrl.u32 %v4413, 16
        %v4487 = vrot.slane %v4485, 3
        %v4488 = vshll.u32 %v4413, 16
        %v4490 = vrot.slane %v4488, 4
        %v4491 = vor.u32 %v4487, %v4490
        %v4492 = vsel %vm2224, %v4482, %v4491
        %v4494 = vshrl.u32 %v4414, 16
        %v4496 = vrot.slane %v4494, 3
        %v4497 = vshll.u32 %v4414, 16
        %v4499 = vrot.slane %v4497, 4
        %v4500 = vor.u32 %v4496, %v4499
        %v4501 = vsel %vm2224, %v4491, %v4500
        %v4503 = vshrl.u32 %v4415, 16
        %v4505 = vrot.slane %v4503, 3
        %v4506 = vshll.u32 %v4415, 16
        %v4508 = vrot.slane %v4506, 4
        %v4509 = vor.u32 %v4505, %v4508
        %v4510 = vsel %vm2224, %v4500, %v4509
        %v4512 = vshrl.u32 %v4416, 16
        %v4514 = vrot.slane %v4512, 3
        %v4515 = vshll.u32 %v4416, 16
        %v4517 = vrot.slane %v4515, 4
        %v4518 = vor.u32 %v4514, %v4517
        %v4519 = vsel %vm2224, %v4509, %v4518
        %v4521 = vshrl.u32 %v4417, 16
        %v4523 = vrot.slane %v4521, 3
        %v4524 = vshll.u32 %v4417, 16
        %v4526 = vrot.slane %v4524, 4
        %v4527 = vor.u32 %v4523, %v4526
        %v4528 = vsel %vm2224, %v4518, %v4527
        %v4530 = vshrl.u32 %v4418, 16
        %v4532 = vrot.slane %v4530, 3
        %v4533 = vshll.u32 %v4418, 16
        %v4535 = vrot.slane %v4533, 4
        %v4536 = vor.u32 %v4532, %v4535
        %v4537 = vsel %vm2224, %v4527, %v4536
        %v4539 = vshrl.u32 %v4419, 16
        %v4541 = vrot.slane %v4539, 3
        %v4542 = vshll.u32 %v4419, 16
        %v4544 = vrot.slane %v4542, 4
        %v4545 = vor.u32 %v4541, %v4544
        %v4546 = vsel %vm2224, %v4536, %v4545
        %v4548 = vshrl.u32 %v4420, 16
        %v4550 = vrot.slane %v4548, 3
        %v4551 = vshll.u32 %v4420, 16
        %v4553 = vrot.slane %v4551, 4
        %v4554 = vor.u32 %v4550, %v4553
        %v4555 = vsel %vm2224, %v4545, %v4554
        %v4557 = vshrl.u32 %v4421, 16
        %v4559 = vrot.slane %v4557, 3
        %v4560 = vshll.u32 %v4421, 16
        %v4562 = vrot.slane %v4560, 4
        %v4563 = vor.u32 %v4559, %v4562
        %v4564 = vsel %vm2224, %v4554, %v4563
        %v4566 = vshrl.u32 %v4422, 16
        %v4568 = vrot.slane %v4566, 3
        %v4569 = vshll.u32 %v4422, 16
        %v4571 = vrot.slane %v4569, 4
        %v4572 = vor.u32 %v4568, %v4571
        %v4573 = vsel %vm2224, %v4563, %v4572
        %v4575 = vshrl.u32 %v4423, 16
        %v4577 = vrot.slane %v4575, 3
        %v4578 = vshll.u32 %v4423, 16
        %v4580 = vrot.slane %v4578, 4
        %v4581 = vor.u32 %v4577, %v4580
        %v4582 = vsel %vm2224, %v4572, %v4581
        %v4584 = vshrl.u32 %v4424, 16
        %v4586 = vrot.slane %v4584, 3
        %v4587 = vshll.u32 %v4424, 16
        %v4589 = vrot.slane %v4587, 4
        %v4590 = vor.u32 %v4586, %v4589
        %v4591 = vsel %vm2224, %v4581, %v4590
        %v4593 = vshrl.u32 %v4425, 16
        %v4595 = vrot.slane %v4593, 3
        %v4596 = vshll.u32 %v4425, 16
        %v4598 = vrot.slane %v4596, 4
        %v4599 = vor.u32 %v4595, %v4598
        %v4600 = vsel %vm2224, %v4590, %v4599
        %v4602 = vshrl.u32 %v4430, 16
        %v4604 = vrot.slane %v4602, 3
        %v4605 = vshll.u32 %v4430, 16
        %v4607 = vrot.slane %v4605, 4
        %v4608 = vor.u32 %v4604, %v4607
        %v4609 = vsel %vm2224, %v3487, %v4608
        %v4611 = vshrl.u32 %v4426, 16
        %v4613 = vrot.slane %v4611, 3
        %v4614 = vshll.u32 %v4426, 16
        %v4616 = vrot.slane %v4614, 4
        %v4617 = vor.u32 %v4613, %v4616
        %v4618 = vsel %vm2224, %v4599, %v4617
        %v4620 = vshrl.u32 %v4434, 16
        %v4622 = vrot.slane %v4620, 3
        %v4623 = vshll.u32 %v4434, 16
        %v4625 = vrot.slane %v4623, 4
        %v4626 = vor.u32 %v4622, %v4625
        %v4627 = vsel %vm2224, %v4608, %v4626
        %v4628 = vsel %vm2224, %v4617, %v3210
        %v4630 = vshrl.u32 %v1888, 16
        %v4632 = vrot.slane %v4630, 3
        %v4633 = vshll.u32 %v1888, 16
        %v4635 = vrot.slane %v4633, 4
        %v4636 = vor.u32 %v4632, %v4635
        %v4637 = vsel %vm2224, %v4626, %v4636
        %v4689 = vunpack.c.l.b16 %v4435
        %v4690 = vunpack.c.l.b16 %v4436
        %v4691 = vunpack.c.l.b16 %v4437
        %v4692 = vunpack.c.l.b16 %v4438
        %v4693 = vunpack.c.l.b16 %v4439
        %v4694 = vunpack.c.l.b16 %v4440
        %v4695 = vunpack.c.l.b16 %v4441
        %v4696 = vunpack.c.l.b16 %v4442
        %v4697 = vunpack.c.l.b16 %v4443
        %v4698 = vunpack.c.l.b16 %v4444
        %v4699 = vunpack.c.l.b16 %v4445
        %v4700 = vunpack.c.l.b16 %v4446
        %v4701 = vunpack.c.l.b16 %v4447
        %v4702 = vunpack.c.l.b16 %v4448
        %v4703 = vunpack.c.l.b16 %v4449
        %v4704 = vunpack.c.l.b16 %v4450
        %v4705 = vunpack.c.l.b16 %v4451
        %v4706 = vunpack.c.l.b16 %v4452
        %v4707 = vunpack.c.l.b16 %v4453
        %v4708 = vunpack.c.l.b16 %v4454
        %v4709 = vunpack.c.l.b16 %v4455
        %v4710 = vunpack.c.l.b16 %v4456
        %v4711 = vunpack.c.l.b16 %v4457
        %v4712 = vunpack.c.l.b16 %v4458
        %v4713 = vunpack.c.l.b16 %v4459
        %v4714 = vunpack.c.l.b16 %v4460
        %v4715 = vunpack.c.l.b16 %v4461
        %v4716 = vunpack.c.l.b16 %v4462
        %v4717 = vunpack.c.l.b16 %v4463
        %v4718 = vunpack.c.l.b16 %v4464
        %v4719 = vunpack.c.l.b16 %v4465
        %v4720 = vunpack.c.l.b16 %v4466
        %v4721 = vpack.c.b16 %v4690, %v4689
        %v4722 = vpack.c.b16 %v4692, %v4691
        %v4723 = vpack.c.b16 %v4694, %v4693
        %v4724 = vpack.c.b16 %v4696, %v4695
        %v4725 = vpack.c.b16 %v4698, %v4697
        %v4726 = vpack.c.b16 %v4700, %v4699
        %v4727 = vpack.c.b16 %v4702, %v4701
        %v4728 = vpack.c.b16 %v4704, %v4703
        %v4729 = vpack.c.b16 %v4706, %v4705
        %v4730 = vpack.c.b16 %v4708, %v4707
        %v4731 = vpack.c.b16 %v4710, %v4709
        %v4732 = vpack.c.b16 %v4712, %v4711
        %v4733 = vpack.c.b16 %v4714, %v4713
        %v4734 = vpack.c.b16 %v4716, %v4715
        %v4735 = vpack.c.b16 %v4718, %v4717
        %v4736 = vpack.c.b16 %v4720, %v4719
        %4753 = vmatpush.bf16.msra.mxu0 %v4728
        %4754 = vmatpush.bf16.msra.mxu0 %v4727
        %4755 = vmatpush.bf16.msra.mxu0 %v4726
        %4756 = vmatpush.bf16.msra.mxu0 %v4725
        %4757 = vmatpush.bf16.msra.mxu0 %v4724
        %4758 = vmatpush.bf16.msra.mxu0 %v4723
        %4759 = vmatpush.bf16.msra.mxu0 %v4722
        %4760 = vmatpush.bf16.msra.mxu0 %v4721
        %4761 = vmatmul.bf16.gmra.mxu0 %v4483
        %v4762 = vpop.f32.mrf.mxu0
        %v4763 = vadd.f32 0.0, %v4762
        %v4764 = vpop.f32.mrf.mxu0
        %v4765 = vadd.f32 0.0, %v4764
        %4766 = vmatmul.bf16.gmra.mxu0 %v4492
        %v4767 = vpop.f32.mrf.mxu0
        %v4768 = vadd.f32 0.0, %v4767
        %v4769 = vpop.f32.mrf.mxu0
        %v4770 = vadd.f32 0.0, %v4769
        %4771 = vmatmul.bf16.gmra.mxu0 %v4501
        %v4772 = vpop.f32.mrf.mxu0
        %v4773 = vadd.f32 0.0, %v4772
        %v4774 = vpop.f32.mrf.mxu0
        %v4775 = vadd.f32 0.0, %v4774
        %4776 = vmatmul.bf16.gmra.mxu0 %v4510
        %v4777 = vpop.f32.mrf.mxu0
        %v4778 = vadd.f32 0.0, %v4777
        %v4779 = vpop.f32.mrf.mxu0
        %v4780 = vadd.f32 0.0, %v4779
        %4781 = vmatmul.bf16.gmra.mxu0 %v4519
        %v4782 = vpop.f32.mrf.mxu0
        %v4783 = vadd.f32 0.0, %v4782
        %v4784 = vpop.f32.mrf.mxu0
        %v4785 = vadd.f32 0.0, %v4784
        %4786 = vmatmul.bf16.gmra.mxu0 %v4528
        %v4787 = vpop.f32.mrf.mxu0
        %v4788 = vadd.f32 0.0, %v4787
        %v4789 = vpop.f32.mrf.mxu0
        %v4790 = vadd.f32 0.0, %v4789
        %4791 = vmatmul.bf16.gmra.mxu0 %v4537
        %v4792 = vpop.f32.mrf.mxu0
        %v4793 = vadd.f32 0.0, %v4792
        %v4794 = vpop.f32.mrf.mxu0
        %v4795 = vadd.f32 0.0, %v4794
        %4796 = vmatmul.bf16.gmra.mxu0 %v4546
        %v4797 = vpop.f32.mrf.mxu0
        %v4798 = vadd.f32 0.0, %v4797
        %v4799 = vpop.f32.mrf.mxu0
        %v4800 = vadd.f32 0.0, %v4799
        %4801 = vmatmul.bf16.gmra.mxu0 %v4555
        %v4802 = vpop.f32.mrf.mxu0
        %v4803 = vadd.f32 0.0, %v4802
        %v4804 = vpop.f32.mrf.mxu0
        %v4805 = vadd.f32 0.0, %v4804
        %4806 = vmatmul.bf16.gmra.mxu0 %v4564
        %v4807 = vpop.f32.mrf.mxu0
        %v4808 = vadd.f32 0.0, %v4807
        %v4809 = vpop.f32.mrf.mxu0
        %v4810 = vadd.f32 0.0, %v4809
        %4811 = vmatmul.bf16.gmra.mxu0 %v4573
        %v4812 = vpop.f32.mrf.mxu0
        %v4813 = vadd.f32 0.0, %v4812
        %v4814 = vpop.f32.mrf.mxu0
        %v4815 = vadd.f32 0.0, %v4814
        %4816 = vmatmul.bf16.gmra.mxu0 %v4582
        %v4817 = vpop.f32.mrf.mxu0
        %v4818 = vadd.f32 0.0, %v4817
        %v4819 = vpop.f32.mrf.mxu0
        %v4820 = vadd.f32 0.0, %v4819
        %4821 = vmatmul.bf16.gmra.mxu0 %v4591
        %v4822 = vpop.f32.mrf.mxu0
        %v4823 = vadd.f32 0.0, %v4822
        %v4824 = vpop.f32.mrf.mxu0
        %v4825 = vadd.f32 0.0, %v4824
        %4826 = vmatmul.bf16.gmra.mxu0 %v4600
        %v4827 = vpop.f32.mrf.mxu0
        %v4828 = vadd.f32 0.0, %v4827
        %v4829 = vpop.f32.mrf.mxu0
        %v4830 = vadd.f32 0.0, %v4829
        %4831 = vmatmul.bf16.gmra.mxu0 %v4618
        %v4832 = vpop.f32.mrf.mxu0
        %v4833 = vadd.f32 0.0, %v4832
        %v4834 = vpop.f32.mrf.mxu0
        %v4835 = vadd.f32 0.0, %v4834
        %4836 = vmatmul.bf16.gmra.mxu0 %v4628
        %v4837 = vpop.f32.mrf.mxu0
        %v4838 = vadd.f32 0.0, %v4837
        %v4839 = vpop.f32.mrf.mxu0
        %v4840 = vadd.f32 0.0, %v4839
        %4841 = vdwg.mxu0
        %4842 = vmatpush.bf16.msra.mxu0 %v4736
        %4843 = vmatpush.bf16.msra.mxu0 %v4735
        %4844 = vmatpush.bf16.msra.mxu0 %v4734
        %4845 = vmatpush.bf16.msra.mxu0 %v4733
        %4846 = vmatpush.bf16.msra.mxu0 %v4732
        %4847 = vmatpush.bf16.msra.mxu0 %v4731
        %4848 = vmatpush.bf16.msra.mxu0 %v4730
        %4849 = vmatpush.bf16.msra.mxu0 %v4729
        %4850 = vmatmul.bf16.gmra.mxu0 %v3272
        %v4851 = vpop.f32.mrf.mxu0
        %v4852 = vadd.f32 %v4763, %v4851
        %v4853 = vpop.f32.mrf.mxu0
        %v4854 = vadd.f32 %v4765, %v4853
        %4855 = vmatmul.bf16.gmra.mxu0 %v3290
        %v4856 = vpop.f32.mrf.mxu0
        %v4857 = vadd.f32 %v4768, %v4856
        %v4858 = vpop.f32.mrf.mxu0
        %v4859 = vadd.f32 %v4770, %v4858
        %4860 = vmatmul.bf16.gmra.mxu0 %v3308
        %v4861 = vpop.f32.mrf.mxu0
        %v4862 = vadd.f32 %v4773, %v4861
        %v4863 = vpop.f32.mrf.mxu0
        %v4864 = vadd.f32 %v4775, %v4863
        %4865 = vmatmul.bf16.gmra.mxu0 %v3326
        %v4866 = vpop.f32.mrf.mxu0
        %v4867 = vadd.f32 %v4778, %v4866
        %v4868 = vpop.f32.mrf.mxu0
        %v4869 = vadd.f32 %v4780, %v4868
        %4870 = vmatmul.bf16.gmra.mxu0 %v3344
        %v4871 = vpop.f32.mrf.mxu0
        %v4872 = vadd.f32 %v4783, %v4871
        %v4873 = vpop.f32.mrf.mxu0
        %v4874 = vadd.f32 %v4785, %v4873
        %4875 = vmatmul.bf16.gmra.mxu0 %v3362
        %v4876 = vpop.f32.mrf.mxu0
        %v4877 = vadd.f32 %v4788, %v4876
        %v4878 = vpop.f32.mrf.mxu0
        %v4879 = vadd.f32 %v4790, %v4878
        %4880 = vmatmul.bf16.gmra.mxu0 %v3380
        %v4881 = vpop.f32.mrf.mxu0
        %v4882 = vadd.f32 %v4793, %v4881
        %v4883 = vpop.f32.mrf.mxu0
        %v4884 = vadd.f32 %v4795, %v4883
        %4885 = vmatmul.bf16.gmra.mxu0 %v3398
        %v4886 = vpop.f32.mrf.mxu0
        %v4887 = vadd.f32 %v4798, %v4886
        %v4888 = vpop.f32.mrf.mxu0
        %v4889 = vadd.f32 %v4800, %v4888
        %4890 = vmatmul.bf16.gmra.mxu0 %v3416
        %v4891 = vpop.f32.mrf.mxu0
        %v4892 = vadd.f32 %v4803, %v4891
        %v4893 = vpop.f32.mrf.mxu0
        %v4894 = vadd.f32 %v4805, %v4893
        %4895 = vmatmul.bf16.gmra.mxu0 %v3434
        %v4896 = vpop.f32.mrf.mxu0
        %v4897 = vadd.f32 %v4808, %v4896
        %v4898 = vpop.f32.mrf.mxu0
        %v4899 = vadd.f32 %v4810, %v4898
        %4900 = vmatmul.bf16.gmra.mxu0 %v3452
        %v4901 = vpop.f32.mrf.mxu0
        %v4902 = vadd.f32 %v4813, %v4901
        %v4903 = vpop.f32.mrf.mxu0
        %v4904 = vadd.f32 %v4815, %v4903
        %4905 = vmatmul.bf16.gmra.mxu0 %v3470
        %v4906 = vpop.f32.mrf.mxu0
        %v4907 = vadd.f32 %v4818, %v4906
        %v4908 = vpop.f32.mrf.mxu0
        %v4909 = vadd.f32 %v4820, %v4908
        %4910 = vmatmul.bf16.gmra.mxu0 %v3488
        %v4911 = vpop.f32.mrf.mxu0
        %v4912 = vadd.f32 %v4823, %v4911
        %v4913 = vpop.f32.mrf.mxu0
        %v4914 = vadd.f32 %v4825, %v4913
        %4915 = vmatmul.bf16.gmra.mxu0 %v4609
        %v4916 = vpop.f32.mrf.mxu0
        %v4917 = vadd.f32 %v4828, %v4916
        %v4918 = vpop.f32.mrf.mxu0
        %v4919 = vadd.f32 %v4830, %v4918
        %4920 = vmatmul.bf16.gmra.mxu0 %v4627
        %v4921 = vpop.f32.mrf.mxu0
        %v4922 = vadd.f32 %v4833, %v4921
        %v4923 = vpop.f32.mrf.mxu0
        %v4924 = vadd.f32 %v4835, %v4923
        %4925 = vmatmul.bf16.gmra.mxu0 %v4637
        %v4926 = vpop.f32.mrf.mxu0
        %v4927 = vadd.f32 %v4838, %v4926
        %v4928 = vpop.f32.mrf.mxu0
        %v4929 = vadd.f32 %v4840, %v4928
        %4930 = vdwg.mxu0
        %v4931 = vadd.f32 %v4379, %v4852
        %v4932 = vadd.f32 %v4380, %v4854
        %v4933 = vadd.f32 %v4381, %v4857
        %v4934 = vadd.f32 %v4382, %v4859
        %v4935 = vadd.f32 %v4383, %v4862
        %v4936 = vadd.f32 %v4384, %v4864
        %v4937 = vadd.f32 %v4385, %v4867
        %v4938 = vadd.f32 %v4386, %v4869
        %v4939 = vadd.f32 %v4387, %v4872
        %v4940 = vadd.f32 %v4388, %v4874
        %v4941 = vadd.f32 %v4389, %v4877
        %v4942 = vadd.f32 %v4390, %v4879
        %v4943 = vadd.f32 %v4391, %v4882
        %v4944 = vadd.f32 %v4392, %v4884
        %v4945 = vadd.f32 %v4393, %v4887
        %v4946 = vadd.f32 %v4394, %v4889
        %v4947 = vadd.f32 %v4395, %v4892
        %v4948 = vadd.f32 %v4396, %v4894
        %v4949 = vadd.f32 %v4397, %v4897
        %v4950 = vadd.f32 %v4398, %v4899
        %v4951 = vadd.f32 %v4399, %v4902
        %v4952 = vadd.f32 %v4400, %v4904
        %v4953 = vadd.f32 %v4401, %v4907
        %v4954 = vadd.f32 %v4402, %v4909
        %v4955 = vadd.f32 %v4403, %v4912
        %v4956 = vadd.f32 %v4404, %v4914
        %v4957 = vadd.f32 %v4405, %v4917
        %v4958 = vadd.f32 %v4406, %v4919
        %v4959 = vadd.f32 %v4407, %v4922
        %v4960 = vadd.f32 %v4408, %v4924
        %v4961 = vadd.f32 %v4409, %v4927
        %v4962 = vadd.f32 %v4410, %v4929
        %v4963 = vsel %vm3819, %v914, 0
        %v4964 = vsel %vm2374, %v915, 0
        %v4965 = vsel %vm2381, %v916, 0
        %v4966 = vsel %vm2388, %v917, 0
        %v4967 = vsel %vm2395, %v918, 0
        %v4968 = vsel %vm2402, %v919, 0
        %v4969 = vsel %vm2409, %v920, 0
        %v4970 = vsel %vm2416, %v921, 0
        %v4971 = vsel %vm2423, %v922, 0
        %v4972 = vsel %vm2430, %v923, 0
        %v4973 = vsel %vm2437, %v924, 0
        %v4974 = vsel %vm2444, %v925, 0
        %v4975 = vsel %vm2451, %v926, 0
        %v4976 = vsel %vm2458, %v927, 0
        %v4977 = vsel %vm2465, %v928, 0
        %v4978 = vsel %vm2472, %v951, 0
        %v4979 = vld [vmem:[#allocation5 + $0x200] sm:$0xf]
        %v4980 = vld [vmem:[#allocation5 + $0x204] sm:$0xf]
        %v4981 = vld [vmem:[#allocation5 + $0x208] sm:$0xf]
        %v4982 = vld [vmem:[#allocation5 + $0x20c] sm:$0xf]
        %v4983 = vld [vmem:[#allocation5 + $0x210] sm:$0xf]
        %v4984 = vld [vmem:[#allocation5 + $0x214] sm:$0xf]
        %v4985 = vld [vmem:[#allocation5 + $0x218] sm:$0xf]
        %v4986 = vld [vmem:[#allocation5 + $0x21c] sm:$0xf]
        %v4987 = vld [vmem:[#allocation5 + $0x220] sm:$0xf]
        %v4988 = vld [vmem:[#allocation5 + $0x224] sm:$0xf]
        %v4989 = vld [vmem:[#allocation5 + $0x228] sm:$0xf]
        %v4990 = vld [vmem:[#allocation5 + $0x22c] sm:$0xf]
        %v4991 = vld [vmem:[#allocation5 + $0x230] sm:$0xf]
        %v4992 = vld [vmem:[#allocation5 + $0x234] sm:$0xf]
        %v4993 = vld [vmem:[#allocation5 + $0x238] sm:$0xf]
        %v4994 = vld [vmem:[#allocation5 + $0x23c] sm:$0xf]
        %v4996 = vshrl.u32 %v4963, 16
        %v4998 = vrot.slane %v4996, 4
        %v4999 = vshll.u32 %v4963, 16
        %v5001 = vrot.slane %v4999, 5
        %v5002 = vor.u32 %v4998, %v5001
        %v5004 = vshrl.u32 %v4964, 16
        %v5006 = vrot.slane %v5004, 4
        %v5007 = vshll.u32 %v4964, 16
        %v5009 = vrot.slane %v5007, 5
        %v5010 = vor.u32 %v5006, %v5009
        %v5011 = vsel %vm1610, %v5002, %v5010
        %v5013 = vshrl.u32 %v4965, 16
        %v5015 = vrot.slane %v5013, 4
        %v5016 = vshll.u32 %v4965, 16
        %v5018 = vrot.slane %v5016, 5
        %v5019 = vor.u32 %v5015, %v5018
        %v5020 = vsel %vm1610, %v5010, %v5019
        %v5022 = vshrl.u32 %v4966, 16
        %v5024 = vrot.slane %v5022, 4
        %v5025 = vshll.u32 %v4966, 16
        %v5027 = vrot.slane %v5025, 5
        %v5028 = vor.u32 %v5024, %v5027
        %v5029 = vsel %vm1610, %v5019, %v5028
        %v5031 = vshrl.u32 %v4967, 16
        %v5033 = vrot.slane %v5031, 4
        %v5034 = vshll.u32 %v4967, 16
        %v5036 = vrot.slane %v5034, 5
        %v5037 = vor.u32 %v5033, %v5036
        %v5038 = vsel %vm1610, %v5028, %v5037
        %v5040 = vshrl.u32 %v4968, 16
        %v5042 = vrot.slane %v5040, 4
        %v5043 = vshll.u32 %v4968, 16
        %v5045 = vrot.slane %v5043, 5
        %v5046 = vor.u32 %v5042, %v5045
        %v5047 = vsel %vm1610, %v5037, %v5046
        %v5049 = vshrl.u32 %v4969, 16
        %v5051 = vrot.slane %v5049, 4
        %v5052 = vshll.u32 %v4969, 16
        %v5054 = vrot.slane %v5052, 5
        %v5055 = vor.u32 %v5051, %v5054
        %v5056 = vsel %vm1610, %v5046, %v5055
        %v5058 = vshrl.u32 %v4970, 16
        %v5060 = vrot.slane %v5058, 4
        %v5061 = vshll.u32 %v4970, 16
        %v5063 = vrot.slane %v5061, 5
        %v5064 = vor.u32 %v5060, %v5063
        %v5065 = vsel %vm1610, %v5055, %v5064
        %v5067 = vshrl.u32 %v4971, 16
        %v5069 = vrot.slane %v5067, 4
        %v5070 = vshll.u32 %v4971, 16
        %v5072 = vrot.slane %v5070, 5
        %v5073 = vor.u32 %v5069, %v5072
        %v5074 = vsel %vm1610, %v5064, %v5073
        %v5076 = vshrl.u32 %v4972, 16
        %v5078 = vrot.slane %v5076, 4
        %v5079 = vshll.u32 %v4972, 16
        %v5081 = vrot.slane %v5079, 5
        %v5082 = vor.u32 %v5078, %v5081
        %v5083 = vsel %vm1610, %v5073, %v5082
        %v5085 = vshrl.u32 %v4973, 16
        %v5087 = vrot.slane %v5085, 4
        %v5088 = vshll.u32 %v4973, 16
        %v5090 = vrot.slane %v5088, 5
        %v5091 = vor.u32 %v5087, %v5090
        %v5092 = vsel %vm1610, %v5082, %v5091
        %v5094 = vshrl.u32 %v4974, 16
        %v5096 = vrot.slane %v5094, 4
        %v5097 = vshll.u32 %v4974, 16
        %v5099 = vrot.slane %v5097, 5
        %v5100 = vor.u32 %v5096, %v5099
        %v5101 = vsel %vm1610, %v5091, %v5100
        %v5103 = vshrl.u32 %v4975, 16
        %v5105 = vrot.slane %v5103, 4
        %v5106 = vshll.u32 %v4975, 16
        %v5108 = vrot.slane %v5106, 5
        %v5109 = vor.u32 %v5105, %v5108
        %v5110 = vsel %vm1610, %v5100, %v5109
        %v5112 = vshrl.u32 %v4976, 16
        %v5114 = vrot.slane %v5112, 4
        %v5115 = vshll.u32 %v4976, 16
        %v5117 = vrot.slane %v5115, 5
        %v5118 = vor.u32 %v5114, %v5117
        %v5119 = vsel %vm1610, %v5109, %v5118
        %v5121 = vshrl.u32 %v4977, 16
        %v5123 = vrot.slane %v5121, 4
        %v5124 = vshll.u32 %v4977, 16
        %v5126 = vrot.slane %v5124, 5
        %v5127 = vor.u32 %v5123, %v5126
        %v5128 = vsel %vm1610, %v5118, %v5127
        %v5130 = vshrl.u32 %v4978, 16
        %v5132 = vrot.slane %v5130, 4
        %v5133 = vshll.u32 %v4978, 16
        %v5135 = vrot.slane %v5133, 5
        %v5136 = vor.u32 %v5132, %v5135
        %v5137 = vsel %vm1610, %v5127, %v5136
        %v5138 = vsel %vm1610, %v5136, %v2605
        %v5171 = vunpack.c.l.b16 %v4979
        %v5172 = vunpack.c.l.b16 %v4980
        %v5173 = vunpack.c.l.b16 %v4981
        %v5174 = vunpack.c.l.b16 %v4982
        %v5175 = vunpack.c.l.b16 %v4983
        %v5176 = vunpack.c.l.b16 %v4984
        %v5177 = vunpack.c.l.b16 %v4985
        %v5178 = vunpack.c.l.b16 %v4986
        %v5179 = vunpack.c.l.b16 %v4987
        %v5180 = vunpack.c.l.b16 %v4988
        %v5181 = vunpack.c.l.b16 %v4989
        %v5182 = vunpack.c.l.b16 %v4990
        %v5183 = vunpack.c.l.b16 %v4991
        %v5184 = vunpack.c.l.b16 %v4992
        %v5185 = vunpack.c.l.b16 %v4993
        %v5186 = vunpack.c.l.b16 %v4994
        %v5187 = vpack.c.b16 %v5172, %v5171
        %v5188 = vpack.c.b16 %v5174, %v5173
        %v5189 = vpack.c.b16 %v5176, %v5175
        %v5190 = vpack.c.b16 %v5178, %v5177
        %v5191 = vpack.c.b16 %v5180, %v5179
        %v5192 = vpack.c.b16 %v5182, %v5181
        %v5193 = vpack.c.b16 %v5184, %v5183
        %v5194 = vpack.c.b16 %v5186, %v5185
        %5203 = vmatpush.bf16.msra.mxu0 %v5194
        %5204 = vmatpush.bf16.msra.mxu0 %v5193
        %5205 = vmatpush.bf16.msra.mxu0 %v5192
        %5206 = vmatpush.bf16.msra.mxu0 %v5191
        %5207 = vmatpush.bf16.msra.mxu0 %v5190
        %5208 = vmatpush.bf16.msra.mxu0 %v5189
        %5209 = vmatpush.bf16.msra.mxu0 %v5188
        %5210 = vmatpush.bf16.msra.mxu0 %v5187
        %5211 = vmatmul.bf16.gmra.mxu0 %v5011
        %v5212 = vpop.f32.mrf.mxu0
        %v5213 = vadd.f32 0.0, %v5212
        %v5214 = vpop.f32.mrf.mxu0
        %v5215 = vadd.f32 0.0, %v5214
        %5216 = vmatmul.bf16.gmra.mxu0 %v5020
        %v5217 = vpop.f32.mrf.mxu0
        %v5218 = vadd.f32 0.0, %v5217
        %v5219 = vpop.f32.mrf.mxu0
        %v5220 = vadd.f32 0.0, %v5219
        %5221 = vmatmul.bf16.gmra.mxu0 %v5029
        %v5222 = vpop.f32.mrf.mxu0
        %v5223 = vadd.f32 0.0, %v5222
        %v5224 = vpop.f32.mrf.mxu0
        %v5225 = vadd.f32 0.0, %v5224
        %5226 = vmatmul.bf16.gmra.mxu0 %v5038
        %v5227 = vpop.f32.mrf.mxu0
        %v5228 = vadd.f32 0.0, %v5227
        %v5229 = vpop.f32.mrf.mxu0
        %v5230 = vadd.f32 0.0, %v5229
        %5231 = vmatmul.bf16.gmra.mxu0 %v5047
        %v5232 = vpop.f32.mrf.mxu0
        %v5233 = vadd.f32 0.0, %v5232
        %v5234 = vpop.f32.mrf.mxu0
        %v5235 = vadd.f32 0.0, %v5234
        %5236 = vmatmul.bf16.gmra.mxu0 %v5056
        %v5237 = vpop.f32.mrf.mxu0
        %v5238 = vadd.f32 0.0, %v5237
        %v5239 = vpop.f32.mrf.mxu0
        %v5240 = vadd.f32 0.0, %v5239
        %5241 = vmatmul.bf16.gmra.mxu0 %v5065
        %v5242 = vpop.f32.mrf.mxu0
        %v5243 = vadd.f32 0.0, %v5242
        %v5244 = vpop.f32.mrf.mxu0
        %v5245 = vadd.f32 0.0, %v5244
        %5246 = vmatmul.bf16.gmra.mxu0 %v5074
        %v5247 = vpop.f32.mrf.mxu0
        %v5248 = vadd.f32 0.0, %v5247
        %v5249 = vpop.f32.mrf.mxu0
        %v5250 = vadd.f32 0.0, %v5249
        %5251 = vmatmul.bf16.gmra.mxu0 %v5083
        %v5252 = vpop.f32.mrf.mxu0
        %v5253 = vadd.f32 0.0, %v5252
        %v5254 = vpop.f32.mrf.mxu0
        %v5255 = vadd.f32 0.0, %v5254
        %5256 = vmatmul.bf16.gmra.mxu0 %v5092
        %v5257 = vpop.f32.mrf.mxu0
        %v5258 = vadd.f32 0.0, %v5257
        %v5259 = vpop.f32.mrf.mxu0
        %v5260 = vadd.f32 0.0, %v5259
        %5261 = vmatmul.bf16.gmra.mxu0 %v5101
        %v5262 = vpop.f32.mrf.mxu0
        %v5263 = vadd.f32 0.0, %v5262
        %v5264 = vpop.f32.mrf.mxu0
        %v5265 = vadd.f32 0.0, %v5264
        %5266 = vmatmul.bf16.gmra.mxu0 %v5110
        %v5267 = vpop.f32.mrf.mxu0
        %v5268 = vadd.f32 0.0, %v5267
        %v5269 = vpop.f32.mrf.mxu0
        %v5270 = vadd.f32 0.0, %v5269
        %5271 = vmatmul.bf16.gmra.mxu0 %v5119
        %v5272 = vpop.f32.mrf.mxu0
        %v5273 = vadd.f32 0.0, %v5272
        %v5274 = vpop.f32.mrf.mxu0
        %v5275 = vadd.f32 0.0, %v5274
        %5276 = vmatmul.bf16.gmra.mxu0 %v5128
        %v5277 = vpop.f32.mrf.mxu0
        %v5278 = vadd.f32 0.0, %v5277
        %v5279 = vpop.f32.mrf.mxu0
        %v5280 = vadd.f32 0.0, %v5279
        %5281 = vmatmul.bf16.gmra.mxu0 %v5137
        %v5282 = vpop.f32.mrf.mxu0
        %v5283 = vadd.f32 0.0, %v5282
        %v5284 = vpop.f32.mrf.mxu0
        %v5285 = vadd.f32 0.0, %v5284
        %5286 = vmatmul.bf16.gmra.mxu0 %v5138
        %v5287 = vpop.f32.mrf.mxu0
        %v5288 = vadd.f32 0.0, %v5287
        %v5289 = vpop.f32.mrf.mxu0
        %v5290 = vadd.f32 0.0, %v5289
        %5291 = vdwg.mxu0
        %v5292 = vadd.f32 %v4931, %v5213
        %v5293 = vadd.f32 %v4932, %v5215
        %v5294 = vadd.f32 %v4933, %v5218
        %v5295 = vadd.f32 %v4934, %v5220
        %v5296 = vadd.f32 %v4935, %v5223
        %v5297 = vadd.f32 %v4936, %v5225
        %v5298 = vadd.f32 %v4937, %v5228
        %v5299 = vadd.f32 %v4938, %v5230
        %v5300 = vadd.f32 %v4939, %v5233
        %v5301 = vadd.f32 %v4940, %v5235
        %v5302 = vadd.f32 %v4941, %v5238
        %v5303 = vadd.f32 %v4942, %v5240
        %v5304 = vadd.f32 %v4943, %v5243
        %v5305 = vadd.f32 %v4944, %v5245
        %v5306 = vadd.f32 %v4945, %v5248
        %v5307 = vadd.f32 %v4946, %v5250
        %v5308 = vadd.f32 %v4947, %v5253
        %v5309 = vadd.f32 %v4948, %v5255
        %v5310 = vadd.f32 %v4949, %v5258
        %v5311 = vadd.f32 %v4950, %v5260
        %v5312 = vadd.f32 %v4951, %v5263
        %v5313 = vadd.f32 %v4952, %v5265
        %v5314 = vadd.f32 %v4953, %v5268
        %v5315 = vadd.f32 %v4954, %v5270
        %v5316 = vadd.f32 %v4955, %v5273
        %v5317 = vadd.f32 %v4956, %v5275
        %v5318 = vadd.f32 %v4957, %v5278
        %v5319 = vadd.f32 %v4958, %v5280
        %v5320 = vadd.f32 %v4959, %v5283
        %v5321 = vadd.f32 %v4960, %v5285
        %v5322 = vadd.f32 %v4961, %v5288
        %v5323 = vadd.f32 %v4962, %v5290
        %v5324 = vld [vmem:[%s2] sm:$0x1]
        %v5326 = vperm.slane %v5324, 0
        %v5328 = vadd.f32 %v5292, %v5326
        %v5329 = vadd.f32 %v5293, %v5326
        %v5330 = vadd.f32 %v5294, %v5326
        %v5331 = vadd.f32 %v5295, %v5326
        %v5332 = vadd.f32 %v5296, %v5326
        %v5333 = vadd.f32 %v5297, %v5326
        %v5334 = vadd.f32 %v5298, %v5326
        %v5335 = vadd.f32 %v5299, %v5326
        %v5336 = vadd.f32 %v5300, %v5326
        %v5337 = vadd.f32 %v5301, %v5326
        %v5338 = vadd.f32 %v5302, %v5326
        %v5339 = vadd.f32 %v5303, %v5326
        %v5340 = vadd.f32 %v5304, %v5326
        %v5341 = vadd.f32 %v5305, %v5326
        %v5342 = vadd.f32 %v5306, %v5326
        %v5343 = vadd.f32 %v5307, %v5326
        %v5344 = vadd.f32 %v5308, %v5326
        %v5345 = vadd.f32 %v5309, %v5326
        %v5346 = vadd.f32 %v5310, %v5326
        %v5347 = vadd.f32 %v5311, %v5326
        %v5348 = vadd.f32 %v5312, %v5326
        %v5349 = vadd.f32 %v5313, %v5326
        %v5350 = vadd.f32 %v5314, %v5326
        %v5351 = vadd.f32 %v5315, %v5326
        %v5352 = vadd.f32 %v5316, %v5326
        %v5353 = vadd.f32 %v5317, %v5326
        %v5354 = vadd.f32 %v5318, %v5326
        %v5355 = vadd.f32 %v5319, %v5326
        %v5356 = vadd.f32 %v5320, %v5326
        %v5357 = vadd.f32 %v5321, %v5326
        %v5358 = vadd.f32 %v5322, %v5326
        %v5359 = vadd.f32 %v5323, %v5326
        %v5392 = vrot.slane %v5328, 2
        %v5393 = vrot.slane %v5328, 4
        %v5394 = vrot.slane %v5328, 6
        %v5395 = vrot.slane %v5329, 2
        %v5396 = vrot.slane %v5329, 4
        %v5397 = vrot.slane %v5329, 6
        %v5398 = vrot.slane %v5330, 2
        %v5399 = vrot.slane %v5330, 4
        %v5400 = vrot.slane %v5330, 6
        %v5401 = vrot.slane %v5331, 2
        %v5402 = vrot.slane %v5331, 4
        %v5403 = vrot.slane %v5331, 6
        %v5404 = vrot.slane %v5332, 2
        %v5405 = vrot.slane %v5332, 4
        %v5406 = vrot.slane %v5332, 6
        %v5407 = vrot.slane %v5333, 2
        %v5408 = vrot.slane %v5333, 4
        %v5409 = vrot.slane %v5333, 6
        %v5410 = vrot.slane %v5334, 2
        %v5411 = vrot.slane %v5334, 4
        %v5412 = vrot.slane %v5334, 6
        %v5413 = vrot.slane %v5335, 2
        %v5414 = vrot.slane %v5335, 4
        %v5415 = vrot.slane %v5335, 6
        %v5416 = vrot.slane %v5336, 2
        %v5417 = vrot.slane %v5336, 4
        %v5418 = vrot.slane %v5336, 6
        %v5419 = vrot.slane %v5337, 2
        %v5420 = vrot.slane %v5337, 4
        %v5421 = vrot.slane %v5337, 6
        %v5422 = vrot.slane %v5338, 2
        %v5423 = vrot.slane %v5338, 4
        %v5424 = vrot.slane %v5338, 6
        %v5425 = vrot.slane %v5339, 2
        %v5426 = vrot.slane %v5339, 4
        %v5427 = vrot.slane %v5339, 6
        %v5428 = vrot.slane %v5340, 2
        %v5429 = vrot.slane %v5340, 4
        %v5430 = vrot.slane %v5340, 6
        %v5431 = vrot.slane %v5341, 2
        %v5432 = vrot.slane %v5341, 4
        %v5433 = vrot.slane %v5341, 6
        %v5434 = vrot.slane %v5342, 2
        %v5435 = vrot.slane %v5342, 4
        %v5436 = vrot.slane %v5342, 6
        %v5437 = vrot.slane %v5343, 2
        %v5438 = vrot.slane %v5343, 4
        %v5439 = vrot.slane %v5343, 6
        %v5440 = vrot.slane %v5344, 2
        %v5441 = vrot.slane %v5344, 4
        %v5442 = vrot.slane %v5344, 6
        %v5443 = vrot.slane %v5345, 2
        %v5444 = vrot.slane %v5345, 4
        %v5445 = vrot.slane %v5345, 6
        %v5446 = vrot.slane %v5346, 2
        %v5447 = vrot.slane %v5346, 4
        %v5448 = vrot.slane %v5346, 6
        %v5449 = vrot.slane %v5347, 2
        %v5450 = vrot.slane %v5347, 4
        %v5451 = vrot.slane %v5347, 6
        %v5452 = vrot.slane %v5348, 2
        %v5453 = vrot.slane %v5348, 4
        %v5454 = vrot.slane %v5348, 6
        %v5455 = vrot.slane %v5349, 2
        %v5456 = vrot.slane %v5349, 4
        %v5457 = vrot.slane %v5349, 6
        %v5458 = vrot.slane %v5350, 2
        %v5459 = vrot.slane %v5350, 4
        %v5460 = vrot.slane %v5350, 6
        %v5461 = vrot.slane %v5351, 2
        %v5462 = vrot.slane %v5351, 4
        %v5463 = vrot.slane %v5351, 6
        %v5464 = vrot.slane %v5352, 2
        %v5465 = vrot.slane %v5352, 4
        %v5466 = vrot.slane %v5352, 6
        %v5467 = vrot.slane %v5353, 2
        %v5468 = vrot.slane %v5353, 4
        %v5469 = vrot.slane %v5353, 6
        %v5470 = vrot.slane %v5354, 2
        %v5471 = vrot.slane %v5354, 4
        %v5472 = vrot.slane %v5354, 6
        %v5473 = vrot.slane %v5355, 2
        %v5474 = vrot.slane %v5355, 4
        %v5475 = vrot.slane %v5355, 6
        %v5476 = vrot.slane %v5356, 2
        %v5477 = vrot.slane %v5356, 4
        %v5478 = vrot.slane %v5356, 6
        %v5479 = vrot.slane %v5357, 2
        %v5480 = vrot.slane %v5357, 4
        %v5481 = vrot.slane %v5357, 6
        %v5482 = vrot.slane %v5358, 2
        %v5483 = vrot.slane %v5358, 4
        %v5484 = vrot.slane %v5358, 6
        %v5485 = vrot.slane %v5359, 2
        %v5486 = vrot.slane %v5359, 4
        %v5487 = vrot.slane %v5359, 6
        %v5584 = vrot.slane %v5328, 7
        %v5585 = vrot.slane %v5584, 2
        %v5586 = vrot.slane %v5392, 7
        %v5587 = vrot.slane %v5586, 2
        %v5588 = vrot.slane %v5393, 7
        %v5589 = vrot.slane %v5588, 2
        %v5590 = vrot.slane %v5394, 7
        %v5591 = vrot.slane %v5590, 2
        %v5592 = vrot.slane %v5329, 7
        %v5593 = vrot.slane %v5592, 2
        %v5594 = vrot.slane %v5395, 7
        %v5595 = vrot.slane %v5594, 2
        %v5596 = vrot.slane %v5396, 7
        %v5597 = vrot.slane %v5596, 2
        %v5598 = vrot.slane %v5397, 7
        %v5599 = vrot.slane %v5598, 2
        %v5600 = vrot.slane %v5332, 7
        %v5601 = vrot.slane %v5600, 2
        %v5602 = vrot.slane %v5404, 7
        %v5603 = vrot.slane %v5602, 2
        %v5604 = vrot.slane %v5405, 7
        %v5605 = vrot.slane %v5604, 2
        %v5606 = vrot.slane %v5406, 7
        %v5607 = vrot.slane %v5606, 2
        %v5608 = vrot.slane %v5333, 7
        %v5609 = vrot.slane %v5608, 2
        %v5610 = vrot.slane %v5407, 7
        %v5611 = vrot.slane %v5610, 2
        %v5612 = vrot.slane %v5408, 7
        %v5613 = vrot.slane %v5612, 2
        %v5614 = vrot.slane %v5409, 7
        %v5615 = vrot.slane %v5614, 2
        %v5616 = vrot.slane %v5336, 7
        %v5617 = vrot.slane %v5616, 2
        %v5618 = vrot.slane %v5416, 7
        %v5619 = vrot.slane %v5618, 2
        %v5620 = vrot.slane %v5417, 7
        %v5621 = vrot.slane %v5620, 2
        %v5622 = vrot.slane %v5418, 7
        %v5623 = vrot.slane %v5622, 2
        %v5624 = vrot.slane %v5337, 7
        %v5625 = vrot.slane %v5624, 2
        %v5626 = vrot.slane %v5419, 7
        %v5627 = vrot.slane %v5626, 2
        %v5628 = vrot.slane %v5420, 7
        %v5629 = vrot.slane %v5628, 2
        %v5630 = vrot.slane %v5421, 7
        %v5631 = vrot.slane %v5630, 2
        %v5632 = vrot.slane %v5340, 7
        %v5633 = vrot.slane %v5632, 2
        %v5634 = vrot.slane %v5428, 7
        %v5635 = vrot.slane %v5634, 2
        %v5636 = vrot.slane %v5429, 7
        %v5637 = vrot.slane %v5636, 2
        %v5638 = vrot.slane %v5430, 7
        %v5639 = vrot.slane %v5638, 2
        %v5640 = vrot.slane %v5341, 7
        %v5641 = vrot.slane %v5640, 2
        %v5642 = vrot.slane %v5431, 7
        %v5643 = vrot.slane %v5642, 2
        %v5644 = vrot.slane %v5432, 7
        %v5645 = vrot.slane %v5644, 2
        %v5646 = vrot.slane %v5433, 7
        %v5647 = vrot.slane %v5646, 2
        %v5648 = vrot.slane %v5344, 7
        %v5649 = vrot.slane %v5648, 2
        %v5650 = vrot.slane %v5440, 7
        %v5651 = vrot.slane %v5650, 2
        %v5652 = vrot.slane %v5441, 7
        %v5653 = vrot.slane %v5652, 2
        %v5654 = vrot.slane %v5442, 7
        %v5655 = vrot.slane %v5654, 2
        %v5656 = vrot.slane %v5345, 7
        %v5657 = vrot.slane %v5656, 2
        %v5658 = vrot.slane %v5443, 7
        %v5659 = vrot.slane %v5658, 2
        %v5660 = vrot.slane %v5444, 7
        %v5661 = vrot.slane %v5660, 2
        %v5662 = vrot.slane %v5445, 7
        %v5663 = vrot.slane %v5662, 2
        %v5664 = vrot.slane %v5348, 7
        %v5665 = vrot.slane %v5664, 2
        %v5666 = vrot.slane %v5452, 7
        %v5667 = vrot.slane %v5666, 2
        %v5668 = vrot.slane %v5453, 7
        %v5669 = vrot.slane %v5668, 2
        %v5670 = vrot.slane %v5454, 7
        %v5671 = vrot.slane %v5670, 2
        %v5672 = vrot.slane %v5349, 7
        %v5673 = vrot.slane %v5672, 2
        %v5674 = vrot.slane %v5455, 7
        %v5675 = vrot.slane %v5674, 2
        %v5676 = vrot.slane %v5456, 7
        %v5677 = vrot.slane %v5676, 2
        %v5678 = vrot.slane %v5457, 7
        %v5679 = vrot.slane %v5678, 2
        %v5680 = vrot.slane %v5352, 7
        %v5681 = vrot.slane %v5680, 2
        %v5682 = vrot.slane %v5464, 7
        %v5683 = vrot.slane %v5682, 2
        %v5684 = vrot.slane %v5465, 7
        %v5685 = vrot.slane %v5684, 2
        %v5686 = vrot.slane %v5466, 7
        %v5687 = vrot.slane %v5686, 2
        %v5688 = vrot.slane %v5353, 7
        %v5689 = vrot.slane %v5688, 2
        %v5690 = vrot.slane %v5467, 7
        %v5691 = vrot.slane %v5690, 2
        %v5692 = vrot.slane %v5468, 7
        %v5693 = vrot.slane %v5692, 2
        %v5694 = vrot.slane %v5469, 7
        %v5695 = vrot.slane %v5694, 2
        %v5696 = vrot.slane %v5356, 7
        %v5697 = vrot.slane %v5696, 2
        %v5698 = vrot.slane %v5476, 7
        %v5699 = vrot.slane %v5698, 2
        %v5700 = vrot.slane %v5477, 7
        %v5701 = vrot.slane %v5700, 2
        %v5702 = vrot.slane %v5478, 7
        %v5703 = vrot.slane %v5702, 2
        %v5704 = vrot.slane %v5357, 7
        %v5705 = vrot.slane %v5704, 2
        %v5706 = vrot.slane %v5479, 7
        %v5707 = vrot.slane %v5706, 2
        %v5708 = vrot.slane %v5480, 7
        %v5709 = vrot.slane %v5708, 2
        %v5710 = vrot.slane %v5481, 7
        %v5711 = vrot.slane %v5710, 2
        %v5776 = vadd.f32 %v5328, %v5585
        %v5777 = vadd.f32 %v5392, %v5587
        %v5778 = vadd.f32 %v5393, %v5589
        %v5779 = vadd.f32 %v5394, %v5591
        %v5780 = vadd.f32 %v5329, %v5593
        %v5781 = vadd.f32 %v5395, %v5595
        %v5782 = vadd.f32 %v5396, %v5597
        %v5783 = vadd.f32 %v5397, %v5599
        %v5784 = vadd.f32 %v5332, %v5601
        %v5785 = vadd.f32 %v5404, %v5603
        %v5786 = vadd.f32 %v5405, %v5605
        %v5787 = vadd.f32 %v5406, %v5607
        %v5788 = vadd.f32 %v5333, %v5609
        %v5789 = vadd.f32 %v5407, %v5611
        %v5790 = vadd.f32 %v5408, %v5613
        %v5791 = vadd.f32 %v5409, %v5615
        %v5792 = vadd.f32 %v5336, %v5617
        %v5793 = vadd.f32 %v5416, %v5619
        %v5794 = vadd.f32 %v5417, %v5621
        %v5795 = vadd.f32 %v5418, %v5623
        %v5796 = vadd.f32 %v5337, %v5625
        %v5797 = vadd.f32 %v5419, %v5627
        %v5798 = vadd.f32 %v5420, %v5629
        %v5799 = vadd.f32 %v5421, %v5631
        %v5800 = vadd.f32 %v5340, %v5633
        %v5801 = vadd.f32 %v5428, %v5635
        %v5802 = vadd.f32 %v5429, %v5637
        %v5803 = vadd.f32 %v5430, %v5639
        %v5804 = vadd.f32 %v5341, %v5641
        %v5805 = vadd.f32 %v5431, %v5643
        %v5806 = vadd.f32 %v5432, %v5645
        %v5807 = vadd.f32 %v5433, %v5647
        %v5808 = vadd.f32 %v5344, %v5649
        %v5809 = vadd.f32 %v5440, %v5651
        %v5810 = vadd.f32 %v5441, %v5653
        %v5811 = vadd.f32 %v5442, %v5655
        %v5812 = vadd.f32 %v5345, %v5657
        %v5813 = vadd.f32 %v5443, %v5659
        %v5814 = vadd.f32 %v5444, %v5661
        %v5815 = vadd.f32 %v5445, %v5663
        %v5816 = vadd.f32 %v5348, %v5665
        %v5817 = vadd.f32 %v5452, %v5667
        %v5818 = vadd.f32 %v5453, %v5669
        %v5819 = vadd.f32 %v5454, %v5671
        %v5820 = vadd.f32 %v5349, %v5673
        %v5821 = vadd.f32 %v5455, %v5675
        %v5822 = vadd.f32 %v5456, %v5677
        %v5823 = vadd.f32 %v5457, %v5679
        %v5824 = vadd.f32 %v5352, %v5681
        %v5825 = vadd.f32 %v5464, %v5683
        %v5826 = vadd.f32 %v5465, %v5685
        %v5827 = vadd.f32 %v5466, %v5687
        %v5828 = vadd.f32 %v5353, %v5689
        %v5829 = vadd.f32 %v5467, %v5691
        %v5830 = vadd.f32 %v5468, %v5693
        %v5831 = vadd.f32 %v5469, %v5695
        %v5832 = vadd.f32 %v5356, %v5697
        %v5833 = vadd.f32 %v5476, %v5699
        %v5834 = vadd.f32 %v5477, %v5701
        %v5835 = vadd.f32 %v5478, %v5703
        %v5836 = vadd.f32 %v5357, %v5705
        %v5837 = vadd.f32 %v5479, %v5707
        %v5838 = vadd.f32 %v5480, %v5709
        %v5839 = vadd.f32 %v5481, %v5711
        %v5840 = vadd.f32 %v5776, %v5330
        %v5841 = vadd.f32 %v5777, %v5398
        %v5842 = vadd.f32 %v5778, %v5399
        %v5843 = vadd.f32 %v5779, %v5400
        %v5844 = vadd.f32 %v5780, %v5331
        %v5845 = vadd.f32 %v5781, %v5401
        %v5846 = vadd.f32 %v5782, %v5402
        %v5847 = vadd.f32 %v5783, %v5403
        %v5848 = vadd.f32 %v5784, %v5334
        %v5849 = vadd.f32 %v5785, %v5410
        %v5850 = vadd.f32 %v5786, %v5411
        %v5851 = vadd.f32 %v5787, %v5412
        %v5852 = vadd.f32 %v5788, %v5335
        %v5853 = vadd.f32 %v5789, %v5413
        %v5854 = vadd.f32 %v5790, %v5414
        %v5855 = vadd.f32 %v5791, %v5415
        %v5856 = vadd.f32 %v5792, %v5338
        %v5857 = vadd.f32 %v5793, %v5422
        %v5858 = vadd.f32 %v5794, %v5423
        %v5859 = vadd.f32 %v5795, %v5424
        %v5860 = vadd.f32 %v5796, %v5339
        %v5861 = vadd.f32 %v5797, %v5425
        %v5862 = vadd.f32 %v5798, %v5426
        %v5863 = vadd.f32 %v5799, %v5427
        %v5864 = vadd.f32 %v5800, %v5342
        %v5865 = vadd.f32 %v5801, %v5434
        %v5866 = vadd.f32 %v5802, %v5435
        %v5867 = vadd.f32 %v5803, %v5436
        %v5868 = vadd.f32 %v5804, %v5343
        %v5869 = vadd.f32 %v5805, %v5437
        %v5870 = vadd.f32 %v5806, %v5438
        %v5871 = vadd.f32 %v5807, %v5439
        %v5872 = vadd.f32 %v5808, %v5346
        %v5873 = vadd.f32 %v5809, %v5446
        %v5874 = vadd.f32 %v5810, %v5447
        %v5875 = vadd.f32 %v5811, %v5448
        %v5876 = vadd.f32 %v5812, %v5347
        %v5877 = vadd.f32 %v5813, %v5449
        %v5878 = vadd.f32 %v5814, %v5450
        %v5879 = vadd.f32 %v5815, %v5451
        %v5880 = vadd.f32 %v5816, %v5350
        %v5881 = vadd.f32 %v5817, %v5458
        %v5882 = vadd.f32 %v5818, %v5459
        %v5883 = vadd.f32 %v5819, %v5460
        %v5884 = vadd.f32 %v5820, %v5351
        %v5885 = vadd.f32 %v5821, %v5461
        %v5886 = vadd.f32 %v5822, %v5462
        %v5887 = vadd.f32 %v5823, %v5463
        %v5888 = vadd.f32 %v5824, %v5354
        %v5889 = vadd.f32 %v5825, %v5470
        %v5890 = vadd.f32 %v5826, %v5471
        %v5891 = vadd.f32 %v5827, %v5472
        %v5892 = vadd.f32 %v5828, %v5355
        %v5893 = vadd.f32 %v5829, %v5473
        %v5894 = vadd.f32 %v5830, %v5474
        %v5895 = vadd.f32 %v5831, %v5475
        %v5896 = vadd.f32 %v5832, %v5358
        %v5897 = vadd.f32 %v5833, %v5482
        %v5898 = vadd.f32 %v5834, %v5483
        %v5899 = vadd.f32 %v5835, %v5484
        %v5900 = vadd.f32 %v5836, %v5359
        %v5901 = vadd.f32 %v5837, %v5485
        %v5902 = vadd.f32 %v5838, %v5486
        %v5903 = vadd.f32 %v5839, %v5487
        %v5904 = vrot.slane %v5330, 7
        %v5905 = vrot.slane %v5904, 2
        %v5906 = vrot.slane %v5398, 7
        %v5907 = vrot.slane %v5906, 2
        %v5908 = vrot.slane %v5399, 7
        %v5909 = vrot.slane %v5908, 2
        %v5910 = vrot.slane %v5400, 7
        %v5911 = vrot.slane %v5910, 2
        %v5912 = vrot.slane %v5331, 7
        %v5913 = vrot.slane %v5912, 2
        %v5914 = vrot.slane %v5401, 7
        %v5915 = vrot.slane %v5914, 2
        %v5916 = vrot.slane %v5402, 7
        %v5917 = vrot.slane %v5916, 2
        %v5918 = vrot.slane %v5403, 7
        %v5919 = vrot.slane %v5918, 2
        %v5920 = vrot.slane %v5334, 7
        %v5921 = vrot.slane %v5920, 2
        %v5922 = vrot.slane %v5410, 7
        %v5923 = vrot.slane %v5922, 2
        %v5924 = vrot.slane %v5411, 7
        %v5925 = vrot.slane %v5924, 2
        %v5926 = vrot.slane %v5412, 7
        %v5927 = vrot.slane %v5926, 2
        %v5928 = vrot.slane %v5335, 7
        %v5929 = vrot.slane %v5928, 2
        %v5930 = vrot.slane %v5413, 7
        %v5931 = vrot.slane %v5930, 2
        %v5932 = vrot.slane %v5414, 7
        %v5933 = vrot.slane %v5932, 2
        %v5934 = vrot.slane %v5415, 7
        %v5935 = vrot.slane %v5934, 2
        %v5936 = vrot.slane %v5338, 7
        %v5937 = vrot.slane %v5936, 2
        %v5938 = vrot.slane %v5422, 7
        %v5939 = vrot.slane %v5938, 2
        %v5940 = vrot.slane %v5423, 7
        %v5941 = vrot.slane %v5940, 2
        %v5942 = vrot.slane %v5424, 7
        %v5943 = vrot.slane %v5942, 2
        %v5944 = vrot.slane %v5339, 7
        %v5945 = vrot.slane %v5944, 2
        %v5946 = vrot.slane %v5425, 7
        %v5947 = vrot.slane %v5946, 2
        %v5948 = vrot.slane %v5426, 7
        %v5949 = vrot.slane %v5948, 2
        %v5950 = vrot.slane %v5427, 7
        %v5951 = vrot.slane %v5950, 2
        %v5952 = vrot.slane %v5342, 7
        %v5953 = vrot.slane %v5952, 2
        %v5954 = vrot.slane %v5434, 7
        %v5955 = vrot.slane %v5954, 2
        %v5956 = vrot.slane %v5435, 7
        %v5957 = vrot.slane %v5956, 2
        %v5958 = vrot.slane %v5436, 7
        %v5959 = vrot.slane %v5958, 2
        %v5960 = vrot.slane %v5343, 7
        %v5961 = vrot.slane %v5960, 2
        %v5962 = vrot.slane %v5437, 7
        %v5963 = vrot.slane %v5962, 2
        %v5964 = vrot.slane %v5438, 7
        %v5965 = vrot.slane %v5964, 2
        %v5966 = vrot.slane %v5439, 7
        %v5967 = vrot.slane %v5966, 2
        %v5968 = vrot.slane %v5346, 7
        %v5969 = vrot.slane %v5968, 2
        %v5970 = vrot.slane %v5446, 7
        %v5971 = vrot.slane %v5970, 2
        %v5972 = vrot.slane %v5447, 7
        %v5973 = vrot.slane %v5972, 2
        %v5974 = vrot.slane %v5448, 7
        %v5975 = vrot.slane %v5974, 2
        %v5976 = vrot.slane %v5347, 7
        %v5977 = vrot.slane %v5976, 2
        %v5978 = vrot.slane %v5449, 7
        %v5979 = vrot.slane %v5978, 2
        %v5980 = vrot.slane %v5450, 7
        %v5981 = vrot.slane %v5980, 2
        %v5982 = vrot.slane %v5451, 7
        %v5983 = vrot.slane %v5982, 2
        %v5984 = vrot.slane %v5350, 7
        %v5985 = vrot.slane %v5984, 2
        %v5986 = vrot.slane %v5458, 7
        %v5987 = vrot.slane %v5986, 2
        %v5988 = vrot.slane %v5459, 7
        %v5989 = vrot.slane %v5988, 2
        %v5990 = vrot.slane %v5460, 7
        %v5991 = vrot.slane %v5990, 2
        %v5992 = vrot.slane %v5351, 7
        %v5993 = vrot.slane %v5992, 2
        %v5994 = vrot.slane %v5461, 7
        %v5995 = vrot.slane %v5994, 2
        %v5996 = vrot.slane %v5462, 7
        %v5997 = vrot.slane %v5996, 2
        %v5998 = vrot.slane %v5463, 7
        %v5999 = vrot.slane %v5998, 2
        %v6000 = vrot.slane %v5354, 7
        %v6001 = vrot.slane %v6000, 2
        %v6002 = vrot.slane %v5470, 7
        %v6003 = vrot.slane %v6002, 2
        %v6004 = vrot.slane %v5471, 7
        %v6005 = vrot.slane %v6004, 2
        %v6006 = vrot.slane %v5472, 7
        %v6007 = vrot.slane %v6006, 2
        %v6008 = vrot.slane %v5355, 7
        %v6009 = vrot.slane %v6008, 2
        %v6010 = vrot.slane %v5473, 7
        %v6011 = vrot.slane %v6010, 2
        %v6012 = vrot.slane %v5474, 7
        %v6013 = vrot.slane %v6012, 2
        %v6014 = vrot.slane %v5475, 7
        %v6015 = vrot.slane %v6014, 2
        %v6016 = vrot.slane %v5358, 7
        %v6017 = vrot.slane %v6016, 2
        %v6018 = vrot.slane %v5482, 7
        %v6019 = vrot.slane %v6018, 2
        %v6020 = vrot.slane %v5483, 7
        %v6021 = vrot.slane %v6020, 2
        %v6022 = vrot.slane %v5484, 7
        %v6023 = vrot.slane %v6022, 2
        %v6024 = vrot.slane %v5359, 7
        %v6025 = vrot.slane %v6024, 2
        %v6026 = vrot.slane %v5485, 7
        %v6027 = vrot.slane %v6026, 2
        %v6028 = vrot.slane %v5486, 7
        %v6029 = vrot.slane %v6028, 2
        %v6030 = vrot.slane %v5487, 7
        %v6031 = vrot.slane %v6030, 2
        %v6096 = vadd.f32 %v5840, %v5905
        %v6097 = vadd.f32 %v5841, %v5907
        %v6098 = vadd.f32 %v5842, %v5909
        %v6099 = vadd.f32 %v5843, %v5911
        %v6100 = vadd.f32 %v5844, %v5913
        %v6101 = vadd.f32 %v5845, %v5915
        %v6102 = vadd.f32 %v5846, %v5917
        %v6103 = vadd.f32 %v5847, %v5919
        %v6104 = vadd.f32 %v5848, %v5921
        %v6105 = vadd.f32 %v5849, %v5923
        %v6106 = vadd.f32 %v5850, %v5925
        %v6107 = vadd.f32 %v5851, %v5927
        %v6108 = vadd.f32 %v5852, %v5929
        %v6109 = vadd.f32 %v5853, %v5931
        %v6110 = vadd.f32 %v5854, %v5933
        %v6111 = vadd.f32 %v5855, %v5935
        %v6112 = vadd.f32 %v5856, %v5937
        %v6113 = vadd.f32 %v5857, %v5939
        %v6114 = vadd.f32 %v5858, %v5941
        %v6115 = vadd.f32 %v5859, %v5943
        %v6116 = vadd.f32 %v5860, %v5945
        %v6117 = vadd.f32 %v5861, %v5947
        %v6118 = vadd.f32 %v5862, %v5949
        %v6119 = vadd.f32 %v5863, %v5951
        %v6120 = vadd.f32 %v5864, %v5953
        %v6121 = vadd.f32 %v5865, %v5955
        %v6122 = vadd.f32 %v5866, %v5957
        %v6123 = vadd.f32 %v5867, %v5959
        %v6124 = vadd.f32 %v5868, %v5961
        %v6125 = vadd.f32 %v5869, %v5963
        %v6126 = vadd.f32 %v5870, %v5965
        %v6127 = vadd.f32 %v5871, %v5967
        %v6128 = vadd.f32 %v5872, %v5969
        %v6129 = vadd.f32 %v5873, %v5971
        %v6130 = vadd.f32 %v5874, %v5973
        %v6131 = vadd.f32 %v5875, %v5975
        %v6132 = vadd.f32 %v5876, %v5977
        %v6133 = vadd.f32 %v5877, %v5979
        %v6134 = vadd.f32 %v5878, %v5981
        %v6135 = vadd.f32 %v5879, %v5983
        %v6136 = vadd.f32 %v5880, %v5985
        %v6137 = vadd.f32 %v5881, %v5987
        %v6138 = vadd.f32 %v5882, %v5989
        %v6139 = vadd.f32 %v5883, %v5991
        %v6140 = vadd.f32 %v5884, %v5993
        %v6141 = vadd.f32 %v5885, %v5995
        %v6142 = vadd.f32 %v5886, %v5997
        %v6143 = vadd.f32 %v5887, %v5999
        %v6144 = vadd.f32 %v5888, %v6001
        %v6145 = vadd.f32 %v5889, %v6003
        %v6146 = vadd.f32 %v5890, %v6005
        %v6147 = vadd.f32 %v5891, %v6007
        %v6148 = vadd.f32 %v5892, %v6009
        %v6149 = vadd.f32 %v5893, %v6011
        %v6150 = vadd.f32 %v5894, %v6013
        %v6151 = vadd.f32 %v5895, %v6015
        %v6152 = vadd.f32 %v5896, %v6017
        %v6153 = vadd.f32 %v5897, %v6019
        %v6154 = vadd.f32 %v5898, %v6021
        %v6155 = vadd.f32 %v5899, %v6023
        %v6156 = vadd.f32 %v5900, %v6025
        %v6157 = vadd.f32 %v5901, %v6027
        %v6158 = vadd.f32 %v5902, %v6029
        %v6159 = vadd.f32 %v5903, %v6031
        %v6160 = vmul.f32 %v6096, 0.25
        %v6161 = vmul.f32 %v6097, 0.25
        %v6162 = vmul.f32 %v6098, 0.25
        %v6163 = vmul.f32 %v6099, 0.25
        %v6164 = vmul.f32 %v6100, 0.25
        %v6165 = vmul.f32 %v6101, 0.25
        %v6166 = vmul.f32 %v6102, 0.25
        %v6167 = vmul.f32 %v6103, 0.25
        %v6168 = vmul.f32 %v6104, 0.25
        %v6169 = vmul.f32 %v6105, 0.25
        %v6170 = vmul.f32 %v6106, 0.25
        %v6171 = vmul.f32 %v6107, 0.25
        %v6172 = vmul.f32 %v6108, 0.25
        %v6173 = vmul.f32 %v6109, 0.25
        %v6174 = vmul.f32 %v6110, 0.25
        %v6175 = vmul.f32 %v6111, 0.25
        %v6176 = vmul.f32 %v6112, 0.25
        %v6177 = vmul.f32 %v6113, 0.25
        %v6178 = vmul.f32 %v6114, 0.25
        %v6179 = vmul.f32 %v6115, 0.25
        %v6180 = vmul.f32 %v6116, 0.25
        %v6181 = vmul.f32 %v6117, 0.25
        %v6182 = vmul.f32 %v6118, 0.25
        %v6183 = vmul.f32 %v6119, 0.25
        %v6184 = vmul.f32 %v6120, 0.25
        %v6185 = vmul.f32 %v6121, 0.25
        %v6186 = vmul.f32 %v6122, 0.25
        %v6187 = vmul.f32 %v6123, 0.25
        %v6188 = vmul.f32 %v6124, 0.25
        %v6189 = vmul.f32 %v6125, 0.25
        %v6190 = vmul.f32 %v6126, 0.25
        %v6191 = vmul.f32 %v6127, 0.25
        %v6192 = vmul.f32 %v6128, 0.25
        %v6193 = vmul.f32 %v6129, 0.25
        %v6194 = vmul.f32 %v6130, 0.25
        %v6195 = vmul.f32 %v6131, 0.25
        %v6196 = vmul.f32 %v6132, 0.25
        %v6197 = vmul.f32 %v6133, 0.25
        %v6198 = vmul.f32 %v6134, 0.25
        %v6199 = vmul.f32 %v6135, 0.25
        %v6200 = vmul.f32 %v6136, 0.25
        %v6201 = vmul.f32 %v6137, 0.25
        %v6202 = vmul.f32 %v6138, 0.25
        %v6203 = vmul.f32 %v6139, 0.25
        %v6204 = vmul.f32 %v6140, 0.25
        %v6205 = vmul.f32 %v6141, 0.25
        %v6206 = vmul.f32 %v6142, 0.25
        %v6207 = vmul.f32 %v6143, 0.25
        %v6208 = vmul.f32 %v6144, 0.25
        %v6209 = vmul.f32 %v6145, 0.25
        %v6210 = vmul.f32 %v6146, 0.25
        %v6211 = vmul.f32 %v6147, 0.25
        %v6212 = vmul.f32 %v6148, 0.25
        %v6213 = vmul.f32 %v6149, 0.25
        %v6214 = vmul.f32 %v6150, 0.25
        %v6215 = vmul.f32 %v6151, 0.25
        %v6216 = vmul.f32 %v6152, 0.25
        %v6217 = vmul.f32 %v6153, 0.25
        %v6218 = vmul.f32 %v6154, 0.25
        %v6219 = vmul.f32 %v6155, 0.25
        %v6220 = vmul.f32 %v6156, 0.25
        %v6221 = vmul.f32 %v6157, 0.25
        %v6222 = vmul.f32 %v6158, 0.25
        %v6223 = vmul.f32 %v6159, 0.25
        %v6288 = vperm.slane %v6160, 0
        %v6289 = vperm.slane %v6161, 0
        %v6290 = vperm.slane %v6162, 0
        %v6291 = vperm.slane %v6163, 0
        %v6292 = vperm.slane %v6164, 0
        %v6293 = vperm.slane %v6165, 0
        %v6294 = vperm.slane %v6166, 0
        %v6295 = vperm.slane %v6167, 0
        %v6296 = vperm.slane %v6168, 0
        %v6297 = vperm.slane %v6169, 0
        %v6298 = vperm.slane %v6170, 0
        %v6299 = vperm.slane %v6171, 0
        %v6300 = vperm.slane %v6172, 0
        %v6301 = vperm.slane %v6173, 0
        %v6302 = vperm.slane %v6174, 0
        %v6303 = vperm.slane %v6175, 0
        %v6304 = vperm.slane %v6176, 0
        %v6305 = vperm.slane %v6177, 0
        %v6306 = vperm.slane %v6178, 0
        %v6307 = vperm.slane %v6179, 0
        %v6308 = vperm.slane %v6180, 0
        %v6309 = vperm.slane %v6181, 0
        %v6310 = vperm.slane %v6182, 0
        %v6311 = vperm.slane %v6183, 0
        %v6312 = vperm.slane %v6184, 0
        %v6313 = vperm.slane %v6185, 0
        %v6314 = vperm.slane %v6186, 0
        %v6315 = vperm.slane %v6187, 0
        %v6316 = vperm.slane %v6188, 0
        %v6317 = vperm.slane %v6189, 0
        %v6318 = vperm.slane %v6190, 0
        %v6319 = vperm.slane %v6191, 0
        %v6320 = vperm.slane %v6192, 0
        %v6321 = vperm.slane %v6193, 0
        %v6322 = vperm.slane %v6194, 0
        %v6323 = vperm.slane %v6195, 0
        %v6324 = vperm.slane %v6196, 0
        %v6325 = vperm.slane %v6197, 0
        %v6326 = vperm.slane %v6198, 0
        %v6327 = vperm.slane %v6199, 0
        %v6328 = vperm.slane %v6200, 0
        %v6329 = vperm.slane %v6201, 0
        %v6330 = vperm.slane %v6202, 0
        %v6331 = vperm.slane %v6203, 0
        %v6332 = vperm.slane %v6204, 0
        %v6333 = vperm.slane %v6205, 0
        %v6334 = vperm.slane %v6206, 0
        %v6335 = vperm.slane %v6207, 0
        %v6336 = vperm.slane %v6208, 0
        %v6337 = vperm.slane %v6209, 0
        %v6338 = vperm.slane %v6210, 0
        %v6339 = vperm.slane %v6211, 0
        %v6340 = vperm.slane %v6212, 0
        %v6341 = vperm.slane %v6213, 0
        %v6342 = vperm.slane %v6214, 0
        %v6343 = vperm.slane %v6215, 0
        %v6344 = vperm.slane %v6216, 0
        %v6345 = vperm.slane %v6217, 0
        %v6346 = vperm.slane %v6218, 0
        %v6347 = vperm.slane %v6219, 0
        %v6348 = vperm.slane %v6220, 0
        %v6349 = vperm.slane %v6221, 0
        %v6350 = vperm.slane %v6222, 0
        %v6351 = vperm.slane %v6223, 0
        %vm6352 = vcmask 1041409
        %v6353 = vsel %vm6352, %v6289, %v6288
        %vm6354 = vcmask 1042434
        %v6355 = vsel %vm6354, %v6290, %v6353
        %vm6356 = vcmask 1043459
        %v6357 = vsel %vm6356, %v6291, %v6355
        %vm6358 = vcmask 1044484
        %v6359 = vsel %vm6358, %v6292, %v6357
        %vm6360 = vcmask 1045509
        %v6361 = vsel %vm6360, %v6293, %v6359
        %vm6362 = vcmask 1046534
        %v6363 = vsel %vm6362, %v6294, %v6361
        %vm6364 = vcmask 1047559
        %v6365 = vsel %vm6364, %v6295, %v6363
        %v6366 = vsel %vm6352, %v6297, %v6296
        %v6367 = vsel %vm6354, %v6298, %v6366
        %v6368 = vsel %vm6356, %v6299, %v6367
        %v6369 = vsel %vm6358, %v6300, %v6368
        %v6370 = vsel %vm6360, %v6301, %v6369
        %v6371 = vsel %vm6362, %v6302, %v6370
        %v6372 = vsel %vm6364, %v6303, %v6371
        %v6373 = vsel %vm6352, %v6305, %v6304
        %v6374 = vsel %vm6354, %v6306, %v6373
        %v6375 = vsel %vm6356, %v6307, %v6374
        %v6376 = vsel %vm6358, %v6308, %v6375
        %v6377 = vsel %vm6360, %v6309, %v6376
        %v6378 = vsel %vm6362, %v6310, %v6377
        %v6379 = vsel %vm6364, %v6311, %v6378
        %v6380 = vsel %vm6352, %v6313, %v6312
        %v6381 = vsel %vm6354, %v6314, %v6380
        %v6382 = vsel %vm6356, %v6315, %v6381
        %v6383 = vsel %vm6358, %v6316, %v6382
        %v6384 = vsel %vm6360, %v6317, %v6383
        %v6385 = vsel %vm6362, %v6318, %v6384
        %v6386 = vsel %vm6364, %v6319, %v6385
        %v6387 = vsel %vm6352, %v6321, %v6320
        %v6388 = vsel %vm6354, %v6322, %v6387
        %v6389 = vsel %vm6356, %v6323, %v6388
        %v6390 = vsel %vm6358, %v6324, %v6389
        %v6391 = vsel %vm6360, %v6325, %v6390
        %v6392 = vsel %vm6362, %v6326, %v6391
        %v6393 = vsel %vm6364, %v6327, %v6392
        %v6394 = vsel %vm6352, %v6329, %v6328
        %v6395 = vsel %vm6354, %v6330, %v6394
        %v6396 = vsel %vm6356, %v6331, %v6395
        %v6397 = vsel %vm6358, %v6332, %v6396
        %v6398 = vsel %vm6360, %v6333, %v6397
        %v6399 = vsel %vm6362, %v6334, %v6398
        %v6400 = vsel %vm6364, %v6335, %v6399
        %v6401 = vsel %vm6352, %v6337, %v6336
        %v6402 = vsel %vm6354, %v6338, %v6401
        %v6403 = vsel %vm6356, %v6339, %v6402
        %v6404 = vsel %vm6358, %v6340, %v6403
        %v6405 = vsel %vm6360, %v6341, %v6404
        %v6406 = vsel %vm6362, %v6342, %v6405
        %v6407 = vsel %vm6364, %v6343, %v6406
        %v6408 = vsel %vm6352, %v6345, %v6344
        %v6409 = vsel %vm6354, %v6346, %v6408
        %v6410 = vsel %vm6356, %v6347, %v6409
        %v6411 = vsel %vm6358, %v6348, %v6410
        %v6412 = vsel %vm6360, %v6349, %v6411
        %v6413 = vsel %vm6362, %v6350, %v6412
        %v6414 = vsel %vm6364, %v6351, %v6413
        %v6423 = vadd.f32 %v6365, %v6372
        %v6424 = vadd.f32 %v6423, %v6379
        %v6425 = vadd.f32 %v6424, %v6386
        %v6426 = vadd.f32 %v6425, %v6393
        %v6427 = vadd.f32 %v6426, %v6400
        %v6428 = vadd.f32 %v6427, %v6407
        %v6429 = vadd.f32 %v6428, %v6414
        %v6430 = vrot.slane %v6429, 4
        %v6431 = vadd.f32 %v6429, %v6430
        %v6432 = vrot.slane %v6431, 2
        %v6433 = vadd.f32 %v6431, %v6432
        %v6434 = vrot.slane %v6433, 1
        %v6435 = vadd.f32 %v6433, %v6434
        %v6436 = vmul.f32 %v6435, 0.015625
        %v6437 = vperm.slane %v6436, 0
        %v6439 = vrot.slane %v6437, 2
        %v6440 = vrot.slane %v6437, 4
        %v6441 = vrot.slane %v6437, 6
        %v6442 = vrot.slane %v6437, 1
        %v6443 = vrot.slane %v6439, 1
        %v6444 = vrot.slane %v6440, 1
        %v6445 = vrot.slane %v6441, 1
        %v6454 = vsub.f32 %v6160, %v6437
        %v6455 = vsub.f32 %v6161, %v6442
        %v6456 = vsub.f32 %v6162, %v6439
        %v6457 = vsub.f32 %v6163, %v6443
        %v6458 = vsub.f32 %v6164, %v6440
        %v6459 = vsub.f32 %v6165, %v6444
        %v6460 = vsub.f32 %v6166, %v6441
        %v6461 = vsub.f32 %v6167, %v6445
        %v6462 = vsub.f32 %v6168, %v6437
        %v6463 = vsub.f32 %v6169, %v6442
        %v6464 = vsub.f32 %v6170, %v6439
        %v6465 = vsub.f32 %v6171, %v6443
        %v6466 = vsub.f32 %v6172, %v6440
        %v6467 = vsub.f32 %v6173, %v6444
        %v6468 = vsub.f32 %v6174, %v6441
        %v6469 = vsub.f32 %v6175, %v6445
        %v6470 = vsub.f32 %v6176, %v6437
        %v6471 = vsub.f32 %v6177, %v6442
        %v6472 = vsub.f32 %v6178, %v6439
        %v6473 = vsub.f32 %v6179, %v6443
        %v6474 = vsub.f32 %v6180, %v6440
        %v6475 = vsub.f32 %v6181, %v6444
        %v6476 = vsub.f32 %v6182, %v6441
        %v6477 = vsub.f32 %v6183, %v6445
        %v6478 = vsub.f32 %v6184, %v6437
        %v6479 = vsub.f32 %v6185, %v6442
        %v6480 = vsub.f32 %v6186, %v6439
        %v6481 = vsub.f32 %v6187, %v6443
        %v6482 = vsub.f32 %v6188, %v6440
        %v6483 = vsub.f32 %v6189, %v6444
        %v6484 = vsub.f32 %v6190, %v6441
        %v6485 = vsub.f32 %v6191, %v6445
        %v6486 = vsub.f32 %v6192, %v6437
        %v6487 = vsub.f32 %v6193, %v6442
        %v6488 = vsub.f32 %v6194, %v6439
        %v6489 = vsub.f32 %v6195, %v6443
        %v6490 = vsub.f32 %v6196, %v6440
        %v6491 = vsub.f32 %v6197, %v6444
        %v6492 = vsub.f32 %v6198, %v6441
        %v6493 = vsub.f32 %v6199, %v6445
        %v6494 = vsub.f32 %v6200, %v6437
        %v6495 = vsub.f32 %v6201, %v6442
        %v6496 = vsub.f32 %v6202, %v6439
        %v6497 = vsub.f32 %v6203, %v6443
        %v6498 = vsub.f32 %v6204, %v6440
        %v6499 = vsub.f32 %v6205, %v6444
        %v6500 = vsub.f32 %v6206, %v6441
        %v6501 = vsub.f32 %v6207, %v6445
        %v6502 = vsub.f32 %v6208, %v6437
        %v6503 = vsub.f32 %v6209, %v6442
        %v6504 = vsub.f32 %v6210, %v6439
        %v6505 = vsub.f32 %v6211, %v6443
        %v6506 = vsub.f32 %v6212, %v6440
        %v6507 = vsub.f32 %v6213, %v6444
        %v6508 = vsub.f32 %v6214, %v6441
        %v6509 = vsub.f32 %v6215, %v6445
        %v6510 = vsub.f32 %v6216, %v6437
        %v6511 = vsub.f32 %v6217, %v6442
        %v6512 = vsub.f32 %v6218, %v6439
        %v6513 = vsub.f32 %v6219, %v6443
        %v6514 = vsub.f32 %v6220, %v6440
        %v6515 = vsub.f32 %v6221, %v6444
        %v6516 = vsub.f32 %v6222, %v6441
        %v6517 = vsub.f32 %v6223, %v6445
        %v6518 = vmul.f32 %v6454, %v6454
        %v6519 = vmul.f32 %v6455, %v6455
        %v6520 = vmul.f32 %v6456, %v6456
        %v6521 = vmul.f32 %v6457, %v6457
        %v6522 = vmul.f32 %v6458, %v6458
        %v6523 = vmul.f32 %v6459, %v6459
        %v6524 = vmul.f32 %v6460, %v6460
        %v6525 = vmul.f32 %v6461, %v6461
        %v6526 = vmul.f32 %v6462, %v6462
        %v6527 = vmul.f32 %v6463, %v6463
        %v6528 = vmul.f32 %v6464, %v6464
        %v6529 = vmul.f32 %v6465, %v6465
        %v6530 = vmul.f32 %v6466, %v6466
        %v6531 = vmul.f32 %v6467, %v6467
        %v6532 = vmul.f32 %v6468, %v6468
        %v6533 = vmul.f32 %v6469, %v6469
        %v6534 = vmul.f32 %v6470, %v6470
        %v6535 = vmul.f32 %v6471, %v6471
        %v6536 = vmul.f32 %v6472, %v6472
        %v6537 = vmul.f32 %v6473, %v6473
        %v6538 = vmul.f32 %v6474, %v6474
        %v6539 = vmul.f32 %v6475, %v6475
        %v6540 = vmul.f32 %v6476, %v6476
        %v6541 = vmul.f32 %v6477, %v6477
        %v6542 = vmul.f32 %v6478, %v6478
        %v6543 = vmul.f32 %v6479, %v6479
        %v6544 = vmul.f32 %v6480, %v6480
        %v6545 = vmul.f32 %v6481, %v6481
        %v6546 = vmul.f32 %v6482, %v6482
        %v6547 = vmul.f32 %v6483, %v6483
        %v6548 = vmul.f32 %v6484, %v6484
        %v6549 = vmul.f32 %v6485, %v6485
        %v6550 = vmul.f32 %v6486, %v6486
        %v6551 = vmul.f32 %v6487, %v6487
        %v6552 = vmul.f32 %v6488, %v6488
        %v6553 = vmul.f32 %v6489, %v6489
        %v6554 = vmul.f32 %v6490, %v6490
        %v6555 = vmul.f32 %v6491, %v6491
        %v6556 = vmul.f32 %v6492, %v6492
        %v6557 = vmul.f32 %v6493, %v6493
        %v6558 = vmul.f32 %v6494, %v6494
        %v6559 = vmul.f32 %v6495, %v6495
        %v6560 = vmul.f32 %v6496, %v6496
        %v6561 = vmul.f32 %v6497, %v6497
        %v6562 = vmul.f32 %v6498, %v6498
        %v6563 = vmul.f32 %v6499, %v6499
        %v6564 = vmul.f32 %v6500, %v6500
        %v6565 = vmul.f32 %v6501, %v6501
        %v6566 = vmul.f32 %v6502, %v6502
        %v6567 = vmul.f32 %v6503, %v6503
        %v6568 = vmul.f32 %v6504, %v6504
        %v6569 = vmul.f32 %v6505, %v6505
        %v6570 = vmul.f32 %v6506, %v6506
        %v6571 = vmul.f32 %v6507, %v6507
        %v6572 = vmul.f32 %v6508, %v6508
        %v6573 = vmul.f32 %v6509, %v6509
        %v6574 = vmul.f32 %v6510, %v6510
        %v6575 = vmul.f32 %v6511, %v6511
        %v6576 = vmul.f32 %v6512, %v6512
        %v6577 = vmul.f32 %v6513, %v6513
        %v6578 = vmul.f32 %v6514, %v6514
        %v6579 = vmul.f32 %v6515, %v6515
        %v6580 = vmul.f32 %v6516, %v6516
        %v6581 = vmul.f32 %v6517, %v6517
        %v6646 = vperm.slane %v6518, 0
        %v6647 = vperm.slane %v6519, 0
        %v6648 = vperm.slane %v6520, 0
        %v6649 = vperm.slane %v6521, 0
        %v6650 = vperm.slane %v6522, 0
        %v6651 = vperm.slane %v6523, 0
        %v6652 = vperm.slane %v6524, 0
        %v6653 = vperm.slane %v6525, 0
        %v6654 = vperm.slane %v6526, 0
        %v6655 = vperm.slane %v6527, 0
        %v6656 = vperm.slane %v6528, 0
        %v6657 = vperm.slane %v6529, 0
        %v6658 = vperm.slane %v6530, 0
        %v6659 = vperm.slane %v6531, 0
        %v6660 = vperm.slane %v6532, 0
        %v6661 = vperm.slane %v6533, 0
        %v6662 = vperm.slane %v6534, 0
        %v6663 = vperm.slane %v6535, 0
        %v6664 = vperm.slane %v6536, 0
        %v6665 = vperm.slane %v6537, 0
        %v6666 = vperm.slane %v6538, 0
        %v6667 = vperm.slane %v6539, 0
        %v6668 = vperm.slane %v6540, 0
        %v6669 = vperm.slane %v6541, 0
        %v6670 = vperm.slane %v6542, 0
        %v6671 = vperm.slane %v6543, 0
        %v6672 = vperm.slane %v6544, 0
        %v6673 = vperm.slane %v6545, 0
        %v6674 = vperm.slane %v6546, 0
        %v6675 = vperm.slane %v6547, 0
        %v6676 = vperm.slane %v6548, 0
        %v6677 = vperm.slane %v6549, 0
        %v6678 = vperm.slane %v6550, 0
        %v6679 = vperm.slane %v6551, 0
        %v6680 = vperm.slane %v6552, 0
        %v6681 = vperm.slane %v6553, 0
        %v6682 = vperm.slane %v6554, 0
        %v6683 = vperm.slane %v6555, 0
        %v6684 = vperm.slane %v6556, 0
        %v6685 = vperm.slane %v6557, 0
        %v6686 = vperm.slane %v6558, 0
        %v6687 = vperm.slane %v6559, 0
        %v6688 = vperm.slane %v6560, 0
        %v6689 = vperm.slane %v6561, 0
        %v6690 = vperm.slane %v6562, 0
        %v6691 = vperm.slane %v6563, 0
        %v6692 = vperm.slane %v6564, 0
        %v6693 = vperm.slane %v6565, 0
        %v6694 = vperm.slane %v6566, 0
        %v6695 = vperm.slane %v6567, 0
        %v6696 = vperm.slane %v6568, 0
        %v6697 = vperm.slane %v6569, 0
        %v6698 = vperm.slane %v6570, 0
        %v6699 = vperm.slane %v6571, 0
        %v6700 = vperm.slane %v6572, 0
        %v6701 = vperm.slane %v6573, 0
        %v6702 = vperm.slane %v6574, 0
        %v6703 = vperm.slane %v6575, 0
        %v6704 = vperm.slane %v6576, 0
        %v6705 = vperm.slane %v6577, 0
        %v6706 = vperm.slane %v6578, 0
        %v6707 = vperm.slane %v6579, 0
        %v6708 = vperm.slane %v6580, 0
        %v6709 = vperm.slane %v6581, 0
        %v6710 = vsel %vm6352, %v6647, %v6646
        %v6711 = vsel %vm6354, %v6648, %v6710
        %v6712 = vsel %vm6356, %v6649, %v6711
        %v6713 = vsel %vm6358, %v6650, %v6712
        %v6714 = vsel %vm6360, %v6651, %v6713
        %v6715 = vsel %vm6362, %v6652, %v6714
        %v6716 = vsel %vm6364, %v6653, %v6715
        %v6717 = vsel %vm6352, %v6655, %v6654
        %v6718 = vsel %vm6354, %v6656, %v6717
        %v6719 = vsel %vm6356, %v6657, %v6718
        %v6720 = vsel %vm6358, %v6658, %v6719
        %v6721 = vsel %vm6360, %v6659, %v6720
        %v6722 = vsel %vm6362, %v6660, %v6721
        %v6723 = vsel %vm6364, %v6661, %v6722
        %v6724 = vsel %vm6352, %v6663, %v6662
        %v6725 = vsel %vm6354, %v6664, %v6724
        %v6726 = vsel %vm6356, %v6665, %v6725
        %v6727 = vsel %vm6358, %v6666, %v6726
        %v6728 = vsel %vm6360, %v6667, %v6727
        %v6729 = vsel %vm6362, %v6668, %v6728
        %v6730 = vsel %vm6364, %v6669, %v6729
        %v6731 = vsel %vm6352, %v6671, %v6670
        %v6732 = vsel %vm6354, %v6672, %v6731
        %v6733 = vsel %vm6356, %v6673, %v6732
        %v6734 = vsel %vm6358, %v6674, %v6733
        %v6735 = vsel %vm6360, %v6675, %v6734
        %v6736 = vsel %vm6362, %v6676, %v6735
        %v6737 = vsel %vm6364, %v6677, %v6736
        %v6738 = vsel %vm6352, %v6679, %v6678
        %v6739 = vsel %vm6354, %v6680, %v6738
        %v6740 = vsel %vm6356, %v6681, %v6739
        %v6741 = vsel %vm6358, %v6682, %v6740
        %v6742 = vsel %vm6360, %v6683, %v6741
        %v6743 = vsel %vm6362, %v6684, %v6742
        %v6744 = vsel %vm6364, %v6685, %v6743
        %v6745 = vsel %vm6352, %v6687, %v6686
        %v6746 = vsel %vm6354, %v6688, %v6745
        %v6747 = vsel %vm6356, %v6689, %v6746
        %v6748 = vsel %vm6358, %v6690, %v6747
        %v6749 = vsel %vm6360, %v6691, %v6748
        %v6750 = vsel %vm6362, %v6692, %v6749
        %v6751 = vsel %vm6364, %v6693, %v6750
        %v6752 = vsel %vm6352, %v6695, %v6694
        %v6753 = vsel %vm6354, %v6696, %v6752
        %v6754 = vsel %vm6356, %v6697, %v6753
        %v6755 = vsel %vm6358, %v6698, %v6754
        %v6756 = vsel %vm6360, %v6699, %v6755
        %v6757 = vsel %vm6362, %v6700, %v6756
        %v6758 = vsel %vm6364, %v6701, %v6757
        %v6759 = vsel %vm6352, %v6703, %v6702
        %v6760 = vsel %vm6354, %v6704, %v6759
        %v6761 = vsel %vm6356, %v6705, %v6760
        %v6762 = vsel %vm6358, %v6706, %v6761
        %v6763 = vsel %vm6360, %v6707, %v6762
        %v6764 = vsel %vm6362, %v6708, %v6763
        %v6765 = vsel %vm6364, %v6709, %v6764
        %v6774 = vadd.f32 %v6716, %v6723
        %v6775 = vadd.f32 %v6774, %v6730
        %v6776 = vadd.f32 %v6775, %v6737
        %v6777 = vadd.f32 %v6776, %v6744
        %v6778 = vadd.f32 %v6777, %v6751
        %v6779 = vadd.f32 %v6778, %v6758
        %v6780 = vadd.f32 %v6779, %v6765
        %v6781 = vrot.slane %v6780, 4
        %v6782 = vadd.f32 %v6780, %v6781
        %v6783 = vrot.slane %v6782, 2
        %v6784 = vadd.f32 %v6782, %v6783
        %v6785 = vrot.slane %v6784, 1
        %v6786 = vadd.f32 %v6784, %v6785
        %v6787 = vmul.f32 %v6786, 0.015625
        %v6788 = vld [vmem:[%s7] sm:$0x1]
        %v6789 = vadd.f32 %v6787, 1e-05
        %v6790 = vrsqrt.pop %v6789
        %v6791 = vmul.f32 %v6790, %v6789
        %v6792 = vmul.f32 %v6791, %v6790
        %v6793 = vmul.f32 0.5, %v6792
        %v6794 = vsub.f32 1.5, %v6793
        %v6795 = vmul.f32 %v6790, %v6794
        %vm6796 = vweird.f32 %v6789
        %vm6797 = vweird.f32 %v6790
        %vm6798 = vmor %vm6796, %vm6797
        %v6799 = vsel %vm6798, %v6790, %v6795
        %v6800 = vmul.f32 %v6788, %v6799
        %v6802 = vperm.slane %v6800, 0
        %v6803 = vrot.slane %v6802, 2
        %v6804 = vrot.slane %v6802, 4
        %v6805 = vrot.slane %v6802, 6
        %v6806 = vrot.slane %v6802, 1
        %v6807 = vrot.slane %v6803, 1
        %v6808 = vrot.slane %v6804, 1
        %v6809 = vrot.slane %v6805, 1
        %v6818 = vmul.f32 %v6454, %v6802
        %v6819 = vmul.f32 %v6455, %v6806
        %v6820 = vmul.f32 %v6456, %v6803
        %v6821 = vmul.f32 %v6457, %v6807
        %v6822 = vmul.f32 %v6458, %v6804
        %v6823 = vmul.f32 %v6459, %v6808
        %v6824 = vmul.f32 %v6460, %v6805
        %v6825 = vmul.f32 %v6461, %v6809
        %v6826 = vmul.f32 %v6462, %v6802
        %v6827 = vmul.f32 %v6463, %v6806
        %v6828 = vmul.f32 %v6464, %v6803
        %v6829 = vmul.f32 %v6465, %v6807
        %v6830 = vmul.f32 %v6466, %v6804
        %v6831 = vmul.f32 %v6467, %v6808
        %v6832 = vmul.f32 %v6468, %v6805
        %v6833 = vmul.f32 %v6469, %v6809
        %v6834 = vmul.f32 %v6470, %v6802
        %v6835 = vmul.f32 %v6471, %v6806
        %v6836 = vmul.f32 %v6472, %v6803
        %v6837 = vmul.f32 %v6473, %v6807
        %v6838 = vmul.f32 %v6474, %v6804
        %v6839 = vmul.f32 %v6475, %v6808
        %v6840 = vmul.f32 %v6476, %v6805
        %v6841 = vmul.f32 %v6477, %v6809
        %v6842 = vmul.f32 %v6478, %v6802
        %v6843 = vmul.f32 %v6479, %v6806
        %v6844 = vmul.f32 %v6480, %v6803
        %v6845 = vmul.f32 %v6481, %v6807
        %v6846 = vmul.f32 %v6482, %v6804
        %v6847 = vmul.f32 %v6483, %v6808
        %v6848 = vmul.f32 %v6484, %v6805
        %v6849 = vmul.f32 %v6485, %v6809
        %v6850 = vmul.f32 %v6486, %v6802
        %v6851 = vmul.f32 %v6487, %v6806
        %v6852 = vmul.f32 %v6488, %v6803
        %v6853 = vmul.f32 %v6489, %v6807
        %v6854 = vmul.f32 %v6490, %v6804
        %v6855 = vmul.f32 %v6491, %v6808
        %v6856 = vmul.f32 %v6492, %v6805
        %v6857 = vmul.f32 %v6493, %v6809
        %v6858 = vmul.f32 %v6494, %v6802
        %v6859 = vmul.f32 %v6495, %v6806
        %v6860 = vmul.f32 %v6496, %v6803
        %v6861 = vmul.f32 %v6497, %v6807
        %v6862 = vmul.f32 %v6498, %v6804
        %v6863 = vmul.f32 %v6499, %v6808
        %v6864 = vmul.f32 %v6500, %v6805
        %v6865 = vmul.f32 %v6501, %v6809
        %v6866 = vmul.f32 %v6502, %v6802
        %v6867 = vmul.f32 %v6503, %v6806
        %v6868 = vmul.f32 %v6504, %v6803
        %v6869 = vmul.f32 %v6505, %v6807
        %v6870 = vmul.f32 %v6506, %v6804
        %v6871 = vmul.f32 %v6507, %v6808
        %v6872 = vmul.f32 %v6508, %v6805
        %v6873 = vmul.f32 %v6509, %v6809
        %v6874 = vmul.f32 %v6510, %v6802
        %v6875 = vmul.f32 %v6511, %v6806
        %v6876 = vmul.f32 %v6512, %v6803
        %v6877 = vmul.f32 %v6513, %v6807
        %v6878 = vmul.f32 %v6514, %v6804
        %v6879 = vmul.f32 %v6515, %v6808
        %v6880 = vmul.f32 %v6516, %v6805
        %v6881 = vmul.f32 %v6517, %v6809
        %v6882 = vld [vmem:[%s8] sm:$0x1]
        %v6884 = vperm.slane %v6882, 0
        %v6885 = vrot.slane %v6884, 2
        %v6886 = vrot.slane %v6884, 4
        %v6887 = vrot.slane %v6884, 6
        %v6888 = vrot.slane %v6884, 1
        %v6889 = vrot.slane %v6885, 1
        %v6890 = vrot.slane %v6886, 1
        %v6891 = vrot.slane %v6887, 1
        %v6900 = vadd.f32 %v6818, %v6884
        %v6901 = vadd.f32 %v6819, %v6888
        %v6902 = vadd.f32 %v6820, %v6885
        %v6903 = vadd.f32 %v6821, %v6889
        %v6904 = vadd.f32 %v6822, %v6886
        %v6905 = vadd.f32 %v6823, %v6890
        %v6906 = vadd.f32 %v6824, %v6887
        %v6907 = vadd.f32 %v6825, %v6891
        %v6908 = vadd.f32 %v6826, %v6884
        %v6909 = vadd.f32 %v6827, %v6888
        %v6910 = vadd.f32 %v6828, %v6885
        %v6911 = vadd.f32 %v6829, %v6889
        %v6912 = vadd.f32 %v6830, %v6886
        %v6913 = vadd.f32 %v6831, %v6890
        %v6914 = vadd.f32 %v6832, %v6887
        %v6915 = vadd.f32 %v6833, %v6891
        %v6916 = vadd.f32 %v6834, %v6884
        %v6917 = vadd.f32 %v6835, %v6888
        %v6918 = vadd.f32 %v6836, %v6885
        %v6919 = vadd.f32 %v6837, %v6889
        %v6920 = vadd.f32 %v6838, %v6886
        %v6921 = vadd.f32 %v6839, %v6890
        %v6922 = vadd.f32 %v6840, %v6887
        %v6923 = vadd.f32 %v6841, %v6891
        %v6924 = vadd.f32 %v6842, %v6884
        %v6925 = vadd.f32 %v6843, %v6888
        %v6926 = vadd.f32 %v6844, %v6885
        %v6927 = vadd.f32 %v6845, %v6889
        %v6928 = vadd.f32 %v6846, %v6886
        %v6929 = vadd.f32 %v6847, %v6890
        %v6930 = vadd.f32 %v6848, %v6887
        %v6931 = vadd.f32 %v6849, %v6891
        %v6932 = vadd.f32 %v6850, %v6884
        %v6933 = vadd.f32 %v6851, %v6888
        %v6934 = vadd.f32 %v6852, %v6885
        %v6935 = vadd.f32 %v6853, %v6889
        %v6936 = vadd.f32 %v6854, %v6886
        %v6937 = vadd.f32 %v6855, %v6890
        %v6938 = vadd.f32 %v6856, %v6887
        %v6939 = vadd.f32 %v6857, %v6891
        %v6940 = vadd.f32 %v6858, %v6884
        %v6941 = vadd.f32 %v6859, %v6888
        %v6942 = vadd.f32 %v6860, %v6885
        %v6943 = vadd.f32 %v6861, %v6889
        %v6944 = vadd.f32 %v6862, %v6886
        %v6945 = vadd.f32 %v6863, %v6890
        %v6946 = vadd.f32 %v6864, %v6887
        %v6947 = vadd.f32 %v6865, %v6891
        %v6948 = vadd.f32 %v6866, %v6884
        %v6949 = vadd.f32 %v6867, %v6888
        %v6950 = vadd.f32 %v6868, %v6885
        %v6951 = vadd.f32 %v6869, %v6889
        %v6952 = vadd.f32 %v6870, %v6886
        %v6953 = vadd.f32 %v6871, %v6890
        %v6954 = vadd.f32 %v6872, %v6887
        %v6955 = vadd.f32 %v6873, %v6891
        %v6956 = vadd.f32 %v6874, %v6884
        %v6957 = vadd.f32 %v6875, %v6888
        %v6958 = vadd.f32 %v6876, %v6885
        %v6959 = vadd.f32 %v6877, %v6889
        %v6960 = vadd.f32 %v6878, %v6886
        %v6961 = vadd.f32 %v6879, %v6890
        %v6962 = vadd.f32 %v6880, %v6887
        %v6963 = vadd.f32 %v6881, %v6891
        %vm6964 = vcmp.ge.f32.partialorder %v6900, 0.0
        %vm6965 = vcmp.ge.f32.partialorder %v6901, 0.0
        %vm6966 = vcmp.ge.f32.partialorder %v6902, 0.0
        %vm6967 = vcmp.ge.f32.partialorder %v6903, 0.0
        %vm6968 = vcmp.ge.f32.partialorder %v6904, 0.0
        %vm6969 = vcmp.ge.f32.partialorder %v6905, 0.0
        %vm6970 = vcmp.ge.f32.partialorder %v6906, 0.0
        %vm6971 = vcmp.ge.f32.partialorder %v6907, 0.0
        %vm6972 = vcmp.ge.f32.partialorder %v6908, 0.0
        %vm6973 = vcmp.ge.f32.partialorder %v6909, 0.0
        %vm6974 = vcmp.ge.f32.partialorder %v6910, 0.0
        %vm6975 = vcmp.ge.f32.partialorder %v6911, 0.0
        %vm6976 = vcmp.ge.f32.partialorder %v6912, 0.0
        %vm6977 = vcmp.ge.f32.partialorder %v6913, 0.0
        %vm6978 = vcmp.ge.f32.partialorder %v6914, 0.0
        %vm6979 = vcmp.ge.f32.partialorder %v6915, 0.0
        %vm6980 = vcmp.ge.f32.partialorder %v6916, 0.0
        %vm6981 = vcmp.ge.f32.partialorder %v6917, 0.0
        %vm6982 = vcmp.ge.f32.partialorder %v6918, 0.0
        %vm6983 = vcmp.ge.f32.partialorder %v6919, 0.0
        %vm6984 = vcmp.ge.f32.partialorder %v6920, 0.0
        %vm6985 = vcmp.ge.f32.partialorder %v6921, 0.0
        %vm6986 = vcmp.ge.f32.partialorder %v6922, 0.0
        %vm6987 = vcmp.ge.f32.partialorder %v6923, 0.0
        %vm6988 = vcmp.ge.f32.partialorder %v6924, 0.0
        %vm6989 = vcmp.ge.f32.partialorder %v6925, 0.0
        %vm6990 = vcmp.ge.f32.partialorder %v6926, 0.0
        %vm6991 = vcmp.ge.f32.partialorder %v6927, 0.0
        %vm6992 = vcmp.ge.f32.partialorder %v6928, 0.0
        %vm6993 = vcmp.ge.f32.partialorder %v6929, 0.0
        %vm6994 = vcmp.ge.f32.partialorder %v6930, 0.0
        %vm6995 = vcmp.ge.f32.partialorder %v6931, 0.0
        %vm6996 = vcmp.ge.f32.partialorder %v6932, 0.0
        %vm6997 = vcmp.ge.f32.partialorder %v6933, 0.0
        %vm6998 = vcmp.ge.f32.partialorder %v6934, 0.0
        %vm6999 = vcmp.ge.f32.partialorder %v6935, 0.0
        %vm7000 = vcmp.ge.f32.partialorder %v6936, 0.0
        %vm7001 = vcmp.ge.f32.partialorder %v6937, 0.0
        %vm7002 = vcmp.ge.f32.partialorder %v6938, 0.0
        %vm7003 = vcmp.ge.f32.partialorder %v6939, 0.0
        %vm7004 = vcmp.ge.f32.partialorder %v6940, 0.0
        %vm7005 = vcmp.ge.f32.partialorder %v6941, 0.0
        %vm7006 = vcmp.ge.f32.partialorder %v6942, 0.0
        %vm7007 = vcmp.ge.f32.partialorder %v6943, 0.0
        %vm7008 = vcmp.ge.f32.partialorder %v6944, 0.0
        %vm7009 = vcmp.ge.f32.partialorder %v6945, 0.0
        %vm7010 = vcmp.ge.f32.partialorder %v6946, 0.0
        %vm7011 = vcmp.ge.f32.partialorder %v6947, 0.0
        %vm7012 = vcmp.ge.f32.partialorder %v6948, 0.0
        %vm7013 = vcmp.ge.f32.partialorder %v6949, 0.0
        %vm7014 = vcmp.ge.f32.partialorder %v6950, 0.0
        %vm7015 = vcmp.ge.f32.partialorder %v6951, 0.0
        %vm7016 = vcmp.ge.f32.partialorder %v6952, 0.0
        %vm7017 = vcmp.ge.f32.partialorder %v6953, 0.0
        %vm7018 = vcmp.ge.f32.partialorder %v6954, 0.0
        %vm7019 = vcmp.ge.f32.partialorder %v6955, 0.0
        %vm7020 = vcmp.ge.f32.partialorder %v6956, 0.0
        %vm7021 = vcmp.ge.f32.partialorder %v6957, 0.0
        %vm7022 = vcmp.ge.f32.partialorder %v6958, 0.0
        %vm7023 = vcmp.ge.f32.partialorder %v6959, 0.0
        %vm7024 = vcmp.ge.f32.partialorder %v6960, 0.0
        %vm7025 = vcmp.ge.f32.partialorder %v6961, 0.0
        %vm7026 = vcmp.ge.f32.partialorder %v6962, 0.0
        %vm7027 = vcmp.ge.f32.partialorder %v6963, 0.0
        %v7028 = vmul.f32 %v6900, 0.2
        %v7029 = vmul.f32 %v6901, 0.2
        %v7030 = vmul.f32 %v6902, 0.2
        %v7031 = vmul.f32 %v6903, 0.2
        %v7032 = vmul.f32 %v6904, 0.2
        %v7033 = vmul.f32 %v6905, 0.2
        %v7034 = vmul.f32 %v6906, 0.2
        %v7035 = vmul.f32 %v6907, 0.2
        %v7036 = vmul.f32 %v6908, 0.2
        %v7037 = vmul.f32 %v6909, 0.2
        %v7038 = vmul.f32 %v6910, 0.2
        %v7039 = vmul.f32 %v6911, 0.2
        %v7040 = vmul.f32 %v6912, 0.2
        %v7041 = vmul.f32 %v6913, 0.2
        %v7042 = vmul.f32 %v6914, 0.2
        %v7043 = vmul.f32 %v6915, 0.2
        %v7044 = vmul.f32 %v6916, 0.2
        %v7045 = vmul.f32 %v6917, 0.2
        %v7046 = vmul.f32 %v6918, 0.2
        %v7047 = vmul.f32 %v6919, 0.2
        %v7048 = vmul.f32 %v6920, 0.2
        %v7049 = vmul.f32 %v6921, 0.2
        %v7050 = vmul.f32 %v6922, 0.2
        %v7051 = vmul.f32 %v6923, 0.2
        %v7052 = vmul.f32 %v6924, 0.2
        %v7053 = vmul.f32 %v6925, 0.2
        %v7054 = vmul.f32 %v6926, 0.2
        %v7055 = vmul.f32 %v6927, 0.2
        %v7056 = vmul.f32 %v6928, 0.2
        %v7057 = vmul.f32 %v6929, 0.2
        %v7058 = vmul.f32 %v6930, 0.2
        %v7059 = vmul.f32 %v6931, 0.2
        %v7060 = vmul.f32 %v6932, 0.2
        %v7061 = vmul.f32 %v6933, 0.2
        %v7062 = vmul.f32 %v6934, 0.2
        %v7063 = vmul.f32 %v6935, 0.2
        %v7064 = vmul.f32 %v6936, 0.2
        %v7065 = vmul.f32 %v6937, 0.2
        %v7066 = vmul.f32 %v6938, 0.2
        %v7067 = vmul.f32 %v6939, 0.2
        %v7068 = vmul.f32 %v6940, 0.2
        %v7069 = vmul.f32 %v6941, 0.2
        %v7070 = vmul.f32 %v6942, 0.2
        %v7071 = vmul.f32 %v6943, 0.2
        %v7072 = vmul.f32 %v6944, 0.2
        %v7073 = vmul.f32 %v6945, 0.2
        %v7074 = vmul.f32 %v6946, 0.2
        %v7075 = vmul.f32 %v6947, 0.2
        %v7076 = vmul.f32 %v6948, 0.2
        %v7077 = vmul.f32 %v6949, 0.2
        %v7078 = vmul.f32 %v6950, 0.2
        %v7079 = vmul.f32 %v6951, 0.2
        %v7080 = vmul.f32 %v6952, 0.2
        %v7081 = vmul.f32 %v6953, 0.2
        %v7082 = vmul.f32 %v6954, 0.2
        %v7083 = vmul.f32 %v6955, 0.2
        %v7084 = vmul.f32 %v6956, 0.2
        %v7085 = vmul.f32 %v6957, 0.2
        %v7086 = vmul.f32 %v6958, 0.2
        %v7087 = vmul.f32 %v6959, 0.2
        %v7088 = vmul.f32 %v6960, 0.2
        %v7089 = vmul.f32 %v6961, 0.2
        %v7090 = vmul.f32 %v6962, 0.2
        %v7091 = vmul.f32 %v6963, 0.2
        %v7092 = vsel %vm6964, %v6900, %v7028
        %v7093 = vsel %vm6965, %v6901, %v7029
        %v7094 = vsel %vm6966, %v6902, %v7030
        %v7095 = vsel %vm6967, %v6903, %v7031
        %v7096 = vsel %vm6968, %v6904, %v7032
        %v7097 = vsel %vm6969, %v6905, %v7033
        %v7098 = vsel %vm6970, %v6906, %v7034
        %v7099 = vsel %vm6971, %v6907, %v7035
        %v7100 = vsel %vm6972, %v6908, %v7036
        %v7101 = vsel %vm6973, %v6909, %v7037
        %v7102 = vsel %vm6974, %v6910, %v7038
        %v7103 = vsel %vm6975, %v6911, %v7039
        %v7104 = vsel %vm6976, %v6912, %v7040
        %v7105 = vsel %vm6977, %v6913, %v7041
        %v7106 = vsel %vm6978, %v6914, %v7042
        %v7107 = vsel %vm6979, %v6915, %v7043
        %v7108 = vsel %vm6980, %v6916, %v7044
        %v7109 = vsel %vm6981, %v6917, %v7045
        %v7110 = vsel %vm6982, %v6918, %v7046
        %v7111 = vsel %vm6983, %v6919, %v7047
        %v7112 = vsel %vm6984, %v6920, %v7048
        %v7113 = vsel %vm6985, %v6921, %v7049
        %v7114 = vsel %vm6986, %v6922, %v7050
        %v7115 = vsel %vm6987, %v6923, %v7051
        %v7116 = vsel %vm6988, %v6924, %v7052
        %v7117 = vsel %vm6989, %v6925, %v7053
        %v7118 = vsel %vm6990, %v6926, %v7054
        %v7119 = vsel %vm6991, %v6927, %v7055
        %v7120 = vsel %vm6992, %v6928, %v7056
        %v7121 = vsel %vm6993, %v6929, %v7057
        %v7122 = vsel %vm6994, %v6930, %v7058
        %v7123 = vsel %vm6995, %v6931, %v7059
        %v7124 = vsel %vm6996, %v6932, %v7060
        %v7125 = vsel %vm6997, %v6933, %v7061
        %v7126 = vsel %vm6998, %v6934, %v7062
        %v7127 = vsel %vm6999, %v6935, %v7063
        %v7128 = vsel %vm7000, %v6936, %v7064
        %v7129 = vsel %vm7001, %v6937, %v7065
        %v7130 = vsel %vm7002, %v6938, %v7066
        %v7131 = vsel %vm7003, %v6939, %v7067
        %v7132 = vsel %vm7004, %v6940, %v7068
        %v7133 = vsel %vm7005, %v6941, %v7069
        %v7134 = vsel %vm7006, %v6942, %v7070
        %v7135 = vsel %vm7007, %v6943, %v7071
        %v7136 = vsel %vm7008, %v6944, %v7072
        %v7137 = vsel %vm7009, %v6945, %v7073
        %v7138 = vsel %vm7010, %v6946, %v7074
        %v7139 = vsel %vm7011, %v6947, %v7075
        %v7140 = vsel %vm7012, %v6948, %v7076
        %v7141 = vsel %vm7013, %v6949, %v7077
        %v7142 = vsel %vm7014, %v6950, %v7078
        %v7143 = vsel %vm7015, %v6951, %v7079
        %v7144 = vsel %vm7016, %v6952, %v7080
        %v7145 = vsel %vm7017, %v6953, %v7081
        %v7146 = vsel %vm7018, %v6954, %v7082
        %v7147 = vsel %vm7019, %v6955, %v7083
        %v7148 = vsel %vm7020, %v6956, %v7084
        %v7149 = vsel %vm7021, %v6957, %v7085
        %v7150 = vsel %vm7022, %v6958, %v7086
        %v7151 = vsel %vm7023, %v6959, %v7087
        %v7152 = vsel %vm7024, %v6960, %v7088
        %v7153 = vsel %vm7025, %v6961, %v7089
        %v7154 = vsel %vm7026, %v6962, %v7090
        %v7155 = vsel %vm7027, %v6963, %v7091
        %v7156 = vpack.c.bf16 %v7092, %v7092
        %v7157 = vpack.c.bf16 %v7093, %v7093
        %v7158 = vpack.c.bf16 %v7094, %v7094
        %v7159 = vpack.c.bf16 %v7095, %v7095
        %v7160 = vpack.c.bf16 %v7096, %v7096
        %v7161 = vpack.c.bf16 %v7097, %v7097
        %v7162 = vpack.c.bf16 %v7098, %v7098
        %v7163 = vpack.c.bf16 %v7099, %v7099
        %v7164 = vpack.c.bf16 %v7100, %v7100
        %v7165 = vpack.c.bf16 %v7101, %v7101
        %v7166 = vpack.c.bf16 %v7102, %v7102
        %v7167 = vpack.c.bf16 %v7103, %v7103
        %v7168 = vpack.c.bf16 %v7104, %v7104
        %v7169 = vpack.c.bf16 %v7105, %v7105
        %v7170 = vpack.c.bf16 %v7106, %v7106
        %v7171 = vpack.c.bf16 %v7107, %v7107
        %v7172 = vpack.c.bf16 %v7108, %v7108
        %v7173 = vpack.c.bf16 %v7109, %v7109
        %v7174 = vpack.c.bf16 %v7110, %v7110
        %v7175 = vpack.c.bf16 %v7111, %v7111
        %v7176 = vpack.c.bf16 %v7112, %v7112
        %v7177 = vpack.c.bf16 %v7113, %v7113
        %v7178 = vpack.c.bf16 %v7114, %v7114
        %v7179 = vpack.c.bf16 %v7115, %v7115
        %v7180 = vpack.c.bf16 %v7116, %v7116
        %v7181 = vpack.c.bf16 %v7117, %v7117
        %v7182 = vpack.c.bf16 %v7118, %v7118
        %v7183 = vpack.c.bf16 %v7119, %v7119
        %v7184 = vpack.c.bf16 %v7120, %v7120
        %v7185 = vpack.c.bf16 %v7121, %v7121
        %v7186 = vpack.c.bf16 %v7122, %v7122
        %v7187 = vpack.c.bf16 %v7123, %v7123
        %v7188 = vpack.c.bf16 %v7124, %v7124
        %v7189 = vpack.c.bf16 %v7125, %v7125
        %v7190 = vpack.c.bf16 %v7126, %v7126
        %v7191 = vpack.c.bf16 %v7127, %v7127
        %v7192 = vpack.c.bf16 %v7128, %v7128
        %v7193 = vpack.c.bf16 %v7129, %v7129
        %v7194 = vpack.c.bf16 %v7130, %v7130
        %v7195 = vpack.c.bf16 %v7131, %v7131
        %v7196 = vpack.c.bf16 %v7132, %v7132
        %v7197 = vpack.c.bf16 %v7133, %v7133
        %v7198 = vpack.c.bf16 %v7134, %v7134
        %v7199 = vpack.c.bf16 %v7135, %v7135
        %v7200 = vpack.c.bf16 %v7136, %v7136
        %v7201 = vpack.c.bf16 %v7137, %v7137
        %v7202 = vpack.c.bf16 %v7138, %v7138
        %v7203 = vpack.c.bf16 %v7139, %v7139
        %v7204 = vpack.c.bf16 %v7140, %v7140
        %v7205 = vpack.c.bf16 %v7141, %v7141
        %v7206 = vpack.c.bf16 %v7142, %v7142
        %v7207 = vpack.c.bf16 %v7143, %v7143
        %v7208 = vpack.c.bf16 %v7144, %v7144
        %v7209 = vpack.c.bf16 %v7145, %v7145
        %v7210 = vpack.c.bf16 %v7146, %v7146
        %v7211 = vpack.c.bf16 %v7147, %v7147
        %v7212 = vpack.c.bf16 %v7148, %v7148
        %v7213 = vpack.c.bf16 %v7149, %v7149
        %v7214 = vpack.c.bf16 %v7150, %v7150
        %v7215 = vpack.c.bf16 %v7151, %v7151
        %v7216 = vpack.c.bf16 %v7152, %v7152
        %v7217 = vpack.c.bf16 %v7153, %v7153
        %v7218 = vpack.c.bf16 %v7154, %v7154
        %v7219 = vpack.c.bf16 %v7155, %v7155
        %v7284 = vunpack.c.l.b16 %v7156
        %v7285 = vunpack.c.l.b16 %v7157
        %v7286 = vunpack.c.l.b16 %v7158
        %v7287 = vunpack.c.l.b16 %v7159
        %v7288 = vunpack.c.l.b16 %v7160
        %v7289 = vunpack.c.l.b16 %v7161
        %v7290 = vunpack.c.l.b16 %v7162
        %v7291 = vunpack.c.l.b16 %v7163
        %v7292 = vunpack.c.l.b16 %v7164
        %v7293 = vunpack.c.l.b16 %v7165
        %v7294 = vunpack.c.l.b16 %v7166
        %v7295 = vunpack.c.l.b16 %v7167
        %v7296 = vunpack.c.l.b16 %v7168
        %v7297 = vunpack.c.l.b16 %v7169
        %v7298 = vunpack.c.l.b16 %v7170
        %v7299 = vunpack.c.l.b16 %v7171
        %v7300 = vunpack.c.l.b16 %v7172
        %v7301 = vunpack.c.l.b16 %v7173
        %v7302 = vunpack.c.l.b16 %v7174
        %v7303 = vunpack.c.l.b16 %v7175
        %v7304 = vunpack.c.l.b16 %v7176
        %v7305 = vunpack.c.l.b16 %v7177
        %v7306 = vunpack.c.l.b16 %v7178
        %v7307 = vunpack.c.l.b16 %v7179
        %v7308 = vunpack.c.l.b16 %v7180
        %v7309 = vunpack.c.l.b16 %v7181
        %v7310 = vunpack.c.l.b16 %v7182
        %v7311 = vunpack.c.l.b16 %v7183
        %v7312 = vunpack.c.l.b16 %v7184
        %v7313 = vunpack.c.l.b16 %v7185
        %v7314 = vunpack.c.l.b16 %v7186
        %v7315 = vunpack.c.l.b16 %v7187
        %v7316 = vunpack.c.l.b16 %v7188
        %v7317 = vunpack.c.l.b16 %v7189
        %v7318 = vunpack.c.l.b16 %v7190
        %v7319 = vunpack.c.l.b16 %v7191
        %v7320 = vunpack.c.l.b16 %v7192
        %v7321 = vunpack.c.l.b16 %v7193
        %v7322 = vunpack.c.l.b16 %v7194
        %v7323 = vunpack.c.l.b16 %v7195
        %v7324 = vunpack.c.l.b16 %v7196
        %v7325 = vunpack.c.l.b16 %v7197
        %v7326 = vunpack.c.l.b16 %v7198
        %v7327 = vunpack.c.l.b16 %v7199
        %v7328 = vunpack.c.l.b16 %v7200
        %v7329 = vunpack.c.l.b16 %v7201
        %v7330 = vunpack.c.l.b16 %v7202
        %v7331 = vunpack.c.l.b16 %v7203
        %v7332 = vunpack.c.l.b16 %v7204
        %v7333 = vunpack.c.l.b16 %v7205
        %v7334 = vunpack.c.l.b16 %v7206
        %v7335 = vunpack.c.l.b16 %v7207
        %v7336 = vunpack.c.l.b16 %v7208
        %v7337 = vunpack.c.l.b16 %v7209
        %v7338 = vunpack.c.l.b16 %v7210
        %v7339 = vunpack.c.l.b16 %v7211
        %v7340 = vunpack.c.l.b16 %v7212
        %v7341 = vunpack.c.l.b16 %v7213
        %v7342 = vunpack.c.l.b16 %v7214
        %v7343 = vunpack.c.l.b16 %v7215
        %v7344 = vunpack.c.l.b16 %v7216
        %v7345 = vunpack.c.l.b16 %v7217
        %v7346 = vunpack.c.l.b16 %v7218
        %v7347 = vunpack.c.l.b16 %v7219
        %v7348 = vpack.c.b16 %v7284, %v7284
        %v7349 = vpack.c.b16 %v7285, %v7285
        %v7350 = vpack.c.b16 %v7286, %v7286
        %v7351 = vpack.c.b16 %v7287, %v7287
        %v7352 = vpack.c.b16 %v7288, %v7288
        %v7353 = vpack.c.b16 %v7289, %v7289
        %v7354 = vpack.c.b16 %v7290, %v7290
        %v7355 = vpack.c.b16 %v7291, %v7291
        %v7356 = vpack.c.b16 %v7292, %v7292
        %v7357 = vpack.c.b16 %v7293, %v7293
        %v7358 = vpack.c.b16 %v7294, %v7294
        %v7359 = vpack.c.b16 %v7295, %v7295
        %v7360 = vpack.c.b16 %v7296, %v7296
        %v7361 = vpack.c.b16 %v7297, %v7297
        %v7362 = vpack.c.b16 %v7298, %v7298
        %v7363 = vpack.c.b16 %v7299, %v7299
        %v7364 = vpack.c.b16 %v7300, %v7300
        %v7365 = vpack.c.b16 %v7301, %v7301
        %v7366 = vpack.c.b16 %v7302, %v7302
        %v7367 = vpack.c.b16 %v7303, %v7303
        %v7368 = vpack.c.b16 %v7304, %v7304
        %v7369 = vpack.c.b16 %v7305, %v7305
        %v7370 = vpack.c.b16 %v7306, %v7306
        %v7371 = vpack.c.b16 %v7307, %v7307
        %v7372 = vpack.c.b16 %v7308, %v7308
        %v7373 = vpack.c.b16 %v7309, %v7309
        %v7374 = vpack.c.b16 %v7310, %v7310
        %v7375 = vpack.c.b16 %v7311, %v7311
        %v7376 = vpack.c.b16 %v7312, %v7312
        %v7377 = vpack.c.b16 %v7313, %v7313
        %v7378 = vpack.c.b16 %v7314, %v7314
        %v7379 = vpack.c.b16 %v7315, %v7315
        %v7380 = vpack.c.b16 %v7316, %v7316
        %v7381 = vpack.c.b16 %v7317, %v7317
        %v7382 = vpack.c.b16 %v7318, %v7318
        %v7383 = vpack.c.b16 %v7319, %v7319
        %v7384 = vpack.c.b16 %v7320, %v7320
        %v7385 = vpack.c.b16 %v7321, %v7321
        %v7386 = vpack.c.b16 %v7322, %v7322
        %v7387 = vpack.c.b16 %v7323, %v7323
        %v7388 = vpack.c.b16 %v7324, %v7324
        %v7389 = vpack.c.b16 %v7325, %v7325
        %v7390 = vpack.c.b16 %v7326, %v7326
        %v7391 = vpack.c.b16 %v7327, %v7327
        %v7392 = vpack.c.b16 %v7328, %v7328
        %v7393 = vpack.c.b16 %v7329, %v7329
        %v7394 = vpack.c.b16 %v7330, %v7330
        %v7395 = vpack.c.b16 %v7331, %v7331
        %v7396 = vpack.c.b16 %v7332, %v7332
        %v7397 = vpack.c.b16 %v7333, %v7333
        %v7398 = vpack.c.b16 %v7334, %v7334
        %v7399 = vpack.c.b16 %v7335, %v7335
        %v7400 = vpack.c.b16 %v7336, %v7336
        %v7401 = vpack.c.b16 %v7337, %v7337
        %v7402 = vpack.c.b16 %v7338, %v7338
        %v7403 = vpack.c.b16 %v7339, %v7339
        %v7404 = vpack.c.b16 %v7340, %v7340
        %v7405 = vpack.c.b16 %v7341, %v7341
        %v7406 = vpack.c.b16 %v7342, %v7342
        %v7407 = vpack.c.b16 %v7343, %v7343
        %v7408 = vpack.c.b16 %v7344, %v7344
        %v7409 = vpack.c.b16 %v7345, %v7345
        %v7410 = vpack.c.b16 %v7346, %v7346
        %v7411 = vpack.c.b16 %v7347, %v7347
        %v7412 = vunpack.c.l.b16 %v7348
        %v7413 = vunpack.c.l.b16 %v7349
        %v7414 = vunpack.c.l.b16 %v7350
        %v7415 = vunpack.c.l.b16 %v7351
        %v7416 = vunpack.c.l.b16 %v7352
        %v7417 = vunpack.c.l.b16 %v7353
        %v7418 = vunpack.c.l.b16 %v7354
        %v7419 = vunpack.c.l.b16 %v7355
        %v7420 = vunpack.c.l.b16 %v7356
        %v7421 = vunpack.c.l.b16 %v7357
        %v7422 = vunpack.c.l.b16 %v7358
        %v7423 = vunpack.c.l.b16 %v7359
        %v7424 = vunpack.c.l.b16 %v7360
        %v7425 = vunpack.c.l.b16 %v7361
        %v7426 = vunpack.c.l.b16 %v7362
        %v7427 = vunpack.c.l.b16 %v7363
        %v7428 = vunpack.c.l.b16 %v7364
        %v7429 = vunpack.c.l.b16 %v7365
        %v7430 = vunpack.c.l.b16 %v7366
        %v7431 = vunpack.c.l.b16 %v7367
        %v7432 = vunpack.c.l.b16 %v7368
        %v7433 = vunpack.c.l.b16 %v7369
        %v7434 = vunpack.c.l.b16 %v7370
        %v7435 = vunpack.c.l.b16 %v7371
        %v7436 = vunpack.c.l.b16 %v7372
        %v7437 = vunpack.c.l.b16 %v7373
        %v7438 = vunpack.c.l.b16 %v7374
        %v7439 = vunpack.c.l.b16 %v7375
        %v7440 = vunpack.c.l.b16 %v7376
        %v7441 = vunpack.c.l.b16 %v7377
        %v7442 = vunpack.c.l.b16 %v7378
        %v7443 = vunpack.c.l.b16 %v7379
        %v7444 = vunpack.c.l.b16 %v7380
        %v7445 = vunpack.c.l.b16 %v7381
        %v7446 = vunpack.c.l.b16 %v7382
        %v7447 = vunpack.c.l.b16 %v7383
        %v7448 = vunpack.c.l.b16 %v7384
        %v7449 = vunpack.c.l.b16 %v7385
        %v7450 = vunpack.c.l.b16 %v7386
        %v7451 = vunpack.c.l.b16 %v7387
        %v7452 = vunpack.c.l.b16 %v7388
        %v7453 = vunpack.c.l.b16 %v7389
        %v7454 = vunpack.c.l.b16 %v7390
        %v7455 = vunpack.c.l.b16 %v7391
        %v7456 = vunpack.c.l.b16 %v7392
        %v7457 = vunpack.c.l.b16 %v7393
        %v7458 = vunpack.c.l.b16 %v7394
        %v7459 = vunpack.c.l.b16 %v7395
        %v7460 = vunpack.c.l.b16 %v7396
        %v7461 = vunpack.c.l.b16 %v7397
        %v7462 = vunpack.c.l.b16 %v7398
        %v7463 = vunpack.c.l.b16 %v7399
        %v7464 = vunpack.c.l.b16 %v7400
        %v7465 = vunpack.c.l.b16 %v7401
        %v7466 = vunpack.c.l.b16 %v7402
        %v7467 = vunpack.c.l.b16 %v7403
        %v7468 = vunpack.c.l.b16 %v7404
        %v7469 = vunpack.c.l.b16 %v7405
        %v7470 = vunpack.c.l.b16 %v7406
        %v7471 = vunpack.c.l.b16 %v7407
        %v7472 = vunpack.c.l.b16 %v7408
        %v7473 = vunpack.c.l.b16 %v7409
        %v7474 = vunpack.c.l.b16 %v7410
        %v7475 = vunpack.c.l.b16 %v7411
        %v7476 = vrot.slane %v7413, 7
        %v7477 = vsel %vm6352, %v7476, %v7412
        %v7478 = vrot.slane %v7414, 6
        %v7479 = vsel %vm6354, %v7478, %v7477
        %v7480 = vrot.slane %v7415, 5
        %v7481 = vsel %vm6356, %v7480, %v7479
        %v7482 = vrot.slane %v7416, 4
        %v7483 = vsel %vm6358, %v7482, %v7481
        %v7484 = vrot.slane %v7417, 3
        %v7485 = vsel %vm6360, %v7484, %v7483
        %v7486 = vrot.slane %v7418, 2
        %v7487 = vsel %vm6362, %v7486, %v7485
        %v7488 = vrot.slane %v7419, 1
        %v7489 = vsel %vm6364, %v7488, %v7487
        %v7490 = vrot.slane %v7421, 7
        %v7491 = vsel %vm6352, %v7490, %v7420
        %v7492 = vrot.slane %v7422, 6
        %v7493 = vsel %vm6354, %v7492, %v7491
        %v7494 = vrot.slane %v7423, 5
        %v7495 = vsel %vm6356, %v7494, %v7493
        %v7496 = vrot.slane %v7424, 4
        %v7497 = vsel %vm6358, %v7496, %v7495
        %v7498 = vrot.slane %v7425, 3
        %v7499 = vsel %vm6360, %v7498, %v7497
        %v7500 = vrot.slane %v7426, 2
        %v7501 = vsel %vm6362, %v7500, %v7499
        %v7502 = vrot.slane %v7427, 1
        %v7503 = vsel %vm6364, %v7502, %v7501
        %v7504 = vrot.slane %v7429, 7
        %v7505 = vsel %vm6352, %v7504, %v7428
        %v7506 = vrot.slane %v7430, 6
        %v7507 = vsel %vm6354, %v7506, %v7505
        %v7508 = vrot.slane %v7431, 5
        %v7509 = vsel %vm6356, %v7508, %v7507
        %v7510 = vrot.slane %v7432, 4
        %v7511 = vsel %vm6358, %v7510, %v7509
        %v7512 = vrot.slane %v7433, 3
        %v7513 = vsel %vm6360, %v7512, %v7511
        %v7514 = vrot.slane %v7434, 2
        %v7515 = vsel %vm6362, %v7514, %v7513
        %v7516 = vrot.slane %v7435, 1
        %v7517 = vsel %vm6364, %v7516, %v7515
        %v7518 = vrot.slane %v7437, 7
        %v7519 = vsel %vm6352, %v7518, %v7436
        %v7520 = vrot.slane %v7438, 6
        %v7521 = vsel %vm6354, %v7520, %v7519
        %v7522 = vrot.slane %v7439, 5
        %v7523 = vsel %vm6356, %v7522, %v7521
        %v7524 = vrot.slane %v7440, 4
        %v7525 = vsel %vm6358, %v7524, %v7523
        %v7526 = vrot.slane %v7441, 3
        %v7527 = vsel %vm6360, %v7526, %v7525
        %v7528 = vrot.slane %v7442, 2
        %v7529 = vsel %vm6362, %v7528, %v7527
        %v7530 = vrot.slane %v7443, 1
        %v7531 = vsel %vm6364, %v7530, %v7529
        %v7532 = vrot.slane %v7445, 7
        %v7533 = vsel %vm6352, %v7532, %v7444
        %v7534 = vrot.slane %v7446, 6
        %v7535 = vsel %vm6354, %v7534, %v7533
        %v7536 = vrot.slane %v7447, 5
        %v7537 = vsel %vm6356, %v7536, %v7535
        %v7538 = vrot.slane %v7448, 4
        %v7539 = vsel %vm6358, %v7538, %v7537
        %v7540 = vrot.slane %v7449, 3
        %v7541 = vsel %vm6360, %v7540, %v7539
        %v7542 = vrot.slane %v7450, 2
        %v7543 = vsel %vm6362, %v7542, %v7541
        %v7544 = vrot.slane %v7451, 1
        %v7545 = vsel %vm6364, %v7544, %v7543
        %v7546 = vrot.slane %v7453, 7
        %v7547 = vsel %vm6352, %v7546, %v7452
        %v7548 = vrot.slane %v7454, 6
        %v7549 = vsel %vm6354, %v7548, %v7547
        %v7550 = vrot.slane %v7455, 5
        %v7551 = vsel %vm6356, %v7550, %v7549
        %v7552 = vrot.slane %v7456, 4
        %v7553 = vsel %vm6358, %v7552, %v7551
        %v7554 = vrot.slane %v7457, 3
        %v7555 = vsel %vm6360, %v7554, %v7553
        %v7556 = vrot.slane %v7458, 2
        %v7557 = vsel %vm6362, %v7556, %v7555
        %v7558 = vrot.slane %v7459, 1
        %v7559 = vsel %vm6364, %v7558, %v7557
        %v7560 = vrot.slane %v7461, 7
        %v7561 = vsel %vm6352, %v7560, %v7460
        %v7562 = vrot.slane %v7462, 6
        %v7563 = vsel %vm6354, %v7562, %v7561
        %v7564 = vrot.slane %v7463, 5
        %v7565 = vsel %vm6356, %v7564, %v7563
        %v7566 = vrot.slane %v7464, 4
        %v7567 = vsel %vm6358, %v7566, %v7565
        %v7568 = vrot.slane %v7465, 3
        %v7569 = vsel %vm6360, %v7568, %v7567
        %v7570 = vrot.slane %v7466, 2
        %v7571 = vsel %vm6362, %v7570, %v7569
        %v7572 = vrot.slane %v7467, 1
        %v7573 = vsel %vm6364, %v7572, %v7571
        %v7574 = vrot.slane %v7469, 7
        %v7575 = vsel %vm6352, %v7574, %v7468
        %v7576 = vrot.slane %v7470, 6
        %v7577 = vsel %vm6354, %v7576, %v7575
        %v7578 = vrot.slane %v7471, 5
        %v7579 = vsel %vm6356, %v7578, %v7577
        %v7580 = vrot.slane %v7472, 4
        %v7581 = vsel %vm6358, %v7580, %v7579
        %v7582 = vrot.slane %v7473, 3
        %v7583 = vsel %vm6360, %v7582, %v7581
        %v7584 = vrot.slane %v7474, 2
        %v7585 = vsel %vm6362, %v7584, %v7583
        %v7586 = vrot.slane %v7475, 1
        %v7587 = vsel %vm6364, %v7586, %v7585
        %v7588 = vpack.c.b16 %v7503, %v7489
        %v7589 = vpack.c.b16 %v7531, %v7517
        %v7590 = vpack.c.b16 %v7559, %v7545
        %v7591 = vpack.c.b16 %v7587, %v7573
        %vm7596 = vcmp.lt.s32.totalorder %v954, 0
        %v7597 = vsub.s32 0, %v954
        %v7598 = vsel %vm7596, %v7597, %v954
        %v7599 = vshrl.u32 %v7598, 3
        %v7600 = vand.u32 %v7598, 7
        %v7601 = vsub.s32 0, %v7600
        %v7602 = vsel %vm7596, %v7601, %v7600
        %vm7603 = vcmp.lt.s32.totalorder %v955, 0
        %v7604 = vsub.s32 0, %v955
        %v7605 = vsel %vm7603, %v7604, %v955
        %v7606 = vshrl.u32 %v7605, 3
        %v7607 = vand.u32 %v7605, 7
        %v7608 = vsub.s32 0, %v7607
        %v7609 = vsel %vm7603, %v7608, %v7607
        %vm7610 = vcmp.lt.s32.totalorder %v956, 0
        %v7611 = vsub.s32 0, %v956
        %v7612 = vsel %vm7610, %v7611, %v956
        %v7613 = vshrl.u32 %v7612, 3
        %v7614 = vand.u32 %v7612, 7
        %v7615 = vsub.s32 0, %v7614
        %v7616 = vsel %vm7610, %v7615, %v7614
        %vm7617 = vcmp.lt.s32.totalorder %v957, 0
        %v7618 = vsub.s32 0, %v957
        %v7619 = vsel %vm7617, %v7618, %v957
        %v7620 = vshrl.u32 %v7619, 3
        %v7621 = vand.u32 %v7619, 7
        %v7622 = vsub.s32 0, %v7621
        %v7623 = vsel %vm7617, %v7622, %v7621
        %vm7624 = vcmp.lt.s32.totalorder %v958, 0
        %v7625 = vsub.s32 0, %v958
        %v7626 = vsel %vm7624, %v7625, %v958
        %v7627 = vshrl.u32 %v7626, 3
        %v7628 = vand.u32 %v7626, 7
        %v7629 = vsub.s32 0, %v7628
        %v7630 = vsel %vm7624, %v7629, %v7628
        %vm7631 = vcmp.lt.s32.totalorder %v959, 0
        %v7632 = vsub.s32 0, %v959
        %v7633 = vsel %vm7631, %v7632, %v959
        %v7634 = vshrl.u32 %v7633, 3
        %v7635 = vand.u32 %v7633, 7
        %v7636 = vsub.s32 0, %v7635
        %v7637 = vsel %vm7631, %v7636, %v7635
        %vm7638 = vcmp.lt.s32.totalorder %v960, 0
        %v7639 = vsub.s32 0, %v960
        %v7640 = vsel %vm7638, %v7639, %v960
        %v7641 = vshrl.u32 %v7640, 3
        %v7642 = vand.u32 %v7640, 7
        %v7643 = vsub.s32 0, %v7642
        %v7644 = vsel %vm7638, %v7643, %v7642
        %vm7645 = vcmp.lt.s32.totalorder %v961, 0
        %v7646 = vsub.s32 0, %v961
        %v7647 = vsel %vm7645, %v7646, %v961
        %v7648 = vshrl.u32 %v7647, 3
        %v7649 = vand.u32 %v7647, 7
        %v7650 = vsub.s32 0, %v7649
        %v7651 = vsel %vm7645, %v7650, %v7649
        %vm7652 = vcmp.ne.s32.totalorder %v7602, 0
        %vm7653 = vcmp.ne.s32.totalorder %v7609, 0
        %vm7654 = vcmp.ne.s32.totalorder %v7616, 0
        %vm7655 = vcmp.ne.s32.totalorder %v7623, 0
        %vm7656 = vcmp.ne.s32.totalorder %v7630, 0
        %vm7657 = vcmp.ne.s32.totalorder %v7637, 0
        %vm7658 = vcmp.ne.s32.totalorder %v7644, 0
        %vm7659 = vcmp.ne.s32.totalorder %v7651, 0
        %vm7660 = vcmp.lt.s32.totalorder %v7602, 0
        %vm7661 = vcmp.lt.s32.totalorder %v7609, 0
        %vm7662 = vcmp.lt.s32.totalorder %v7616, 0
        %vm7663 = vcmp.lt.s32.totalorder %v7623, 0
        %vm7664 = vcmp.lt.s32.totalorder %v7630, 0
        %vm7665 = vcmp.lt.s32.totalorder %v7637, 0
        %vm7666 = vcmp.lt.s32.totalorder %v7644, 0
        %vm7667 = vcmp.lt.s32.totalorder %v7651, 0
        %vm7668 = vmand %vm7660, %vm7652
        %vm7669 = vmand %vm7661, %vm7653
        %vm7670 = vmand %vm7662, %vm7654
        %vm7671 = vmand %vm7663, %vm7655
        %vm7672 = vmand %vm7664, %vm7656
        %vm7673 = vmand %vm7665, %vm7657
        %vm7674 = vmand %vm7666, %vm7658
        %vm7675 = vmand %vm7667, %vm7659
        %v7676 = vadd.s32 %v7602, 8
        %v7677 = vadd.s32 %v7609, 8
        %v7678 = vadd.s32 %v7616, 8
        %v7679 = vadd.s32 %v7623, 8
        %v7680 = vadd.s32 %v7630, 8
        %v7681 = vadd.s32 %v7637, 8
        %v7682 = vadd.s32 %v7644, 8
        %v7683 = vadd.s32 %v7651, 8
        %v7684 = vsel %vm7668, %v7676, %v7602
        %v7685 = vsel %vm7669, %v7677, %v7609
        %v7686 = vsel %vm7670, %v7678, %v7616
        %v7687 = vsel %vm7671, %v7679, %v7623
        %v7688 = vsel %vm7672, %v7680, %v7630
        %v7689 = vsel %vm7673, %v7681, %v7637
        %v7690 = vsel %vm7674, %v7682, %v7644
        %v7691 = vsel %vm7675, %v7683, %v7651
        %vm7692 = vcmp.ge.s32.totalorder %v7684, 1
        %vm7693 = vcmp.ge.s32.totalorder %v7685, 1
        %vm7694 = vcmp.ge.s32.totalorder %v7686, 1
        %vm7695 = vcmp.ge.s32.totalorder %v7687, 1
        %vm7696 = vcmp.ge.s32.totalorder %v7688, 1
        %vm7697 = vcmp.ge.s32.totalorder %v7689, 1
        %vm7698 = vcmp.ge.s32.totalorder %v7690, 1
        %vm7699 = vcmp.ge.s32.totalorder %v7691, 1
        %vm7700 = vcmp.le.s32.totalorder %v7684, 6
        %vm7701 = vcmp.le.s32.totalorder %v7685, 6
        %vm7702 = vcmp.le.s32.totalorder %v7686, 6
        %vm7703 = vcmp.le.s32.totalorder %v7687, 6
        %vm7704 = vcmp.le.s32.totalorder %v7688, 6
        %vm7705 = vcmp.le.s32.totalorder %v7689, 6
        %vm7706 = vcmp.le.s32.totalorder %v7690, 6
        %vm7707 = vcmp.le.s32.totalorder %v7691, 6
        %v7708 = vsel %vm7692, 1, 0
        %v7709 = vsel %vm7693, 1, 0
        %v7710 = vsel %vm7694, 1, 0
        %v7711 = vsel %vm7695, 1, 0
        %v7712 = vsel %vm7696, 1, 0
        %v7713 = vsel %vm7697, 1, 0
        %v7714 = vsel %vm7698, 1, 0
        %v7715 = vsel %vm7699, 1, 0
        %vm7716 = vcmp.eq.s32.totalorder %v7708, 1
        %vm7717 = vcmp.eq.s32.totalorder %v7709, 1
        %vm7718 = vcmp.eq.s32.totalorder %v7710, 1
        %vm7719 = vcmp.eq.s32.totalorder %v7711, 1
        %vm7720 = vcmp.eq.s32.totalorder %v7712, 1
        %vm7721 = vcmp.eq.s32.totalorder %v7713, 1
        %vm7722 = vcmp.eq.s32.totalorder %v7714, 1
        %vm7723 = vcmp.eq.s32.totalorder %v7715, 1
        %vm7724 = vmpackc.low %vm7716, %vm7716
        %vm7725 = vmpackc.low %vm7717, %vm7717
        %vm7726 = vmpackc.low %vm7718, %vm7718
        %vm7727 = vmpackc.low %vm7719, %vm7719
        %vm7728 = vmpackc.low %vm7720, %vm7720
        %vm7729 = vmpackc.low %vm7721, %vm7721
        %vm7730 = vmpackc.low %vm7722, %vm7722
        %vm7731 = vmpackc.low %vm7723, %vm7723
        %v7732 = vsel %vm7724, 65537, 0
        %v7733 = vsel %vm7725, 65537, 0
        %v7734 = vsel %vm7726, 65537, 0
        %v7735 = vsel %vm7727, 65537, 0
        %v7736 = vsel %vm7728, 65537, 0
        %v7737 = vsel %vm7729, 65537, 0
        %v7738 = vsel %vm7730, 65537, 0
        %v7739 = vsel %vm7731, 65537, 0
        %v7740 = vunpack.c.l.b16 %v7732
        %v7741 = vunpack.c.l.b16 %v7733
        %v7742 = vunpack.c.l.b16 %v7734
        %v7743 = vunpack.c.l.b16 %v7735
        %v7744 = vunpack.c.l.b16 %v7736
        %v7745 = vunpack.c.l.b16 %v7737
        %v7746 = vunpack.c.l.b16 %v7738
        %v7747 = vunpack.c.l.b16 %v7739
        %v7748 = vpack.c.b16 %v7741, %v7740
        %v7749 = vpack.c.b16 %v7743, %v7742
        %v7750 = vpack.c.b16 %v7745, %v7744
        %v7751 = vpack.c.b16 %v7747, %v7746
        %v7753 = vshrl.u32 %v7748, 16
        %v7755 = vrot.slane %v7753, 4
        %v7756 = vshll.u32 %v7748, 16
        %v7758 = vrot.slane %v7756, 5
        %v7759 = vor.u32 %v7755, %v7758
        %v7761 = vshrl.u32 %v7749, 16
        %v7763 = vrot.slane %v7761, 4
        %v7764 = vshll.u32 %v7749, 16
        %v7766 = vrot.slane %v7764, 5
        %v7767 = vor.u32 %v7763, %v7766
        %v7768 = vsel %vm1610, %v7759, %v7767
        %v7770 = vshrl.u32 %v7750, 16
        %v7772 = vrot.slane %v7770, 4
        %v7773 = vshll.u32 %v7750, 16
        %v7775 = vrot.slane %v7773, 5
        %v7776 = vor.u32 %v7772, %v7775
        %v7777 = vsel %vm1610, %v7767, %v7776
        %v7779 = vshrl.u32 %v7751, 16
        %v7781 = vrot.slane %v7779, 4
        %v7782 = vshll.u32 %v7751, 16
        %v7784 = vrot.slane %v7782, 5
        %v7785 = vor.u32 %v7781, %v7784
        %v7786 = vsel %vm1610, %v7776, %v7785
        %v7787 = vunpack.c.l.b16 %v7768
        %v7788 = vunpack.c.h.b16 %v7768
        %v7789 = vunpack.c.l.b16 0
        %v7790 = vunpack.c.h.b16 0
        %vm7791 = vcmp.ne.s32.totalorder %v7787, %v7789
        %vm7792 = vcmp.ne.s32.totalorder %v7788, %v7790
        %vm7793 = vmpackc.low %vm7792, %vm7791
        %v7794 = vunpack.c.l.b16 %v7777
        %v7795 = vunpack.c.h.b16 %v7777
        %v7796 = vunpack.c.l.b16 0
        %v7797 = vunpack.c.h.b16 0
        %vm7798 = vcmp.ne.s32.totalorder %v7794, %v7796
        %vm7799 = vcmp.ne.s32.totalorder %v7795, %v7797
        %vm7800 = vmpackc.low %vm7799, %vm7798
        %v7801 = vunpack.c.l.b16 %v7786
        %v7802 = vunpack.c.h.b16 %v7786
        %v7803 = vunpack.c.l.b16 0
        %v7804 = vunpack.c.h.b16 0
        %vm7805 = vcmp.ne.s32.totalorder %v7801, %v7803
        %vm7806 = vcmp.ne.s32.totalorder %v7802, %v7804
        %vm7807 = vmpackc.low %vm7806, %vm7805
        %v7808 = vunpack.c.l.b16 %v7785
        %v7809 = vunpack.c.h.b16 %v7785
        %v7810 = vunpack.c.l.b16 0
        %v7811 = vunpack.c.h.b16 0
        %vm7812 = vcmp.ne.s32.totalorder %v7808, %v7810
        %vm7813 = vcmp.ne.s32.totalorder %v7809, %v7811
        %vm7814 = vmpackc.low %vm7813, %vm7812
        %v7815 = vsel %vm7793, %v7588, 0
        %v7816 = vsel %vm7800, %v7589, 0
        %v7817 = vsel %vm7807, %v7590, 0
        %v7818 = vsel %vm7814, %v7591, 0
        %v7820 = vshll.u32 %v7588, 16
        %v7822 = vrot.slane %v7820, 1
        %v7823 = vsel %vm1882, %v1888, %v7822
        %v7824 = vshrl.u32 %v7588, 16
        %v7826 = vor.u32 %v7824, %v7822
        %v7828 = vshll.u32 %v7589, 16
        %v7830 = vrot.slane %v7828, 1
        %v7831 = vsel %vm1882, %v7826, %v7830
        %v7832 = vshrl.u32 %v7589, 16
        %v7834 = vor.u32 %v7832, %v7830
        %v7836 = vshll.u32 %v7590, 16
        %v7838 = vrot.slane %v7836, 1
        %v7839 = vsel %vm1882, %v7834, %v7838
        %v7840 = vshrl.u32 %v7590, 16
        %v7842 = vor.u32 %v7840, %v7838
        %v7844 = vshll.u32 %v7591, 16
        %v7846 = vrot.slane %v7844, 1
        %v7847 = vsel %vm1882, %v7842, %v7846
        %v7848 = vshrl.u32 %v7591, 16
        %v7850 = vor.u32 %v7848, %v7846
        %v7851 = vld [vmem:[#allocation7] sm:$0xf]
        %v7852 = vld [vmem:[#allocation7 + $0x4] sm:$0xf]
        %v7853 = vld [vmem:[#allocation7 + $0x8] sm:$0xf]
        %v7854 = vld [vmem:[#allocation7 + $0xc] sm:$0xf]
        %v7855 = vld [vmem:[#allocation7 + $0x10] sm:$0xf]
        %v7856 = vld [vmem:[#allocation7 + $0x14] sm:$0xf]
        %v7857 = vld [vmem:[#allocation7 + $0x18] sm:$0xf]
        %v7858 = vld [vmem:[#allocation7 + $0x1c] sm:$0xf]
        %v7859 = vld [vmem:[#allocation7 + $0x20] sm:$0xf]
        %v7860 = vld [vmem:[#allocation7 + $0x24] sm:$0xf]
        %v7861 = vld [vmem:[#allocation7 + $0x28] sm:$0xf]
        %v7862 = vld [vmem:[#allocation7 + $0x2c] sm:$0xf]
        %v7863 = vld [vmem:[#allocation7 + $0x30] sm:$0xf]
        %v7864 = vld [vmem:[#allocation7 + $0x34] sm:$0xf]
        %v7865 = vld [vmem:[#allocation7 + $0x38] sm:$0xf]
        %v7866 = vld [vmem:[#allocation7 + $0x3c] sm:$0xf]
        %v7867 = vld [vmem:[#allocation7 + $0x40] sm:$0xf]
        %v7868 = vld [vmem:[#allocation7 + $0x44] sm:$0xf]
        %v7869 = vld [vmem:[#allocation7 + $0x48] sm:$0xf]
        %v7870 = vld [vmem:[#allocation7 + $0x4c] sm:$0xf]
        %v7871 = vld [vmem:[#allocation7 + $0x50] sm:$0xf]
        %v7872 = vld [vmem:[#allocation7 + $0x54] sm:$0xf]
        %v7873 = vld [vmem:[#allocation7 + $0x58] sm:$0xf]
        %v7874 = vld [vmem:[#allocation7 + $0x5c] sm:$0xf]
        %v7875 = vld [vmem:[#allocation7 + $0x60] sm:$0xf]
        %v7876 = vld [vmem:[#allocation7 + $0x64] sm:$0xf]
        %v7877 = vld [vmem:[#allocation7 + $0x68] sm:$0xf]
        %v7878 = vld [vmem:[#allocation7 + $0x6c] sm:$0xf]
        %v7879 = vld [vmem:[#allocation7 + $0x70] sm:$0xf]
        %v7880 = vld [vmem:[#allocation7 + $0x74] sm:$0xf]
        %v7881 = vld [vmem:[#allocation7 + $0x78] sm:$0xf]
        %v7882 = vld [vmem:[#allocation7 + $0x7c] sm:$0xf]
        %v7883 = vsel %vm7700, 1, 0
        %v7884 = vsel %vm7701, 1, 0
        %v7885 = vsel %vm7702, 1, 0
        %v7886 = vsel %vm7703, 1, 0
        %v7887 = vsel %vm7704, 1, 0
        %v7888 = vsel %vm7705, 1, 0
        %v7889 = vsel %vm7706, 1, 0
        %v7890 = vsel %vm7707, 1, 0
        %vm7891 = vcmp.eq.s32.totalorder %v7883, 1
        %vm7892 = vcmp.eq.s32.totalorder %v7884, 1
        %vm7893 = vcmp.eq.s32.totalorder %v7885, 1
        %vm7894 = vcmp.eq.s32.totalorder %v7886, 1
        %vm7895 = vcmp.eq.s32.totalorder %v7887, 1
        %vm7896 = vcmp.eq.s32.totalorder %v7888, 1
        %vm7897 = vcmp.eq.s32.totalorder %v7889, 1
        %vm7898 = vcmp.eq.s32.totalorder %v7890, 1
        %vm7899 = vmpackc.low %vm7891, %vm7891
        %vm7900 = vmpackc.low %vm7892, %vm7892
        %vm7901 = vmpackc.low %vm7893, %vm7893
        %vm7902 = vmpackc.low %vm7894, %vm7894
        %vm7903 = vmpackc.low %vm7895, %vm7895
        %vm7904 = vmpackc.low %vm7896, %vm7896
        %vm7905 = vmpackc.low %vm7897, %vm7897
        %vm7906 = vmpackc.low %vm7898, %vm7898
        %v7907 = vsel %vm7899, 65537, 0
        %v7908 = vsel %vm7900, 65537, 0
        %v7909 = vsel %vm7901, 65537, 0
        %v7910 = vsel %vm7902, 65537, 0
        %v7911 = vsel %vm7903, 65537, 0
        %v7912 = vsel %vm7904, 65537, 0
        %v7913 = vsel %vm7905, 65537, 0
        %v7914 = vsel %vm7906, 65537, 0
        %v7915 = vunpack.c.l.b16 %v7907
        %v7916 = vunpack.c.l.b16 %v7908
        %v7917 = vunpack.c.l.b16 %v7909
        %v7918 = vunpack.c.l.b16 %v7910
        %v7919 = vunpack.c.l.b16 %v7911
        %v7920 = vunpack.c.l.b16 %v7912
        %v7921 = vunpack.c.l.b16 %v7913
        %v7922 = vunpack.c.l.b16 %v7914
        %v7923 = vpack.c.b16 %v7916, %v7915
        %v7924 = vpack.c.b16 %v7918, %v7917
        %v7925 = vpack.c.b16 %v7920, %v7919
        %v7926 = vpack.c.b16 %v7922, %v7921
        %v7928 = vshrl.u32 %v7923, 16
        %v7930 = vrot.slane %v7928, 3
        %v7931 = vshll.u32 %v7923, 16
        %v7933 = vrot.slane %v7931, 4
        %v7934 = vor.u32 %v7930, %v7933
        %v7936 = vshrl.u32 %v7924, 16
        %v7938 = vrot.slane %v7936, 3
        %v7939 = vshll.u32 %v7924, 16
        %v7941 = vrot.slane %v7939, 4
        %v7942 = vor.u32 %v7938, %v7941
        %v7943 = vsel %vm2224, %v7934, %v7942
        %v7945 = vshrl.u32 %v7925, 16
        %v7947 = vrot.slane %v7945, 3
        %v7948 = vshll.u32 %v7925, 16
        %v7950 = vrot.slane %v7948, 4
        %v7951 = vor.u32 %v7947, %v7950
        %v7952 = vsel %vm2224, %v7942, %v7951
        %v7954 = vshrl.u32 %v7926, 16
        %v7956 = vrot.slane %v7954, 3
        %v7957 = vshll.u32 %v7926, 16
        %v7959 = vrot.slane %v7957, 4
        %v7960 = vor.u32 %v7956, %v7959
        %v7961 = vsel %vm2224, %v7951, %v7960
        %v7962 = vunpack.c.l.b16 %v7943
        %v7963 = vunpack.c.h.b16 %v7943
        %v7964 = vunpack.c.l.b16 0
        %v7965 = vunpack.c.h.b16 0
        %vm7966 = vcmp.ne.s32.totalorder %v7962, %v7964
        %vm7967 = vcmp.ne.s32.totalorder %v7963, %v7965
        %vm7968 = vmpackc.low %vm7967, %vm7966
        %v7969 = vunpack.c.l.b16 %v7952
        %v7970 = vunpack.c.h.b16 %v7952
        %v7971 = vunpack.c.l.b16 0
        %v7972 = vunpack.c.h.b16 0
        %vm7973 = vcmp.ne.s32.totalorder %v7969, %v7971
        %vm7974 = vcmp.ne.s32.totalorder %v7970, %v7972
        %vm7975 = vmpackc.low %vm7974, %vm7973
        %v7976 = vunpack.c.l.b16 %v7961
        %v7977 = vunpack.c.h.b16 %v7961
        %v7978 = vunpack.c.l.b16 0
        %v7979 = vunpack.c.h.b16 0
        %vm7980 = vcmp.ne.s32.totalorder %v7976, %v7978
        %vm7981 = vcmp.ne.s32.totalorder %v7977, %v7979
        %vm7982 = vmpackc.low %vm7981, %vm7980
        %v7983 = vunpack.c.l.b16 %v7960
        %v7984 = vunpack.c.h.b16 %v7960
        %v7985 = vunpack.c.l.b16 0
        %v7986 = vunpack.c.h.b16 0
        %vm7987 = vcmp.ne.s32.totalorder %v7983, %v7985
        %vm7988 = vcmp.ne.s32.totalorder %v7984, %v7986
        %vm7989 = vmpackc.low %vm7988, %vm7987
        %v7990 = vsel %vm7968, %v7588, 0
        %v7991 = vsel %vm7975, %v7589, 0
        %v7992 = vsel %vm7982, %v7590, 0
        %v7993 = vsel %vm7989, %v7591, 0
        %v7994 = vrot.slane %v7756, 1
        %v7995 = vor.u32 %v7753, %v7994
        %v7996 = vrot.slane %v7764, 1
        %v7997 = vsel %vm1882, %v7995, %v7996
        %v7998 = vor.u32 %v7761, %v7996
        %v7999 = vrot.slane %v7773, 1
        %v8000 = vsel %vm1882, %v7998, %v7999
        %v8001 = vor.u32 %v7770, %v7999
        %v8002 = vrot.slane %v7782, 1
        %v8003 = vsel %vm1882, %v8001, %v8002
        %v8004 = vor.u32 %v7779, %v8002
        %v8005 = vunpack.c.l.b16 %v7997
        %v8006 = vunpack.c.h.b16 %v7997
        %v8007 = vunpack.c.l.b16 0
        %v8008 = vunpack.c.h.b16 0
        %vm8009 = vcmp.ne.s32.totalorder %v8005, %v8007
        %vm8010 = vcmp.ne.s32.totalorder %v8006, %v8008
        %vm8011 = vmpackc.low %vm8010, %vm8009
        %v8012 = vunpack.c.l.b16 %v8000
        %v8013 = vunpack.c.h.b16 %v8000
        %v8014 = vunpack.c.l.b16 0
        %v8015 = vunpack.c.h.b16 0
        %vm8016 = vcmp.ne.s32.totalorder %v8012, %v8014
        %vm8017 = vcmp.ne.s32.totalorder %v8013, %v8015
        %vm8018 = vmpackc.low %vm8017, %vm8016
        %v8019 = vunpack.c.l.b16 %v8003
        %v8020 = vunpack.c.h.b16 %v8003
        %v8021 = vunpack.c.l.b16 0
        %v8022 = vunpack.c.h.b16 0
        %vm8023 = vcmp.ne.s32.totalorder %v8019, %v8021
        %vm8024 = vcmp.ne.s32.totalorder %v8020, %v8022
        %vm8025 = vmpackc.low %vm8024, %vm8023
        %v8026 = vunpack.c.l.b16 %v8004
        %v8027 = vunpack.c.h.b16 %v8004
        %v8028 = vunpack.c.l.b16 0
        %v8029 = vunpack.c.h.b16 0
        %vm8030 = vcmp.ne.s32.totalorder %v8026, %v8028
        %vm8031 = vcmp.ne.s32.totalorder %v8027, %v8029
        %vm8032 = vmpackc.low %vm8031, %vm8030
        %v8033 = vsel %vm8011, %v7588, 0
        %v8034 = vsel %vm8018, %v7589, 0
        %v8035 = vsel %vm8025, %v7590, 0
        %v8036 = vsel %vm8032, %v7591, 0
        %vm8042 = vcmask 1044480
        %v8043 = vrot.slane 0, 3
        %v8044 = vrot.slane %v8033, 3
        %v8045 = vsel %vm8042, %v8043, %v8044
        %v8046 = vrot.slane %v8034, 3
        %v8047 = vsel %vm8042, %v8044, %v8046
        %v8048 = vrot.slane %v8035, 3
        %v8049 = vsel %vm8042, %v8046, %v8048
        %v8050 = vrot.slane %v8036, 3
        %v8051 = vsel %vm8042, %v8048, %v8050
        %v8052 = vld [vmem:[#allocation7 + $0x80] sm:$0xf]
        %v8053 = vld [vmem:[#allocation7 + $0x84] sm:$0xf]
        %v8054 = vld [vmem:[#allocation7 + $0x88] sm:$0xf]
        %v8055 = vld [vmem:[#allocation7 + $0x8c] sm:$0xf]
        %v8056 = vld [vmem:[#allocation7 + $0x90] sm:$0xf]
        %v8057 = vld [vmem:[#allocation7 + $0x94] sm:$0xf]
        %v8058 = vld [vmem:[#allocation7 + $0x98] sm:$0xf]
        %v8059 = vld [vmem:[#allocation7 + $0x9c] sm:$0xf]
        %v8060 = vld [vmem:[#allocation7 + $0xa0] sm:$0xf]
        %v8061 = vld [vmem:[#allocation7 + $0xa4] sm:$0xf]
        %v8062 = vld [vmem:[#allocation7 + $0xa8] sm:$0xf]
        %v8063 = vld [vmem:[#allocation7 + $0xac] sm:$0xf]
        %v8064 = vld [vmem:[#allocation7 + $0xb0] sm:$0xf]
        %v8065 = vld [vmem:[#allocation7 + $0xb4] sm:$0xf]
        %v8066 = vld [vmem:[#allocation7 + $0xb8] sm:$0xf]
        %v8067 = vld [vmem:[#allocation7 + $0xbc] sm:$0xf]
        %v8068 = vld [vmem:[#allocation7 + $0xc0] sm:$0xf]
        %v8069 = vld [vmem:[#allocation7 + $0xc4] sm:$0xf]
        %v8070 = vld [vmem:[#allocation7 + $0xc8] sm:$0xf]
        %v8071 = vld [vmem:[#allocation7 + $0xcc] sm:$0xf]
        %v8072 = vld [vmem:[#allocation7 + $0xd0] sm:$0xf]
        %v8073 = vld [vmem:[#allocation7 + $0xd4] sm:$0xf]
        %v8074 = vld [vmem:[#allocation7 + $0xd8] sm:$0xf]
        %v8075 = vld [vmem:[#allocation7 + $0xdc] sm:$0xf]
        %v8076 = vld [vmem:[#allocation7 + $0xe0] sm:$0xf]
        %v8077 = vld [vmem:[#allocation7 + $0xe4] sm:$0xf]
        %v8078 = vld [vmem:[#allocation7 + $0xe8] sm:$0xf]
        %v8079 = vld [vmem:[#allocation7 + $0xec] sm:$0xf]
        %v8080 = vld [vmem:[#allocation7 + $0xf0] sm:$0xf]
        %v8081 = vld [vmem:[#allocation7 + $0xf4] sm:$0xf]
        %v8082 = vld [vmem:[#allocation7 + $0xf8] sm:$0xf]
        %v8083 = vld [vmem:[#allocation7 + $0xfc] sm:$0xf]
        %v8085 = vshrl.u32 %v7990, 16
        %v8087 = vrot.slane %v8085, 4
        %v8088 = vshll.u32 %v7990, 16
        %v8090 = vrot.slane %v8088, 5
        %v8091 = vor.u32 %v8087, %v8090
        %v8092 = vsel %vm1610, %v2605, %v8091
        %v8094 = vshrl.u32 %v8045, 16
        %v8096 = vrot.slane %v8094, 4
        %v8097 = vshll.u32 %v8045, 16
        %v8099 = vrot.slane %v8097, 5
        %v8100 = vor.u32 %v8096, %v8099
        %v8102 = vshrl.u32 %v8047, 16
        %v8104 = vrot.slane %v8102, 4
        %v8105 = vshll.u32 %v8047, 16
        %v8107 = vrot.slane %v8105, 5
        %v8108 = vor.u32 %v8104, %v8107
        %v8109 = vsel %vm1610, %v8100, %v8108
        %v8111 = vshrl.u32 %v7991, 16
        %v8113 = vrot.slane %v8111, 4
        %v8114 = vshll.u32 %v7991, 16
        %v8116 = vrot.slane %v8114, 5
        %v8117 = vor.u32 %v8113, %v8116
        %v8118 = vsel %vm1610, %v8091, %v8117
        %v8120 = vshrl.u32 %v8049, 16
        %v8122 = vrot.slane %v8120, 4
        %v8123 = vshll.u32 %v8049, 16
        %v8125 = vrot.slane %v8123, 5
        %v8126 = vor.u32 %v8122, %v8125
        %v8127 = vsel %vm1610, %v8108, %v8126
        %v8129 = vshrl.u32 %v7992, 16
        %v8131 = vrot.slane %v8129, 4
        %v8132 = vshll.u32 %v7992, 16
        %v8134 = vrot.slane %v8132, 5
        %v8135 = vor.u32 %v8131, %v8134
        %v8136 = vsel %vm1610, %v8117, %v8135
        %v8138 = vshrl.u32 %v8051, 16
        %v8140 = vrot.slane %v8138, 4
        %v8141 = vshll.u32 %v8051, 16
        %v8143 = vrot.slane %v8141, 5
        %v8144 = vor.u32 %v8140, %v8143
        %v8145 = vsel %vm1610, %v8126, %v8144
        %v8147 = vshrl.u32 %v7993, 16
        %v8149 = vrot.slane %v8147, 4
        %v8150 = vshll.u32 %v7993, 16
        %v8152 = vrot.slane %v8150, 5
        %v8153 = vor.u32 %v8149, %v8152
        %v8154 = vsel %vm1610, %v8135, %v8153
        %v8156 = vshrl.u32 %v8050, 16
        %v8158 = vrot.slane %v8156, 4
        %v8159 = vshll.u32 %v8050, 16
        %v8161 = vrot.slane %v8159, 5
        %v8162 = vor.u32 %v8158, %v8161
        %v8163 = vsel %vm1610, %v8144, %v8162
        %v8204 = vunpack.c.l.b16 %v8052
        %v8205 = vunpack.c.l.b16 %v8053
        %v8206 = vunpack.c.l.b16 %v8054
        %v8207 = vunpack.c.l.b16 %v8055
        %v8208 = vunpack.c.l.b16 %v8056
        %v8209 = vunpack.c.l.b16 %v8057
        %v8210 = vunpack.c.l.b16 %v8058
        %v8211 = vunpack.c.l.b16 %v8059
        %v8212 = vunpack.c.l.b16 %v8060
        %v8213 = vunpack.c.l.b16 %v8061
        %v8214 = vunpack.c.l.b16 %v8062
        %v8215 = vunpack.c.l.b16 %v8063
        %v8216 = vunpack.c.l.b16 %v8064
        %v8217 = vunpack.c.l.b16 %v8065
        %v8218 = vunpack.c.l.b16 %v8066
        %v8219 = vunpack.c.l.b16 %v8067
        %v8220 = vunpack.c.l.b16 %v8068
        %v8221 = vunpack.c.l.b16 %v8069
        %v8222 = vunpack.c.l.b16 %v8070
        %v8223 = vunpack.c.l.b16 %v8071
        %v8224 = vunpack.c.l.b16 %v8072
        %v8225 = vunpack.c.l.b16 %v8073
        %v8226 = vunpack.c.l.b16 %v8074
        %v8227 = vunpack.c.l.b16 %v8075
        %v8228 = vunpack.c.l.b16 %v8076
        %v8229 = vunpack.c.l.b16 %v8077
        %v8230 = vunpack.c.l.b16 %v8078
        %v8231 = vunpack.c.l.b16 %v8079
        %v8232 = vunpack.c.l.b16 %v8080
        %v8233 = vunpack.c.l.b16 %v8081
        %v8234 = vunpack.c.l.b16 %v8082
        %v8235 = vunpack.c.l.b16 %v8083
        %v8236 = vpack.c.b16 %v8205, %v8204
        %v8237 = vpack.c.b16 %v8207, %v8206
        %v8238 = vpack.c.b16 %v8209, %v8208
        %v8239 = vpack.c.b16 %v8211, %v8210
        %v8240 = vpack.c.b16 %v8213, %v8212
        %v8241 = vpack.c.b16 %v8215, %v8214
        %v8242 = vpack.c.b16 %v8217, %v8216
        %v8243 = vpack.c.b16 %v8219, %v8218
        %v8244 = vpack.c.b16 %v8221, %v8220
        %v8245 = vpack.c.b16 %v8223, %v8222
        %v8246 = vpack.c.b16 %v8225, %v8224
        %v8247 = vpack.c.b16 %v8227, %v8226
        %v8248 = vpack.c.b16 %v8229, %v8228
        %v8249 = vpack.c.b16 %v8231, %v8230
        %v8250 = vpack.c.b16 %v8233, %v8232
        %v8251 = vpack.c.b16 %v8235, %v8234
        %8268 = vmatpush.bf16.msra.mxu0 %v8243
        %8269 = vmatpush.bf16.msra.mxu0 %v8242
        %8270 = vmatpush.bf16.msra.mxu0 %v8241
        %8271 = vmatpush.bf16.msra.mxu0 %v8240
        %8272 = vmatpush.bf16.msra.mxu0 %v8239
        %8273 = vmatpush.bf16.msra.mxu0 %v8238
        %8274 = vmatpush.bf16.msra.mxu0 %v8237
        %8275 = vmatpush.bf16.msra.mxu0 %v8236
        %8276 = vmatmul.bf16.gmra.mxu0 %v8092
        %v8277 = vpop.f32.mrf.mxu0
        %v8278 = vadd.f32 0.0, %v8277
        %v8279 = vpop.f32.mrf.mxu0
        %v8280 = vadd.f32 0.0, %v8279
        %8281 = vmatmul.bf16.gmra.mxu0 %v8118
        %v8282 = vpop.f32.mrf.mxu0
        %v8283 = vadd.f32 0.0, %v8282
        %v8284 = vpop.f32.mrf.mxu0
        %v8285 = vadd.f32 0.0, %v8284
        %8286 = vmatmul.bf16.gmra.mxu0 %v8136
        %v8287 = vpop.f32.mrf.mxu0
        %v8288 = vadd.f32 0.0, %v8287
        %v8289 = vpop.f32.mrf.mxu0
        %v8290 = vadd.f32 0.0, %v8289
        %8291 = vmatmul.bf16.gmra.mxu0 %v8154
        %v8292 = vpop.f32.mrf.mxu0
        %v8293 = vadd.f32 0.0, %v8292
        %v8294 = vpop.f32.mrf.mxu0
        %v8295 = vadd.f32 0.0, %v8294
        %8296 = vdwg.mxu0
        %8297 = vmatpush.bf16.msra.mxu0 %v8251
        %8298 = vmatpush.bf16.msra.mxu0 %v8250
        %8299 = vmatpush.bf16.msra.mxu0 %v8249
        %8300 = vmatpush.bf16.msra.mxu0 %v8248
        %8301 = vmatpush.bf16.msra.mxu0 %v8247
        %8302 = vmatpush.bf16.msra.mxu0 %v8246
        %8303 = vmatpush.bf16.msra.mxu0 %v8245
        %8304 = vmatpush.bf16.msra.mxu0 %v8244
        %8305 = vmatmul.bf16.gmra.mxu0 %v8109
        %v8306 = vpop.f32.mrf.mxu0
        %v8307 = vadd.f32 %v8278, %v8306
        %v8308 = vpop.f32.mrf.mxu0
        %v8309 = vadd.f32 %v8280, %v8308
        %8310 = vmatmul.bf16.gmra.mxu0 %v8127
        %v8311 = vpop.f32.mrf.mxu0
        %v8312 = vadd.f32 %v8283, %v8311
        %v8313 = vpop.f32.mrf.mxu0
        %v8314 = vadd.f32 %v8285, %v8313
        %8315 = vmatmul.bf16.gmra.mxu0 %v8145
        %v8316 = vpop.f32.mrf.mxu0
        %v8317 = vadd.f32 %v8288, %v8316
        %v8318 = vpop.f32.mrf.mxu0
        %v8319 = vadd.f32 %v8290, %v8318
        %8320 = vmatmul.bf16.gmra.mxu0 %v8163
        %v8321 = vpop.f32.mrf.mxu0
        %v8322 = vadd.f32 %v8293, %v8321
        %v8323 = vpop.f32.mrf.mxu0
        %v8324 = vadd.f32 %v8295, %v8323
        %8325 = vdwg.mxu0
        %v8327 = vshrl.u32 %v7815, 16
        %v8329 = vrot.slane %v8327, 3
        %v8330 = vshll.u32 %v7815, 16
        %v8332 = vrot.slane %v8330, 4
        %v8333 = vor.u32 %v8329, %v8332
        %v8334 = vsel %vm2224, %v3210, %v8333
        %v8336 = vshrl.u32 %v7823, 16
        %v8338 = vrot.slane %v8336, 3
        %v8339 = vshll.u32 %v7823, 16
        %v8341 = vrot.slane %v8339, 4
        %v8342 = vor.u32 %v8338, %v8341
        %v8344 = vshrl.u32 %v7831, 16
        %v8346 = vrot.slane %v8344, 3
        %v8347 = vshll.u32 %v7831, 16
        %v8349 = vrot.slane %v8347, 4
        %v8350 = vor.u32 %v8346, %v8349
        %v8351 = vsel %vm2224, %v8342, %v8350
        %v8353 = vshrl.u32 %v7816, 16
        %v8355 = vrot.slane %v8353, 3
        %v8356 = vshll.u32 %v7816, 16
        %v8358 = vrot.slane %v8356, 4
        %v8359 = vor.u32 %v8355, %v8358
        %v8360 = vsel %vm2224, %v8333, %v8359
        %v8362 = vshrl.u32 %v7839, 16
        %v8364 = vrot.slane %v8362, 3
        %v8365 = vshll.u32 %v7839, 16
        %v8367 = vrot.slane %v8365, 4
        %v8368 = vor.u32 %v8364, %v8367
        %v8369 = vsel %vm2224, %v8350, %v8368
        %v8371 = vshrl.u32 %v7817, 16
        %v8373 = vrot.slane %v8371, 3
        %v8374 = vshll.u32 %v7817, 16
        %v8376 = vrot.slane %v8374, 4
        %v8377 = vor.u32 %v8373, %v8376
        %v8378 = vsel %vm2224, %v8359, %v8377
        %v8380 = vshrl.u32 %v7847, 16
        %v8382 = vrot.slane %v8380, 3
        %v8383 = vshll.u32 %v7847, 16
        %v8385 = vrot.slane %v8383, 4
        %v8386 = vor.u32 %v8382, %v8385
        %v8387 = vsel %vm2224, %v8368, %v8386
        %v8389 = vshrl.u32 %v7818, 16
        %v8391 = vrot.slane %v8389, 3
        %v8392 = vshll.u32 %v7818, 16
        %v8394 = vrot.slane %v8392, 4
        %v8395 = vor.u32 %v8391, %v8394
        %v8396 = vsel %vm2224, %v8377, %v8395
        %v8398 = vshrl.u32 %v7850, 16
        %v8400 = vrot.slane %v8398, 3
        %v8401 = vshll.u32 %v7850, 16
        %v8403 = vrot.slane %v8401, 4
        %v8404 = vor.u32 %v8400, %v8403
        %v8405 = vsel %vm2224, %v8386, %v8404
        %v8446 = vunpack.c.l.b16 %v7851
        %v8447 = vunpack.c.l.b16 %v7852
        %v8448 = vunpack.c.l.b16 %v7853
        %v8449 = vunpack.c.l.b16 %v7854
        %v8450 = vunpack.c.l.b16 %v7855
        %v8451 = vunpack.c.l.b16 %v7856
        %v8452 = vunpack.c.l.b16 %v7857
        %v8453 = vunpack.c.l.b16 %v7858
        %v8454 = vunpack.c.l.b16 %v7859
        %v8455 = vunpack.c.l.b16 %v7860
        %v8456 = vunpack.c.l.b16 %v7861
        %v8457 = vunpack.c.l.b16 %v7862
        %v8458 = vunpack.c.l.b16 %v7863
        %v8459 = vunpack.c.l.b16 %v7864
        %v8460 = vunpack.c.l.b16 %v7865
        %v8461 = vunpack.c.l.b16 %v7866
        %v8462 = vunpack.c.l.b16 %v7867
        %v8463 = vunpack.c.l.b16 %v7868
        %v8464 = vunpack.c.l.b16 %v7869
        %v8465 = vunpack.c.l.b16 %v7870
        %v8466 = vunpack.c.l.b16 %v7871
        %v8467 = vunpack.c.l.b16 %v7872
        %v8468 = vunpack.c.l.b16 %v7873
        %v8469 = vunpack.c.l.b16 %v7874
        %v8470 = vunpack.c.l.b16 %v7875
        %v8471 = vunpack.c.l.b16 %v7876
        %v8472 = vunpack.c.l.b16 %v7877
        %v8473 = vunpack.c.l.b16 %v7878
        %v8474 = vunpack.c.l.b16 %v7879
        %v8475 = vunpack.c.l.b16 %v7880
        %v8476 = vunpack.c.l.b16 %v7881
        %v8477 = vunpack.c.l.b16 %v7882
        %v8478 = vpack.c.b16 %v8447, %v8446
        %v8479 = vpack.c.b16 %v8449, %v8448
        %v8480 = vpack.c.b16 %v8451, %v8450
        %v8481 = vpack.c.b16 %v8453, %v8452
        %v8482 = vpack.c.b16 %v8455, %v8454
        %v8483 = vpack.c.b16 %v8457, %v8456
        %v8484 = vpack.c.b16 %v8459, %v8458
        %v8485 = vpack.c.b16 %v8461, %v8460
        %v8486 = vpack.c.b16 %v8463, %v8462
        %v8487 = vpack.c.b16 %v8465, %v8464
        %v8488 = vpack.c.b16 %v8467, %v8466
        %v8489 = vpack.c.b16 %v8469, %v8468
        %v8490 = vpack.c.b16 %v8471, %v8470
        %v8491 = vpack.c.b16 %v8473, %v8472
        %v8492 = vpack.c.b16 %v8475, %v8474
        %v8493 = vpack.c.b16 %v8477, %v8476
        %8510 = vmatpush.bf16.msra.mxu0 %v8485
        %8511 = vmatpush.bf16.msra.mxu0 %v8484
        %8512 = vmatpush.bf16.msra.mxu0 %v8483
        %8513 = vmatpush.bf16.msra.mxu0 %v8482
        %8514 = vmatpush.bf16.msra.mxu0 %v8481
        %8515 = vmatpush.bf16.msra.mxu0 %v8480
        %8516 = vmatpush.bf16.msra.mxu0 %v8479
        %8517 = vmatpush.bf16.msra.mxu0 %v8478
        %8518 = vmatmul.bf16.gmra.mxu0 %v8334
        %v8519 = vpop.f32.mrf.mxu0
        %v8520 = vadd.f32 %v8307, %v8519
        %v8521 = vpop.f32.mrf.mxu0
        %v8522 = vadd.f32 %v8309, %v8521
        %8523 = vmatmul.bf16.gmra.mxu0 %v8360
        %v8524 = vpop.f32.mrf.mxu0
        %v8525 = vadd.f32 %v8312, %v8524
        %v8526 = vpop.f32.mrf.mxu0
        %v8527 = vadd.f32 %v8314, %v8526
        %8528 = vmatmul.bf16.gmra.mxu0 %v8378
        %v8529 = vpop.f32.mrf.mxu0
        %v8530 = vadd.f32 %v8317, %v8529
        %v8531 = vpop.f32.mrf.mxu0
        %v8532 = vadd.f32 %v8319, %v8531
        %8533 = vmatmul.bf16.gmra.mxu0 %v8396
        %v8534 = vpop.f32.mrf.mxu0
        %v8535 = vadd.f32 %v8322, %v8534
        %v8536 = vpop.f32.mrf.mxu0
        %v8537 = vadd.f32 %v8324, %v8536
        %8538 = vdwg.mxu0
        %8539 = vmatpush.bf16.msra.mxu0 %v8493
        %8540 = vmatpush.bf16.msra.mxu0 %v8492
        %8541 = vmatpush.bf16.msra.mxu0 %v8491
        %8542 = vmatpush.bf16.msra.mxu0 %v8490
        %8543 = vmatpush.bf16.msra.mxu0 %v8489
        %8544 = vmatpush.bf16.msra.mxu0 %v8488
        %8545 = vmatpush.bf16.msra.mxu0 %v8487
        %8546 = vmatpush.bf16.msra.mxu0 %v8486
        %8547 = vmatmul.bf16.gmra.mxu0 %v8351
        %v8548 = vpop.f32.mrf.mxu0
        %v8549 = vadd.f32 %v8520, %v8548
        %v8550 = vpop.f32.mrf.mxu0
        %v8551 = vadd.f32 %v8522, %v8550
        %8552 = vmatmul.bf16.gmra.mxu0 %v8369
        %v8553 = vpop.f32.mrf.mxu0
        %v8554 = vadd.f32 %v8525, %v8553
        %v8555 = vpop.f32.mrf.mxu0
        %v8556 = vadd.f32 %v8527, %v8555
        %8557 = vmatmul.bf16.gmra.mxu0 %v8387
        %v8558 = vpop.f32.mrf.mxu0
        %v8559 = vadd.f32 %v8530, %v8558
        %v8560 = vpop.f32.mrf.mxu0
        %v8561 = vadd.f32 %v8532, %v8560
        %8562 = vmatmul.bf16.gmra.mxu0 %v8405
        %v8563 = vpop.f32.mrf.mxu0
        %v8564 = vadd.f32 %v8535, %v8563
        %v8565 = vpop.f32.mrf.mxu0
        %v8566 = vadd.f32 %v8537, %v8565
        %8567 = vdwg.mxu0
        %vm8568 = vsmask.f32 256
        %v8569 = vrot.slane %v7928, 7
        %v8570 = vor.u32 %v8569, %v7931
        %v8571 = vrot.slane %v7936, 7
        %v8572 = vor.u32 %v8571, %v7939
        %v8573 = vsel %vm8568, %v8569, %v8572
        %v8574 = vrot.slane %v7945, 7
        %v8575 = vor.u32 %v8574, %v7948
        %v8576 = vsel %vm8568, %v8571, %v8575
        %v8577 = vrot.slane %v7954, 7
        %v8578 = vor.u32 %v8577, %v7957
        %v8579 = vsel %vm8568, %v8574, %v8578
        %v8580 = vunpack.c.l.b16 %v8570
        %v8581 = vunpack.c.h.b16 %v8570
        %v8582 = vunpack.c.l.b16 0
        %v8583 = vunpack.c.h.b16 0
        %vm8584 = vcmp.ne.s32.totalorder %v8580, %v8582
        %vm8585 = vcmp.ne.s32.totalorder %v8581, %v8583
        %vm8586 = vmpackc.low %vm8585, %vm8584
        %v8587 = vunpack.c.l.b16 %v8573
        %v8588 = vunpack.c.h.b16 %v8573
        %v8589 = vunpack.c.l.b16 0
        %v8590 = vunpack.c.h.b16 0
        %vm8591 = vcmp.ne.s32.totalorder %v8587, %v8589
        %vm8592 = vcmp.ne.s32.totalorder %v8588, %v8590
        %vm8593 = vmpackc.low %vm8592, %vm8591
        %v8594 = vunpack.c.l.b16 %v8576
        %v8595 = vunpack.c.h.b16 %v8576
        %v8596 = vunpack.c.l.b16 0
        %v8597 = vunpack.c.h.b16 0
        %vm8598 = vcmp.ne.s32.totalorder %v8594, %v8596
        %vm8599 = vcmp.ne.s32.totalorder %v8595, %v8597
        %vm8600 = vmpackc.low %vm8599, %vm8598
        %v8601 = vunpack.c.l.b16 %v8579
        %v8602 = vunpack.c.h.b16 %v8579
        %v8603 = vunpack.c.l.b16 0
        %v8604 = vunpack.c.h.b16 0
        %vm8605 = vcmp.ne.s32.totalorder %v8601, %v8603
        %vm8606 = vcmp.ne.s32.totalorder %v8602, %v8604
        %vm8607 = vmpackc.low %vm8606, %vm8605
        %v8608 = vsel %vm8586, %v7588, 0
        %v8609 = vsel %vm8593, %v7589, 0
        %v8610 = vsel %vm8600, %v7590, 0
        %v8611 = vsel %vm8607, %v7591, 0
        %v8613 = vshrl.u32 %v8608, 16
        %v8615 = vshll.u32 %v8608, 16
        %v8617 = vrot.slane %v8615, 1
        %v8618 = vor.u32 %v8613, %v8617
        %v8620 = vshll.u32 %v8609, 16
        %v8622 = vrot.slane %v8620, 1
        %v8623 = vsel %vm1882, %v8618, %v8622
        %v8624 = vshrl.u32 %v8609, 16
        %v8626 = vor.u32 %v8624, %v8622
        %v8628 = vshll.u32 %v8610, 16
        %v8630 = vrot.slane %v8628, 1
        %v8631 = vsel %vm1882, %v8626, %v8630
        %v8632 = vshrl.u32 %v8610, 16
        %v8634 = vor.u32 %v8632, %v8630
        %v8636 = vshll.u32 %v8611, 16
        %v8638 = vrot.slane %v8636, 1
        %v8639 = vsel %vm1882, %v8634, %v8638
        %v8640 = vshrl.u32 %v8611, 16
        %v8642 = vor.u32 %v8640, %v8638
        %v8643 = vsel %vm1882, %v8642, %v1887
        %v8648 = vld [vmem:[#allocation7 + $0x100] sm:$0xf]
        %v8649 = vld [vmem:[#allocation7 + $0x104] sm:$0xf]
        %v8650 = vld [vmem:[#allocation7 + $0x108] sm:$0xf]
        %v8651 = vld [vmem:[#allocation7 + $0x10c] sm:$0xf]
        %v8652 = vld [vmem:[#allocation7 + $0x110] sm:$0xf]
        %v8653 = vld [vmem:[#allocation7 + $0x114] sm:$0xf]
        %v8654 = vld [vmem:[#allocation7 + $0x118] sm:$0xf]
        %v8655 = vld [vmem:[#allocation7 + $0x11c] sm:$0xf]
        %v8656 = vld [vmem:[#allocation7 + $0x120] sm:$0xf]
        %v8657 = vld [vmem:[#allocation7 + $0x124] sm:$0xf]
        %v8658 = vld [vmem:[#allocation7 + $0x128] sm:$0xf]
        %v8659 = vld [vmem:[#allocation7 + $0x12c] sm:$0xf]
        %v8660 = vld [vmem:[#allocation7 + $0x130] sm:$0xf]
        %v8661 = vld [vmem:[#allocation7 + $0x134] sm:$0xf]
        %v8662 = vld [vmem:[#allocation7 + $0x138] sm:$0xf]
        %v8663 = vld [vmem:[#allocation7 + $0x13c] sm:$0xf]
        %v8664 = vld [vmem:[#allocation7 + $0x140] sm:$0xf]
        %v8665 = vld [vmem:[#allocation7 + $0x144] sm:$0xf]
        %v8666 = vld [vmem:[#allocation7 + $0x148] sm:$0xf]
        %v8667 = vld [vmem:[#allocation7 + $0x14c] sm:$0xf]
        %v8668 = vld [vmem:[#allocation7 + $0x150] sm:$0xf]
        %v8669 = vld [vmem:[#allocation7 + $0x154] sm:$0xf]
        %v8670 = vld [vmem:[#allocation7 + $0x158] sm:$0xf]
        %v8671 = vld [vmem:[#allocation7 + $0x15c] sm:$0xf]
        %v8672 = vld [vmem:[#allocation7 + $0x160] sm:$0xf]
        %v8673 = vld [vmem:[#allocation7 + $0x164] sm:$0xf]
        %v8674 = vld [vmem:[#allocation7 + $0x168] sm:$0xf]
        %v8675 = vld [vmem:[#allocation7 + $0x16c] sm:$0xf]
        %v8676 = vld [vmem:[#allocation7 + $0x170] sm:$0xf]
        %v8677 = vld [vmem:[#allocation7 + $0x174] sm:$0xf]
        %v8678 = vld [vmem:[#allocation7 + $0x178] sm:$0xf]
        %v8679 = vld [vmem:[#allocation7 + $0x17c] sm:$0xf]
        %v8712 = vunpack.c.l.b16 %v8648
        %v8713 = vunpack.c.l.b16 %v8649
        %v8714 = vunpack.c.l.b16 %v8650
        %v8715 = vunpack.c.l.b16 %v8651
        %v8716 = vunpack.c.l.b16 %v8652
        %v8717 = vunpack.c.l.b16 %v8653
        %v8718 = vunpack.c.l.b16 %v8654
        %v8719 = vunpack.c.l.b16 %v8655
        %v8720 = vunpack.c.l.b16 %v8656
        %v8721 = vunpack.c.l.b16 %v8657
        %v8722 = vunpack.c.l.b16 %v8658
        %v8723 = vunpack.c.l.b16 %v8659
        %v8724 = vunpack.c.l.b16 %v8660
        %v8725 = vunpack.c.l.b16 %v8661
        %v8726 = vunpack.c.l.b16 %v8662
        %v8727 = vunpack.c.l.b16 %v8663
        %v8728 = vunpack.c.l.b16 %v8664
        %v8729 = vunpack.c.l.b16 %v8665
        %v8730 = vunpack.c.l.b16 %v8666
        %v8731 = vunpack.c.l.b16 %v8667
        %v8732 = vunpack.c.l.b16 %v8668
        %v8733 = vunpack.c.l.b16 %v8669
        %v8734 = vunpack.c.l.b16 %v8670
        %v8735 = vunpack.c.l.b16 %v8671
        %v8736 = vunpack.c.l.b16 %v8672
        %v8737 = vunpack.c.l.b16 %v8673
        %v8738 = vunpack.c.l.b16 %v8674
        %v8739 = vunpack.c.l.b16 %v8675
        %v8740 = vunpack.c.l.b16 %v8676
        %v8741 = vunpack.c.l.b16 %v8677
        %v8742 = vunpack.c.l.b16 %v8678
        %v8743 = vunpack.c.l.b16 %v8679
        %v8744 = vpack.c.b16 %v8713, %v8712
        %v8745 = vpack.c.b16 %v8715, %v8714
        %v8746 = vpack.c.b16 %v8717, %v8716
        %v8747 = vpack.c.b16 %v8719, %v8718
        %v8748 = vpack.c.b16 %v8721, %v8720
        %v8749 = vpack.c.b16 %v8723, %v8722
        %v8750 = vpack.c.b16 %v8725, %v8724
        %v8751 = vpack.c.b16 %v8727, %v8726
        %v8752 = vpack.c.b16 %v8729, %v8728
        %v8753 = vpack.c.b16 %v8731, %v8730
        %v8754 = vpack.c.b16 %v8733, %v8732
        %v8755 = vpack.c.b16 %v8735, %v8734
        %v8756 = vpack.c.b16 %v8737, %v8736
        %v8757 = vpack.c.b16 %v8739, %v8738
        %v8758 = vpack.c.b16 %v8741, %v8740
        %v8759 = vpack.c.b16 %v8743, %v8742
        %8776 = vmatpush.bf16.msra.mxu0 %v8751
        %8777 = vmatpush.bf16.msra.mxu0 %v8750
        %8778 = vmatpush.bf16.msra.mxu0 %v8749
        %8779 = vmatpush.bf16.msra.mxu0 %v8748
        %8780 = vmatpush.bf16.msra.mxu0 %v8747
        %8781 = vmatpush.bf16.msra.mxu0 %v8746
        %8782 = vmatpush.bf16.msra.mxu0 %v8745
        %8783 = vmatpush.bf16.msra.mxu0 %v8744
        %8784 = vmatmul.bf16.gmra.mxu0 %v7588
        %v8785 = vpop.f32.mrf.mxu0
        %v8786 = vadd.f32 0.0, %v8785
        %v8787 = vpop.f32.mrf.mxu0
        %v8788 = vadd.f32 0.0, %v8787
        %8789 = vmatmul.bf16.gmra.mxu0 %v7589
        %v8790 = vpop.f32.mrf.mxu0
        %v8791 = vadd.f32 0.0, %v8790
        %v8792 = vpop.f32.mrf.mxu0
        %v8793 = vadd.f32 0.0, %v8792
        %8794 = vmatmul.bf16.gmra.mxu0 %v7590
        %v8795 = vpop.f32.mrf.mxu0
        %v8796 = vadd.f32 0.0, %v8795
        %v8797 = vpop.f32.mrf.mxu0
        %v8798 = vadd.f32 0.0, %v8797
        %8799 = vmatmul.bf16.gmra.mxu0 %v7591
        %v8800 = vpop.f32.mrf.mxu0
        %v8801 = vadd.f32 0.0, %v8800
        %v8802 = vpop.f32.mrf.mxu0
        %v8803 = vadd.f32 0.0, %v8802
        %8804 = vdwg.mxu0
        %8805 = vmatpush.bf16.msra.mxu0 %v8759
        %8806 = vmatpush.bf16.msra.mxu0 %v8758
        %8807 = vmatpush.bf16.msra.mxu0 %v8757
        %8808 = vmatpush.bf16.msra.mxu0 %v8756
        %8809 = vmatpush.bf16.msra.mxu0 %v8755
        %8810 = vmatpush.bf16.msra.mxu0 %v8754
        %8811 = vmatpush.bf16.msra.mxu0 %v8753
        %8812 = vmatpush.bf16.msra.mxu0 %v8752
        %8813 = vmatmul.bf16.gmra.mxu0 %v8623
        %v8814 = vpop.f32.mrf.mxu0
        %v8815 = vadd.f32 %v8786, %v8814
        %v8816 = vpop.f32.mrf.mxu0
        %v8817 = vadd.f32 %v8788, %v8816
        %8818 = vmatmul.bf16.gmra.mxu0 %v8631
        %v8819 = vpop.f32.mrf.mxu0
        %v8820 = vadd.f32 %v8791, %v8819
        %v8821 = vpop.f32.mrf.mxu0
        %v8822 = vadd.f32 %v8793, %v8821
        %8823 = vmatmul.bf16.gmra.mxu0 %v8639
        %v8824 = vpop.f32.mrf.mxu0
        %v8825 = vadd.f32 %v8796, %v8824
        %v8826 = vpop.f32.mrf.mxu0
        %v8827 = vadd.f32 %v8798, %v8826
        %8828 = vmatmul.bf16.gmra.mxu0 %v8643
        %v8829 = vpop.f32.mrf.mxu0
        %v8830 = vadd.f32 %v8801, %v8829
        %v8831 = vpop.f32.mrf.mxu0
        %v8832 = vadd.f32 %v8803, %v8831
        %8833 = vdwg.mxu0
        %v8834 = vadd.f32 %v8549, %v8815
        %v8835 = vadd.f32 %v8551, %v8817
        %v8836 = vadd.f32 %v8554, %v8820
        %v8837 = vadd.f32 %v8556, %v8822
        %v8838 = vadd.f32 %v8559, %v8825
        %v8839 = vadd.f32 %v8561, %v8827
        %v8840 = vadd.f32 %v8564, %v8830
        %v8841 = vadd.f32 %v8566, %v8832
        %v8842 = vunpack.c.l.b16 %v7759
        %v8843 = vunpack.c.h.b16 %v7759
        %v8844 = vunpack.c.l.b16 0
        %v8845 = vunpack.c.h.b16 0
        %vm8846 = vcmp.ne.s32.totalorder %v8842, %v8844
        %vm8847 = vcmp.ne.s32.totalorder %v8843, %v8845
        %vm8848 = vmpackc.low %vm8847, %vm8846
        %v8849 = vsel %vm8848, %v7588, 0
        %v8850 = vsel %vm7793, %v7589, 0
        %v8851 = vsel %vm7800, %v7590, 0
        %v8852 = vsel %vm7807, %v7591, 0
        %v8853 = vsel %vm1882, %v7850, %v1887
        %v8854 = vld [vmem:[#allocation7 + $0x180] sm:$0xf]
        %v8855 = vld [vmem:[#allocation7 + $0x184] sm:$0xf]
        %v8856 = vld [vmem:[#allocation7 + $0x188] sm:$0xf]
        %v8857 = vld [vmem:[#allocation7 + $0x18c] sm:$0xf]
        %v8858 = vld [vmem:[#allocation7 + $0x190] sm:$0xf]
        %v8859 = vld [vmem:[#allocation7 + $0x194] sm:$0xf]
        %v8860 = vld [vmem:[#allocation7 + $0x198] sm:$0xf]
        %v8861 = vld [vmem:[#allocation7 + $0x19c] sm:$0xf]
        %v8862 = vld [vmem:[#allocation7 + $0x1a0] sm:$0xf]
        %v8863 = vld [vmem:[#allocation7 + $0x1a4] sm:$0xf]
        %v8864 = vld [vmem:[#allocation7 + $0x1a8] sm:$0xf]
        %v8865 = vld [vmem:[#allocation7 + $0x1ac] sm:$0xf]
        %v8866 = vld [vmem:[#allocation7 + $0x1b0] sm:$0xf]
        %v8867 = vld [vmem:[#allocation7 + $0x1b4] sm:$0xf]
        %v8868 = vld [vmem:[#allocation7 + $0x1b8] sm:$0xf]
        %v8869 = vld [vmem:[#allocation7 + $0x1bc] sm:$0xf]
        %v8870 = vld [vmem:[#allocation7 + $0x1c0] sm:$0xf]
        %v8871 = vld [vmem:[#allocation7 + $0x1c4] sm:$0xf]
        %v8872 = vld [vmem:[#allocation7 + $0x1c8] sm:$0xf]
        %v8873 = vld [vmem:[#allocation7 + $0x1cc] sm:$0xf]
        %v8874 = vld [vmem:[#allocation7 + $0x1d0] sm:$0xf]
        %v8875 = vld [vmem:[#allocation7 + $0x1d4] sm:$0xf]
        %v8876 = vld [vmem:[#allocation7 + $0x1d8] sm:$0xf]
        %v8877 = vld [vmem:[#allocation7 + $0x1dc] sm:$0xf]
        %v8878 = vld [vmem:[#allocation7 + $0x1e0] sm:$0xf]
        %v8879 = vld [vmem:[#allocation7 + $0x1e4] sm:$0xf]
        %v8880 = vld [vmem:[#allocation7 + $0x1e8] sm:$0xf]
        %v8881 = vld [vmem:[#allocation7 + $0x1ec] sm:$0xf]
        %v8882 = vld [vmem:[#allocation7 + $0x1f0] sm:$0xf]
        %v8883 = vld [vmem:[#allocation7 + $0x1f4] sm:$0xf]
        %v8884 = vld [vmem:[#allocation7 + $0x1f8] sm:$0xf]
        %v8885 = vld [vmem:[#allocation7 + $0x1fc] sm:$0xf]
        %v8887 = vshrl.u32 %v8849, 16
        %v8889 = vrot.slane %v8887, 3
        %v8890 = vshll.u32 %v8849, 16
        %v8892 = vrot.slane %v8890, 4
        %v8893 = vor.u32 %v8889, %v8892
        %v8895 = vshrl.u32 %v8850, 16
        %v8897 = vrot.slane %v8895, 3
        %v8898 = vshll.u32 %v8850, 16
        %v8900 = vrot.slane %v8898, 4
        %v8901 = vor.u32 %v8897, %v8900
        %v8902 = vsel %vm2224, %v8893, %v8901
        %v8904 = vshrl.u32 %v8851, 16
        %v8906 = vrot.slane %v8904, 3
        %v8907 = vshll.u32 %v8851, 16
        %v8909 = vrot.slane %v8907, 4
        %v8910 = vor.u32 %v8906, %v8909
        %v8911 = vsel %vm2224, %v8901, %v8910
        %v8913 = vshrl.u32 %v8852, 16
        %v8915 = vrot.slane %v8913, 3
        %v8916 = vshll.u32 %v8852, 16
        %v8918 = vrot.slane %v8916, 4
        %v8919 = vor.u32 %v8915, %v8918
        %v8920 = vsel %vm2224, %v8910, %v8919
        %v8922 = vshrl.u32 %v8853, 16
        %v8924 = vrot.slane %v8922, 3
        %v8925 = vshll.u32 %v8853, 16
        %v8927 = vrot.slane %v8925, 4
        %v8928 = vor.u32 %v8924, %v8927
        %v8929 = vsel %vm2224, %v8386, %v8928
        %v8930 = vsel %vm2224, %v8919, %v3210
        %v8931 = vsel %vm2224, %v8928, %v4636
        %v8970 = vunpack.c.l.b16 %v8854
        %v8971 = vunpack.c.l.b16 %v8855
        %v8972 = vunpack.c.l.b16 %v8856
        %v8973 = vunpack.c.l.b16 %v8857
        %v8974 = vunpack.c.l.b16 %v8858
        %v8975 = vunpack.c.l.b16 %v8859
        %v8976 = vunpack.c.l.b16 %v8860
        %v8977 = vunpack.c.l.b16 %v8861
        %v8978 = vunpack.c.l.b16 %v8862
        %v8979 = vunpack.c.l.b16 %v8863
        %v8980 = vunpack.c.l.b16 %v8864
        %v8981 = vunpack.c.l.b16 %v8865
        %v8982 = vunpack.c.l.b16 %v8866
        %v8983 = vunpack.c.l.b16 %v8867
        %v8984 = vunpack.c.l.b16 %v8868
        %v8985 = vunpack.c.l.b16 %v8869
        %v8986 = vunpack.c.l.b16 %v8870
        %v8987 = vunpack.c.l.b16 %v8871
        %v8988 = vunpack.c.l.b16 %v8872
        %v8989 = vunpack.c.l.b16 %v8873
        %v8990 = vunpack.c.l.b16 %v8874
        %v8991 = vunpack.c.l.b16 %v8875
        %v8992 = vunpack.c.l.b16 %v8876
        %v8993 = vunpack.c.l.b16 %v8877
        %v8994 = vunpack.c.l.b16 %v8878
        %v8995 = vunpack.c.l.b16 %v8879
        %v8996 = vunpack.c.l.b16 %v8880
        %v8997 = vunpack.c.l.b16 %v8881
        %v8998 = vunpack.c.l.b16 %v8882
        %v8999 = vunpack.c.l.b16 %v8883
        %v9000 = vunpack.c.l.b16 %v8884
        %v9001 = vunpack.c.l.b16 %v8885
        %v9002 = vpack.c.b16 %v8971, %v8970
        %v9003 = vpack.c.b16 %v8973, %v8972
        %v9004 = vpack.c.b16 %v8975, %v8974
        %v9005 = vpack.c.b16 %v8977, %v8976
        %v9006 = vpack.c.b16 %v8979, %v8978
        %v9007 = vpack.c.b16 %v8981, %v8980
        %v9008 = vpack.c.b16 %v8983, %v8982
        %v9009 = vpack.c.b16 %v8985, %v8984
        %v9010 = vpack.c.b16 %v8987, %v8986
        %v9011 = vpack.c.b16 %v8989, %v8988
        %v9012 = vpack.c.b16 %v8991, %v8990
        %v9013 = vpack.c.b16 %v8993, %v8992
        %v9014 = vpack.c.b16 %v8995, %v8994
        %v9015 = vpack.c.b16 %v8997, %v8996
        %v9016 = vpack.c.b16 %v8999, %v8998
        %v9017 = vpack.c.b16 %v9001, %v9000
        %9034 = vmatpush.bf16.msra.mxu0 %v9009
        %9035 = vmatpush.bf16.msra.mxu0 %v9008
        %9036 = vmatpush.bf16.msra.mxu0 %v9007
        %9037 = vmatpush.bf16.msra.mxu0 %v9006
        %9038 = vmatpush.bf16.msra.mxu0 %v9005
        %9039 = vmatpush.bf16.msra.mxu0 %v9004
        %9040 = vmatpush.bf16.msra.mxu0 %v9003
        %9041 = vmatpush.bf16.msra.mxu0 %v9002
        %9042 = vmatmul.bf16.gmra.mxu0 %v8902
        %v9043 = vpop.f32.mrf.mxu0
        %v9044 = vadd.f32 0.0, %v9043
        %v9045 = vpop.f32.mrf.mxu0
        %v9046 = vadd.f32 0.0, %v9045
        %9047 = vmatmul.bf16.gmra.mxu0 %v8911
        %v9048 = vpop.f32.mrf.mxu0
        %v9049 = vadd.f32 0.0, %v9048
        %v9050 = vpop.f32.mrf.mxu0
        %v9051 = vadd.f32 0.0, %v9050
        %9052 = vmatmul.bf16.gmra.mxu0 %v8920
        %v9053 = vpop.f32.mrf.mxu0
        %v9054 = vadd.f32 0.0, %v9053
        %v9055 = vpop.f32.mrf.mxu0
        %v9056 = vadd.f32 0.0, %v9055
        %9057 = vmatmul.bf16.gmra.mxu0 %v8930
        %v9058 = vpop.f32.mrf.mxu0
        %v9059 = vadd.f32 0.0, %v9058
        %v9060 = vpop.f32.mrf.mxu0
        %v9061 = vadd.f32 0.0, %v9060
        %9062 = vdwg.mxu0
        %9063 = vmatpush.bf16.msra.mxu0 %v9017
        %9064 = vmatpush.bf16.msra.mxu0 %v9016
        %9065 = vmatpush.bf16.msra.mxu0 %v9015
        %9066 = vmatpush.bf16.msra.mxu0 %v9014
        %9067 = vmatpush.bf16.msra.mxu0 %v9013
        %9068 = vmatpush.bf16.msra.mxu0 %v9012
        %9069 = vmatpush.bf16.msra.mxu0 %v9011
        %9070 = vmatpush.bf16.msra.mxu0 %v9010
        %9071 = vmatmul.bf16.gmra.mxu0 %v8369
        %v9072 = vpop.f32.mrf.mxu0
        %v9073 = vadd.f32 %v9044, %v9072
        %v9074 = vpop.f32.mrf.mxu0
        %v9075 = vadd.f32 %v9046, %v9074
        %9076 = vmatmul.bf16.gmra.mxu0 %v8387
        %v9077 = vpop.f32.mrf.mxu0
        %v9078 = vadd.f32 %v9049, %v9077
        %v9079 = vpop.f32.mrf.mxu0
        %v9080 = vadd.f32 %v9051, %v9079
        %9081 = vmatmul.bf16.gmra.mxu0 %v8929
        %v9082 = vpop.f32.mrf.mxu0
        %v9083 = vadd.f32 %v9054, %v9082
        %v9084 = vpop.f32.mrf.mxu0
        %v9085 = vadd.f32 %v9056, %v9084
        %9086 = vmatmul.bf16.gmra.mxu0 %v8931
        %v9087 = vpop.f32.mrf.mxu0
        %v9088 = vadd.f32 %v9059, %v9087
        %v9089 = vpop.f32.mrf.mxu0
        %v9090 = vadd.f32 %v9061, %v9089
        %9091 = vdwg.mxu0
        %v9092 = vadd.f32 %v8834, %v9073
        %v9093 = vadd.f32 %v8835, %v9075
        %v9094 = vadd.f32 %v8836, %v9078
        %v9095 = vadd.f32 %v8837, %v9080
        %v9096 = vadd.f32 %v8838, %v9083
        %v9097 = vadd.f32 %v8839, %v9085
        %v9098 = vadd.f32 %v8840, %v9088
        %v9099 = vadd.f32 %v8841, %v9090
        %v9100 = vunpack.c.l.b16 %v7934
        %v9101 = vunpack.c.h.b16 %v7934
        %v9102 = vunpack.c.l.b16 0
        %v9103 = vunpack.c.h.b16 0
        %vm9104 = vcmp.ne.s32.totalorder %v9100, %v9102
        %vm9105 = vcmp.ne.s32.totalorder %v9101, %v9103
        %vm9106 = vmpackc.low %vm9105, %vm9104
        %v9107 = vsel %vm9106, %v7588, 0
        %v9108 = vsel %vm7968, %v7589, 0
        %v9109 = vsel %vm7975, %v7590, 0
        %v9110 = vsel %vm7982, %v7591, 0
        %v9111 = vld [vmem:[#allocation7 + $0x200] sm:$0xf]
        %v9112 = vld [vmem:[#allocation7 + $0x204] sm:$0xf]
        %v9113 = vld [vmem:[#allocation7 + $0x208] sm:$0xf]
        %v9114 = vld [vmem:[#allocation7 + $0x20c] sm:$0xf]
        %v9115 = vld [vmem:[#allocation7 + $0x210] sm:$0xf]
        %v9116 = vld [vmem:[#allocation7 + $0x214] sm:$0xf]
        %v9117 = vld [vmem:[#allocation7 + $0x218] sm:$0xf]
        %v9118 = vld [vmem:[#allocation7 + $0x21c] sm:$0xf]
        %v9119 = vld [vmem:[#allocation7 + $0x220] sm:$0xf]
        %v9120 = vld [vmem:[#allocation7 + $0x224] sm:$0xf]
        %v9121 = vld [vmem:[#allocation7 + $0x228] sm:$0xf]
        %v9122 = vld [vmem:[#allocation7 + $0x22c] sm:$0xf]
        %v9123 = vld [vmem:[#allocation7 + $0x230] sm:$0xf]
        %v9124 = vld [vmem:[#allocation7 + $0x234] sm:$0xf]
        %v9125 = vld [vmem:[#allocation7 + $0x238] sm:$0xf]
        %v9126 = vld [vmem:[#allocation7 + $0x23c] sm:$0xf]
        %v9128 = vshrl.u32 %v9107, 16
        %v9130 = vrot.slane %v9128, 4
        %v9131 = vshll.u32 %v9107, 16
        %v9133 = vrot.slane %v9131, 5
        %v9134 = vor.u32 %v9130, %v9133
        %v9136 = vshrl.u32 %v9108, 16
        %v9138 = vrot.slane %v9136, 4
        %v9139 = vshll.u32 %v9108, 16
        %v9141 = vrot.slane %v9139, 5
        %v9142 = vor.u32 %v9138, %v9141
        %v9143 = vsel %vm1610, %v9134, %v9142
        %v9145 = vshrl.u32 %v9109, 16
        %v9147 = vrot.slane %v9145, 4
        %v9148 = vshll.u32 %v9109, 16
        %v9150 = vrot.slane %v9148, 5
        %v9151 = vor.u32 %v9147, %v9150
        %v9152 = vsel %vm1610, %v9142, %v9151
        %v9154 = vshrl.u32 %v9110, 16
        %v9156 = vrot.slane %v9154, 4
        %v9157 = vshll.u32 %v9110, 16
        %v9159 = vrot.slane %v9157, 5
        %v9160 = vor.u32 %v9156, %v9159
        %v9161 = vsel %vm1610, %v9151, %v9160
        %v9162 = vsel %vm1610, %v9160, %v2605
        %v9183 = vunpack.c.l.b16 %v9111
        %v9184 = vunpack.c.l.b16 %v9112
        %v9185 = vunpack.c.l.b16 %v9113
        %v9186 = vunpack.c.l.b16 %v9114
        %v9187 = vunpack.c.l.b16 %v9115
        %v9188 = vunpack.c.l.b16 %v9116
        %v9189 = vunpack.c.l.b16 %v9117
        %v9190 = vunpack.c.l.b16 %v9118
        %v9191 = vunpack.c.l.b16 %v9119
        %v9192 = vunpack.c.l.b16 %v9120
        %v9193 = vunpack.c.l.b16 %v9121
        %v9194 = vunpack.c.l.b16 %v9122
        %v9195 = vunpack.c.l.b16 %v9123
        %v9196 = vunpack.c.l.b16 %v9124
        %v9197 = vunpack.c.l.b16 %v9125
        %v9198 = vunpack.c.l.b16 %v9126
        %v9199 = vpack.c.b16 %v9184, %v9183
        %v9200 = vpack.c.b16 %v9186, %v9185
        %v9201 = vpack.c.b16 %v9188, %v9187
        %v9202 = vpack.c.b16 %v9190, %v9189
        %v9203 = vpack.c.b16 %v9192, %v9191
        %v9204 = vpack.c.b16 %v9194, %v9193
        %v9205 = vpack.c.b16 %v9196, %v9195
        %v9206 = vpack.c.b16 %v9198, %v9197
        %9215 = vmatpush.bf16.msra.mxu0 %v9206
        %9216 = vmatpush.bf16.msra.mxu0 %v9205
        %9217 = vmatpush.bf16.msra.mxu0 %v9204
        %9218 = vmatpush.bf16.msra.mxu0 %v9203
        %9219 = vmatpush.bf16.msra.mxu0 %v9202
        %9220 = vmatpush.bf16.msra.mxu0 %v9201
        %9221 = vmatpush.bf16.msra.mxu0 %v9200
        %9222 = vmatpush.bf16.msra.mxu0 %v9199
        %9223 = vmatmul.bf16.gmra.mxu0 %v9143
        %v9224 = vpop.f32.mrf.mxu0
        %v9225 = vadd.f32 0.0, %v9224
        %v9226 = vpop.f32.mrf.mxu0
        %v9227 = vadd.f32 0.0, %v9226
        %9228 = vmatmul.bf16.gmra.mxu0 %v9152
        %v9229 = vpop.f32.mrf.mxu0
        %v9230 = vadd.f32 0.0, %v9229
        %v9231 = vpop.f32.mrf.mxu0
        %v9232 = vadd.f32 0.0, %v9231
        %9233 = vmatmul.bf16.gmra.mxu0 %v9161
        %v9234 = vpop.f32.mrf.mxu0
        %v9235 = vadd.f32 0.0, %v9234
        %v9236 = vpop.f32.mrf.mxu0
        %v9237 = vadd.f32 0.0, %v9236
        %9238 = vmatmul.bf16.gmra.mxu0 %v9162
        %v9239 = vpop.f32.mrf.mxu0
        %v9240 = vadd.f32 0.0, %v9239
        %v9241 = vpop.f32.mrf.mxu0
        %v9242 = vadd.f32 0.0, %v9241
        %9243 = vdwg.mxu0
        %v9244 = vadd.f32 %v9092, %v9225
        %v9245 = vadd.f32 %v9093, %v9227
        %v9246 = vadd.f32 %v9094, %v9230
        %v9247 = vadd.f32 %v9095, %v9232
        %v9248 = vadd.f32 %v9096, %v9235
        %v9249 = vadd.f32 %v9097, %v9237
        %v9250 = vadd.f32 %v9098, %v9240
        %v9251 = vadd.f32 %v9099, %v9242
        %v9252 = vld [vmem:[%s4] sm:$0x1]
        %v9254 = vperm.slane %v9252, 0
        %v9256 = vadd.f32 %v9244, %v9254
        %v9257 = vadd.f32 %v9245, %v9254
        %v9258 = vadd.f32 %v9246, %v9254
        %v9259 = vadd.f32 %v9247, %v9254
        %v9260 = vadd.f32 %v9248, %v9254
        %v9261 = vadd.f32 %v9249, %v9254
        %v9262 = vadd.f32 %v9250, %v9254
        %v9263 = vadd.f32 %v9251, %v9254
        %v9296 = vrot.slane %v433, 3
        %v9297 = vrot.slane %v434, 3
        %v9298 = vrot.slane %v435, 3
        %v9299 = vrot.slane %v436, 3
        %v9300 = vrot.slane %v437, 3
        %v9301 = vrot.slane %v438, 3
        %v9302 = vrot.slane %v439, 3
        %v9303 = vrot.slane %v440, 3
        %v9304 = vrot.slane %v441, 3
        %v9305 = vrot.slane %v442, 3
        %v9306 = vrot.slane %v443, 3
        %v9307 = vrot.slane %v444, 3
        %v9308 = vrot.slane %v445, 3
        %v9309 = vrot.slane %v446, 3
        %v9310 = vrot.slane %v447, 3
        %v9311 = vrot.slane %v448, 3
        %v9312 = vrot.slane %v449, 3
        %v9313 = vrot.slane %v450, 3
        %v9314 = vrot.slane %v451, 3
        %v9315 = vrot.slane %v452, 3
        %v9316 = vrot.slane %v453, 3
        %v9317 = vrot.slane %v454, 3
        %v9318 = vrot.slane %v455, 3
        %v9319 = vrot.slane %v456, 3
        %v9320 = vrot.slane %v457, 3
        %v9321 = vrot.slane %v458, 3
        %v9322 = vrot.slane %v459, 3
        %v9323 = vrot.slane %v460, 3
        %v9324 = vrot.slane %v461, 3
        %v9325 = vrot.slane %v462, 3
        %v9326 = vrot.slane %v463, 3
        %v9327 = vrot.slane %v464, 3
        %vm9328 = vcmask 1040384
        %v9331 = vsel %vm9328, %v433, %v9296
        %v9332 = vsel %vm6352, %v433, %v9296
        %v9334 = vrot.slane %v9332, 1
        %v9335 = vsel %vm6354, %v433, %v9296
        %v9337 = vrot.slane %v9335, 2
        %v9338 = vsel %vm6356, %v433, %v9296
        %v9340 = vrot.slane %v9338, 3
        %v9343 = vsel %vm9328, %v434, %v9297
        %v9344 = vsel %vm6352, %v434, %v9297
        %v9346 = vrot.slane %v9344, 1
        %v9347 = vsel %vm6354, %v434, %v9297
        %v9349 = vrot.slane %v9347, 2
        %v9350 = vsel %vm6356, %v434, %v9297
        %v9352 = vrot.slane %v9350, 3
        %v9355 = vsel %vm9328, %v435, %v9298
        %v9356 = vsel %vm6352, %v435, %v9298
        %v9358 = vrot.slane %v9356, 1
        %v9359 = vsel %vm6354, %v435, %v9298
        %v9361 = vrot.slane %v9359, 2
        %v9362 = vsel %vm6356, %v435, %v9298
        %v9364 = vrot.slane %v9362, 3
        %v9367 = vsel %vm9328, %v436, %v9299
        %v9368 = vsel %vm6352, %v436, %v9299
        %v9370 = vrot.slane %v9368, 1
        %v9371 = vsel %vm6354, %v436, %v9299
        %v9373 = vrot.slane %v9371, 2
        %v9374 = vsel %vm6356, %v436, %v9299
        %v9376 = vrot.slane %v9374, 3
        %v9379 = vsel %vm9328, %v437, %v9300
        %v9380 = vsel %vm6352, %v437, %v9300
        %v9382 = vrot.slane %v9380, 1
        %v9383 = vsel %vm6354, %v437, %v9300
        %v9385 = vrot.slane %v9383, 2
        %v9386 = vsel %vm6356, %v437, %v9300
        %v9388 = vrot.slane %v9386, 3
        %v9391 = vsel %vm9328, %v438, %v9301
        %v9392 = vsel %vm6352, %v438, %v9301
        %v9394 = vrot.slane %v9392, 1
        %v9395 = vsel %vm6354, %v438, %v9301
        %v9397 = vrot.slane %v9395, 2
        %v9398 = vsel %vm6356, %v438, %v9301
        %v9400 = vrot.slane %v9398, 3
        %v9403 = vsel %vm9328, %v439, %v9302
        %v9404 = vsel %vm6352, %v439, %v9302
        %v9406 = vrot.slane %v9404, 1
        %v9407 = vsel %vm6354, %v439, %v9302
        %v9409 = vrot.slane %v9407, 2
        %v9410 = vsel %vm6356, %v439, %v9302
        %v9412 = vrot.slane %v9410, 3
        %v9415 = vsel %vm9328, %v440, %v9303
        %v9416 = vsel %vm6352, %v440, %v9303
        %v9418 = vrot.slane %v9416, 1
        %v9419 = vsel %vm6354, %v440, %v9303
        %v9421 = vrot.slane %v9419, 2
        %v9422 = vsel %vm6356, %v440, %v9303
        %v9424 = vrot.slane %v9422, 3
        %v9427 = vsel %vm9328, %v441, %v9304
        %v9428 = vsel %vm6352, %v441, %v9304
        %v9430 = vrot.slane %v9428, 1
        %v9431 = vsel %vm6354, %v441, %v9304
        %v9433 = vrot.slane %v9431, 2
        %v9434 = vsel %vm6356, %v441, %v9304
        %v9436 = vrot.slane %v9434, 3
        %v9439 = vsel %vm9328, %v442, %v9305
        %v9440 = vsel %vm6352, %v442, %v9305
        %v9442 = vrot.slane %v9440, 1
        %v9443 = vsel %vm6354, %v442, %v9305
        %v9445 = vrot.slane %v9443, 2
        %v9446 = vsel %vm6356, %v442, %v9305
        %v9448 = vrot.slane %v9446, 3
        %v9451 = vsel %vm9328, %v443, %v9306
        %v9452 = vsel %vm6352, %v443, %v9306
        %v9454 = vrot.slane %v9452, 1
        %v9455 = vsel %vm6354, %v443, %v9306
        %v9457 = vrot.slane %v9455, 2
        %v9458 = vsel %vm6356, %v443, %v9306
        %v9460 = vrot.slane %v9458, 3
        %v9463 = vsel %vm9328, %v444, %v9307
        %v9464 = vsel %vm6352, %v444, %v9307
        %v9466 = vrot.slane %v9464, 1
        %v9467 = vsel %vm6354, %v444, %v9307
        %v9469 = vrot.slane %v9467, 2
        %v9470 = vsel %vm6356, %v444, %v9307
        %v9472 = vrot.slane %v9470, 3
        %v9475 = vsel %vm9328, %v445, %v9308
        %v9476 = vsel %vm6352, %v445, %v9308
        %v9478 = vrot.slane %v9476, 1
        %v9479 = vsel %vm6354, %v445, %v9308
        %v9481 = vrot.slane %v9479, 2
        %v9482 = vsel %vm6356, %v445, %v9308
        %v9484 = vrot.slane %v9482, 3
        %v9487 = vsel %vm9328, %v446, %v9309
        %v9488 = vsel %vm6352, %v446, %v9309
        %v9490 = vrot.slane %v9488, 1
        %v9491 = vsel %vm6354, %v446, %v9309
        %v9493 = vrot.slane %v9491, 2
        %v9494 = vsel %vm6356, %v446, %v9309
        %v9496 = vrot.slane %v9494, 3
        %v9499 = vsel %vm9328, %v447, %v9310
        %v9500 = vsel %vm6352, %v447, %v9310
        %v9502 = vrot.slane %v9500, 1
        %v9503 = vsel %vm6354, %v447, %v9310
        %v9505 = vrot.slane %v9503, 2
        %v9506 = vsel %vm6356, %v447, %v9310
        %v9508 = vrot.slane %v9506, 3
        %v9511 = vsel %vm9328, %v448, %v9311
        %v9512 = vsel %vm6352, %v448, %v9311
        %v9514 = vrot.slane %v9512, 1
        %v9515 = vsel %vm6354, %v448, %v9311
        %v9517 = vrot.slane %v9515, 2
        %v9518 = vsel %vm6356, %v448, %v9311
        %v9520 = vrot.slane %v9518, 3
        %v9523 = vsel %vm9328, %v449, %v9312
        %v9524 = vsel %vm6352, %v449, %v9312
        %v9526 = vrot.slane %v9524, 1
        %v9527 = vsel %vm6354, %v449, %v9312
        %v9529 = vrot.slane %v9527, 2
        %v9530 = vsel %vm6356, %v449, %v9312
        %v9532 = vrot.slane %v9530, 3
        %v9535 = vsel %vm9328, %v450, %v9313
        %v9536 = vsel %vm6352, %v450, %v9313
        %v9538 = vrot.slane %v9536, 1
        %v9539 = vsel %vm6354, %v450, %v9313
        %v9541 = vrot.slane %v9539, 2
        %v9542 = vsel %vm6356, %v450, %v9313
        %v9544 = vrot.slane %v9542, 3
        %v9547 = vsel %vm9328, %v451, %v9314
        %v9548 = vsel %vm6352, %v451, %v9314
        %v9550 = vrot.slane %v9548, 1
        %v9551 = vsel %vm6354, %v451, %v9314
        %v9553 = vrot.slane %v9551, 2
        %v9554 = vsel %vm6356, %v451, %v9314
        %v9556 = vrot.slane %v9554, 3
        %v9559 = vsel %vm9328, %v452, %v9315
        %v9560 = vsel %vm6352, %v452, %v9315
        %v9562 = vrot.slane %v9560, 1
        %v9563 = vsel %vm6354, %v452, %v9315
        %v9565 = vrot.slane %v9563, 2
        %v9566 = vsel %vm6356, %v452, %v9315
        %v9568 = vrot.slane %v9566, 3
        %v9571 = vsel %vm9328, %v453, %v9316
        %v9572 = vsel %vm6352, %v453, %v9316
        %v9574 = vrot.slane %v9572, 1
        %v9575 = vsel %vm6354, %v453, %v9316
        %v9577 = vrot.slane %v9575, 2
        %v9578 = vsel %vm6356, %v453, %v9316
        %v9580 = vrot.slane %v9578, 3
        %v9583 = vsel %vm9328, %v454, %v9317
        %v9584 = vsel %vm6352, %v454, %v9317
        %v9586 = vrot.slane %v9584, 1
        %v9587 = vsel %vm6354, %v454, %v9317
        %v9589 = vrot.slane %v9587, 2
        %v9590 = vsel %vm6356, %v454, %v9317
        %v9592 = vrot.slane %v9590, 3
        %v9595 = vsel %vm9328, %v455, %v9318
        %v9596 = vsel %vm6352, %v455, %v9318
        %v9598 = vrot.slane %v9596, 1
        %v9599 = vsel %vm6354, %v455, %v9318
        %v9601 = vrot.slane %v9599, 2
        %v9602 = vsel %vm6356, %v455, %v9318
        %v9604 = vrot.slane %v9602, 3
        %v9607 = vsel %vm9328, %v456, %v9319
        %v9608 = vsel %vm6352, %v456, %v9319
        %v9610 = vrot.slane %v9608, 1
        %v9611 = vsel %vm6354, %v456, %v9319
        %v9613 = vrot.slane %v9611, 2
        %v9614 = vsel %vm6356, %v456, %v9319
        %v9616 = vrot.slane %v9614, 3
        %v9619 = vsel %vm9328, %v457, %v9320
        %v9620 = vsel %vm6352, %v457, %v9320
        %v9622 = vrot.slane %v9620, 1
        %v9623 = vsel %vm6354, %v457, %v9320
        %v9625 = vrot.slane %v9623, 2
        %v9626 = vsel %vm6356, %v457, %v9320
        %v9628 = vrot.slane %v9626, 3
        %v9631 = vsel %vm9328, %v458, %v9321
        %v9632 = vsel %vm6352, %v458, %v9321
        %v9634 = vrot.slane %v9632, 1
        %v9635 = vsel %vm6354, %v458, %v9321
        %v9637 = vrot.slane %v9635, 2
        %v9638 = vsel %vm6356, %v458, %v9321
        %v9640 = vrot.slane %v9638, 3
        %v9643 = vsel %vm9328, %v459, %v9322
        %v9644 = vsel %vm6352, %v459, %v9322
        %v9646 = vrot.slane %v9644, 1
        %v9647 = vsel %vm6354, %v459, %v9322
        %v9649 = vrot.slane %v9647, 2
        %v9650 = vsel %vm6356, %v459, %v9322
        %v9652 = vrot.slane %v9650, 3
        %v9655 = vsel %vm9328, %v460, %v9323
        %v9656 = vsel %vm6352, %v460, %v9323
        %v9658 = vrot.slane %v9656, 1
        %v9659 = vsel %vm6354, %v460, %v9323
        %v9661 = vrot.slane %v9659, 2
        %v9662 = vsel %vm6356, %v460, %v9323
        %v9664 = vrot.slane %v9662, 3
        %v9667 = vsel %vm9328, %v461, %v9324
        %v9668 = vsel %vm6352, %v461, %v9324
        %v9670 = vrot.slane %v9668, 1
        %v9671 = vsel %vm6354, %v461, %v9324
        %v9673 = vrot.slane %v9671, 2
        %v9674 = vsel %vm6356, %v461, %v9324
        %v9676 = vrot.slane %v9674, 3
        %v9679 = vsel %vm9328, %v462, %v9325
        %v9680 = vsel %vm6352, %v462, %v9325
        %v9682 = vrot.slane %v9680, 1
        %v9683 = vsel %vm6354, %v462, %v9325
        %v9685 = vrot.slane %v9683, 2
        %v9686 = vsel %vm6356, %v462, %v9325
        %v9688 = vrot.slane %v9686, 3
        %v9691 = vsel %vm9328, %v463, %v9326
        %v9692 = vsel %vm6352, %v463, %v9326
        %v9694 = vrot.slane %v9692, 1
        %v9695 = vsel %vm6354, %v463, %v9326
        %v9697 = vrot.slane %v9695, 2
        %v9698 = vsel %vm6356, %v463, %v9326
        %v9700 = vrot.slane %v9698, 3
        %v9703 = vsel %vm9328, %v464, %v9327
        %v9704 = vsel %vm6352, %v464, %v9327
        %v9706 = vrot.slane %v9704, 1
        %v9707 = vsel %vm6354, %v464, %v9327
        %v9709 = vrot.slane %v9707, 2
        %v9710 = vsel %vm6356, %v464, %v9327
        %v9712 = vrot.slane %v9710, 3
        %v9841 = vunpack.c.l.bf16 %v9331
        %v9842 = vunpack.c.l.bf16 %v9334
        %v9843 = vunpack.c.l.bf16 %v9337
        %v9844 = vunpack.c.l.bf16 %v9340
        %v9845 = vunpack.c.l.bf16 %v9343
        %v9846 = vunpack.c.l.bf16 %v9346
        %v9847 = vunpack.c.l.bf16 %v9349
        %v9848 = vunpack.c.l.bf16 %v9352
        %v9849 = vunpack.c.l.bf16 %v9379
        %v9850 = vunpack.c.l.bf16 %v9382
        %v9851 = vunpack.c.l.bf16 %v9385
        %v9852 = vunpack.c.l.bf16 %v9388
        %v9853 = vunpack.c.l.bf16 %v9391
        %v9854 = vunpack.c.l.bf16 %v9394
        %v9855 = vunpack.c.l.bf16 %v9397
        %v9856 = vunpack.c.l.bf16 %v9400
        %v9857 = vunpack.c.l.bf16 %v9427
        %v9858 = vunpack.c.l.bf16 %v9430
        %v9859 = vunpack.c.l.bf16 %v9433
        %v9860 = vunpack.c.l.bf16 %v9436
        %v9861 = vunpack.c.l.bf16 %v9439
        %v9862 = vunpack.c.l.bf16 %v9442
        %v9863 = vunpack.c.l.bf16 %v9445
        %v9864 = vunpack.c.l.bf16 %v9448
        %v9865 = vunpack.c.l.bf16 %v9475
        %v9866 = vunpack.c.l.bf16 %v9478
        %v9867 = vunpack.c.l.bf16 %v9481
        %v9868 = vunpack.c.l.bf16 %v9484
        %v9869 = vunpack.c.l.bf16 %v9487
        %v9870 = vunpack.c.l.bf16 %v9490
        %v9871 = vunpack.c.l.bf16 %v9493
        %v9872 = vunpack.c.l.bf16 %v9496
        %v9873 = vunpack.c.l.bf16 %v9523
        %v9874 = vunpack.c.l.bf16 %v9526
        %v9875 = vunpack.c.l.bf16 %v9529
        %v9876 = vunpack.c.l.bf16 %v9532
        %v9877 = vunpack.c.l.bf16 %v9535
        %v9878 = vunpack.c.l.bf16 %v9538
        %v9879 = vunpack.c.l.bf16 %v9541
        %v9880 = vunpack.c.l.bf16 %v9544
        %v9881 = vunpack.c.l.bf16 %v9571
        %v9882 = vunpack.c.l.bf16 %v9574
        %v9883 = vunpack.c.l.bf16 %v9577
        %v9884 = vunpack.c.l.bf16 %v9580
        %v9885 = vunpack.c.l.bf16 %v9583
        %v9886 = vunpack.c.l.bf16 %v9586
        %v9887 = vunpack.c.l.bf16 %v9589
        %v9888 = vunpack.c.l.bf16 %v9592
        %v9889 = vunpack.c.l.bf16 %v9619
        %v9890 = vunpack.c.l.bf16 %v9622
        %v9891 = vunpack.c.l.bf16 %v9625
        %v9892 = vunpack.c.l.bf16 %v9628
        %v9893 = vunpack.c.l.bf16 %v9631
        %v9894 = vunpack.c.l.bf16 %v9634
        %v9895 = vunpack.c.l.bf16 %v9637
        %v9896 = vunpack.c.l.bf16 %v9640
        %v9897 = vunpack.c.l.bf16 %v9667
        %v9898 = vunpack.c.l.bf16 %v9670
        %v9899 = vunpack.c.l.bf16 %v9673
        %v9900 = vunpack.c.l.bf16 %v9676
        %v9901 = vunpack.c.l.bf16 %v9679
        %v9902 = vunpack.c.l.bf16 %v9682
        %v9903 = vunpack.c.l.bf16 %v9685
        %v9904 = vunpack.c.l.bf16 %v9688
        %v9969 = vrot.slane %v9841, 7
        %v9970 = vrot.slane %v9969, 2
        %v9971 = vrot.slane %v9842, 7
        %v9972 = vrot.slane %v9971, 2
        %v9973 = vrot.slane %v9843, 7
        %v9974 = vrot.slane %v9973, 2
        %v9975 = vrot.slane %v9844, 7
        %v9976 = vrot.slane %v9975, 2
        %v9977 = vrot.slane %v9845, 7
        %v9978 = vrot.slane %v9977, 2
        %v9979 = vrot.slane %v9846, 7
        %v9980 = vrot.slane %v9979, 2
        %v9981 = vrot.slane %v9847, 7
        %v9982 = vrot.slane %v9981, 2
        %v9983 = vrot.slane %v9848, 7
        %v9984 = vrot.slane %v9983, 2
        %v9985 = vrot.slane %v9849, 7
        %v9986 = vrot.slane %v9985, 2
        %v9987 = vrot.slane %v9850, 7
        %v9988 = vrot.slane %v9987, 2
        %v9989 = vrot.slane %v9851, 7
        %v9990 = vrot.slane %v9989, 2
        %v9991 = vrot.slane %v9852, 7
        %v9992 = vrot.slane %v9991, 2
        %v9993 = vrot.slane %v9853, 7
        %v9994 = vrot.slane %v9993, 2
        %v9995 = vrot.slane %v9854, 7
        %v9996 = vrot.slane %v9995, 2
        %v9997 = vrot.slane %v9855, 7
        %v9998 = vrot.slane %v9997, 2
        %v9999 = vrot.slane %v9856, 7
        %v10000 = vrot.slane %v9999, 2
        %v10001 = vrot.slane %v9857, 7
        %v10002 = vrot.slane %v10001, 2
        %v10003 = vrot.slane %v9858, 7
        %v10004 = vrot.slane %v10003, 2
        %v10005 = vrot.slane %v9859, 7
        %v10006 = vrot.slane %v10005, 2
        %v10007 = vrot.slane %v9860, 7
        %v10008 = vrot.slane %v10007, 2
        %v10009 = vrot.slane %v9861, 7
        %v10010 = vrot.slane %v10009, 2
        %v10011 = vrot.slane %v9862, 7
        %v10012 = vrot.slane %v10011, 2
        %v10013 = vrot.slane %v9863, 7
        %v10014 = vrot.slane %v10013, 2
        %v10015 = vrot.slane %v9864, 7
        %v10016 = vrot.slane %v10015, 2
        %v10017 = vrot.slane %v9865, 7
        %v10018 = vrot.slane %v10017, 2
        %v10019 = vrot.slane %v9866, 7
        %v10020 = vrot.slane %v10019, 2
        %v10021 = vrot.slane %v9867, 7
        %v10022 = vrot.slane %v10021, 2
        %v10023 = vrot.slane %v9868, 7
        %v10024 = vrot.slane %v10023, 2
        %v10025 = vrot.slane %v9869, 7
        %v10026 = vrot.slane %v10025, 2
        %v10027 = vrot.slane %v9870, 7
        %v10028 = vrot.slane %v10027, 2
        %v10029 = vrot.slane %v9871, 7
        %v10030 = vrot.slane %v10029, 2
        %v10031 = vrot.slane %v9872, 7
        %v10032 = vrot.slane %v10031, 2
        %v10033 = vrot.slane %v9873, 7
        %v10034 = vrot.slane %v10033, 2
        %v10035 = vrot.slane %v9874, 7
        %v10036 = vrot.slane %v10035, 2
        %v10037 = vrot.slane %v9875, 7
        %v10038 = vrot.slane %v10037, 2
        %v10039 = vrot.slane %v9876, 7
        %v10040 = vrot.slane %v10039, 2
        %v10041 = vrot.slane %v9877, 7
        %v10042 = vrot.slane %v10041, 2
        %v10043 = vrot.slane %v9878, 7
        %v10044 = vrot.slane %v10043, 2
        %v10045 = vrot.slane %v9879, 7
        %v10046 = vrot.slane %v10045, 2
        %v10047 = vrot.slane %v9880, 7
        %v10048 = vrot.slane %v10047, 2
        %v10049 = vrot.slane %v9881, 7
        %v10050 = vrot.slane %v10049, 2
        %v10051 = vrot.slane %v9882, 7
        %v10052 = vrot.slane %v10051, 2
        %v10053 = vrot.slane %v9883, 7
        %v10054 = vrot.slane %v10053, 2
        %v10055 = vrot.slane %v9884, 7
        %v10056 = vrot.slane %v10055, 2
        %v10057 = vrot.slane %v9885, 7
        %v10058 = vrot.slane %v10057, 2
        %v10059 = vrot.slane %v9886, 7
        %v10060 = vrot.slane %v10059, 2
        %v10061 = vrot.slane %v9887, 7
        %v10062 = vrot.slane %v10061, 2
        %v10063 = vrot.slane %v9888, 7
        %v10064 = vrot.slane %v10063, 2
        %v10065 = vrot.slane %v9889, 7
        %v10066 = vrot.slane %v10065, 2
        %v10067 = vrot.slane %v9890, 7
        %v10068 = vrot.slane %v10067, 2
        %v10069 = vrot.slane %v9891, 7
        %v10070 = vrot.slane %v10069, 2
        %v10071 = vrot.slane %v9892, 7
        %v10072 = vrot.slane %v10071, 2
        %v10073 = vrot.slane %v9893, 7
        %v10074 = vrot.slane %v10073, 2
        %v10075 = vrot.slane %v9894, 7
        %v10076 = vrot.slane %v10075, 2
        %v10077 = vrot.slane %v9895, 7
        %v10078 = vrot.slane %v10077, 2
        %v10079 = vrot.slane %v9896, 7
        %v10080 = vrot.slane %v10079, 2
        %v10081 = vrot.slane %v9897, 7
        %v10082 = vrot.slane %v10081, 2
        %v10083 = vrot.slane %v9898, 7
        %v10084 = vrot.slane %v10083, 2
        %v10085 = vrot.slane %v9899, 7
        %v10086 = vrot.slane %v10085, 2
        %v10087 = vrot.slane %v9900, 7
        %v10088 = vrot.slane %v10087, 2
        %v10089 = vrot.slane %v9901, 7
        %v10090 = vrot.slane %v10089, 2
        %v10091 = vrot.slane %v9902, 7
        %v10092 = vrot.slane %v10091, 2
        %v10093 = vrot.slane %v9903, 7
        %v10094 = vrot.slane %v10093, 2
        %v10095 = vrot.slane %v9904, 7
        %v10096 = vrot.slane %v10095, 2
        %v10161 = vadd.f32 %v9841, %v9970
        %v10162 = vadd.f32 %v9842, %v9972
        %v10163 = vadd.f32 %v9843, %v9974
        %v10164 = vadd.f32 %v9844, %v9976
        %v10165 = vadd.f32 %v9845, %v9978
        %v10166 = vadd.f32 %v9846, %v9980
        %v10167 = vadd.f32 %v9847, %v9982
        %v10168 = vadd.f32 %v9848, %v9984
        %v10169 = vadd.f32 %v9849, %v9986
        %v10170 = vadd.f32 %v9850, %v9988
        %v10171 = vadd.f32 %v9851, %v9990
        %v10172 = vadd.f32 %v9852, %v9992
        %v10173 = vadd.f32 %v9853, %v9994
        %v10174 = vadd.f32 %v9854, %v9996
        %v10175 = vadd.f32 %v9855, %v9998
        %v10176 = vadd.f32 %v9856, %v10000
        %v10177 = vadd.f32 %v9857, %v10002
        %v10178 = vadd.f32 %v9858, %v10004
        %v10179 = vadd.f32 %v9859, %v10006
        %v10180 = vadd.f32 %v9860, %v10008
        %v10181 = vadd.f32 %v9861, %v10010
        %v10182 = vadd.f32 %v9862, %v10012
        %v10183 = vadd.f32 %v9863, %v10014
        %v10184 = vadd.f32 %v9864, %v10016
        %v10185 = vadd.f32 %v9865, %v10018
        %v10186 = vadd.f32 %v9866, %v10020
        %v10187 = vadd.f32 %v9867, %v10022
        %v10188 = vadd.f32 %v9868, %v10024
        %v10189 = vadd.f32 %v9869, %v10026
        %v10190 = vadd.f32 %v9870, %v10028
        %v10191 = vadd.f32 %v9871, %v10030
        %v10192 = vadd.f32 %v9872, %v10032
        %v10193 = vadd.f32 %v9873, %v10034
        %v10194 = vadd.f32 %v9874, %v10036
        %v10195 = vadd.f32 %v9875, %v10038
        %v10196 = vadd.f32 %v9876, %v10040
        %v10197 = vadd.f32 %v9877, %v10042
        %v10198 = vadd.f32 %v9878, %v10044
        %v10199 = vadd.f32 %v9879, %v10046
        %v10200 = vadd.f32 %v9880, %v10048
        %v10201 = vadd.f32 %v9881, %v10050
        %v10202 = vadd.f32 %v9882, %v10052
        %v10203 = vadd.f32 %v9883, %v10054
        %v10204 = vadd.f32 %v9884, %v10056
        %v10205 = vadd.f32 %v9885, %v10058
        %v10206 = vadd.f32 %v9886, %v10060
        %v10207 = vadd.f32 %v9887, %v10062
        %v10208 = vadd.f32 %v9888, %v10064
        %v10209 = vadd.f32 %v9889, %v10066
        %v10210 = vadd.f32 %v9890, %v10068
        %v10211 = vadd.f32 %v9891, %v10070
        %v10212 = vadd.f32 %v9892, %v10072
        %v10213 = vadd.f32 %v9893, %v10074
        %v10214 = vadd.f32 %v9894, %v10076
        %v10215 = vadd.f32 %v9895, %v10078
        %v10216 = vadd.f32 %v9896, %v10080
        %v10217 = vadd.f32 %v9897, %v10082
        %v10218 = vadd.f32 %v9898, %v10084
        %v10219 = vadd.f32 %v9899, %v10086
        %v10220 = vadd.f32 %v9900, %v10088
        %v10221 = vadd.f32 %v9901, %v10090
        %v10222 = vadd.f32 %v9902, %v10092
        %v10223 = vadd.f32 %v9903, %v10094
        %v10224 = vadd.f32 %v9904, %v10096
        %v10225 = vpack.c.bf16 %v10161, %v10161
        %v10226 = vpack.c.bf16 %v10162, %v10162
        %v10227 = vpack.c.bf16 %v10163, %v10163
        %v10228 = vpack.c.bf16 %v10164, %v10164
        %v10229 = vpack.c.bf16 %v10165, %v10165
        %v10230 = vpack.c.bf16 %v10166, %v10166
        %v10231 = vpack.c.bf16 %v10167, %v10167
        %v10232 = vpack.c.bf16 %v10168, %v10168
        %v10233 = vpack.c.bf16 %v10169, %v10169
        %v10234 = vpack.c.bf16 %v10170, %v10170
        %v10235 = vpack.c.bf16 %v10171, %v10171
        %v10236 = vpack.c.bf16 %v10172, %v10172
        %v10237 = vpack.c.bf16 %v10173, %v10173
        %v10238 = vpack.c.bf16 %v10174, %v10174
        %v10239 = vpack.c.bf16 %v10175, %v10175
        %v10240 = vpack.c.bf16 %v10176, %v10176
        %v10241 = vpack.c.bf16 %v10177, %v10177
        %v10242 = vpack.c.bf16 %v10178, %v10178
        %v10243 = vpack.c.bf16 %v10179, %v10179
        %v10244 = vpack.c.bf16 %v10180, %v10180
        %v10245 = vpack.c.bf16 %v10181, %v10181
        %v10246 = vpack.c.bf16 %v10182, %v10182
        %v10247 = vpack.c.bf16 %v10183, %v10183
        %v10248 = vpack.c.bf16 %v10184, %v10184
        %v10249 = vpack.c.bf16 %v10185, %v10185
        %v10250 = vpack.c.bf16 %v10186, %v10186
        %v10251 = vpack.c.bf16 %v10187, %v10187
        %v10252 = vpack.c.bf16 %v10188, %v10188
        %v10253 = vpack.c.bf16 %v10189, %v10189
        %v10254 = vpack.c.bf16 %v10190, %v10190
        %v10255 = vpack.c.bf16 %v10191, %v10191
        %v10256 = vpack.c.bf16 %v10192, %v10192
        %v10257 = vpack.c.bf16 %v10193, %v10193
        %v10258 = vpack.c.bf16 %v10194, %v10194
        %v10259 = vpack.c.bf16 %v10195, %v10195
        %v10260 = vpack.c.bf16 %v10196, %v10196
        %v10261 = vpack.c.bf16 %v10197, %v10197
        %v10262 = vpack.c.bf16 %v10198, %v10198
        %v10263 = vpack.c.bf16 %v10199, %v10199
        %v10264 = vpack.c.bf16 %v10200, %v10200
        %v10265 = vpack.c.bf16 %v10201, %v10201
        %v10266 = vpack.c.bf16 %v10202, %v10202
        %v10267 = vpack.c.bf16 %v10203, %v10203
        %v10268 = vpack.c.bf16 %v10204, %v10204
        %v10269 = vpack.c.bf16 %v10205, %v10205
        %v10270 = vpack.c.bf16 %v10206, %v10206
        %v10271 = vpack.c.bf16 %v10207, %v10207
        %v10272 = vpack.c.bf16 %v10208, %v10208
        %v10273 = vpack.c.bf16 %v10209, %v10209
        %v10274 = vpack.c.bf16 %v10210, %v10210
        %v10275 = vpack.c.bf16 %v10211, %v10211
        %v10276 = vpack.c.bf16 %v10212, %v10212
        %v10277 = vpack.c.bf16 %v10213, %v10213
        %v10278 = vpack.c.bf16 %v10214, %v10214
        %v10279 = vpack.c.bf16 %v10215, %v10215
        %v10280 = vpack.c.bf16 %v10216, %v10216
        %v10281 = vpack.c.bf16 %v10217, %v10217
        %v10282 = vpack.c.bf16 %v10218, %v10218
        %v10283 = vpack.c.bf16 %v10219, %v10219
        %v10284 = vpack.c.bf16 %v10220, %v10220
        %v10285 = vpack.c.bf16 %v10221, %v10221
        %v10286 = vpack.c.bf16 %v10222, %v10222
        %v10287 = vpack.c.bf16 %v10223, %v10223
        %v10288 = vpack.c.bf16 %v10224, %v10224
        %v10289 = vunpack.c.l.bf16 %v10225
        %v10290 = vunpack.c.l.bf16 %v10226
        %v10291 = vunpack.c.l.bf16 %v10227
        %v10292 = vunpack.c.l.bf16 %v10228
        %v10293 = vunpack.c.l.bf16 %v10229
        %v10294 = vunpack.c.l.bf16 %v10230
        %v10295 = vunpack.c.l.bf16 %v10231
        %v10296 = vunpack.c.l.bf16 %v10232
        %v10297 = vunpack.c.l.bf16 %v10233
        %v10298 = vunpack.c.l.bf16 %v10234
        %v10299 = vunpack.c.l.bf16 %v10235
        %v10300 = vunpack.c.l.bf16 %v10236
        %v10301 = vunpack.c.l.bf16 %v10237
        %v10302 = vunpack.c.l.bf16 %v10238
        %v10303 = vunpack.c.l.bf16 %v10239
        %v10304 = vunpack.c.l.bf16 %v10240
        %v10305 = vunpack.c.l.bf16 %v10241
        %v10306 = vunpack.c.l.bf16 %v10242
        %v10307 = vunpack.c.l.bf16 %v10243
        %v10308 = vunpack.c.l.bf16 %v10244
        %v10309 = vunpack.c.l.bf16 %v10245
        %v10310 = vunpack.c.l.bf16 %v10246
        %v10311 = vunpack.c.l.bf16 %v10247
        %v10312 = vunpack.c.l.bf16 %v10248
        %v10313 = vunpack.c.l.bf16 %v10249
        %v10314 = vunpack.c.l.bf16 %v10250
        %v10315 = vunpack.c.l.bf16 %v10251
        %v10316 = vunpack.c.l.bf16 %v10252
        %v10317 = vunpack.c.l.bf16 %v10253
        %v10318 = vunpack.c.l.bf16 %v10254
        %v10319 = vunpack.c.l.bf16 %v10255
        %v10320 = vunpack.c.l.bf16 %v10256
        %v10321 = vunpack.c.l.bf16 %v10257
        %v10322 = vunpack.c.l.bf16 %v10258
        %v10323 = vunpack.c.l.bf16 %v10259
        %v10324 = vunpack.c.l.bf16 %v10260
        %v10325 = vunpack.c.l.bf16 %v10261
        %v10326 = vunpack.c.l.bf16 %v10262
        %v10327 = vunpack.c.l.bf16 %v10263
        %v10328 = vunpack.c.l.bf16 %v10264
        %v10329 = vunpack.c.l.bf16 %v10265
        %v10330 = vunpack.c.l.bf16 %v10266
        %v10331 = vunpack.c.l.bf16 %v10267
        %v10332 = vunpack.c.l.bf16 %v10268
        %v10333 = vunpack.c.l.bf16 %v10269
        %v10334 = vunpack.c.l.bf16 %v10270
        %v10335 = vunpack.c.l.bf16 %v10271
        %v10336 = vunpack.c.l.bf16 %v10272
        %v10337 = vunpack.c.l.bf16 %v10273
        %v10338 = vunpack.c.l.bf16 %v10274
        %v10339 = vunpack.c.l.bf16 %v10275
        %v10340 = vunpack.c.l.bf16 %v10276
        %v10341 = vunpack.c.l.bf16 %v10277
        %v10342 = vunpack.c.l.bf16 %v10278
        %v10343 = vunpack.c.l.bf16 %v10279
        %v10344 = vunpack.c.l.bf16 %v10280
        %v10345 = vunpack.c.l.bf16 %v10281
        %v10346 = vunpack.c.l.bf16 %v10282
        %v10347 = vunpack.c.l.bf16 %v10283
        %v10348 = vunpack.c.l.bf16 %v10284
        %v10349 = vunpack.c.l.bf16 %v10285
        %v10350 = vunpack.c.l.bf16 %v10286
        %v10351 = vunpack.c.l.bf16 %v10287
        %v10352 = vunpack.c.l.bf16 %v10288
        %v10353 = vunpack.c.l.bf16 %v9355
        %v10354 = vunpack.c.l.bf16 %v9358
        %v10355 = vunpack.c.l.bf16 %v9361
        %v10356 = vunpack.c.l.bf16 %v9364
        %v10357 = vunpack.c.l.bf16 %v9367
        %v10358 = vunpack.c.l.bf16 %v9370
        %v10359 = vunpack.c.l.bf16 %v9373
        %v10360 = vunpack.c.l.bf16 %v9376
        %v10361 = vunpack.c.l.bf16 %v9403
        %v10362 = vunpack.c.l.bf16 %v9406
        %v10363 = vunpack.c.l.bf16 %v9409
        %v10364 = vunpack.c.l.bf16 %v9412
        %v10365 = vunpack.c.l.bf16 %v9415
        %v10366 = vunpack.c.l.bf16 %v9418
        %v10367 = vunpack.c.l.bf16 %v9421
        %v10368 = vunpack.c.l.bf16 %v9424
        %v10369 = vunpack.c.l.bf16 %v9451
        %v10370 = vunpack.c.l.bf16 %v9454
        %v10371 = vunpack.c.l.bf16 %v9457
        %v10372 = vunpack.c.l.bf16 %v9460
        %v10373 = vunpack.c.l.bf16 %v9463
        %v10374 = vunpack.c.l.bf16 %v9466
        %v10375 = vunpack.c.l.bf16 %v9469
        %v10376 = vunpack.c.l.bf16 %v9472
        %v10377 = vunpack.c.l.bf16 %v9499
        %v10378 = vunpack.c.l.bf16 %v9502
        %v10379 = vunpack.c.l.bf16 %v9505
        %v10380 = vunpack.c.l.bf16 %v9508
        %v10381 = vunpack.c.l.bf16 %v9511
        %v10382 = vunpack.c.l.bf16 %v9514
        %v10383 = vunpack.c.l.bf16 %v9517
        %v10384 = vunpack.c.l.bf16 %v9520
        %v10385 = vunpack.c.l.bf16 %v9547
        %v10386 = vunpack.c.l.bf16 %v9550
        %v10387 = vunpack.c.l.bf16 %v9553
        %v10388 = vunpack.c.l.bf16 %v9556
        %v10389 = vunpack.c.l.bf16 %v9559
        %v10390 = vunpack.c.l.bf16 %v9562
        %v10391 = vunpack.c.l.bf16 %v9565
        %v10392 = vunpack.c.l.bf16 %v9568
        %v10393 = vunpack.c.l.bf16 %v9595
        %v10394 = vunpack.c.l.bf16 %v9598
        %v10395 = vunpack.c.l.bf16 %v9601
        %v10396 = vunpack.c.l.bf16 %v9604
        %v10397 = vunpack.c.l.bf16 %v9607
        %v10398 = vunpack.c.l.bf16 %v9610
        %v10399 = vunpack.c.l.bf16 %v9613
        %v10400 = vunpack.c.l.bf16 %v9616
        %v10401 = vunpack.c.l.bf16 %v9643
        %v10402 = vunpack.c.l.bf16 %v9646
        %v10403 = vunpack.c.l.bf16 %v9649
        %v10404 = vunpack.c.l.bf16 %v9652
        %v10405 = vunpack.c.l.bf16 %v9655
        %v10406 = vunpack.c.l.bf16 %v9658
        %v10407 = vunpack.c.l.bf16 %v9661
        %v10408 = vunpack.c.l.bf16 %v9664
        %v10409 = vunpack.c.l.bf16 %v9691
        %v10410 = vunpack.c.l.bf16 %v9694
        %v10411 = vunpack.c.l.bf16 %v9697
        %v10412 = vunpack.c.l.bf16 %v9700
        %v10413 = vunpack.c.l.bf16 %v9703
        %v10414 = vunpack.c.l.bf16 %v9706
        %v10415 = vunpack.c.l.bf16 %v9709
        %v10416 = vunpack.c.l.bf16 %v9712
        %v10417 = vadd.f32 %v10289, %v10353
        %v10418 = vadd.f32 %v10290, %v10354
        %v10419 = vadd.f32 %v10291, %v10355
        %v10420 = vadd.f32 %v10292, %v10356
        %v10421 = vadd.f32 %v10293, %v10357
        %v10422 = vadd.f32 %v10294, %v10358
        %v10423 = vadd.f32 %v10295, %v10359
        %v10424 = vadd.f32 %v10296, %v10360
        %v10425 = vadd.f32 %v10297, %v10361
        %v10426 = vadd.f32 %v10298, %v10362
        %v10427 = vadd.f32 %v10299, %v10363
        %v10428 = vadd.f32 %v10300, %v10364
        %v10429 = vadd.f32 %v10301, %v10365
        %v10430 = vadd.f32 %v10302, %v10366
        %v10431 = vadd.f32 %v10303, %v10367
        %v10432 = vadd.f32 %v10304, %v10368
        %v10433 = vadd.f32 %v10305, %v10369
        %v10434 = vadd.f32 %v10306, %v10370
        %v10435 = vadd.f32 %v10307, %v10371
        %v10436 = vadd.f32 %v10308, %v10372
        %v10437 = vadd.f32 %v10309, %v10373
        %v10438 = vadd.f32 %v10310, %v10374
        %v10439 = vadd.f32 %v10311, %v10375
        %v10440 = vadd.f32 %v10312, %v10376
        %v10441 = vadd.f32 %v10313, %v10377
        %v10442 = vadd.f32 %v10314, %v10378
        %v10443 = vadd.f32 %v10315, %v10379
        %v10444 = vadd.f32 %v10316, %v10380
        %v10445 = vadd.f32 %v10317, %v10381
        %v10446 = vadd.f32 %v10318, %v10382
        %v10447 = vadd.f32 %v10319, %v10383
        %v10448 = vadd.f32 %v10320, %v10384
        %v10449 = vadd.f32 %v10321, %v10385
        %v10450 = vadd.f32 %v10322, %v10386
        %v10451 = vadd.f32 %v10323, %v10387
        %v10452 = vadd.f32 %v10324, %v10388
        %v10453 = vadd.f32 %v10325, %v10389
        %v10454 = vadd.f32 %v10326, %v10390
        %v10455 = vadd.f32 %v10327, %v10391
        %v10456 = vadd.f32 %v10328, %v10392
        %v10457 = vadd.f32 %v10329, %v10393
        %v10458 = vadd.f32 %v10330, %v10394
        %v10459 = vadd.f32 %v10331, %v10395
        %v10460 = vadd.f32 %v10332, %v10396
        %v10461 = vadd.f32 %v10333, %v10397
        %v10462 = vadd.f32 %v10334, %v10398
        %v10463 = vadd.f32 %v10335, %v10399
        %v10464 = vadd.f32 %v10336, %v10400
        %v10465 = vadd.f32 %v10337, %v10401
        %v10466 = vadd.f32 %v10338, %v10402
        %v10467 = vadd.f32 %v10339, %v10403
        %v10468 = vadd.f32 %v10340, %v10404
        %v10469 = vadd.f32 %v10341, %v10405
        %v10470 = vadd.f32 %v10342, %v10406
        %v10471 = vadd.f32 %v10343, %v10407
        %v10472 = vadd.f32 %v10344, %v10408
        %v10473 = vadd.f32 %v10345, %v10409
        %v10474 = vadd.f32 %v10346, %v10410
        %v10475 = vadd.f32 %v10347, %v10411
        %v10476 = vadd.f32 %v10348, %v10412
        %v10477 = vadd.f32 %v10349, %v10413
        %v10478 = vadd.f32 %v10350, %v10414
        %v10479 = vadd.f32 %v10351, %v10415
        %v10480 = vadd.f32 %v10352, %v10416
        %v10481 = vpack.c.bf16 %v10417, %v10417
        %v10482 = vpack.c.bf16 %v10418, %v10418
        %v10483 = vpack.c.bf16 %v10419, %v10419
        %v10484 = vpack.c.bf16 %v10420, %v10420
        %v10485 = vpack.c.bf16 %v10421, %v10421
        %v10486 = vpack.c.bf16 %v10422, %v10422
        %v10487 = vpack.c.bf16 %v10423, %v10423
        %v10488 = vpack.c.bf16 %v10424, %v10424
        %v10489 = vpack.c.bf16 %v10425, %v10425
        %v10490 = vpack.c.bf16 %v10426, %v10426
        %v10491 = vpack.c.bf16 %v10427, %v10427
        %v10492 = vpack.c.bf16 %v10428, %v10428
        %v10493 = vpack.c.bf16 %v10429, %v10429
        %v10494 = vpack.c.bf16 %v10430, %v10430
        %v10495 = vpack.c.bf16 %v10431, %v10431
        %v10496 = vpack.c.bf16 %v10432, %v10432
        %v10497 = vpack.c.bf16 %v10433, %v10433
        %v10498 = vpack.c.bf16 %v10434, %v10434
        %v10499 = vpack.c.bf16 %v10435, %v10435
        %v10500 = vpack.c.bf16 %v10436, %v10436
        %v10501 = vpack.c.bf16 %v10437, %v10437
        %v10502 = vpack.c.bf16 %v10438, %v10438
        %v10503 = vpack.c.bf16 %v10439, %v10439
        %v10504 = vpack.c.bf16 %v10440, %v10440
        %v10505 = vpack.c.bf16 %v10441, %v10441
        %v10506 = vpack.c.bf16 %v10442, %v10442
        %v10507 = vpack.c.bf16 %v10443, %v10443
        %v10508 = vpack.c.bf16 %v10444, %v10444
        %v10509 = vpack.c.bf16 %v10445, %v10445
        %v10510 = vpack.c.bf16 %v10446, %v10446
        %v10511 = vpack.c.bf16 %v10447, %v10447
        %v10512 = vpack.c.bf16 %v10448, %v10448
        %v10513 = vpack.c.bf16 %v10449, %v10449
        %v10514 = vpack.c.bf16 %v10450, %v10450
        %v10515 = vpack.c.bf16 %v10451, %v10451
        %v10516 = vpack.c.bf16 %v10452, %v10452
        %v10517 = vpack.c.bf16 %v10453, %v10453
        %v10518 = vpack.c.bf16 %v10454, %v10454
        %v10519 = vpack.c.bf16 %v10455, %v10455
        %v10520 = vpack.c.bf16 %v10456, %v10456
        %v10521 = vpack.c.bf16 %v10457, %v10457
        %v10522 = vpack.c.bf16 %v10458, %v10458
        %v10523 = vpack.c.bf16 %v10459, %v10459
        %v10524 = vpack.c.bf16 %v10460, %v10460
        %v10525 = vpack.c.bf16 %v10461, %v10461
        %v10526 = vpack.c.bf16 %v10462, %v10462
        %v10527 = vpack.c.bf16 %v10463, %v10463
        %v10528 = vpack.c.bf16 %v10464, %v10464
        %v10529 = vpack.c.bf16 %v10465, %v10465
        %v10530 = vpack.c.bf16 %v10466, %v10466
        %v10531 = vpack.c.bf16 %v10467, %v10467
        %v10532 = vpack.c.bf16 %v10468, %v10468
        %v10533 = vpack.c.bf16 %v10469, %v10469
        %v10534 = vpack.c.bf16 %v10470, %v10470
        %v10535 = vpack.c.bf16 %v10471, %v10471
        %v10536 = vpack.c.bf16 %v10472, %v10472
        %v10537 = vpack.c.bf16 %v10473, %v10473
        %v10538 = vpack.c.bf16 %v10474, %v10474
        %v10539 = vpack.c.bf16 %v10475, %v10475
        %v10540 = vpack.c.bf16 %v10476, %v10476
        %v10541 = vpack.c.bf16 %v10477, %v10477
        %v10542 = vpack.c.bf16 %v10478, %v10478
        %v10543 = vpack.c.bf16 %v10479, %v10479
        %v10544 = vpack.c.bf16 %v10480, %v10480
        %v10545 = vunpack.c.l.bf16 %v10481
        %v10546 = vunpack.c.l.bf16 %v10482
        %v10547 = vunpack.c.l.bf16 %v10483
        %v10548 = vunpack.c.l.bf16 %v10484
        %v10549 = vunpack.c.l.bf16 %v10485
        %v10550 = vunpack.c.l.bf16 %v10486
        %v10551 = vunpack.c.l.bf16 %v10487
        %v10552 = vunpack.c.l.bf16 %v10488
        %v10553 = vunpack.c.l.bf16 %v10489
        %v10554 = vunpack.c.l.bf16 %v10490
        %v10555 = vunpack.c.l.bf16 %v10491
        %v10556 = vunpack.c.l.bf16 %v10492
        %v10557 = vunpack.c.l.bf16 %v10493
        %v10558 = vunpack.c.l.bf16 %v10494
        %v10559 = vunpack.c.l.bf16 %v10495
        %v10560 = vunpack.c.l.bf16 %v10496
        %v10561 = vunpack.c.l.bf16 %v10497
        %v10562 = vunpack.c.l.bf16 %v10498
        %v10563 = vunpack.c.l.bf16 %v10499
        %v10564 = vunpack.c.l.bf16 %v10500
        %v10565 = vunpack.c.l.bf16 %v10501
        %v10566 = vunpack.c.l.bf16 %v10502
        %v10567 = vunpack.c.l.bf16 %v10503
        %v10568 = vunpack.c.l.bf16 %v10504
        %v10569 = vunpack.c.l.bf16 %v10505
        %v10570 = vunpack.c.l.bf16 %v10506
        %v10571 = vunpack.c.l.bf16 %v10507
        %v10572 = vunpack.c.l.bf16 %v10508
        %v10573 = vunpack.c.l.bf16 %v10509
        %v10574 = vunpack.c.l.bf16 %v10510
        %v10575 = vunpack.c.l.bf16 %v10511
        %v10576 = vunpack.c.l.bf16 %v10512
        %v10577 = vunpack.c.l.bf16 %v10513
        %v10578 = vunpack.c.l.bf16 %v10514
        %v10579 = vunpack.c.l.bf16 %v10515
        %v10580 = vunpack.c.l.bf16 %v10516
        %v10581 = vunpack.c.l.bf16 %v10517
        %v10582 = vunpack.c.l.bf16 %v10518
        %v10583 = vunpack.c.l.bf16 %v10519
        %v10584 = vunpack.c.l.bf16 %v10520
        %v10585 = vunpack.c.l.bf16 %v10521
        %v10586 = vunpack.c.l.bf16 %v10522
        %v10587 = vunpack.c.l.bf16 %v10523
        %v10588 = vunpack.c.l.bf16 %v10524
        %v10589 = vunpack.c.l.bf16 %v10525
        %v10590 = vunpack.c.l.bf16 %v10526
        %v10591 = vunpack.c.l.bf16 %v10527
        %v10592 = vunpack.c.l.bf16 %v10528
        %v10593 = vunpack.c.l.bf16 %v10529
        %v10594 = vunpack.c.l.bf16 %v10530
        %v10595 = vunpack.c.l.bf16 %v10531
        %v10596 = vunpack.c.l.bf16 %v10532
        %v10597 = vunpack.c.l.bf16 %v10533
        %v10598 = vunpack.c.l.bf16 %v10534
        %v10599 = vunpack.c.l.bf16 %v10535
        %v10600 = vunpack.c.l.bf16 %v10536
        %v10601 = vunpack.c.l.bf16 %v10537
        %v10602 = vunpack.c.l.bf16 %v10538
        %v10603 = vunpack.c.l.bf16 %v10539
        %v10604 = vunpack.c.l.bf16 %v10540
        %v10605 = vunpack.c.l.bf16 %v10541
        %v10606 = vunpack.c.l.bf16 %v10542
        %v10607 = vunpack.c.l.bf16 %v10543
        %v10608 = vunpack.c.l.bf16 %v10544
        %v10673 = vperm.slane %v10353, 1
        %v10674 = vperm.slane %v10354, 1
        %v10675 = vperm.slane %v10355, 1
        %v10676 = vperm.slane %v10356, 1
        %v10677 = vperm.slane %v10357, 1
        %v10678 = vperm.slane %v10358, 1
        %v10679 = vperm.slane %v10359, 1
        %v10680 = vperm.slane %v10360, 1
        %v10681 = vperm.slane %v10361, 1
        %v10682 = vperm.slane %v10362, 1
        %v10683 = vperm.slane %v10363, 1
        %v10684 = vperm.slane %v10364, 1
        %v10685 = vperm.slane %v10365, 1
        %v10686 = vperm.slane %v10366, 1
        %v10687 = vperm.slane %v10367, 1
        %v10688 = vperm.slane %v10368, 1
        %v10689 = vperm.slane %v10369, 1
        %v10690 = vperm.slane %v10370, 1
        %v10691 = vperm.slane %v10371, 1
        %v10692 = vperm.slane %v10372, 1
        %v10693 = vperm.slane %v10373, 1
        %v10694 = vperm.slane %v10374, 1
        %v10695 = vperm.slane %v10375, 1
        %v10696 = vperm.slane %v10376, 1
        %v10697 = vperm.slane %v10377, 1
        %v10698 = vperm.slane %v10378, 1
        %v10699 = vperm.slane %v10379, 1
        %v10700 = vperm.slane %v10380, 1
        %v10701 = vperm.slane %v10381, 1
        %v10702 = vperm.slane %v10382, 1
        %v10703 = vperm.slane %v10383, 1
        %v10704 = vperm.slane %v10384, 1
        %v10705 = vperm.slane %v10385, 1
        %v10706 = vperm.slane %v10386, 1
        %v10707 = vperm.slane %v10387, 1
        %v10708 = vperm.slane %v10388, 1
        %v10709 = vperm.slane %v10389, 1
        %v10710 = vperm.slane %v10390, 1
        %v10711 = vperm.slane %v10391, 1
        %v10712 = vperm.slane %v10392, 1
        %v10713 = vperm.slane %v10393, 1
        %v10714 = vperm.slane %v10394, 1
        %v10715 = vperm.slane %v10395, 1
        %v10716 = vperm.slane %v10396, 1
        %v10717 = vperm.slane %v10397, 1
        %v10718 = vperm.slane %v10398, 1
        %v10719 = vperm.slane %v10399, 1
        %v10720 = vperm.slane %v10400, 1
        %v10721 = vperm.slane %v10401, 1
        %v10722 = vperm.slane %v10402, 1
        %v10723 = vperm.slane %v10403, 1
        %v10724 = vperm.slane %v10404, 1
        %v10725 = vperm.slane %v10405, 1
        %v10726 = vperm.slane %v10406, 1
        %v10727 = vperm.slane %v10407, 1
        %v10728 = vperm.slane %v10408, 1
        %v10729 = vperm.slane %v10409, 1
        %v10730 = vperm.slane %v10410, 1
        %v10731 = vperm.slane %v10411, 1
        %v10732 = vperm.slane %v10412, 1
        %v10733 = vperm.slane %v10413, 1
        %v10734 = vperm.slane %v10414, 1
        %v10735 = vperm.slane %v10415, 1
        %v10736 = vperm.slane %v10416, 1
        %v10801 = vadd.f32 %v10545, %v10673
        %v10802 = vadd.f32 %v10546, %v10674
        %v10803 = vadd.f32 %v10547, %v10675
        %v10804 = vadd.f32 %v10548, %v10676
        %v10805 = vadd.f32 %v10549, %v10677
        %v10806 = vadd.f32 %v10550, %v10678
        %v10807 = vadd.f32 %v10551, %v10679
        %v10808 = vadd.f32 %v10552, %v10680
        %v10809 = vadd.f32 %v10553, %v10681
        %v10810 = vadd.f32 %v10554, %v10682
        %v10811 = vadd.f32 %v10555, %v10683
        %v10812 = vadd.f32 %v10556, %v10684
        %v10813 = vadd.f32 %v10557, %v10685
        %v10814 = vadd.f32 %v10558, %v10686
        %v10815 = vadd.f32 %v10559, %v10687
        %v10816 = vadd.f32 %v10560, %v10688
        %v10817 = vadd.f32 %v10561, %v10689
        %v10818 = vadd.f32 %v10562, %v10690
        %v10819 = vadd.f32 %v10563, %v10691
        %v10820 = vadd.f32 %v10564, %v10692
        %v10821 = vadd.f32 %v10565, %v10693
        %v10822 = vadd.f32 %v10566, %v10694
        %v10823 = vadd.f32 %v10567, %v10695
        %v10824 = vadd.f32 %v10568, %v10696
        %v10825 = vadd.f32 %v10569, %v10697
        %v10826 = vadd.f32 %v10570, %v10698
        %v10827 = vadd.f32 %v10571, %v10699
        %v10828 = vadd.f32 %v10572, %v10700
        %v10829 = vadd.f32 %v10573, %v10701
        %v10830 = vadd.f32 %v10574, %v10702
        %v10831 = vadd.f32 %v10575, %v10703
        %v10832 = vadd.f32 %v10576, %v10704
        %v10833 = vadd.f32 %v10577, %v10705
        %v10834 = vadd.f32 %v10578, %v10706
        %v10835 = vadd.f32 %v10579, %v10707
        %v10836 = vadd.f32 %v10580, %v10708
        %v10837 = vadd.f32 %v10581, %v10709
        %v10838 = vadd.f32 %v10582, %v10710
        %v10839 = vadd.f32 %v10583, %v10711
        %v10840 = vadd.f32 %v10584, %v10712
        %v10841 = vadd.f32 %v10585, %v10713
        %v10842 = vadd.f32 %v10586, %v10714
        %v10843 = vadd.f32 %v10587, %v10715
        %v10844 = vadd.f32 %v10588, %v10716
        %v10845 = vadd.f32 %v10589, %v10717
        %v10846 = vadd.f32 %v10590, %v10718
        %v10847 = vadd.f32 %v10591, %v10719
        %v10848 = vadd.f32 %v10592, %v10720
        %v10849 = vadd.f32 %v10593, %v10721
        %v10850 = vadd.f32 %v10594, %v10722
        %v10851 = vadd.f32 %v10595, %v10723
        %v10852 = vadd.f32 %v10596, %v10724
        %v10853 = vadd.f32 %v10597, %v10725
        %v10854 = vadd.f32 %v10598, %v10726
        %v10855 = vadd.f32 %v10599, %v10727
        %v10856 = vadd.f32 %v10600, %v10728
        %v10857 = vadd.f32 %v10601, %v10729
        %v10858 = vadd.f32 %v10602, %v10730
        %v10859 = vadd.f32 %v10603, %v10731
        %v10860 = vadd.f32 %v10604, %v10732
        %v10861 = vadd.f32 %v10605, %v10733
        %v10862 = vadd.f32 %v10606, %v10734
        %v10863 = vadd.f32 %v10607, %v10735
        %v10864 = vadd.f32 %v10608, %v10736
        %v10865 = vpack.c.bf16 %v10801, %v10801
        %v10866 = vpack.c.bf16 %v10802, %v10802
        %v10867 = vpack.c.bf16 %v10803, %v10803
        %v10868 = vpack.c.bf16 %v10804, %v10804
        %v10869 = vpack.c.bf16 %v10805, %v10805
        %v10870 = vpack.c.bf16 %v10806, %v10806
        %v10871 = vpack.c.bf16 %v10807, %v10807
        %v10872 = vpack.c.bf16 %v10808, %v10808
        %v10873 = vpack.c.bf16 %v10809, %v10809
        %v10874 = vpack.c.bf16 %v10810, %v10810
        %v10875 = vpack.c.bf16 %v10811, %v10811
        %v10876 = vpack.c.bf16 %v10812, %v10812
        %v10877 = vpack.c.bf16 %v10813, %v10813
        %v10878 = vpack.c.bf16 %v10814, %v10814
        %v10879 = vpack.c.bf16 %v10815, %v10815
        %v10880 = vpack.c.bf16 %v10816, %v10816
        %v10881 = vpack.c.bf16 %v10817, %v10817
        %v10882 = vpack.c.bf16 %v10818, %v10818
        %v10883 = vpack.c.bf16 %v10819, %v10819
        %v10884 = vpack.c.bf16 %v10820, %v10820
        %v10885 = vpack.c.bf16 %v10821, %v10821
        %v10886 = vpack.c.bf16 %v10822, %v10822
        %v10887 = vpack.c.bf16 %v10823, %v10823
        %v10888 = vpack.c.bf16 %v10824, %v10824
        %v10889 = vpack.c.bf16 %v10825, %v10825
        %v10890 = vpack.c.bf16 %v10826, %v10826
        %v10891 = vpack.c.bf16 %v10827, %v10827
        %v10892 = vpack.c.bf16 %v10828, %v10828
        %v10893 = vpack.c.bf16 %v10829, %v10829
        %v10894 = vpack.c.bf16 %v10830, %v10830
        %v10895 = vpack.c.bf16 %v10831, %v10831
        %v10896 = vpack.c.bf16 %v10832, %v10832
        %v10897 = vpack.c.bf16 %v10833, %v10833
        %v10898 = vpack.c.bf16 %v10834, %v10834
        %v10899 = vpack.c.bf16 %v10835, %v10835
        %v10900 = vpack.c.bf16 %v10836, %v10836
        %v10901 = vpack.c.bf16 %v10837, %v10837
        %v10902 = vpack.c.bf16 %v10838, %v10838
        %v10903 = vpack.c.bf16 %v10839, %v10839
        %v10904 = vpack.c.bf16 %v10840, %v10840
        %v10905 = vpack.c.bf16 %v10841, %v10841
        %v10906 = vpack.c.bf16 %v10842, %v10842
        %v10907 = vpack.c.bf16 %v10843, %v10843
        %v10908 = vpack.c.bf16 %v10844, %v10844
        %v10909 = vpack.c.bf16 %v10845, %v10845
        %v10910 = vpack.c.bf16 %v10846, %v10846
        %v10911 = vpack.c.bf16 %v10847, %v10847
        %v10912 = vpack.c.bf16 %v10848, %v10848
        %v10913 = vpack.c.bf16 %v10849, %v10849
        %v10914 = vpack.c.bf16 %v10850, %v10850
        %v10915 = vpack.c.bf16 %v10851, %v10851
        %v10916 = vpack.c.bf16 %v10852, %v10852
        %v10917 = vpack.c.bf16 %v10853, %v10853
        %v10918 = vpack.c.bf16 %v10854, %v10854
        %v10919 = vpack.c.bf16 %v10855, %v10855
        %v10920 = vpack.c.bf16 %v10856, %v10856
        %v10921 = vpack.c.bf16 %v10857, %v10857
        %v10922 = vpack.c.bf16 %v10858, %v10858
        %v10923 = vpack.c.bf16 %v10859, %v10859
        %v10924 = vpack.c.bf16 %v10860, %v10860
        %v10925 = vpack.c.bf16 %v10861, %v10861
        %v10926 = vpack.c.bf16 %v10862, %v10862
        %v10927 = vpack.c.bf16 %v10863, %v10863
        %v10928 = vpack.c.bf16 %v10864, %v10864
        %v10929 = vunpack.c.l.bf16 %v10865
        %v10930 = vunpack.c.l.bf16 %v10866
        %v10931 = vunpack.c.l.bf16 %v10867
        %v10932 = vunpack.c.l.bf16 %v10868
        %v10933 = vunpack.c.l.bf16 %v10869
        %v10934 = vunpack.c.l.bf16 %v10870
        %v10935 = vunpack.c.l.bf16 %v10871
        %v10936 = vunpack.c.l.bf16 %v10872
        %v10937 = vunpack.c.l.bf16 %v10873
        %v10938 = vunpack.c.l.bf16 %v10874
        %v10939 = vunpack.c.l.bf16 %v10875
        %v10940 = vunpack.c.l.bf16 %v10876
        %v10941 = vunpack.c.l.bf16 %v10877
        %v10942 = vunpack.c.l.bf16 %v10878
        %v10943 = vunpack.c.l.bf16 %v10879
        %v10944 = vunpack.c.l.bf16 %v10880
        %v10945 = vunpack.c.l.bf16 %v10881
        %v10946 = vunpack.c.l.bf16 %v10882
        %v10947 = vunpack.c.l.bf16 %v10883
        %v10948 = vunpack.c.l.bf16 %v10884
        %v10949 = vunpack.c.l.bf16 %v10885
        %v10950 = vunpack.c.l.bf16 %v10886
        %v10951 = vunpack.c.l.bf16 %v10887
        %v10952 = vunpack.c.l.bf16 %v10888
        %v10953 = vunpack.c.l.bf16 %v10889
        %v10954 = vunpack.c.l.bf16 %v10890
        %v10955 = vunpack.c.l.bf16 %v10891
        %v10956 = vunpack.c.l.bf16 %v10892
        %v10957 = vunpack.c.l.bf16 %v10893
        %v10958 = vunpack.c.l.bf16 %v10894
        %v10959 = vunpack.c.l.bf16 %v10895
        %v10960 = vunpack.c.l.bf16 %v10896
        %v10961 = vunpack.c.l.bf16 %v10897
        %v10962 = vunpack.c.l.bf16 %v10898
        %v10963 = vunpack.c.l.bf16 %v10899
        %v10964 = vunpack.c.l.bf16 %v10900
        %v10965 = vunpack.c.l.bf16 %v10901
        %v10966 = vunpack.c.l.bf16 %v10902
        %v10967 = vunpack.c.l.bf16 %v10903
        %v10968 = vunpack.c.l.bf16 %v10904
        %v10969 = vunpack.c.l.bf16 %v10905
        %v10970 = vunpack.c.l.bf16 %v10906
        %v10971 = vunpack.c.l.bf16 %v10907
        %v10972 = vunpack.c.l.bf16 %v10908
        %v10973 = vunpack.c.l.bf16 %v10909
        %v10974 = vunpack.c.l.bf16 %v10910
        %v10975 = vunpack.c.l.bf16 %v10911
        %v10976 = vunpack.c.l.bf16 %v10912
        %v10977 = vunpack.c.l.bf16 %v10913
        %v10978 = vunpack.c.l.bf16 %v10914
        %v10979 = vunpack.c.l.bf16 %v10915
        %v10980 = vunpack.c.l.bf16 %v10916
        %v10981 = vunpack.c.l.bf16 %v10917
        %v10982 = vunpack.c.l.bf16 %v10918
        %v10983 = vunpack.c.l.bf16 %v10919
        %v10984 = vunpack.c.l.bf16 %v10920
        %v10985 = vunpack.c.l.bf16 %v10921
        %v10986 = vunpack.c.l.bf16 %v10922
        %v10987 = vunpack.c.l.bf16 %v10923
        %v10988 = vunpack.c.l.bf16 %v10924
        %v10989 = vunpack.c.l.bf16 %v10925
        %v10990 = vunpack.c.l.bf16 %v10926
        %v10991 = vunpack.c.l.bf16 %v10927
        %v10992 = vunpack.c.l.bf16 %v10928
        %v10993 = vmul.f32 %v10929, 0.25
        %v10994 = vmul.f32 %v10930, 0.25
        %v10995 = vmul.f32 %v10931, 0.25
        %v10996 = vmul.f32 %v10932, 0.25
        %v10997 = vmul.f32 %v10933, 0.25
        %v10998 = vmul.f32 %v10934, 0.25
        %v10999 = vmul.f32 %v10935, 0.25
        %v11000 = vmul.f32 %v10936, 0.25
        %v11001 = vmul.f32 %v10937, 0.25
        %v11002 = vmul.f32 %v10938, 0.25
        %v11003 = vmul.f32 %v10939, 0.25
        %v11004 = vmul.f32 %v10940, 0.25
        %v11005 = vmul.f32 %v10941, 0.25
        %v11006 = vmul.f32 %v10942, 0.25
        %v11007 = vmul.f32 %v10943, 0.25
        %v11008 = vmul.f32 %v10944, 0.25
        %v11009 = vmul.f32 %v10945, 0.25
        %v11010 = vmul.f32 %v10946, 0.25
        %v11011 = vmul.f32 %v10947, 0.25
        %v11012 = vmul.f32 %v10948, 0.25
        %v11013 = vmul.f32 %v10949, 0.25
        %v11014 = vmul.f32 %v10950, 0.25
        %v11015 = vmul.f32 %v10951, 0.25
        %v11016 = vmul.f32 %v10952, 0.25
        %v11017 = vmul.f32 %v10953, 0.25
        %v11018 = vmul.f32 %v10954, 0.25
        %v11019 = vmul.f32 %v10955, 0.25
        %v11020 = vmul.f32 %v10956, 0.25
        %v11021 = vmul.f32 %v10957, 0.25
        %v11022 = vmul.f32 %v10958, 0.25
        %v11023 = vmul.f32 %v10959, 0.25
        %v11024 = vmul.f32 %v10960, 0.25
        %v11025 = vmul.f32 %v10961, 0.25
        %v11026 = vmul.f32 %v10962, 0.25
        %v11027 = vmul.f32 %v10963, 0.25
        %v11028 = vmul.f32 %v10964, 0.25
        %v11029 = vmul.f32 %v10965, 0.25
        %v11030 = vmul.f32 %v10966, 0.25
        %v11031 = vmul.f32 %v10967, 0.25
        %v11032 = vmul.f32 %v10968, 0.25
        %v11033 = vmul.f32 %v10969, 0.25
        %v11034 = vmul.f32 %v10970, 0.25
        %v11035 = vmul.f32 %v10971, 0.25
        %v11036 = vmul.f32 %v10972, 0.25
        %v11037 = vmul.f32 %v10973, 0.25
        %v11038 = vmul.f32 %v10974, 0.25
        %v11039 = vmul.f32 %v10975, 0.25
        %v11040 = vmul.f32 %v10976, 0.25
        %v11041 = vmul.f32 %v10977, 0.25
        %v11042 = vmul.f32 %v10978, 0.25
        %v11043 = vmul.f32 %v10979, 0.25
        %v11044 = vmul.f32 %v10980, 0.25
        %v11045 = vmul.f32 %v10981, 0.25
        %v11046 = vmul.f32 %v10982, 0.25
        %v11047 = vmul.f32 %v10983, 0.25
        %v11048 = vmul.f32 %v10984, 0.25
        %v11049 = vmul.f32 %v10985, 0.25
        %v11050 = vmul.f32 %v10986, 0.25
        %v11051 = vmul.f32 %v10987, 0.25
        %v11052 = vmul.f32 %v10988, 0.25
        %v11053 = vmul.f32 %v10989, 0.25
        %v11054 = vmul.f32 %v10990, 0.25
        %v11055 = vmul.f32 %v10991, 0.25
        %v11056 = vmul.f32 %v10992, 0.25
        %v11057 = vpack.c.bf16 %v10993, %v10993
        %v11058 = vpack.c.bf16 %v10994, %v10994
        %v11059 = vpack.c.bf16 %v10995, %v10995
        %v11060 = vpack.c.bf16 %v10996, %v10996
        %v11061 = vpack.c.bf16 %v10997, %v10997
        %v11062 = vpack.c.bf16 %v10998, %v10998
        %v11063 = vpack.c.bf16 %v10999, %v10999
        %v11064 = vpack.c.bf16 %v11000, %v11000
        %v11065 = vpack.c.bf16 %v11001, %v11001
        %v11066 = vpack.c.bf16 %v11002, %v11002
        %v11067 = vpack.c.bf16 %v11003, %v11003
        %v11068 = vpack.c.bf16 %v11004, %v11004
        %v11069 = vpack.c.bf16 %v11005, %v11005
        %v11070 = vpack.c.bf16 %v11006, %v11006
        %v11071 = vpack.c.bf16 %v11007, %v11007
        %v11072 = vpack.c.bf16 %v11008, %v11008
        %v11073 = vpack.c.bf16 %v11009, %v11009
        %v11074 = vpack.c.bf16 %v11010, %v11010
        %v11075 = vpack.c.bf16 %v11011, %v11011
        %v11076 = vpack.c.bf16 %v11012, %v11012
        %v11077 = vpack.c.bf16 %v11013, %v11013
        %v11078 = vpack.c.bf16 %v11014, %v11014
        %v11079 = vpack.c.bf16 %v11015, %v11015
        %v11080 = vpack.c.bf16 %v11016, %v11016
        %v11081 = vpack.c.bf16 %v11017, %v11017
        %v11082 = vpack.c.bf16 %v11018, %v11018
        %v11083 = vpack.c.bf16 %v11019, %v11019
        %v11084 = vpack.c.bf16 %v11020, %v11020
        %v11085 = vpack.c.bf16 %v11021, %v11021
        %v11086 = vpack.c.bf16 %v11022, %v11022
        %v11087 = vpack.c.bf16 %v11023, %v11023
        %v11088 = vpack.c.bf16 %v11024, %v11024
        %v11089 = vpack.c.bf16 %v11025, %v11025
        %v11090 = vpack.c.bf16 %v11026, %v11026
        %v11091 = vpack.c.bf16 %v11027, %v11027
        %v11092 = vpack.c.bf16 %v11028, %v11028
        %v11093 = vpack.c.bf16 %v11029, %v11029
        %v11094 = vpack.c.bf16 %v11030, %v11030
        %v11095 = vpack.c.bf16 %v11031, %v11031
        %v11096 = vpack.c.bf16 %v11032, %v11032
        %v11097 = vpack.c.bf16 %v11033, %v11033
        %v11098 = vpack.c.bf16 %v11034, %v11034
        %v11099 = vpack.c.bf16 %v11035, %v11035
        %v11100 = vpack.c.bf16 %v11036, %v11036
        %v11101 = vpack.c.bf16 %v11037, %v11037
        %v11102 = vpack.c.bf16 %v11038, %v11038
        %v11103 = vpack.c.bf16 %v11039, %v11039
        %v11104 = vpack.c.bf16 %v11040, %v11040
        %v11105 = vpack.c.bf16 %v11041, %v11041
        %v11106 = vpack.c.bf16 %v11042, %v11042
        %v11107 = vpack.c.bf16 %v11043, %v11043
        %v11108 = vpack.c.bf16 %v11044, %v11044
        %v11109 = vpack.c.bf16 %v11045, %v11045
        %v11110 = vpack.c.bf16 %v11046, %v11046
        %v11111 = vpack.c.bf16 %v11047, %v11047
        %v11112 = vpack.c.bf16 %v11048, %v11048
        %v11113 = vpack.c.bf16 %v11049, %v11049
        %v11114 = vpack.c.bf16 %v11050, %v11050
        %v11115 = vpack.c.bf16 %v11051, %v11051
        %v11116 = vpack.c.bf16 %v11052, %v11052
        %v11117 = vpack.c.bf16 %v11053, %v11053
        %v11118 = vpack.c.bf16 %v11054, %v11054
        %v11119 = vpack.c.bf16 %v11055, %v11055
        %v11120 = vpack.c.bf16 %v11056, %v11056
        %v11121 = vld [vmem:[#allocation8] sm:$0xf]
        %v11122 = vld [vmem:[#allocation8 + $0x4] sm:$0xf]
        %v11123 = vld [vmem:[#allocation8 + $0x8] sm:$0xf]
        %v11124 = vld [vmem:[#allocation8 + $0xc] sm:$0xf]
        %v11125 = vld [vmem:[#allocation8 + $0x10] sm:$0xf]
        %v11126 = vld [vmem:[#allocation8 + $0x14] sm:$0xf]
        %v11127 = vld [vmem:[#allocation8 + $0x18] sm:$0xf]
        %v11128 = vld [vmem:[#allocation8 + $0x1c] sm:$0xf]
        %v11129 = vld [vmem:[#allocation8 + $0x20] sm:$0xf]
        %v11130 = vld [vmem:[#allocation8 + $0x24] sm:$0xf]
        %v11131 = vld [vmem:[#allocation8 + $0x28] sm:$0xf]
        %v11132 = vld [vmem:[#allocation8 + $0x2c] sm:$0xf]
        %v11133 = vld [vmem:[#allocation8 + $0x30] sm:$0xf]
        %v11134 = vld [vmem:[#allocation8 + $0x34] sm:$0xf]
        %v11135 = vld [vmem:[#allocation8 + $0x38] sm:$0xf]
        %v11136 = vld [vmem:[#allocation8 + $0x3c] sm:$0xf]
        %v11201 = vunpack.c.l.b16 %v11057
        %v11202 = vunpack.c.l.b16 %v11058
        %v11203 = vunpack.c.l.b16 %v11059
        %v11204 = vunpack.c.l.b16 %v11060
        %v11205 = vunpack.c.l.b16 %v11061
        %v11206 = vunpack.c.l.b16 %v11062
        %v11207 = vunpack.c.l.b16 %v11063
        %v11208 = vunpack.c.l.b16 %v11064
        %v11209 = vunpack.c.l.b16 %v11065
        %v11210 = vunpack.c.l.b16 %v11066
        %v11211 = vunpack.c.l.b16 %v11067
        %v11212 = vunpack.c.l.b16 %v11068
        %v11213 = vunpack.c.l.b16 %v11069
        %v11214 = vunpack.c.l.b16 %v11070
        %v11215 = vunpack.c.l.b16 %v11071
        %v11216 = vunpack.c.l.b16 %v11072
        %v11217 = vunpack.c.l.b16 %v11073
        %v11218 = vunpack.c.l.b16 %v11074
        %v11219 = vunpack.c.l.b16 %v11075
        %v11220 = vunpack.c.l.b16 %v11076
        %v11221 = vunpack.c.l.b16 %v11077
        %v11222 = vunpack.c.l.b16 %v11078
        %v11223 = vunpack.c.l.b16 %v11079
        %v11224 = vunpack.c.l.b16 %v11080
        %v11225 = vunpack.c.l.b16 %v11081
        %v11226 = vunpack.c.l.b16 %v11082
        %v11227 = vunpack.c.l.b16 %v11083
        %v11228 = vunpack.c.l.b16 %v11084
        %v11229 = vunpack.c.l.b16 %v11085
        %v11230 = vunpack.c.l.b16 %v11086
        %v11231 = vunpack.c.l.b16 %v11087
        %v11232 = vunpack.c.l.b16 %v11088
        %v11233 = vunpack.c.l.b16 %v11089
        %v11234 = vunpack.c.l.b16 %v11090
        %v11235 = vunpack.c.l.b16 %v11091
        %v11236 = vunpack.c.l.b16 %v11092
        %v11237 = vunpack.c.l.b16 %v11093
        %v11238 = vunpack.c.l.b16 %v11094
        %v11239 = vunpack.c.l.b16 %v11095
        %v11240 = vunpack.c.l.b16 %v11096
        %v11241 = vunpack.c.l.b16 %v11097
        %v11242 = vunpack.c.l.b16 %v11098
        %v11243 = vunpack.c.l.b16 %v11099
        %v11244 = vunpack.c.l.b16 %v11100
        %v11245 = vunpack.c.l.b16 %v11101
        %v11246 = vunpack.c.l.b16 %v11102
        %v11247 = vunpack.c.l.b16 %v11103
        %v11248 = vunpack.c.l.b16 %v11104
        %v11249 = vunpack.c.l.b16 %v11105
        %v11250 = vunpack.c.l.b16 %v11106
        %v11251 = vunpack.c.l.b16 %v11107
        %v11252 = vunpack.c.l.b16 %v11108
        %v11253 = vunpack.c.l.b16 %v11109
        %v11254 = vunpack.c.l.b16 %v11110
        %v11255 = vunpack.c.l.b16 %v11111
        %v11256 = vunpack.c.l.b16 %v11112
        %v11257 = vunpack.c.l.b16 %v11113
        %v11258 = vunpack.c.l.b16 %v11114
        %v11259 = vunpack.c.l.b16 %v11115
        %v11260 = vunpack.c.l.b16 %v11116
        %v11261 = vunpack.c.l.b16 %v11117
        %v11262 = vunpack.c.l.b16 %v11118
        %v11263 = vunpack.c.l.b16 %v11119
        %v11264 = vunpack.c.l.b16 %v11120
        %v11265 = vpack.c.b16 %v11201, %v11201
        %v11266 = vpack.c.b16 %v11202, %v11202
        %v11267 = vpack.c.b16 %v11203, %v11203
        %v11268 = vpack.c.b16 %v11204, %v11204
        %v11269 = vpack.c.b16 %v11205, %v11205
        %v11270 = vpack.c.b16 %v11206, %v11206
        %v11271 = vpack.c.b16 %v11207, %v11207
        %v11272 = vpack.c.b16 %v11208, %v11208
        %v11273 = vpack.c.b16 %v11209, %v11209
        %v11274 = vpack.c.b16 %v11210, %v11210
        %v11275 = vpack.c.b16 %v11211, %v11211
        %v11276 = vpack.c.b16 %v11212, %v11212
        %v11277 = vpack.c.b16 %v11213, %v11213
        %v11278 = vpack.c.b16 %v11214, %v11214
        %v11279 = vpack.c.b16 %v11215, %v11215
        %v11280 = vpack.c.b16 %v11216, %v11216
        %v11281 = vpack.c.b16 %v11217, %v11217
        %v11282 = vpack.c.b16 %v11218, %v11218
        %v11283 = vpack.c.b16 %v11219, %v11219
        %v11284 = vpack.c.b16 %v11220, %v11220
        %v11285 = vpack.c.b16 %v11221, %v11221
        %v11286 = vpack.c.b16 %v11222, %v11222
        %v11287 = vpack.c.b16 %v11223, %v11223
        %v11288 = vpack.c.b16 %v11224, %v11224
        %v11289 = vpack.c.b16 %v11225, %v11225
        %v11290 = vpack.c.b16 %v11226, %v11226
        %v11291 = vpack.c.b16 %v11227, %v11227
        %v11292 = vpack.c.b16 %v11228, %v11228
        %v11293 = vpack.c.b16 %v11229, %v11229
        %v11294 = vpack.c.b16 %v11230, %v11230
        %v11295 = vpack.c.b16 %v11231, %v11231
        %v11296 = vpack.c.b16 %v11232, %v11232
        %v11297 = vpack.c.b16 %v11233, %v11233
        %v11298 = vpack.c.b16 %v11234, %v11234
        %v11299 = vpack.c.b16 %v11235, %v11235
        %v11300 = vpack.c.b16 %v11236, %v11236
        %v11301 = vpack.c.b16 %v11237, %v11237
        %v11302 = vpack.c.b16 %v11238, %v11238
        %v11303 = vpack.c.b16 %v11239, %v11239
        %v11304 = vpack.c.b16 %v11240, %v11240
        %v11305 = vpack.c.b16 %v11241, %v11241
        %v11306 = vpack.c.b16 %v11242, %v11242
        %v11307 = vpack.c.b16 %v11243, %v11243
        %v11308 = vpack.c.b16 %v11244, %v11244
        %v11309 = vpack.c.b16 %v11245, %v11245
        %v11310 = vpack.c.b16 %v11246, %v11246
        %v11311 = vpack.c.b16 %v11247, %v11247
        %v11312 = vpack.c.b16 %v11248, %v11248
        %v11313 = vpack.c.b16 %v11249, %v11249
        %v11314 = vpack.c.b16 %v11250, %v11250
        %v11315 = vpack.c.b16 %v11251, %v11251
        %v11316 = vpack.c.b16 %v11252, %v11252
        %v11317 = vpack.c.b16 %v11253, %v11253
        %v11318 = vpack.c.b16 %v11254, %v11254
        %v11319 = vpack.c.b16 %v11255, %v11255
        %v11320 = vpack.c.b16 %v11256, %v11256
        %v11321 = vpack.c.b16 %v11257, %v11257
        %v11322 = vpack.c.b16 %v11258, %v11258
        %v11323 = vpack.c.b16 %v11259, %v11259
        %v11324 = vpack.c.b16 %v11260, %v11260
        %v11325 = vpack.c.b16 %v11261, %v11261
        %v11326 = vpack.c.b16 %v11262, %v11262
        %v11327 = vpack.c.b16 %v11263, %v11263
        %v11328 = vpack.c.b16 %v11264, %v11264
        %v11329 = vunpack.c.l.b16 %v11265
        %v11330 = vunpack.c.l.b16 %v11266
        %v11331 = vunpack.c.l.b16 %v11267
        %v11332 = vunpack.c.l.b16 %v11268
        %v11333 = vunpack.c.l.b16 %v11269
        %v11334 = vunpack.c.l.b16 %v11270
        %v11335 = vunpack.c.l.b16 %v11271
        %v11336 = vunpack.c.l.b16 %v11272
        %v11337 = vunpack.c.l.b16 %v11273
        %v11338 = vunpack.c.l.b16 %v11274
        %v11339 = vunpack.c.l.b16 %v11275
        %v11340 = vunpack.c.l.b16 %v11276
        %v11341 = vunpack.c.l.b16 %v11277
        %v11342 = vunpack.c.l.b16 %v11278
        %v11343 = vunpack.c.l.b16 %v11279
        %v11344 = vunpack.c.l.b16 %v11280
        %v11345 = vunpack.c.l.b16 %v11281
        %v11346 = vunpack.c.l.b16 %v11282
        %v11347 = vunpack.c.l.b16 %v11283
        %v11348 = vunpack.c.l.b16 %v11284
        %v11349 = vunpack.c.l.b16 %v11285
        %v11350 = vunpack.c.l.b16 %v11286
        %v11351 = vunpack.c.l.b16 %v11287
        %v11352 = vunpack.c.l.b16 %v11288
        %v11353 = vunpack.c.l.b16 %v11289
        %v11354 = vunpack.c.l.b16 %v11290
        %v11355 = vunpack.c.l.b16 %v11291
        %v11356 = vunpack.c.l.b16 %v11292
        %v11357 = vunpack.c.l.b16 %v11293
        %v11358 = vunpack.c.l.b16 %v11294
        %v11359 = vunpack.c.l.b16 %v11295
        %v11360 = vunpack.c.l.b16 %v11296
        %v11361 = vunpack.c.l.b16 %v11297
        %v11362 = vunpack.c.l.b16 %v11298
        %v11363 = vunpack.c.l.b16 %v11299
        %v11364 = vunpack.c.l.b16 %v11300
        %v11365 = vunpack.c.l.b16 %v11301
        %v11366 = vunpack.c.l.b16 %v11302
        %v11367 = vunpack.c.l.b16 %v11303
        %v11368 = vunpack.c.l.b16 %v11304
        %v11369 = vunpack.c.l.b16 %v11305
        %v11370 = vunpack.c.l.b16 %v11306
        %v11371 = vunpack.c.l.b16 %v11307
        %v11372 = vunpack.c.l.b16 %v11308
        %v11373 = vunpack.c.l.b16 %v11309
        %v11374 = vunpack.c.l.b16 %v11310
        %v11375 = vunpack.c.l.b16 %v11311
        %v11376 = vunpack.c.l.b16 %v11312
        %v11377 = vunpack.c.l.b16 %v11313
        %v11378 = vunpack.c.l.b16 %v11314
        %v11379 = vunpack.c.l.b16 %v11315
        %v11380 = vunpack.c.l.b16 %v11316
        %v11381 = vunpack.c.l.b16 %v11317
        %v11382 = vunpack.c.l.b16 %v11318
        %v11383 = vunpack.c.l.b16 %v11319
        %v11384 = vunpack.c.l.b16 %v11320
        %v11385 = vunpack.c.l.b16 %v11321
        %v11386 = vunpack.c.l.b16 %v11322
        %v11387 = vunpack.c.l.b16 %v11323
        %v11388 = vunpack.c.l.b16 %v11324
        %v11389 = vunpack.c.l.b16 %v11325
        %v11390 = vunpack.c.l.b16 %v11326
        %v11391 = vunpack.c.l.b16 %v11327
        %v11392 = vunpack.c.l.b16 %v11328
        %v11393 = vrot.slane %v11330, 7
        %v11394 = vsel %vm6352, %v11393, %v11329
        %v11395 = vrot.slane %v11331, 6
        %v11396 = vsel %vm6354, %v11395, %v11394
        %v11397 = vrot.slane %v11332, 5
        %v11398 = vsel %vm6356, %v11397, %v11396
        %v11399 = vrot.slane %v11333, 4
        %v11400 = vsel %vm6358, %v11399, %v11398
        %v11401 = vrot.slane %v11334, 3
        %v11402 = vsel %vm6360, %v11401, %v11400
        %v11403 = vrot.slane %v11335, 2
        %v11404 = vsel %vm6362, %v11403, %v11402
        %v11405 = vrot.slane %v11336, 1
        %v11406 = vsel %vm6364, %v11405, %v11404
        %v11407 = vrot.slane %v11338, 7
        %v11408 = vsel %vm6352, %v11407, %v11337
        %v11409 = vrot.slane %v11339, 6
        %v11410 = vsel %vm6354, %v11409, %v11408
        %v11411 = vrot.slane %v11340, 5
        %v11412 = vsel %vm6356, %v11411, %v11410
        %v11413 = vrot.slane %v11341, 4
        %v11414 = vsel %vm6358, %v11413, %v11412
        %v11415 = vrot.slane %v11342, 3
        %v11416 = vsel %vm6360, %v11415, %v11414
        %v11417 = vrot.slane %v11343, 2
        %v11418 = vsel %vm6362, %v11417, %v11416
        %v11419 = vrot.slane %v11344, 1
        %v11420 = vsel %vm6364, %v11419, %v11418
        %v11421 = vrot.slane %v11346, 7
        %v11422 = vsel %vm6352, %v11421, %v11345
        %v11423 = vrot.slane %v11347, 6
        %v11424 = vsel %vm6354, %v11423, %v11422
        %v11425 = vrot.slane %v11348, 5
        %v11426 = vsel %vm6356, %v11425, %v11424
        %v11427 = vrot.slane %v11349, 4
        %v11428 = vsel %vm6358, %v11427, %v11426
        %v11429 = vrot.slane %v11350, 3
        %v11430 = vsel %vm6360, %v11429, %v11428
        %v11431 = vrot.slane %v11351, 2
        %v11432 = vsel %vm6362, %v11431, %v11430
        %v11433 = vrot.slane %v11352, 1
        %v11434 = vsel %vm6364, %v11433, %v11432
        %v11435 = vrot.slane %v11354, 7
        %v11436 = vsel %vm6352, %v11435, %v11353
        %v11437 = vrot.slane %v11355, 6
        %v11438 = vsel %vm6354, %v11437, %v11436
        %v11439 = vrot.slane %v11356, 5
        %v11440 = vsel %vm6356, %v11439, %v11438
        %v11441 = vrot.slane %v11357, 4
        %v11442 = vsel %vm6358, %v11441, %v11440
        %v11443 = vrot.slane %v11358, 3
        %v11444 = vsel %vm6360, %v11443, %v11442
        %v11445 = vrot.slane %v11359, 2
        %v11446 = vsel %vm6362, %v11445, %v11444
        %v11447 = vrot.slane %v11360, 1
        %v11448 = vsel %vm6364, %v11447, %v11446
        %v11449 = vrot.slane %v11362, 7
        %v11450 = vsel %vm6352, %v11449, %v11361
        %v11451 = vrot.slane %v11363, 6
        %v11452 = vsel %vm6354, %v11451, %v11450
        %v11453 = vrot.slane %v11364, 5
        %v11454 = vsel %vm6356, %v11453, %v11452
        %v11455 = vrot.slane %v11365, 4
        %v11456 = vsel %vm6358, %v11455, %v11454
        %v11457 = vrot.slane %v11366, 3
        %v11458 = vsel %vm6360, %v11457, %v11456
        %v11459 = vrot.slane %v11367, 2
        %v11460 = vsel %vm6362, %v11459, %v11458
        %v11461 = vrot.slane %v11368, 1
        %v11462 = vsel %vm6364, %v11461, %v11460
        %v11463 = vrot.slane %v11370, 7
        %v11464 = vsel %vm6352, %v11463, %v11369
        %v11465 = vrot.slane %v11371, 6
        %v11466 = vsel %vm6354, %v11465, %v11464
        %v11467 = vrot.slane %v11372, 5
        %v11468 = vsel %vm6356, %v11467, %v11466
        %v11469 = vrot.slane %v11373, 4
        %v11470 = vsel %vm6358, %v11469, %v11468
        %v11471 = vrot.slane %v11374, 3
        %v11472 = vsel %vm6360, %v11471, %v11470
        %v11473 = vrot.slane %v11375, 2
        %v11474 = vsel %vm6362, %v11473, %v11472
        %v11475 = vrot.slane %v11376, 1
        %v11476 = vsel %vm6364, %v11475, %v11474
        %v11477 = vrot.slane %v11378, 7
        %v11478 = vsel %vm6352, %v11477, %v11377
        %v11479 = vrot.slane %v11379, 6
        %v11480 = vsel %vm6354, %v11479, %v11478
        %v11481 = vrot.slane %v11380, 5
        %v11482 = vsel %vm6356, %v11481, %v11480
        %v11483 = vrot.slane %v11381, 4
        %v11484 = vsel %vm6358, %v11483, %v11482
        %v11485 = vrot.slane %v11382, 3
        %v11486 = vsel %vm6360, %v11485, %v11484
        %v11487 = vrot.slane %v11383, 2
        %v11488 = vsel %vm6362, %v11487, %v11486
        %v11489 = vrot.slane %v11384, 1
        %v11490 = vsel %vm6364, %v11489, %v11488
        %v11491 = vrot.slane %v11386, 7
        %v11492 = vsel %vm6352, %v11491, %v11385
        %v11493 = vrot.slane %v11387, 6
        %v11494 = vsel %vm6354, %v11493, %v11492
        %v11495 = vrot.slane %v11388, 5
        %v11496 = vsel %vm6356, %v11495, %v11494
        %v11497 = vrot.slane %v11389, 4
        %v11498 = vsel %vm6358, %v11497, %v11496
        %v11499 = vrot.slane %v11390, 3
        %v11500 = vsel %vm6360, %v11499, %v11498
        %v11501 = vrot.slane %v11391, 2
        %v11502 = vsel %vm6362, %v11501, %v11500
        %v11503 = vrot.slane %v11392, 1
        %v11504 = vsel %vm6364, %v11503, %v11502
        %v11505 = vpack.c.b16 %v11420, %v11406
        %v11506 = vpack.c.b16 %v11448, %v11434
        %v11507 = vpack.c.b16 %v11476, %v11462
        %v11508 = vpack.c.b16 %v11504, %v11490
        %v11529 = vunpack.c.l.b16 %v11121
        %v11530 = vunpack.c.l.b16 %v11122
        %v11531 = vunpack.c.l.b16 %v11123
        %v11532 = vunpack.c.l.b16 %v11124
        %v11533 = vunpack.c.l.b16 %v11125
        %v11534 = vunpack.c.l.b16 %v11126
        %v11535 = vunpack.c.l.b16 %v11127
        %v11536 = vunpack.c.l.b16 %v11128
        %v11537 = vunpack.c.l.b16 %v11129
        %v11538 = vunpack.c.l.b16 %v11130
        %v11539 = vunpack.c.l.b16 %v11131
        %v11540 = vunpack.c.l.b16 %v11132
        %v11541 = vunpack.c.l.b16 %v11133
        %v11542 = vunpack.c.l.b16 %v11134
        %v11543 = vunpack.c.l.b16 %v11135
        %v11544 = vunpack.c.l.b16 %v11136
        %v11545 = vpack.c.b16 %v11530, %v11529
        %v11546 = vpack.c.b16 %v11532, %v11531
        %v11547 = vpack.c.b16 %v11534, %v11533
        %v11548 = vpack.c.b16 %v11536, %v11535
        %v11549 = vpack.c.b16 %v11538, %v11537
        %v11550 = vpack.c.b16 %v11540, %v11539
        %v11551 = vpack.c.b16 %v11542, %v11541
        %v11552 = vpack.c.b16 %v11544, %v11543
        %11561 = vmatpush.bf16.msra.mxu0 %v11552
        %11562 = vmatpush.bf16.msra.mxu0 %v11551
        %11563 = vmatpush.bf16.msra.mxu0 %v11550
        %11564 = vmatpush.bf16.msra.mxu0 %v11549
        %11565 = vmatpush.bf16.msra.mxu0 %v11548
        %11566 = vmatpush.bf16.msra.mxu0 %v11547
        %11567 = vmatpush.bf16.msra.mxu0 %v11546
        %11568 = vmatpush.bf16.msra.mxu0 %v11545
        %11569 = vmatmul.bf16.gmra.mxu0 %v11505
        %v11570 = vpop.f32.mrf.mxu0
        %v11571 = vadd.f32 0.0, %v11570
        %v11572 = vpop.f32.mrf.mxu0
        %v11573 = vadd.f32 0.0, %v11572
        %11574 = vmatmul.bf16.gmra.mxu0 %v11506
        %v11575 = vpop.f32.mrf.mxu0
        %v11576 = vadd.f32 0.0, %v11575
        %v11577 = vpop.f32.mrf.mxu0
        %v11578 = vadd.f32 0.0, %v11577
        %11579 = vmatmul.bf16.gmra.mxu0 %v11507
        %v11580 = vpop.f32.mrf.mxu0
        %v11581 = vadd.f32 0.0, %v11580
        %v11582 = vpop.f32.mrf.mxu0
        %v11583 = vadd.f32 0.0, %v11582
        %11584 = vmatmul.bf16.gmra.mxu0 %v11508
        %v11585 = vpop.f32.mrf.mxu0
        %v11586 = vadd.f32 0.0, %v11585
        %v11587 = vpop.f32.mrf.mxu0
        %v11588 = vadd.f32 0.0, %v11587
        %11589 = vdwg.mxu0
        %v11590 = vadd.f32 %v9256, %v11571
        %v11591 = vadd.f32 %v9257, %v11573
        %v11592 = vadd.f32 %v9258, %v11576
        %v11593 = vadd.f32 %v9259, %v11578
        %v11594 = vadd.f32 %v9260, %v11581
        %v11595 = vadd.f32 %v9261, %v11583
        %v11596 = vadd.f32 %v9262, %v11586
        %v11597 = vadd.f32 %v9263, %v11588
        %v11598 = vmul.f32 %v11590, 0.70710677
        %v11599 = vmul.f32 %v11591, 0.70710677
        %v11600 = vmul.f32 %v11592, 0.70710677
        %v11601 = vmul.f32 %v11593, 0.70710677
        %v11602 = vmul.f32 %v11594, 0.70710677
        %v11603 = vmul.f32 %v11595, 0.70710677
        %v11604 = vmul.f32 %v11596, 0.70710677
        %v11605 = vmul.f32 %v11597, 0.70710677
        %11606 = vst [vmem:[%s429] sm:$0xff] %v11598
        %11607 = vst [vmem:[%s429 + $0x8] sm:$0xff] %v11599
        %11608 = vst [vmem:[%s429 + $0x10] sm:$0xff] %v11600
        %11609 = vst [vmem:[%s429 + $0x18] sm:$0xff] %v11601
        %11610 = vst [vmem:[%s429 + $0x20] sm:$0xff] %v11602
        %11611 = vst [vmem:[%s429 + $0x28] sm:$0xff] %v11603
        %11612 = vst [vmem:[%s429 + $0x30] sm:$0xff] %v11604
        %11613 = vst [vmem:[%s429 + $0x38] sm:$0xff] %v11605
        %s11614 = sand.u32 %s252, 1
        %s11615 = scalar_lea.sflag [#allocation4], %s11614
        %s11616 = sand.u32 %s252, 1
        %s11617 = smul.addr %s11616, 64
        %s11618 = scalar_lea.vmem [#allocation10], %s11617
        // Predicated region
        $region77: #{tpu_custom_call.1} parent=59 // pred_check
          %p11619 = pneg %p262
        $region78: #{tpu_custom_call.1} parent=59 // pred_check_branch
          %11621 = sbr.rel (%p11619) target = $region80
        $region79: #{tpu_custom_call.1} parent=59 // pred_region
          %11623 = vsyncadd %s11615, 0
          %s11624 = smul.addr %s29, 8
          %s11625 = smul.addr %s11624, 8
          %s11626 = scalar_lea.hbm %s10, %s11625
          %s11627 = sshll.u32 %s11618, 4
          %s11628 = int_to_ptr.vmem [resolvable:$true] %s11627
          %s11629 = sshll.u32 %s11626, 4
          %s11630 = int_to_ptr.hbm [resolvable:$true] %s11629
          %11635 = dma.vmem_to_hbm [thread:$0]  %s11628, 1024, %s11630, %s11615, 128, 128, 8
        $region80: #{tpu_custom_call.1} parent=59 // pred_fallthru
          _
      $region60: #{tpu_custom_call.1} parent=5 // pred_fallthru
        _
      %p11636 = scmp.le.s32.totalorder 2, %s24
      // Predicated region
      $region81: #{tpu_custom_call.1} parent=5 // pred_check
        %p11637 = pneg %p11636
      $region82: #{tpu_custom_call.1} parent=5 // pred_check_branch
        %11639 = sbr.rel (%p11637) target = $region84
      $region83: #{tpu_custom_call.1} parent=5 // pred_region
        %s11640 = ssub.s32 %s24, 2
        // Predicated region
        $region85: #{tpu_custom_call.1} parent=83 // pred_check
          %p11641 = pneg %p268
        $region86: #{tpu_custom_call.1} parent=83 // pred_check_branch
          %11643 = sbr.rel (%p11641) target = $region88
        $region87: #{tpu_custom_call.1} parent=83 // pred_region
          %s11644 = sand.u32 %s253, 1
          %s11645 = scalar_lea.sflag [#allocation4], %s11644
          %s11646 = sand.u32 %s253, 1
          %s11647 = smul.addr %s11646, 64
          %s11648 = scalar_lea.vmem [#allocation10], %s11647
          %11650 = dma.done %s11645, 1024
        $region88: #{tpu_custom_call.1} parent=83 // pred_fallthru
          _
      $region84: #{tpu_custom_call.1} parent=5 // pred_fallthru
        _
    $region6: #{tpu_custom_call.1} parent=1 // loop_footer
      %s28 = sadd.s32 1, %s24
    $region7: #{tpu_custom_call.1} parent=1 // loop_footer_branch
      %23 = sbr.rel target = $region3
    $region8: #{tpu_custom_call.1} parent=1 // loop_exit
      _
    %11651 = vsyncpa [#allocation3], 1
    %s11652 = scalar_lea.sflag [#allocation3], 1
    %11653 = vsyncpa %s11652, 1
    %11654 = vsyncpa [#allocation6], 1
    %11655 = vsyncpa [#allocation9], 1
    %11656 = vsyncpa [#allocation4], 1
    %s11657 = scalar_lea.sflag [#allocation4], 1
    %11658 = vsyncpa %s11657, 1

</llo_original>
